<compile_context>
chip_gen: v7x
topology: tpu7x:2x2x1
jax: 0.10.0
libtpu: 0.0.40
codegen_flags: <defaults>
</compile_context>

<pallas_src>
import jax
import jax.numpy as jnp
from jax.experimental import pallas as pl
from jax.experimental.pallas import tpu as pltpu

LANE = 128

# LeNet geometry (fixed by the 16*5*5 flatten -> 32x32x3 input).
KH = KW = 5                      # conv kernel size
C0, C1, C2 = 3, 6, 16            # real channel counts
C1P, C2P = 16, 16                # padded channel counts (bf16 sublane friendly)
NSHIFT = KW                      # conv1 output replicated at width shifts 0,2,..,8
KWE = KW + 2 * (NSHIFT - 1)      # 13 width taps in the conv1 im2col
K1 = KH * KWE * C0               # 195 real conv1 contraction length
K1P = 208                        # padded to a multiple of 16
H0 = W0 = 32                     # input spatial size
OH1 = H0 - KH + 1                # 28 valid conv1 output rows
P1H, P1W = OH1 // 2, W0 // 2     # 14, 16  pooled a1 (w cols >= 14 are junk)
R1 = P1H * P1W                   # 224 a1 rows per image
P2H, P2W = P1H // 2, P1W // 2    # 7, 8    pooled a2 (valid region is 5x5)


def _round_up(x, m):
    return (x + m - 1) // m * m


# ----------------------------------------------------------------------------
# The fused kernel: conv1 -> pool -> conv2 -> pool -> fc1 -> fc2 -> fc3
# ----------------------------------------------------------------------------
def _net_kernel(x_ref, c1w_ref, c1b_ref, c2w_ref, c2b_ref,
                w1_ref, b1_ref, w2_ref, b2_ref, w3_ref, b3_ref, o_ref):
    imgs = x_ref.shape[0]
    m0 = imgs * OH1 * W0                  # conv1 output rows (extended width 32)
    cw = NSHIFT * C1P                     # 80 lanes: (width-shift block, channel)

    # --- conv1: one MXU matmul over the whole batch block (K=208, N=80). -----
    # Column block j of the result holds conv1 output at (h, w + 2j), so after
    # the 2x2 pool the width taps conv2 needs are already folded into lanes.
    xc = x_ref[...].reshape(m0, K1P)
    y1 = jnp.dot(xc, c1w_ref[...], preferred_element_type=jnp.float32)
    y1 = jnp.maximum(y1 + c1b_ref[...], 0.0)

    # 2x2 max pool (h pairs, then w pairs); rows are (image, h, w) row-major.
    y1 = jnp.max(y1.reshape(imgs * P1H, 2, W0, cw), axis=1)
    y1 = jnp.max(y1.reshape(imgs * R1, 2, cw), axis=1)
    a1w = y1.astype(jnp.bfloat16)                        # (imgs*224, 80)

    # --- conv2: 5 matmuls (one per kernel row), K = 80 = 5 w-taps x 16 ch. ---
    # Every LHS slice starts at a 16-row-aligned offset (no relayout copies);
    # rows past the valid region only feed junk outputs that pooling never
    # mixes with valid ones and that the fc1 stage never reads.
    l1 = imgs * R1
    a1wp = jnp.concatenate(
        [a1w, jnp.zeros(((KH - 1) * P1W, cw), jnp.bfloat16)], axis=0)
    acc2 = None
    for i in range(KH):
        part = jnp.dot(a1wp[i * P1W:i * P1W + l1, :], c2w_ref[i],
                       preferred_element_type=jnp.float32)
        acc2 = part if acc2 is None else acc2 + part
    y2 = jnp.maximum(acc2 + c2b_ref[...], 0.0)           # (imgs*224, 16)

    y2 = jnp.max(y2.reshape(imgs * P2H, 2, P1W, C2P), axis=1)
    y2 = jnp.max(y2.reshape(imgs * P2H * P2W, 2, C2P), axis=1)
    a2 = y2.reshape(imgs, P2H, P2W, C2P)                 # valid region [:, :5, :5]

    # --- fc1 (+ReLU): 25 position-wise K=16 matmuls accumulated in f32. ------
    # fc1's packed rows already fold in PyTorch's NCHW .view(-1, 400) order.
    h1 = None
    for hh in range(KH):
        for ww in range(KW):
            piece = a2[:, hh, ww, :].astype(jnp.bfloat16)          # (imgs, 16)
            part = jnp.dot(piece, w1_ref[hh * KW + ww],
                           preferred_element_type=jnp.float32)
            h1 = part if h1 is None else h1 + part
    h1 = jnp.maximum(h1 + b1_ref[...], 0.0).astype(jnp.bfloat16)

    # --- fc2 + ReLU, fc3 (lane-dense 128-wide store; sliced to 10 outside). --
    h2 = jnp.dot(h1, w2_ref[...], preferred_element_type=jnp.float32)
    h2 = jnp.maximum(h2 + b2_ref[...], 0.0).astype(jnp.bfloat16)
    o_ref[0] = (jnp.dot(h2, w3_ref[...], preferred_element_type=jnp.float32)
                + b3_ref[...])


# ----------------------------------------------------------------------------
# Forward pass wrapper (single pallas_call)
# ----------------------------------------------------------------------------
@jax.jit
def net_forward(x_nchw, packed):
    """Matches PyTorch Net.forward.  x_nchw: (N, 3, 32, 32) f32 -> (N, 10) f32."""
    n = x_nchw.shape[0]
    # Images per grid step: amortise the ~0.35us/step overhead while keeping
    # >= 2 grid steps whenever possible (both v7x TensorCores get work) and the
    # per-step VMEM footprint (~10MB incl. f32 conv1 accumulator + pool temps)
    # well inside every generation's scoped-VMEM budget.
    imgs = max(1, min(4, n // 2))
    npad = _round_up(n, imgs)
    grid = (npad // imgs,)

    # conv1 im2col (plain XLA, outside the kernel): row (h*32 + w) holds the
    # x[h+i, w+jj, c] patch for i<5, jj<13, c<3 (195 values, padded to 208).
    # 13 (not 5) width taps feed the shift-replicated conv1 weight columns.
    x = jnp.transpose(x_nchw, (0, 2, 3, 1))                        # NHWC
    x = jnp.pad(x, ((0, npad - n), (0, 0), (0, KWE - 1), (0, 0)))
    cols = [x[:, i:i + OH1, j:j + W0, :] for i in range(KH) for j in range(KWE)]
    xcol = jnp.concatenate(cols, axis=-1)                          # (npad,28,32,195)
    xcol = jnp.pad(xcol, ((0, 0), (0, 0), (0, 0), (0, K1P - K1)))
    xcol = xcol.reshape(npad, OH1 * W0, K1P).astype(jnp.bfloat16)

    out = pl.pallas_call(
        _net_kernel,
        out_shape=jax.ShapeDtypeStruct((grid[0], imgs, LANE), jnp.float32),
        grid=grid,
        in_specs=[
            pl.BlockSpec((imgs, OH1 * W0, K1P), lambda g: (g, 0, 0)),
            pl.BlockSpec((K1P, NSHIFT * C1P), lambda g: (0, 0)),
            pl.BlockSpec((1, NSHIFT * C1P), lambda g: (0, 0)),
            pl.BlockSpec((KH, KW * C1P, C2P), lambda g: (0, 0, 0)),
            pl.BlockSpec((1, C2P), lambda g: (0, 0)),
            pl.BlockSpec((KH * KW, C2P, LANE), lambda g: (0, 0, 0)),
            pl.BlockSpec((1, LANE), lambda g: (0, 0)),
            pl.BlockSpec((LANE, LANE), lambda g: (0, 0)),
            pl.BlockSpec((1, LANE), lambda g: (0, 0)),
            pl.BlockSpec((LANE, LANE), lambda g: (0, 0)),
            pl.BlockSpec((1, LANE), lambda g: (0, 0)),
        ],
        out_specs=pl.BlockSpec((1, imgs, LANE), lambda g: (g, 0, 0)),
        compiler_params=pltpu.CompilerParams(
            dimension_semantics=("parallel",),
            vmem_limit_bytes=32 * 1024 * 1024),
    )(xcol, packed["c1w"], packed["c1b"], packed["c2w"], packed["c2b"],
      packed["w1"], packed["b1"], packed["w2"], packed["b2"],
      packed["w3"], packed["b3"])
    return out.reshape(npad, LANE)[:n, :10]


# ----------------------------------------------------------------------------
# Parameter init (PyTorch-convention shapes) and one-time TPU repacking
# ----------------------------------------------------------------------------
def init_params(key):
    def uniform(k, shape, fan_in):
        bound = 1.0 / jnp.sqrt(jnp.float32(fan_in))
        return jax.random.uniform(k, shape, jnp.float32, -bound, bound)

    ks = jax.random.split(key, 10)
    return {
        "conv1_w": uniform(ks[0], (6, 3, 5, 5), 3 * 5 * 5),
        "conv1_b": uniform(ks[1], (6,), 3 * 5 * 5),
        "conv2_w": uniform(ks[2], (16, 6, 5, 5), 6 * 5 * 5),
        "conv2_b": uniform(ks[3], (16,), 6 * 5 * 5),
        "fc1_w": uniform(ks[4], (120, 400), 400),
        "fc1_b": uniform(ks[5], (120,), 400),
        "fc2_w": uniform(ks[6], (84, 120), 120),
        "fc2_b": uniform(ks[7], (84,), 120),
        "fc3_w": uniform(ks[8], (10, 84), 84),
        "fc3_b": uniform(ks[9], (10,), 84),
    }


def pack_params(p):
    """One-time repack into TPU-friendly layouts (all zero-padded lanes carry
    exactly-zero weights/biases, so they never contaminate real outputs)."""
    # conv1: (K1P, 80).  Column block s (16 wide, 6 real) is the conv1 kernel
    # shifted by 2s along width, so the matmul directly emits the width-shifted
    # replicas that become conv2's folded width taps after 2x2 pooling.
    wc1 = jnp.transpose(p["conv1_w"], (2, 3, 1, 0))                # (5,5,3,6)
    blocks = []
    for s in range(NSHIFT):
        ws = jnp.pad(wc1, ((0, 0), (2 * s, KWE - KW - 2 * s),
                           (0, 0), (0, C1P - C1)))                 # (5,13,3,16)
        blocks.append(ws.reshape(KH * KWE * C0, C1P))
    c1w = jnp.concatenate(blocks, axis=1)                          # (195, 80)
    c1w = jnp.pad(c1w, ((0, K1P - K1), (0, 0))).astype(jnp.bfloat16)
    c1b = jnp.tile(jnp.pad(p["conv1_b"], (0, C1P - C1)), NSHIFT)
    c1b = c1b.reshape(1, NSHIFT * C1P).astype(jnp.float32)

    # conv2: (kh, kw*C1P, C2P); rows within a block ordered (width tap, cin).
    wc2 = jnp.transpose(p["conv2_w"], (2, 3, 1, 0))                # (5,5,6,16)
    wc2 = jnp.pad(wc2, ((0, 0), (0, 0), (0, C1P - C1), (0, C2P - C2)))
    c2w = wc2.reshape(KH, KW * C1P, C2P).astype(jnp.bfloat16)      # (5,80,16)
    c2b = jnp.pad(p["conv2_b"], (0, C2P - C2)).reshape(1, C2P).astype(jnp.float32)

    # fc1: (25, 16, 128); PyTorch's (c, h, w) flatten order folded into the
    # (h, w, c) position/channel ordering the kernel produces.
    w1 = p["fc1_w"].reshape(120, C2, KH, KW)                       # (o,c,h,w)
    w1 = jnp.transpose(w1, (2, 3, 1, 0)).reshape(KH * KW, C2, 120)
    w1 = jnp.pad(w1, ((0, 0), (0, C2P - C2), (0, LANE - 120))).astype(jnp.bfloat16)
    b1 = jnp.pad(p["fc1_b"], (0, LANE - 120)).reshape(1, LANE).astype(jnp.float32)

    def pack_fc(w_oi, b_o):
        o, i = w_oi.shape
        wm = jnp.pad(w_oi.T, ((0, LANE - i), (0, LANE - o))).astype(jnp.bfloat16)
        bp = jnp.pad(b_o, (0, LANE - o)).reshape(1, LANE).astype(jnp.float32)
        return wm, bp

    w2, b2 = pack_fc(p["fc2_w"], p["fc2_b"])
    w3, b3 = pack_fc(p["fc3_w"], p["fc3_b"])
    return {"c1w": c1w, "c1b": c1b, "c2w": c2w, "c2b": c2b,
            "w1": w1, "b1": b1, "w2": w2, "b2": b2, "w3": w3, "b3": b3}


# ----------------------------------------------------------------------------
# Pure-JAX f32 reference (mirrors the PyTorch module) for a sanity check
# ----------------------------------------------------------------------------
def net_reference(x_nchw, p):
    dn = ("NCHW", "OIHW", "NCHW")
    y = jax.lax.conv_general_dilated(x_nchw, p["conv1_w"], (1, 1), "VALID",
                                     dimension_numbers=dn)
    y = jnp.maximum(y + p["conv1_b"][None, :, None, None], 0.0)
    n, c, h, w = y.shape
    y = jnp.max(y.reshape(n, c, h // 2, 2, w // 2, 2), axis=(3, 5))
    y = jax.lax.conv_general_dilated(y, p["conv2_w"], (1, 1), "VALID",
                                     dimension_numbers=dn)
    y = jnp.maximum(y + p["conv2_b"][None, :, None, None], 0.0)
    n, c, h, w = y.shape
    y = jnp.max(y.reshape(n, c, h // 2, 2, w // 2, 2), axis=(3, 5))
    f = y.reshape(n, 400)
    f = jnp.maximum(f @ p["fc1_w"].T + p["fc1_b"], 0.0)
    f = jnp.maximum(f @ p["fc2_w"].T + p["fc2_b"], 0.0)
    return f @ p["fc3_w"].T + p["fc3_b"]


if __name__ == "__main__":
    key = jax.random.PRNGKey(0)
    k_x, k_p = jax.random.split(key)

    # The module's 16*5*5 flatten forces a 32x32 input; NCHW like PyTorch.
    x = jax.random.normal(k_x, (2, 3, 32, 32), dtype=jnp.float32)
    params = init_params(k_p)
    packed = pack_params(params)        # one-time weight repack, outside the jit

    out = jax.block_until_ready(net_forward(x, packed))
    assert out.shape == (2, 10) and out.dtype == jnp.float32

    ref = net_reference(x, params)
    err = float(jnp.max(jnp.abs(out - ref)))
    assert err < 7.5e-2, f"max abs error vs f32 reference too large: {err}"
    print("KERNEL_OK")
</pallas_src>

<mosaic_0001>
module attributes {stable_mosaic.version = 11 : i64} {
  func.func @_net_kernel(%arg0: i32, %arg1: memref<1x896x208xbf16, #tpu.memory_space<vmem>>, %arg2: memref<208x80xbf16, #tpu.memory_space<vmem>>, %arg3: memref<1x80xf32, #tpu.memory_space<vmem>>, %arg4: memref<5x80x16xbf16, #tpu.memory_space<vmem>>, %arg5: memref<1x16xf32, #tpu.memory_space<vmem>>, %arg6: memref<25x16x128xbf16, #tpu.memory_space<vmem>>, %arg7: memref<1x128xf32, #tpu.memory_space<vmem>>, %arg8: memref<128x128xbf16, #tpu.memory_space<vmem>>, %arg9: memref<1x128xf32, #tpu.memory_space<vmem>>, %arg10: memref<128x128xbf16, #tpu.memory_space<vmem>>, %arg11: memref<1x128xf32, #tpu.memory_space<vmem>>, %arg12: memref<1x1x128xf32, #tpu.memory_space<vmem>>) attributes {dimension_semantics = [#tpu.dimension_semantics<parallel>], iteration_bounds = array<i64: 2>, scalar_prefetch = 0 : i64, scratch_operands = 0 : i64, tpu.core_type = #tpu.core_type<tc>, window_params = [{transform_indices = @transform_0, window_bounds = array<i64: 1, 896, 208>}, {pipeline_mode = #tpu.pipeline_mode<synchronous>, transform_indices = @transform_1, window_bounds = array<i64: 208, 80>}, {pipeline_mode = #tpu.pipeline_mode<synchronous>, transform_indices = @transform_2, window_bounds = array<i64: 1, 80>}, {pipeline_mode = #tpu.pipeline_mode<synchronous>, transform_indices = @transform_3, window_bounds = array<i64: 5, 80, 16>}, {pipeline_mode = #tpu.pipeline_mode<synchronous>, transform_indices = @transform_4, window_bounds = array<i64: 1, 16>}, {pipeline_mode = #tpu.pipeline_mode<synchronous>, transform_indices = @transform_5, window_bounds = array<i64: 25, 16, 128>}, {pipeline_mode = #tpu.pipeline_mode<synchronous>, transform_indices = @transform_6, window_bounds = array<i64: 1, 128>}, {pipeline_mode = #tpu.pipeline_mode<synchronous>, transform_indices = @transform_7, window_bounds = array<i64: 128, 128>}, {pipeline_mode = #tpu.pipeline_mode<synchronous>, transform_indices = @transform_8, window_bounds = array<i64: 1, 128>}, {pipeline_mode = #tpu.pipeline_mode<synchronous>, transform_indices = @transform_9, window_bounds = array<i64: 128, 128>}, {pipeline_mode = #tpu.pipeline_mode<synchronous>, transform_indices = @transform_10, window_bounds = array<i64: 1, 128>}, {transform_indices = @transform_11, window_bounds = array<i64: 1, 1, 128>}]} {
    %c0 = arith.constant 0 : index
    %c0_0 = arith.constant 0 : index
    %c0_1 = arith.constant 0 : index
    %0 = vector.load %arg1[%c0, %c0_0, %c0_1] : memref<1x896x208xbf16, #tpu.memory_space<vmem>>, vector<1x896x208xbf16>
    %1 = vector.shape_cast %0 : vector<1x896x208xbf16> to vector<896x208xbf16>
    %c0_2 = arith.constant 0 : index
    %c0_3 = arith.constant 0 : index
    %2 = vector.load %arg2[%c0_2, %c0_3] : memref<208x80xbf16, #tpu.memory_space<vmem>>, vector<208x80xbf16>
    %cst = arith.constant dense<0.000000e+00> : vector<896x80xf32>
    %3 = tpu.matmul %1, %2, %cst {dimension_numbers = #tpu.dot_dimension_numbers<[1], [0], [0], [1], [0, 0, 1, 1], [], []>} : vector<896x208xbf16>, vector<208x80xbf16>, vector<896x80xf32> -> vector<896x80xf32>
    %c0_4 = arith.constant 0 : index
    %c0_5 = arith.constant 0 : index
    %4 = vector.load %arg3[%c0_4, %c0_5] : memref<1x80xf32, #tpu.memory_space<vmem>>, vector<1x80xf32>
    %5 = vector.broadcast %4 : vector<1x80xf32> to vector<896x80xf32>
    %6 = arith.addf %3, %5 : vector<896x80xf32>
    %cst_6 = arith.constant 0.000000e+00 : f32
    %7 = vector.broadcast %cst_6 : f32 to vector<896x80xf32>
    %8 = arith.maximumf %6, %7 : vector<896x80xf32>
    %9 = vector.shape_cast %8 : vector<896x80xf32> to vector<14x2x32x80xf32>
    %cst_7 = arith.constant dense<0xFF800000> : vector<14x32x80xf32>
    %10 = vector.multi_reduction <maximumf>, %9, %cst_7 [1] : vector<14x2x32x80xf32> to vector<14x32x80xf32>
    %11 = vector.shape_cast %10 : vector<14x32x80xf32> to vector<224x2x80xf32>
    %cst_8 = arith.constant dense<0xFF800000> : vector<224x80xf32>
    %12 = vector.multi_reduction <maximumf>, %11, %cst_8 [1] : vector<224x2x80xf32> to vector<224x80xf32>
    %13 = arith.truncf %12 : vector<224x80xf32> to vector<224x80xbf16>
    %cst_9 = arith.constant 0.000000e+00 : bf16
    %14 = vector.broadcast %cst_9 : bf16 to vector<64x80xbf16>
    %15 = tpu.concatenate %13, %14 in 0 : vector<224x80xbf16>, vector<64x80xbf16> -> vector<288x80xbf16>
    %16 = vector.extract_strided_slice %15 {offsets = [0, 0], sizes = [224, 80], strides = [1, 1]} : vector<288x80xbf16> to vector<224x80xbf16>
    %c0_10 = arith.constant 0 : index
    %c0_11 = arith.constant 0 : index
    %c0_12 = arith.constant 0 : index
    %17 = vector.load %arg4[%c0_10, %c0_11, %c0_12] : memref<5x80x16xbf16, #tpu.memory_space<vmem>>, vector<1x80x16xbf16>
    %18 = vector.shape_cast %17 : vector<1x80x16xbf16> to vector<80x16xbf16>
    %cst_13 = arith.constant dense<0.000000e+00> : vector<224x16xf32>
    %19 = tpu.matmul %16, %18, %cst_13 {dimension_numbers = #tpu.dot_dimension_numbers<[1], [0], [0], [1], [0, 0, 1, 1], [], []>} : vector<224x80xbf16>, vector<80x16xbf16>, vector<224x16xf32> -> vector<224x16xf32>
    %20 = vector.extract_strided_slice %15 {offsets = [16, 0], sizes = [224, 80], strides = [1, 1]} : vector<288x80xbf16> to vector<224x80xbf16>
    %c1 = arith.constant 1 : index
    %c0_14 = arith.constant 0 : index
    %c0_15 = arith.constant 0 : index
    %21 = vector.load %arg4[%c1, %c0_14, %c0_15] : memref<5x80x16xbf16, #tpu.memory_space<vmem>>, vector<1x80x16xbf16>
    %22 = vector.shape_cast %21 : vector<1x80x16xbf16> to vector<80x16xbf16>
    %cst_16 = arith.constant dense<0.000000e+00> : vector<224x16xf32>
    %23 = tpu.matmul %20, %22, %cst_16 {dimension_numbers = #tpu.dot_dimension_numbers<[1], [0], [0], [1], [0, 0, 1, 1], [], []>} : vector<224x80xbf16>, vector<80x16xbf16>, vector<224x16xf32> -> vector<224x16xf32>
    %24 = arith.addf %19, %23 : vector<224x16xf32>
    %25 = vector.extract_strided_slice %15 {offsets = [32, 0], sizes = [224, 80], strides = [1, 1]} : vector<288x80xbf16> to vector<224x80xbf16>
    %c2 = arith.constant 2 : index
    %c0_17 = arith.constant 0 : index
    %c0_18 = arith.constant 0 : index
    %26 = vector.load %arg4[%c2, %c0_17, %c0_18] : memref<5x80x16xbf16, #tpu.memory_space<vmem>>, vector<1x80x16xbf16>
    %27 = vector.shape_cast %26 : vector<1x80x16xbf16> to vector<80x16xbf16>
    %cst_19 = arith.constant dense<0.000000e+00> : vector<224x16xf32>
    %28 = tpu.matmul %25, %27, %cst_19 {dimension_numbers = #tpu.dot_dimension_numbers<[1], [0], [0], [1], [0, 0, 1, 1], [], []>} : vector<224x80xbf16>, vector<80x16xbf16>, vector<224x16xf32> -> vector<224x16xf32>
    %29 = arith.addf %24, %28 : vector<224x16xf32>
    %30 = vector.extract_strided_slice %15 {offsets = [48, 0], sizes = [224, 80], strides = [1, 1]} : vector<288x80xbf16> to vector<224x80xbf16>
    %c3 = arith.constant 3 : index
    %c0_20 = arith.constant 0 : index
    %c0_21 = arith.constant 0 : index
    %31 = vector.load %arg4[%c3, %c0_20, %c0_21] : memref<5x80x16xbf16, #tpu.memory_space<vmem>>, vector<1x80x16xbf16>
    %32 = vector.shape_cast %31 : vector<1x80x16xbf16> to vector<80x16xbf16>
    %cst_22 = arith.constant dense<0.000000e+00> : vector<224x16xf32>
    %33 = tpu.matmul %30, %32, %cst_22 {dimension_numbers = #tpu.dot_dimension_numbers<[1], [0], [0], [1], [0, 0, 1, 1], [], []>} : vector<224x80xbf16>, vector<80x16xbf16>, vector<224x16xf32> -> vector<224x16xf32>
    %34 = arith.addf %29, %33 : vector<224x16xf32>
    %35 = vector.extract_strided_slice %15 {offsets = [64, 0], sizes = [224, 80], strides = [1, 1]} : vector<288x80xbf16> to vector<224x80xbf16>
    %c4 = arith.constant 4 : index
    %c0_23 = arith.constant 0 : index
    %c0_24 = arith.constant 0 : index
    %36 = vector.load %arg4[%c4, %c0_23, %c0_24] : memref<5x80x16xbf16, #tpu.memory_space<vmem>>, vector<1x80x16xbf16>
    %37 = vector.shape_cast %36 : vector<1x80x16xbf16> to vector<80x16xbf16>
    %cst_25 = arith.constant dense<0.000000e+00> : vector<224x16xf32>
    %38 = tpu.matmul %35, %37, %cst_25 {dimension_numbers = #tpu.dot_dimension_numbers<[1], [0], [0], [1], [0, 0, 1, 1], [], []>} : vector<224x80xbf16>, vector<80x16xbf16>, vector<224x16xf32> -> vector<224x16xf32>
    %39 = arith.addf %34, %38 : vector<224x16xf32>
    %c0_26 = arith.constant 0 : index
    %c0_27 = arith.constant 0 : index
    %40 = vector.load %arg5[%c0_26, %c0_27] : memref<1x16xf32, #tpu.memory_space<vmem>>, vector<1x16xf32>
    %41 = vector.broadcast %40 : vector<1x16xf32> to vector<224x16xf32>
    %42 = arith.addf %39, %41 : vector<224x16xf32>
    %cst_28 = arith.constant 0.000000e+00 : f32
    %43 = vector.broadcast %cst_28 : f32 to vector<224x16xf32>
    %44 = arith.maximumf %42, %43 : vector<224x16xf32>
    %45 = vector.shape_cast %44 : vector<224x16xf32> to vector<7x2x16x16xf32>
    %cst_29 = arith.constant dense<0xFF800000> : vector<7x16x16xf32>
    %46 = vector.multi_reduction <maximumf>, %45, %cst_29 [1] : vector<7x2x16x16xf32> to vector<7x16x16xf32>
    %47 = vector.shape_cast %46 : vector<7x16x16xf32> to vector<56x2x16xf32>
    %cst_30 = arith.constant dense<0xFF800000> : vector<56x16xf32>
    %48 = vector.multi_reduction <maximumf>, %47, %cst_30 [1] : vector<56x2x16xf32> to vector<56x16xf32>
    %49 = vector.shape_cast %48 : vector<56x16xf32> to vector<1x7x8x16xf32>
    %50 = vector.extract_strided_slice %49 {offsets = [0, 0, 0, 0], sizes = [1, 1, 1, 16], strides = [1, 1, 1, 1]} : vector<1x7x8x16xf32> to vector<1x1x1x16xf32>
    %51 = vector.shape_cast %50 : vector<1x1x1x16xf32> to vector<1x16xf32>
    %52 = arith.truncf %51 : vector<1x16xf32> to vector<1x16xbf16>
    %c0_31 = arith.constant 0 : index
    %c0_32 = arith.constant 0 : index
    %c0_33 = arith.constant 0 : index
    %53 = vector.load %arg6[%c0_31, %c0_32, %c0_33] : memref<25x16x128xbf16, #tpu.memory_space<vmem>>, vector<1x16x128xbf16>
    %54 = vector.shape_cast %53 : vector<1x16x128xbf16> to vector<16x128xbf16>
    %cst_34 = arith.constant dense<0.000000e+00> : vector<1x128xf32>
    %55 = tpu.matmul %52, %54, %cst_34 {dimension_numbers = #tpu.dot_dimension_numbers<[1], [0], [0], [1], [0, 0, 1, 1], [], []>} : vector<1x16xbf16>, vector<16x128xbf16>, vector<1x128xf32> -> vector<1x128xf32>
    %56 = vector.extract_strided_slice %49 {offsets = [0, 0, 1, 0], sizes = [1, 1, 1, 16], strides = [1, 1, 1, 1]} : vector<1x7x8x16xf32> to vector<1x1x1x16xf32>
    %57 = vector.shape_cast %56 : vector<1x1x1x16xf32> to vector<1x16xf32>
    %58 = arith.truncf %57 : vector<1x16xf32> to vector<1x16xbf16>
    %c1_35 = arith.constant 1 : index
    %c0_36 = arith.constant 0 : index
    %c0_37 = arith.constant 0 : index
    %59 = vector.load %arg6[%c1_35, %c0_36, %c0_37] : memref<25x16x128xbf16, #tpu.memory_space<vmem>>, vector<1x16x128xbf16>
    %60 = vector.shape_cast %59 : vector<1x16x128xbf16> to vector<16x128xbf16>
    %cst_38 = arith.constant dense<0.000000e+00> : vector<1x128xf32>
    %61 = tpu.matmul %58, %60, %cst_38 {dimension_numbers = #tpu.dot_dimension_numbers<[1], [0], [0], [1], [0, 0, 1, 1], [], []>} : vector<1x16xbf16>, vector<16x128xbf16>, vector<1x128xf32> -> vector<1x128xf32>
    %62 = arith.addf %55, %61 : vector<1x128xf32>
    %63 = vector.extract_strided_slice %49 {offsets = [0, 0, 2, 0], sizes = [1, 1, 1, 16], strides = [1, 1, 1, 1]} : vector<1x7x8x16xf32> to vector<1x1x1x16xf32>
    %64 = vector.shape_cast %63 : vector<1x1x1x16xf32> to vector<1x16xf32>
    %65 = arith.truncf %64 : vector<1x16xf32> to vector<1x16xbf16>
    %c2_39 = arith.constant 2 : index
    %c0_40 = arith.constant 0 : index
    %c0_41 = arith.constant 0 : index
    %66 = vector.load %arg6[%c2_39, %c0_40, %c0_41] : memref<25x16x128xbf16, #tpu.memory_space<vmem>>, vector<1x16x128xbf16>
    %67 = vector.shape_cast %66 : vector<1x16x128xbf16> to vector<16x128xbf16>
    %cst_42 = arith.constant dense<0.000000e+00> : vector<1x128xf32>
    %68 = tpu.matmul %65, %67, %cst_42 {dimension_numbers = #tpu.dot_dimension_numbers<[1], [0], [0], [1], [0, 0, 1, 1], [], []>} : vector<1x16xbf16>, vector<16x128xbf16>, vector<1x128xf32> -> vector<1x128xf32>
    %69 = arith.addf %62, %68 : vector<1x128xf32>
    %70 = vector.extract_strided_slice %49 {offsets = [0, 0, 3, 0], sizes = [1, 1, 1, 16], strides = [1, 1, 1, 1]} : vector<1x7x8x16xf32> to vector<1x1x1x16xf32>
    %71 = vector.shape_cast %70 : vector<1x1x1x16xf32> to vector<1x16xf32>
    %72 = arith.truncf %71 : vector<1x16xf32> to vector<1x16xbf16>
    %c3_43 = arith.constant 3 : index
    %c0_44 = arith.constant 0 : index
    %c0_45 = arith.constant 0 : index
    %73 = vector.load %arg6[%c3_43, %c0_44, %c0_45] : memref<25x16x128xbf16, #tpu.memory_space<vmem>>, vector<1x16x128xbf16>
    %74 = vector.shape_cast %73 : vector<1x16x128xbf16> to vector<16x128xbf16>
    %cst_46 = arith.constant dense<0.000000e+00> : vector<1x128xf32>
    %75 = tpu.matmul %72, %74, %cst_46 {dimension_numbers = #tpu.dot_dimension_numbers<[1], [0], [0], [1], [0, 0, 1, 1], [], []>} : vector<1x16xbf16>, vector<16x128xbf16>, vector<1x128xf32> -> vector<1x128xf32>
    %76 = arith.addf %69, %75 : vector<1x128xf32>
    %77 = vector.extract_strided_slice %49 {offsets = [0, 0, 4, 0], sizes = [1, 1, 1, 16], strides = [1, 1, 1, 1]} : vector<1x7x8x16xf32> to vector<1x1x1x16xf32>
    %78 = vector.shape_cast %77 : vector<1x1x1x16xf32> to vector<1x16xf32>
    %79 = arith.truncf %78 : vector<1x16xf32> to vector<1x16xbf16>
    %c4_47 = arith.constant 4 : index
    %c0_48 = arith.constant 0 : index
    %c0_49 = arith.constant 0 : index
    %80 = vector.load %arg6[%c4_47, %c0_48, %c0_49] : memref<25x16x128xbf16, #tpu.memory_space<vmem>>, vector<1x16x128xbf16>
    %81 = vector.shape_cast %80 : vector<1x16x128xbf16> to vector<16x128xbf16>
    %cst_50 = arith.constant dense<0.000000e+00> : vector<1x128xf32>
    %82 = tpu.matmul %79, %81, %cst_50 {dimension_numbers = #tpu.dot_dimension_numbers<[1], [0], [0], [1], [0, 0, 1, 1], [], []>} : vector<1x16xbf16>, vector<16x128xbf16>, vector<1x128xf32> -> vector<1x128xf32>
    %83 = arith.addf %76, %82 : vector<1x128xf32>
    %84 = vector.extract_strided_slice %49 {offsets = [0, 1, 0, 0], sizes = [1, 1, 1, 16], strides = [1, 1, 1, 1]} : vector<1x7x8x16xf32> to vector<1x1x1x16xf32>
    %85 = vector.shape_cast %84 : vector<1x1x1x16xf32> to vector<1x16xf32>
    %86 = arith.truncf %85 : vector<1x16xf32> to vector<1x16xbf16>
    %c5 = arith.constant 5 : index
    %c0_51 = arith.constant 0 : index
    %c0_52 = arith.constant 0 : index
    %87 = vector.load %arg6[%c5, %c0_51, %c0_52] : memref<25x16x128xbf16, #tpu.memory_space<vmem>>, vector<1x16x128xbf16>
    %88 = vector.shape_cast %87 : vector<1x16x128xbf16> to vector<16x128xbf16>
    %cst_53 = arith.constant dense<0.000000e+00> : vector<1x128xf32>
    %89 = tpu.matmul %86, %88, %cst_53 {dimension_numbers = #tpu.dot_dimension_numbers<[1], [0], [0], [1], [0, 0, 1, 1], [], []>} : vector<1x16xbf16>, vector<16x128xbf16>, vector<1x128xf32> -> vector<1x128xf32>
    %90 = arith.addf %83, %89 : vector<1x128xf32>
    %91 = vector.extract_strided_slice %49 {offsets = [0, 1, 1, 0], sizes = [1, 1, 1, 16], strides = [1, 1, 1, 1]} : vector<1x7x8x16xf32> to vector<1x1x1x16xf32>
    %92 = vector.shape_cast %91 : vector<1x1x1x16xf32> to vector<1x16xf32>
    %93 = arith.truncf %92 : vector<1x16xf32> to vector<1x16xbf16>
    %c6 = arith.constant 6 : index
    %c0_54 = arith.constant 0 : index
    %c0_55 = arith.constant 0 : index
    %94 = vector.load %arg6[%c6, %c0_54, %c0_55] : memref<25x16x128xbf16, #tpu.memory_space<vmem>>, vector<1x16x128xbf16>
    %95 = vector.shape_cast %94 : vector<1x16x128xbf16> to vector<16x128xbf16>
    %cst_56 = arith.constant dense<0.000000e+00> : vector<1x128xf32>
    %96 = tpu.matmul %93, %95, %cst_56 {dimension_numbers = #tpu.dot_dimension_numbers<[1], [0], [0], [1], [0, 0, 1, 1], [], []>} : vector<1x16xbf16>, vector<16x128xbf16>, vector<1x128xf32> -> vector<1x128xf32>
    %97 = arith.addf %90, %96 : vector<1x128xf32>
    %98 = vector.extract_strided_slice %49 {offsets = [0, 1, 2, 0], sizes = [1, 1, 1, 16], strides = [1, 1, 1, 1]} : vector<1x7x8x16xf32> to vector<1x1x1x16xf32>
    %99 = vector.shape_cast %98 : vector<1x1x1x16xf32> to vector<1x16xf32>
    %100 = arith.truncf %99 : vector<1x16xf32> to vector<1x16xbf16>
    %c7 = arith.constant 7 : index
    %c0_57 = arith.constant 0 : index
    %c0_58 = arith.constant 0 : index
    %101 = vector.load %arg6[%c7, %c0_57, %c0_58] : memref<25x16x128xbf16, #tpu.memory_space<vmem>>, vector<1x16x128xbf16>
    %102 = vector.shape_cast %101 : vector<1x16x128xbf16> to vector<16x128xbf16>
    %cst_59 = arith.constant dense<0.000000e+00> : vector<1x128xf32>
    %103 = tpu.matmul %100, %102, %cst_59 {dimension_numbers = #tpu.dot_dimension_numbers<[1], [0], [0], [1], [0, 0, 1, 1], [], []>} : vector<1x16xbf16>, vector<16x128xbf16>, vector<1x128xf32> -> vector<1x128xf32>
    %104 = arith.addf %97, %103 : vector<1x128xf32>
    %105 = vector.extract_strided_slice %49 {offsets = [0, 1, 3, 0], sizes = [1, 1, 1, 16], strides = [1, 1, 1, 1]} : vector<1x7x8x16xf32> to vector<1x1x1x16xf32>
    %106 = vector.shape_cast %105 : vector<1x1x1x16xf32> to vector<1x16xf32>
    %107 = arith.truncf %106 : vector<1x16xf32> to vector<1x16xbf16>
    %c8 = arith.constant 8 : index
    %c0_60 = arith.constant 0 : index
    %c0_61 = arith.constant 0 : index
    %108 = vector.load %arg6[%c8, %c0_60, %c0_61] : memref<25x16x128xbf16, #tpu.memory_space<vmem>>, vector<1x16x128xbf16>
    %109 = vector.shape_cast %108 : vector<1x16x128xbf16> to vector<16x128xbf16>
    %cst_62 = arith.constant dense<0.000000e+00> : vector<1x128xf32>
    %110 = tpu.matmul %107, %109, %cst_62 {dimension_numbers = #tpu.dot_dimension_numbers<[1], [0], [0], [1], [0, 0, 1, 1], [], []>} : vector<1x16xbf16>, vector<16x128xbf16>, vector<1x128xf32> -> vector<1x128xf32>
    %111 = arith.addf %104, %110 : vector<1x128xf32>
    %112 = vector.extract_strided_slice %49 {offsets = [0, 1, 4, 0], sizes = [1, 1, 1, 16], strides = [1, 1, 1, 1]} : vector<1x7x8x16xf32> to vector<1x1x1x16xf32>
    %113 = vector.shape_cast %112 : vector<1x1x1x16xf32> to vector<1x16xf32>
    %114 = arith.truncf %113 : vector<1x16xf32> to vector<1x16xbf16>
    %c9 = arith.constant 9 : index
    %c0_63 = arith.constant 0 : index
    %c0_64 = arith.constant 0 : index
    %115 = vector.load %arg6[%c9, %c0_63, %c0_64] : memref<25x16x128xbf16, #tpu.memory_space<vmem>>, vector<1x16x128xbf16>
    %116 = vector.shape_cast %115 : vector<1x16x128xbf16> to vector<16x128xbf16>
    %cst_65 = arith.constant dense<0.000000e+00> : vector<1x128xf32>
    %117 = tpu.matmul %114, %116, %cst_65 {dimension_numbers = #tpu.dot_dimension_numbers<[1], [0], [0], [1], [0, 0, 1, 1], [], []>} : vector<1x16xbf16>, vector<16x128xbf16>, vector<1x128xf32> -> vector<1x128xf32>
    %118 = arith.addf %111, %117 : vector<1x128xf32>
    %119 = vector.extract_strided_slice %49 {offsets = [0, 2, 0, 0], sizes = [1, 1, 1, 16], strides = [1, 1, 1, 1]} : vector<1x7x8x16xf32> to vector<1x1x1x16xf32>
    %120 = vector.shape_cast %119 : vector<1x1x1x16xf32> to vector<1x16xf32>
    %121 = arith.truncf %120 : vector<1x16xf32> to vector<1x16xbf16>
    %c10 = arith.constant 10 : index
    %c0_66 = arith.constant 0 : index
    %c0_67 = arith.constant 0 : index
    %122 = vector.load %arg6[%c10, %c0_66, %c0_67] : memref<25x16x128xbf16, #tpu.memory_space<vmem>>, vector<1x16x128xbf16>
    %123 = vector.shape_cast %122 : vector<1x16x128xbf16> to vector<16x128xbf16>
    %cst_68 = arith.constant dense<0.000000e+00> : vector<1x128xf32>
    %124 = tpu.matmul %121, %123, %cst_68 {dimension_numbers = #tpu.dot_dimension_numbers<[1], [0], [0], [1], [0, 0, 1, 1], [], []>} : vector<1x16xbf16>, vector<16x128xbf16>, vector<1x128xf32> -> vector<1x128xf32>
    %125 = arith.addf %118, %124 : vector<1x128xf32>
    %126 = vector.extract_strided_slice %49 {offsets = [0, 2, 1, 0], sizes = [1, 1, 1, 16], strides = [1, 1, 1, 1]} : vector<1x7x8x16xf32> to vector<1x1x1x16xf32>
    %127 = vector.shape_cast %126 : vector<1x1x1x16xf32> to vector<1x16xf32>
    %128 = arith.truncf %127 : vector<1x16xf32> to vector<1x16xbf16>
    %c11 = arith.constant 11 : index
    %c0_69 = arith.constant 0 : index
    %c0_70 = arith.constant 0 : index
    %129 = vector.load %arg6[%c11, %c0_69, %c0_70] : memref<25x16x128xbf16, #tpu.memory_space<vmem>>, vector<1x16x128xbf16>
    %130 = vector.shape_cast %129 : vector<1x16x128xbf16> to vector<16x128xbf16>
    %cst_71 = arith.constant dense<0.000000e+00> : vector<1x128xf32>
    %131 = tpu.matmul %128, %130, %cst_71 {dimension_numbers = #tpu.dot_dimension_numbers<[1], [0], [0], [1], [0, 0, 1, 1], [], []>} : vector<1x16xbf16>, vector<16x128xbf16>, vector<1x128xf32> -> vector<1x128xf32>
    %132 = arith.addf %125, %131 : vector<1x128xf32>
    %133 = vector.extract_strided_slice %49 {offsets = [0, 2, 2, 0], sizes = [1, 1, 1, 16], strides = [1, 1, 1, 1]} : vector<1x7x8x16xf32> to vector<1x1x1x16xf32>
    %134 = vector.shape_cast %133 : vector<1x1x1x16xf32> to vector<1x16xf32>
    %135 = arith.truncf %134 : vector<1x16xf32> to vector<1x16xbf16>
    %c12 = arith.constant 12 : index
    %c0_72 = arith.constant 0 : index
    %c0_73 = arith.constant 0 : index
    %136 = vector.load %arg6[%c12, %c0_72, %c0_73] : memref<25x16x128xbf16, #tpu.memory_space<vmem>>, vector<1x16x128xbf16>
    %137 = vector.shape_cast %136 : vector<1x16x128xbf16> to vector<16x128xbf16>
    %cst_74 = arith.constant dense<0.000000e+00> : vector<1x128xf32>
    %138 = tpu.matmul %135, %137, %cst_74 {dimension_numbers = #tpu.dot_dimension_numbers<[1], [0], [0], [1], [0, 0, 1, 1], [], []>} : vector<1x16xbf16>, vector<16x128xbf16>, vector<1x128xf32> -> vector<1x128xf32>
    %139 = arith.addf %132, %138 : vector<1x128xf32>
    %140 = vector.extract_strided_slice %49 {offsets = [0, 2, 3, 0], sizes = [1, 1, 1, 16], strides = [1, 1, 1, 1]} : vector<1x7x8x16xf32> to vector<1x1x1x16xf32>
    %141 = vector.shape_cast %140 : vector<1x1x1x16xf32> to vector<1x16xf32>
    %142 = arith.truncf %141 : vector<1x16xf32> to vector<1x16xbf16>
    %c13 = arith.constant 13 : index
    %c0_75 = arith.constant 0 : index
    %c0_76 = arith.constant 0 : index
    %143 = vector.load %arg6[%c13, %c0_75, %c0_76] : memref<25x16x128xbf16, #tpu.memory_space<vmem>>, vector<1x16x128xbf16>
    %144 = vector.shape_cast %143 : vector<1x16x128xbf16> to vector<16x128xbf16>
    %cst_77 = arith.constant dense<0.000000e+00> : vector<1x128xf32>
    %145 = tpu.matmul %142, %144, %cst_77 {dimension_numbers = #tpu.dot_dimension_numbers<[1], [0], [0], [1], [0, 0, 1, 1], [], []>} : vector<1x16xbf16>, vector<16x128xbf16>, vector<1x128xf32> -> vector<1x128xf32>
    %146 = arith.addf %139, %145 : vector<1x128xf32>
    %147 = vector.extract_strided_slice %49 {offsets = [0, 2, 4, 0], sizes = [1, 1, 1, 16], strides = [1, 1, 1, 1]} : vector<1x7x8x16xf32> to vector<1x1x1x16xf32>
    %148 = vector.shape_cast %147 : vector<1x1x1x16xf32> to vector<1x16xf32>
    %149 = arith.truncf %148 : vector<1x16xf32> to vector<1x16xbf16>
    %c14 = arith.constant 14 : index
    %c0_78 = arith.constant 0 : index
    %c0_79 = arith.constant 0 : index
    %150 = vector.load %arg6[%c14, %c0_78, %c0_79] : memref<25x16x128xbf16, #tpu.memory_space<vmem>>, vector<1x16x128xbf16>
    %151 = vector.shape_cast %150 : vector<1x16x128xbf16> to vector<16x128xbf16>
    %cst_80 = arith.constant dense<0.000000e+00> : vector<1x128xf32>
    %152 = tpu.matmul %149, %151, %cst_80 {dimension_numbers = #tpu.dot_dimension_numbers<[1], [0], [0], [1], [0, 0, 1, 1], [], []>} : vector<1x16xbf16>, vector<16x128xbf16>, vector<1x128xf32> -> vector<1x128xf32>
    %153 = arith.addf %146, %152 : vector<1x128xf32>
    %154 = vector.extract_strided_slice %49 {offsets = [0, 3, 0, 0], sizes = [1, 1, 1, 16], strides = [1, 1, 1, 1]} : vector<1x7x8x16xf32> to vector<1x1x1x16xf32>
    %155 = vector.shape_cast %154 : vector<1x1x1x16xf32> to vector<1x16xf32>
    %156 = arith.truncf %155 : vector<1x16xf32> to vector<1x16xbf16>
    %c15 = arith.constant 15 : index
    %c0_81 = arith.constant 0 : index
    %c0_82 = arith.constant 0 : index
    %157 = vector.load %arg6[%c15, %c0_81, %c0_82] : memref<25x16x128xbf16, #tpu.memory_space<vmem>>, vector<1x16x128xbf16>
    %158 = vector.shape_cast %157 : vector<1x16x128xbf16> to vector<16x128xbf16>
    %cst_83 = arith.constant dense<0.000000e+00> : vector<1x128xf32>
    %159 = tpu.matmul %156, %158, %cst_83 {dimension_numbers = #tpu.dot_dimension_numbers<[1], [0], [0], [1], [0, 0, 1, 1], [], []>} : vector<1x16xbf16>, vector<16x128xbf16>, vector<1x128xf32> -> vector<1x128xf32>
    %160 = arith.addf %153, %159 : vector<1x128xf32>
    %161 = vector.extract_strided_slice %49 {offsets = [0, 3, 1, 0], sizes = [1, 1, 1, 16], strides = [1, 1, 1, 1]} : vector<1x7x8x16xf32> to vector<1x1x1x16xf32>
    %162 = vector.shape_cast %161 : vector<1x1x1x16xf32> to vector<1x16xf32>
    %163 = arith.truncf %162 : vector<1x16xf32> to vector<1x16xbf16>
    %c16 = arith.constant 16 : index
    %c0_84 = arith.constant 0 : index
    %c0_85 = arith.constant 0 : index
    %164 = vector.load %arg6[%c16, %c0_84, %c0_85] : memref<25x16x128xbf16, #tpu.memory_space<vmem>>, vector<1x16x128xbf16>
    %165 = vector.shape_cast %164 : vector<1x16x128xbf16> to vector<16x128xbf16>
    %cst_86 = arith.constant dense<0.000000e+00> : vector<1x128xf32>
    %166 = tpu.matmul %163, %165, %cst_86 {dimension_numbers = #tpu.dot_dimension_numbers<[1], [0], [0], [1], [0, 0, 1, 1], [], []>} : vector<1x16xbf16>, vector<16x128xbf16>, vector<1x128xf32> -> vector<1x128xf32>
    %167 = arith.addf %160, %166 : vector<1x128xf32>
    %168 = vector.extract_strided_slice %49 {offsets = [0, 3, 2, 0], sizes = [1, 1, 1, 16], strides = [1, 1, 1, 1]} : vector<1x7x8x16xf32> to vector<1x1x1x16xf32>
    %169 = vector.shape_cast %168 : vector<1x1x1x16xf32> to vector<1x16xf32>
    %170 = arith.truncf %169 : vector<1x16xf32> to vector<1x16xbf16>
    %c17 = arith.constant 17 : index
    %c0_87 = arith.constant 0 : index
    %c0_88 = arith.constant 0 : index
    %171 = vector.load %arg6[%c17, %c0_87, %c0_88] : memref<25x16x128xbf16, #tpu.memory_space<vmem>>, vector<1x16x128xbf16>
    %172 = vector.shape_cast %171 : vector<1x16x128xbf16> to vector<16x128xbf16>
    %cst_89 = arith.constant dense<0.000000e+00> : vector<1x128xf32>
    %173 = tpu.matmul %170, %172, %cst_89 {dimension_numbers = #tpu.dot_dimension_numbers<[1], [0], [0], [1], [0, 0, 1, 1], [], []>} : vector<1x16xbf16>, vector<16x128xbf16>, vector<1x128xf32> -> vector<1x128xf32>
    %174 = arith.addf %167, %173 : vector<1x128xf32>
    %175 = vector.extract_strided_slice %49 {offsets = [0, 3, 3, 0], sizes = [1, 1, 1, 16], strides = [1, 1, 1, 1]} : vector<1x7x8x16xf32> to vector<1x1x1x16xf32>
    %176 = vector.shape_cast %175 : vector<1x1x1x16xf32> to vector<1x16xf32>
    %177 = arith.truncf %176 : vector<1x16xf32> to vector<1x16xbf16>
    %c18 = arith.constant 18 : index
    %c0_90 = arith.constant 0 : index
    %c0_91 = arith.constant 0 : index
    %178 = vector.load %arg6[%c18, %c0_90, %c0_91] : memref<25x16x128xbf16, #tpu.memory_space<vmem>>, vector<1x16x128xbf16>
    %179 = vector.shape_cast %178 : vector<1x16x128xbf16> to vector<16x128xbf16>
    %cst_92 = arith.constant dense<0.000000e+00> : vector<1x128xf32>
    %180 = tpu.matmul %177, %179, %cst_92 {dimension_numbers = #tpu.dot_dimension_numbers<[1], [0], [0], [1], [0, 0, 1, 1], [], []>} : vector<1x16xbf16>, vector<16x128xbf16>, vector<1x128xf32> -> vector<1x128xf32>
    %181 = arith.addf %174, %180 : vector<1x128xf32>
    %182 = vector.extract_strided_slice %49 {offsets = [0, 3, 4, 0], sizes = [1, 1, 1, 16], strides = [1, 1, 1, 1]} : vector<1x7x8x16xf32> to vector<1x1x1x16xf32>
    %183 = vector.shape_cast %182 : vector<1x1x1x16xf32> to vector<1x16xf32>
    %184 = arith.truncf %183 : vector<1x16xf32> to vector<1x16xbf16>
    %c19 = arith.constant 19 : index
    %c0_93 = arith.constant 0 : index
    %c0_94 = arith.constant 0 : index
    %185 = vector.load %arg6[%c19, %c0_93, %c0_94] : memref<25x16x128xbf16, #tpu.memory_space<vmem>>, vector<1x16x128xbf16>
    %186 = vector.shape_cast %185 : vector<1x16x128xbf16> to vector<16x128xbf16>
    %cst_95 = arith.constant dense<0.000000e+00> : vector<1x128xf32>
    %187 = tpu.matmul %184, %186, %cst_95 {dimension_numbers = #tpu.dot_dimension_numbers<[1], [0], [0], [1], [0, 0, 1, 1], [], []>} : vector<1x16xbf16>, vector<16x128xbf16>, vector<1x128xf32> -> vector<1x128xf32>
    %188 = arith.addf %181, %187 : vector<1x128xf32>
    %189 = vector.extract_strided_slice %49 {offsets = [0, 4, 0, 0], sizes = [1, 1, 1, 16], strides = [1, 1, 1, 1]} : vector<1x7x8x16xf32> to vector<1x1x1x16xf32>
    %190 = vector.shape_cast %189 : vector<1x1x1x16xf32> to vector<1x16xf32>
    %191 = arith.truncf %190 : vector<1x16xf32> to vector<1x16xbf16>
    %c20 = arith.constant 20 : index
    %c0_96 = arith.constant 0 : index
    %c0_97 = arith.constant 0 : index
    %192 = vector.load %arg6[%c20, %c0_96, %c0_97] : memref<25x16x128xbf16, #tpu.memory_space<vmem>>, vector<1x16x128xbf16>
    %193 = vector.shape_cast %192 : vector<1x16x128xbf16> to vector<16x128xbf16>
    %cst_98 = arith.constant dense<0.000000e+00> : vector<1x128xf32>
    %194 = tpu.matmul %191, %193, %cst_98 {dimension_numbers = #tpu.dot_dimension_numbers<[1], [0], [0], [1], [0, 0, 1, 1], [], []>} : vector<1x16xbf16>, vector<16x128xbf16>, vector<1x128xf32> -> vector<1x128xf32>
    %195 = arith.addf %188, %194 : vector<1x128xf32>
    %196 = vector.extract_strided_slice %49 {offsets = [0, 4, 1, 0], sizes = [1, 1, 1, 16], strides = [1, 1, 1, 1]} : vector<1x7x8x16xf32> to vector<1x1x1x16xf32>
    %197 = vector.shape_cast %196 : vector<1x1x1x16xf32> to vector<1x16xf32>
    %198 = arith.truncf %197 : vector<1x16xf32> to vector<1x16xbf16>
    %c21 = arith.constant 21 : index
    %c0_99 = arith.constant 0 : index
    %c0_100 = arith.constant 0 : index
    %199 = vector.load %arg6[%c21, %c0_99, %c0_100] : memref<25x16x128xbf16, #tpu.memory_space<vmem>>, vector<1x16x128xbf16>
    %200 = vector.shape_cast %199 : vector<1x16x128xbf16> to vector<16x128xbf16>
    %cst_101 = arith.constant dense<0.000000e+00> : vector<1x128xf32>
    %201 = tpu.matmul %198, %200, %cst_101 {dimension_numbers = #tpu.dot_dimension_numbers<[1], [0], [0], [1], [0, 0, 1, 1], [], []>} : vector<1x16xbf16>, vector<16x128xbf16>, vector<1x128xf32> -> vector<1x128xf32>
    %202 = arith.addf %195, %201 : vector<1x128xf32>
    %203 = vector.extract_strided_slice %49 {offsets = [0, 4, 2, 0], sizes = [1, 1, 1, 16], strides = [1, 1, 1, 1]} : vector<1x7x8x16xf32> to vector<1x1x1x16xf32>
    %204 = vector.shape_cast %203 : vector<1x1x1x16xf32> to vector<1x16xf32>
    %205 = arith.truncf %204 : vector<1x16xf32> to vector<1x16xbf16>
    %c22 = arith.constant 22 : index
    %c0_102 = arith.constant 0 : index
    %c0_103 = arith.constant 0 : index
    %206 = vector.load %arg6[%c22, %c0_102, %c0_103] : memref<25x16x128xbf16, #tpu.memory_space<vmem>>, vector<1x16x128xbf16>
    %207 = vector.shape_cast %206 : vector<1x16x128xbf16> to vector<16x128xbf16>
    %cst_104 = arith.constant dense<0.000000e+00> : vector<1x128xf32>
    %208 = tpu.matmul %205, %207, %cst_104 {dimension_numbers = #tpu.dot_dimension_numbers<[1], [0], [0], [1], [0, 0, 1, 1], [], []>} : vector<1x16xbf16>, vector<16x128xbf16>, vector<1x128xf32> -> vector<1x128xf32>
    %209 = arith.addf %202, %208 : vector<1x128xf32>
    %210 = vector.extract_strided_slice %49 {offsets = [0, 4, 3, 0], sizes = [1, 1, 1, 16], strides = [1, 1, 1, 1]} : vector<1x7x8x16xf32> to vector<1x1x1x16xf32>
    %211 = vector.shape_cast %210 : vector<1x1x1x16xf32> to vector<1x16xf32>
    %212 = arith.truncf %211 : vector<1x16xf32> to vector<1x16xbf16>
    %c23 = arith.constant 23 : index
    %c0_105 = arith.constant 0 : index
    %c0_106 = arith.constant 0 : index
    %213 = vector.load %arg6[%c23, %c0_105, %c0_106] : memref<25x16x128xbf16, #tpu.memory_space<vmem>>, vector<1x16x128xbf16>
    %214 = vector.shape_cast %213 : vector<1x16x128xbf16> to vector<16x128xbf16>
    %cst_107 = arith.constant dense<0.000000e+00> : vector<1x128xf32>
    %215 = tpu.matmul %212, %214, %cst_107 {dimension_numbers = #tpu.dot_dimension_numbers<[1], [0], [0], [1], [0, 0, 1, 1], [], []>} : vector<1x16xbf16>, vector<16x128xbf16>, vector<1x128xf32> -> vector<1x128xf32>
    %216 = arith.addf %209, %215 : vector<1x128xf32>
    %217 = vector.extract_strided_slice %49 {offsets = [0, 4, 4, 0], sizes = [1, 1, 1, 16], strides = [1, 1, 1, 1]} : vector<1x7x8x16xf32> to vector<1x1x1x16xf32>
    %218 = vector.shape_cast %217 : vector<1x1x1x16xf32> to vector<1x16xf32>
    %219 = arith.truncf %218 : vector<1x16xf32> to vector<1x16xbf16>
    %c24 = arith.constant 24 : index
    %c0_108 = arith.constant 0 : index
    %c0_109 = arith.constant 0 : index
    %220 = vector.load %arg6[%c24, %c0_108, %c0_109] : memref<25x16x128xbf16, #tpu.memory_space<vmem>>, vector<1x16x128xbf16>
    %221 = vector.shape_cast %220 : vector<1x16x128xbf16> to vector<16x128xbf16>
    %cst_110 = arith.constant dense<0.000000e+00> : vector<1x128xf32>
    %222 = tpu.matmul %219, %221, %cst_110 {dimension_numbers = #tpu.dot_dimension_numbers<[1], [0], [0], [1], [0, 0, 1, 1], [], []>} : vector<1x16xbf16>, vector<16x128xbf16>, vector<1x128xf32> -> vector<1x128xf32>
    %223 = arith.addf %216, %222 : vector<1x128xf32>
    %c0_111 = arith.constant 0 : index
    %c0_112 = arith.constant 0 : index
    %224 = vector.load %arg7[%c0_111, %c0_112] : memref<1x128xf32, #tpu.memory_space<vmem>>, vector<1x128xf32>
    %225 = arith.addf %223, %224 : vector<1x128xf32>
    %cst_113 = arith.constant 0.000000e+00 : f32
    %226 = vector.broadcast %cst_113 : f32 to vector<1x128xf32>
    %227 = arith.maximumf %225, %226 : vector<1x128xf32>
    %228 = arith.truncf %227 : vector<1x128xf32> to vector<1x128xbf16>
    %c0_114 = arith.constant 0 : index
    %c0_115 = arith.constant 0 : index
    %229 = vector.load %arg8[%c0_114, %c0_115] : memref<128x128xbf16, #tpu.memory_space<vmem>>, vector<128x128xbf16>
    %cst_116 = arith.constant dense<0.000000e+00> : vector<1x128xf32>
    %230 = tpu.matmul %228, %229, %cst_116 {dimension_numbers = #tpu.dot_dimension_numbers<[1], [0], [0], [1], [0, 0, 1, 1], [], []>} : vector<1x128xbf16>, vector<128x128xbf16>, vector<1x128xf32> -> vector<1x128xf32>
    %c0_117 = arith.constant 0 : index
    %c0_118 = arith.constant 0 : index
    %231 = vector.load %arg9[%c0_117, %c0_118] : memref<1x128xf32, #tpu.memory_space<vmem>>, vector<1x128xf32>
    %232 = arith.addf %230, %231 : vector<1x128xf32>
    %cst_119 = arith.constant 0.000000e+00 : f32
    %233 = vector.broadcast %cst_119 : f32 to vector<1x128xf32>
    %234 = arith.maximumf %232, %233 : vector<1x128xf32>
    %235 = arith.truncf %234 : vector<1x128xf32> to vector<1x128xbf16>
    %c0_120 = arith.constant 0 : index
    %c0_121 = arith.constant 0 : index
    %236 = vector.load %arg10[%c0_120, %c0_121] : memref<128x128xbf16, #tpu.memory_space<vmem>>, vector<128x128xbf16>
    %cst_122 = arith.constant dense<0.000000e+00> : vector<1x128xf32>
    %237 = tpu.matmul %235, %236, %cst_122 {dimension_numbers = #tpu.dot_dimension_numbers<[1], [0], [0], [1], [0, 0, 1, 1], [], []>} : vector<1x128xbf16>, vector<128x128xbf16>, vector<1x128xf32> -> vector<1x128xf32>
    %c0_123 = arith.constant 0 : index
    %c0_124 = arith.constant 0 : index
    %238 = vector.load %arg11[%c0_123, %c0_124] : memref<1x128xf32, #tpu.memory_space<vmem>>, vector<1x128xf32>
    %239 = arith.addf %237, %238 : vector<1x128xf32>
    %c0_125 = arith.constant 0 : index
    %c0_126 = arith.constant 0 : index
    %c0_127 = arith.constant 0 : index
    %240 = vector.load %arg12[%c0_125, %c0_126, %c0_127] : memref<1x1x128xf32, #tpu.memory_space<vmem>>, vector<1x1x128xf32>
    %241 = vector.shape_cast %240 : vector<1x1x128xf32> to vector<1x128xf32>
    %242 = vector.shape_cast %239 : vector<1x128xf32> to vector<1x1x128xf32>
    tpu.vector_store %arg12[%c0_125, %c0_126, %c0_127], %242 {strides = array<i32>} : memref<1x1x128xf32, #tpu.memory_space<vmem>>, vector<1x1x128xf32>,
    return
  }
  func.func @transform_0(%arg0: i32) -> (i32, i32, i32) {
    %c0_i32 = arith.constant 0 : i32
    %c0_i32_0 = arith.constant 0 : i32
    %c0_i32_1 = arith.constant 0 : i32
    return %arg0, %c0_i32, %c0_i32_0 : i32, i32, i32
  }
  func.func @transform_1(%arg0: i32) -> (i32, i32) {
    %c0_i32 = arith.constant 0 : i32
    %c0_i32_0 = arith.constant 0 : i32
    %c0_i32_1 = arith.constant 0 : i32
    return %c0_i32, %c0_i32_0 : i32, i32
  }
  func.func @transform_2(%arg0: i32) -> (i32, i32) {
    %c0_i32 = arith.constant 0 : i32
    %c0_i32_0 = arith.constant 0 : i32
    %c0_i32_1 = arith.constant 0 : i32
    return %c0_i32, %c0_i32_0 : i32, i32
  }
  func.func @transform_3(%arg0: i32) -> (i32, i32, i32) {
    %c0_i32 = arith.constant 0 : i32
    %c0_i32_0 = arith.constant 0 : i32
    %c0_i32_1 = arith.constant 0 : i32
    %c0_i32_2 = arith.constant 0 : i32
    return %c0_i32, %c0_i32_0, %c0_i32_1 : i32, i32, i32
  }
  func.func @transform_4(%arg0: i32) -> (i32, i32) {
    %c0_i32 = arith.constant 0 : i32
    %c0_i32_0 = arith.constant 0 : i32
    %c0_i32_1 = arith.constant 0 : i32
    return %c0_i32, %c0_i32_0 : i32, i32
  }
  func.func @transform_5(%arg0: i32) -> (i32, i32, i32) {
    %c0_i32 = arith.constant 0 : i32
    %c0_i32_0 = arith.constant 0 : i32
    %c0_i32_1 = arith.constant 0 : i32
    %c0_i32_2 = arith.constant 0 : i32
    return %c0_i32, %c0_i32_0, %c0_i32_1 : i32, i32, i32
  }
  func.func @transform_6(%arg0: i32) -> (i32, i32) {
    %c0_i32 = arith.constant 0 : i32
    %c0_i32_0 = arith.constant 0 : i32
    %c0_i32_1 = arith.constant 0 : i32
    return %c0_i32, %c0_i32_0 : i32, i32
  }
  func.func @transform_7(%arg0: i32) -> (i32, i32) {
    %c0_i32 = arith.constant 0 : i32
    %c0_i32_0 = arith.constant 0 : i32
    %c0_i32_1 = arith.constant 0 : i32
    return %c0_i32, %c0_i32_0 : i32, i32
  }
  func.func @transform_8(%arg0: i32) -> (i32, i32) {
    %c0_i32 = arith.constant 0 : i32
    %c0_i32_0 = arith.constant 0 : i32
    %c0_i32_1 = arith.constant 0 : i32
    return %c0_i32, %c0_i32_0 : i32, i32
  }
  func.func @transform_9(%arg0: i32) -> (i32, i32) {
    %c0_i32 = arith.constant 0 : i32
    %c0_i32_0 = arith.constant 0 : i32
    %c0_i32_1 = arith.constant 0 : i32
    return %c0_i32, %c0_i32_0 : i32, i32
  }
  func.func @transform_10(%arg0: i32) -> (i32, i32) {
    %c0_i32 = arith.constant 0 : i32
    %c0_i32_0 = arith.constant 0 : i32
    %c0_i32_1 = arith.constant 0 : i32
    return %c0_i32, %c0_i32_0 : i32, i32
  }
  func.func @transform_11(%arg0: i32) -> (i32, i32, i32) {
    %c0_i32 = arith.constant 0 : i32
    %c0_i32_0 = arith.constant 0 : i32
    %c0_i32_1 = arith.constant 0 : i32
    return %arg0, %c0_i32, %c0_i32_0 : i32, i32, i32
  }
}

</mosaic_0001>

<llo_original>
// kernel: net_forward.1
$region0: #{net_forward.1}
  #allocation0 [shape = 'u32[]', space=smem, size = 0x4, offset = 0x4, fixed_abs, tag = 'smem constant byte address 0x4 - core index']
  #allocation1 [shape = 'u32[144,128]{1,0:T(1,128)}', space=vmem, size = 0x12000, scoped, tag = 'internal scratch']
  %s0 = inlined_call_operand.vmem [shape: bf16[2,896,208], index: 0, kind: input, shape index: {}]
  %s1 = inlined_call_operand.vmem [shape: bf16[208,80], index: 1, kind: input, shape index: {}]
  %s2 = inlined_call_operand.vmem [shape: f32[1,80], index: 2, kind: input, shape index: {}]
  %s3 = inlined_call_operand.vmem [shape: bf16[5,80,16], index: 3, kind: input, shape index: {}]
  %s4 = inlined_call_operand.vmem [shape: f32[1,16], index: 4, kind: input, shape index: {}]
  %s5 = inlined_call_operand.vmem [shape: bf16[25,16,128], index: 5, kind: input, shape index: {}]
  %s6 = inlined_call_operand.vmem [shape: f32[1,128], index: 6, kind: input, shape index: {}]
  %s7 = inlined_call_operand.vmem [shape: bf16[128,128], index: 7, kind: input, shape index: {}]
  %s8 = inlined_call_operand.vmem [shape: f32[1,128], index: 8, kind: input, shape index: {}]
  %s9 = inlined_call_operand.vmem [shape: bf16[128,128], index: 9, kind: input, shape index: {}]
  %s10 = inlined_call_operand.vmem [shape: f32[1,128], index: 10, kind: input, shape index: {}]
  %s11 = inlined_call_operand.hbm [shape: f32[2,1,128], index: 11, kind: output, shape index: {}]
  %s12 = sld [smem:[#allocation0]]
  $region77: #{net_forward.1} parent=0
    _
  %s14 = ssub.s32 1, %s12
  %s15 = scalar_select 0, %s14, %s12
  $region1: #{net_forward.1} parent=0
    #allocation2 [shape = 'u8[1024]{0}', space=vmem, size = 0x400, scoped, tag = 'output window, operand 0']
    #allocation3 [shape = 's32[2]{0}', space=sflag, size = 0x8, scoped, tag = 'scoped memory for net_forward.1']
    %16 = vsyncpa [#allocation3], 0
    %s17 = scalar_lea.sflag [#allocation3], 1
    %18 = vsyncpa %s17, 0
    loop: start=0, step=1, limit=4
    $region2: #{net_forward.1} parent=1 // loop_pre_header
      _
    $region3: #{net_forward.1} parent=1 // loop_header
      %s20 = sphi 0, %s24
      %p21 = scmp.ge.s32.totalorder %s20, 4
      %s30 = sphi 0, %s32
      %s33 = sphi 0, %s30
      %s34 = sphi 0, %s33
      %s50 = sphi 0, %s34
      %s54 = sphi 0, %s54
      %s56 = sphi 0, %s54
      %s57 = sphi 0, %s56
      %s71 = sphi 0, %s57
      %s75 = sphi 0, %s75
      %s77 = sphi 0, %s75
      %s78 = sphi 0, %s77
      %s92 = sphi 0, %s78
      %s96 = sphi 0, %s96
      %s98 = sphi 0, %s96
      %s99 = sphi 0, %s98
      %s113 = sphi 0, %s99
      %s117 = sphi 0, %s117
      %s119 = sphi 0, %s117
      %s120 = sphi 0, %s119
      %s134 = sphi 0, %s120
      %s138 = sphi 0, %s138
      %s140 = sphi 0, %s138
      %s141 = sphi 0, %s140
      %s155 = sphi 0, %s141
      %s159 = sphi 0, %s159
      %s161 = sphi 0, %s159
      %s162 = sphi 0, %s161
      %s176 = sphi 0, %s162
      %s180 = sphi 0, %s180
      %s182 = sphi 0, %s180
      %s183 = sphi 0, %s182
      %s197 = sphi 0, %s183
      %s201 = sphi 0, %s201
      %s203 = sphi 0, %s201
      %s204 = sphi 0, %s203
      %s218 = sphi 0, %s204
      %s222 = sphi 0, %s222
      %s224 = sphi 0, %s222
      %s225 = sphi 0, %s224
      %s239 = sphi 0, %s225
      %s243 = sphi 0, %s243
      %s245 = sphi 0, %s243
      %s246 = sphi 0, %s245
      %s260 = sphi 0, %s246
      %s266 = sphi 0, %s268
      %s269 = sphi 0, %s266
      %s270 = sphi 0, %s269
      %s286 = sphi 0, %s270
    $region4: #{net_forward.1} parent=1 // loop_header_branch
      %23 = sbr.rel (%p21) target = $region8
    $region5: #{net_forward.1} parent=1 // loop_body
      %s25 = ssub.s32 %s20, 1
      %s26 = ssub.s32 %s20, 2
      %s27 = sadd.s32 %s20, 1
      %s28 = ssub.s32 %s20, %s27
      %p29 = scmp.eq.s32.totalorder %s28, 0
      %s31 = sadd.s32 %s30, 1
      %s32 = scalar_select %p29, %s30, %s31
      %p35 = pneg %p29
      %p36 = scmp.eq.s32.totalorder %s20, 1
      %p37 = por %p35, %p36
      %p38 = scmp.ne.s32.totalorder %s30, %s33
      %p39 = scmp.eq.s32.totalorder %s20, 0
      %p40 = por %p38, %p39
      %p41 = scmp.ne.s32.totalorder %s30, %s33
      %p42 = scmp.eq.s32.totalorder %s25, 1
      %p43 = por %p41, %p42
      %p44 = scmp.ne.s32.totalorder %s33, %s34
      %p45 = scmp.eq.s32.totalorder %s25, 0
      %p46 = por %p44, %p45
      %p47 = scmp.ne.s32.totalorder %s33, %s34
      %p48 = scmp.eq.s32.totalorder %s26, 1
      %p49 = por %p47, %p48
      %p51 = scmp.ne.s32.totalorder %s34, %s50
      %p52 = scmp.eq.s32.totalorder %s26, 0
      %p53 = por %p51, %p52
      %s55 = sadd.s32 %s54, 1
      %p58 = scmp.eq.s32.totalorder %s20, 1
      %p59 = scmp.ne.s32.totalorder %s54, %s56
      %p60 = scmp.eq.s32.totalorder %s20, 0
      %p61 = por %p59, %p60
      %p62 = scmp.ne.s32.totalorder %s54, %s56
      %p63 = scmp.eq.s32.totalorder %s25, 1
      %p64 = por %p62, %p63
      %p65 = scmp.ne.s32.totalorder %s56, %s57
      %p66 = scmp.eq.s32.totalorder %s25, 0
      %p67 = por %p65, %p66
      %p68 = scmp.ne.s32.totalorder %s56, %s57
      %p69 = scmp.eq.s32.totalorder %s26, 1
      %p70 = por %p68, %p69
      %p72 = scmp.ne.s32.totalorder %s57, %s71
      %p73 = scmp.eq.s32.totalorder %s26, 0
      %p74 = por %p72, %p73
      %s76 = sadd.s32 %s75, 1
      %p79 = scmp.eq.s32.totalorder %s20, 1
      %p80 = scmp.ne.s32.totalorder %s75, %s77
      %p81 = scmp.eq.s32.totalorder %s20, 0
      %p82 = por %p80, %p81
      %p83 = scmp.ne.s32.totalorder %s75, %s77
      %p84 = scmp.eq.s32.totalorder %s25, 1
      %p85 = por %p83, %p84
      %p86 = scmp.ne.s32.totalorder %s77, %s78
      %p87 = scmp.eq.s32.totalorder %s25, 0
      %p88 = por %p86, %p87
      %p89 = scmp.ne.s32.totalorder %s77, %s78
      %p90 = scmp.eq.s32.totalorder %s26, 1
      %p91 = por %p89, %p90
      %p93 = scmp.ne.s32.totalorder %s78, %s92
      %p94 = scmp.eq.s32.totalorder %s26, 0
      %p95 = por %p93, %p94
      %s97 = sadd.s32 %s96, 1
      %p100 = scmp.eq.s32.totalorder %s20, 1
      %p101 = scmp.ne.s32.totalorder %s96, %s98
      %p102 = scmp.eq.s32.totalorder %s20, 0
      %p103 = por %p101, %p102
      %p104 = scmp.ne.s32.totalorder %s96, %s98
      %p105 = scmp.eq.s32.totalorder %s25, 1
      %p106 = por %p104, %p105
      %p107 = scmp.ne.s32.totalorder %s98, %s99
      %p108 = scmp.eq.s32.totalorder %s25, 0
      %p109 = por %p107, %p108
      %p110 = scmp.ne.s32.totalorder %s98, %s99
      %p111 = scmp.eq.s32.totalorder %s26, 1
      %p112 = por %p110, %p111
      %p114 = scmp.ne.s32.totalorder %s99, %s113
      %p115 = scmp.eq.s32.totalorder %s26, 0
      %p116 = por %p114, %p115
      %s118 = sadd.s32 %s117, 1
      %p121 = scmp.eq.s32.totalorder %s20, 1
      %p122 = scmp.ne.s32.totalorder %s117, %s119
      %p123 = scmp.eq.s32.totalorder %s20, 0
      %p124 = por %p122, %p123
      %p125 = scmp.ne.s32.totalorder %s117, %s119
      %p126 = scmp.eq.s32.totalorder %s25, 1
      %p127 = por %p125, %p126
      %p128 = scmp.ne.s32.totalorder %s119, %s120
      %p129 = scmp.eq.s32.totalorder %s25, 0
      %p130 = por %p128, %p129
      %p131 = scmp.ne.s32.totalorder %s119, %s120
      %p132 = scmp.eq.s32.totalorder %s26, 1
      %p133 = por %p131, %p132
      %p135 = scmp.ne.s32.totalorder %s120, %s134
      %p136 = scmp.eq.s32.totalorder %s26, 0
      %p137 = por %p135, %p136
      %s139 = sadd.s32 %s138, 1
      %p142 = scmp.eq.s32.totalorder %s20, 1
      %p143 = scmp.ne.s32.totalorder %s138, %s140
      %p144 = scmp.eq.s32.totalorder %s20, 0
      %p145 = por %p143, %p144
      %p146 = scmp.ne.s32.totalorder %s138, %s140
      %p147 = scmp.eq.s32.totalorder %s25, 1
      %p148 = por %p146, %p147
      %p149 = scmp.ne.s32.totalorder %s140, %s141
      %p150 = scmp.eq.s32.totalorder %s25, 0
      %p151 = por %p149, %p150
      %p152 = scmp.ne.s32.totalorder %s140, %s141
      %p153 = scmp.eq.s32.totalorder %s26, 1
      %p154 = por %p152, %p153
      %p156 = scmp.ne.s32.totalorder %s141, %s155
      %p157 = scmp.eq.s32.totalorder %s26, 0
      %p158 = por %p156, %p157
      %s160 = sadd.s32 %s159, 1
      %p163 = scmp.eq.s32.totalorder %s20, 1
      %p164 = scmp.ne.s32.totalorder %s159, %s161
      %p165 = scmp.eq.s32.totalorder %s20, 0
      %p166 = por %p164, %p165
      %p167 = scmp.ne.s32.totalorder %s159, %s161
      %p168 = scmp.eq.s32.totalorder %s25, 1
      %p169 = por %p167, %p168
      %p170 = scmp.ne.s32.totalorder %s161, %s162
      %p171 = scmp.eq.s32.totalorder %s25, 0
      %p172 = por %p170, %p171
      %p173 = scmp.ne.s32.totalorder %s161, %s162
      %p174 = scmp.eq.s32.totalorder %s26, 1
      %p175 = por %p173, %p174
      %p177 = scmp.ne.s32.totalorder %s162, %s176
      %p178 = scmp.eq.s32.totalorder %s26, 0
      %p179 = por %p177, %p178
      %s181 = sadd.s32 %s180, 1
      %p184 = scmp.eq.s32.totalorder %s20, 1
      %p185 = scmp.ne.s32.totalorder %s180, %s182
      %p186 = scmp.eq.s32.totalorder %s20, 0
      %p187 = por %p185, %p186
      %p188 = scmp.ne.s32.totalorder %s180, %s182
      %p189 = scmp.eq.s32.totalorder %s25, 1
      %p190 = por %p188, %p189
      %p191 = scmp.ne.s32.totalorder %s182, %s183
      %p192 = scmp.eq.s32.totalorder %s25, 0
      %p193 = por %p191, %p192
      %p194 = scmp.ne.s32.totalorder %s182, %s183
      %p195 = scmp.eq.s32.totalorder %s26, 1
      %p196 = por %p194, %p195
      %p198 = scmp.ne.s32.totalorder %s183, %s197
      %p199 = scmp.eq.s32.totalorder %s26, 0
      %p200 = por %p198, %p199
      %s202 = sadd.s32 %s201, 1
      %p205 = scmp.eq.s32.totalorder %s20, 1
      %p206 = scmp.ne.s32.totalorder %s201, %s203
      %p207 = scmp.eq.s32.totalorder %s20, 0
      %p208 = por %p206, %p207
      %p209 = scmp.ne.s32.totalorder %s201, %s203
      %p210 = scmp.eq.s32.totalorder %s25, 1
      %p211 = por %p209, %p210
      %p212 = scmp.ne.s32.totalorder %s203, %s204
      %p213 = scmp.eq.s32.totalorder %s25, 0
      %p214 = por %p212, %p213
      %p215 = scmp.ne.s32.totalorder %s203, %s204
      %p216 = scmp.eq.s32.totalorder %s26, 1
      %p217 = por %p215, %p216
      %p219 = scmp.ne.s32.totalorder %s204, %s218
      %p220 = scmp.eq.s32.totalorder %s26, 0
      %p221 = por %p219, %p220
      %s223 = sadd.s32 %s222, 1
      %p226 = scmp.eq.s32.totalorder %s20, 1
      %p227 = scmp.ne.s32.totalorder %s222, %s224
      %p228 = scmp.eq.s32.totalorder %s20, 0
      %p229 = por %p227, %p228
      %p230 = scmp.ne.s32.totalorder %s222, %s224
      %p231 = scmp.eq.s32.totalorder %s25, 1
      %p232 = por %p230, %p231
      %p233 = scmp.ne.s32.totalorder %s224, %s225
      %p234 = scmp.eq.s32.totalorder %s25, 0
      %p235 = por %p233, %p234
      %p236 = scmp.ne.s32.totalorder %s224, %s225
      %p237 = scmp.eq.s32.totalorder %s26, 1
      %p238 = por %p236, %p237
      %p240 = scmp.ne.s32.totalorder %s225, %s239
      %p241 = scmp.eq.s32.totalorder %s26, 0
      %p242 = por %p240, %p241
      %s244 = sadd.s32 %s243, 1
      %p247 = scmp.eq.s32.totalorder %s20, 1
      %p248 = scmp.ne.s32.totalorder %s243, %s245
      %p249 = scmp.eq.s32.totalorder %s20, 0
      %p250 = por %p248, %p249
      %p251 = scmp.ne.s32.totalorder %s243, %s245
      %p252 = scmp.eq.s32.totalorder %s25, 1
      %p253 = por %p251, %p252
      %p254 = scmp.ne.s32.totalorder %s245, %s246
      %p255 = scmp.eq.s32.totalorder %s25, 0
      %p256 = por %p254, %p255
      %p257 = scmp.ne.s32.totalorder %s245, %s246
      %p258 = scmp.eq.s32.totalorder %s26, 1
      %p259 = por %p257, %p258
      %p261 = scmp.ne.s32.totalorder %s246, %s260
      %p262 = scmp.eq.s32.totalorder %s26, 0
      %p263 = por %p261, %p262
      %s264 = ssub.s32 %s20, %s27
      %p265 = scmp.eq.s32.totalorder %s264, 0
      %s267 = sadd.s32 %s266, 1
      %s268 = scalar_select %p265, %s266, %s267
      %p271 = pneg %p265
      %p272 = scmp.eq.s32.totalorder %s20, 1
      %p273 = por %p271, %p272
      %p274 = scmp.ne.s32.totalorder %s266, %s269
      %p275 = scmp.eq.s32.totalorder %s20, 0
      %p276 = por %p274, %p275
      %p277 = scmp.ne.s32.totalorder %s266, %s269
      %p278 = scmp.eq.s32.totalorder %s25, 1
      %p279 = por %p277, %p278
      %p280 = scmp.ne.s32.totalorder %s269, %s270
      %p281 = scmp.eq.s32.totalorder %s25, 0
      %p282 = por %p280, %p281
      %p283 = scmp.ne.s32.totalorder %s269, %s270
      %p284 = scmp.eq.s32.totalorder %s26, 1
      %p285 = por %p283, %p284
      %p287 = scmp.ne.s32.totalorder %s270, %s286
      %p288 = scmp.eq.s32.totalorder %s26, 0
      %p289 = por %p287, %p288
      %p290 = scmp.le.s32.totalorder 1, %s20
      %p291 = scmp.lt.s32.totalorder %s20, 3
      %p292 = pnand %p290, %p291
      %p293 = pneg %p292
      // Predicated region
      $region9: #{net_forward.1} parent=5 // pred_check
        _
      $region10: #{net_forward.1} parent=5 // pred_check_branch
        %295 = sbr.rel (%p292) target = $region12
      $region11: #{net_forward.1} parent=5 // pred_region
        %s296 = ssub.s32 %s20, 1
        // Predicated region
        $region13: #{net_forward.1} parent=11 // pred_check
          %p297 = pneg %p67
        $region14: #{net_forward.1} parent=11 // pred_check_branch
          %299 = sbr.rel (%p297) target = $region16
        $region15: #{net_forward.1} parent=11 // pred_region
          _
        $region16: #{net_forward.1} parent=11 // pred_fallthru
          _
        // Predicated region
        $region17: #{net_forward.1} parent=11 // pred_check
          %p300 = pneg %p88
        $region18: #{net_forward.1} parent=11 // pred_check_branch
          %302 = sbr.rel (%p300) target = $region20
        $region19: #{net_forward.1} parent=11 // pred_region
          _
        $region20: #{net_forward.1} parent=11 // pred_fallthru
          _
        // Predicated region
        $region21: #{net_forward.1} parent=11 // pred_check
          %p303 = pneg %p109
        $region22: #{net_forward.1} parent=11 // pred_check_branch
          %305 = sbr.rel (%p303) target = $region24
        $region23: #{net_forward.1} parent=11 // pred_region
          _
        $region24: #{net_forward.1} parent=11 // pred_fallthru
          _
        // Predicated region
        $region25: #{net_forward.1} parent=11 // pred_check
          %p306 = pneg %p130
        $region26: #{net_forward.1} parent=11 // pred_check_branch
          %308 = sbr.rel (%p306) target = $region28
        $region27: #{net_forward.1} parent=11 // pred_region
          _
        $region28: #{net_forward.1} parent=11 // pred_fallthru
          _
        // Predicated region
        $region29: #{net_forward.1} parent=11 // pred_check
          %p309 = pneg %p151
        $region30: #{net_forward.1} parent=11 // pred_check_branch
          %311 = sbr.rel (%p309) target = $region32
        $region31: #{net_forward.1} parent=11 // pred_region
          _
        $region32: #{net_forward.1} parent=11 // pred_fallthru
          _
        // Predicated region
        $region33: #{net_forward.1} parent=11 // pred_check
          %p312 = pneg %p172
        $region34: #{net_forward.1} parent=11 // pred_check_branch
          %314 = sbr.rel (%p312) target = $region36
        $region35: #{net_forward.1} parent=11 // pred_region
          _
        $region36: #{net_forward.1} parent=11 // pred_fallthru
          _
        // Predicated region
        $region37: #{net_forward.1} parent=11 // pred_check
          %p315 = pneg %p193
        $region38: #{net_forward.1} parent=11 // pred_check_branch
          %317 = sbr.rel (%p315) target = $region40
        $region39: #{net_forward.1} parent=11 // pred_region
          _
        $region40: #{net_forward.1} parent=11 // pred_fallthru
          _
        // Predicated region
        $region41: #{net_forward.1} parent=11 // pred_check
          %p318 = pneg %p214
        $region42: #{net_forward.1} parent=11 // pred_check_branch
          %320 = sbr.rel (%p318) target = $region44
        $region43: #{net_forward.1} parent=11 // pred_region
          _
        $region44: #{net_forward.1} parent=11 // pred_fallthru
          _
        // Predicated region
        $region45: #{net_forward.1} parent=11 // pred_check
          %p321 = pneg %p235
        $region46: #{net_forward.1} parent=11 // pred_check_branch
          %323 = sbr.rel (%p321) target = $region48
        $region47: #{net_forward.1} parent=11 // pred_region
          _
        $region48: #{net_forward.1} parent=11 // pred_fallthru
          _
        // Predicated region
        $region49: #{net_forward.1} parent=11 // pred_check
          %p324 = pneg %p256
        $region50: #{net_forward.1} parent=11 // pred_check_branch
          %326 = sbr.rel (%p324) target = $region52
        $region51: #{net_forward.1} parent=11 // pred_region
          _
        $region52: #{net_forward.1} parent=11 // pred_fallthru
          _
      $region12: #{net_forward.1} parent=5 // pred_fallthru
        _
      %p327 = scmp.lt.s32.totalorder %s20, 2
      // Predicated region
      $region53: #{net_forward.1} parent=5 // pred_check
        %p328 = pneg %p327
      $region54: #{net_forward.1} parent=5 // pred_check_branch
        %330 = sbr.rel (%p328) target = $region56
      $region55: #{net_forward.1} parent=5 // pred_region
        // Predicated region
        $region57: #{net_forward.1} parent=55 // pred_check
          %p331 = pneg %p40
        $region58: #{net_forward.1} parent=55 // pred_check_branch
          %333 = sbr.rel (%p331) target = $region60
        $region59: #{net_forward.1} parent=55 // pred_region
          %p334 = scmp.lt.s32.totalorder %s20, 1
          %s335 = scalar_select %p334, %s20, 1
          %s336 = smul.addr %s335, 224
          %s337 = smul.addr %s336, 4
          %s338 = scalar_lea.vmem %s0, %s337
        $region60: #{net_forward.1} parent=55 // pred_fallthru
          _
      $region56: #{net_forward.1} parent=5 // pred_fallthru
        _
      %p339 = scmp.le.s32.totalorder 1, %s20
      %p340 = scmp.lt.s32.totalorder %s20, 3
      %p341 = pnand %p339, %p340
      %p342 = pneg %p341
      // Predicated region
      $region61: #{net_forward.1} parent=5 // pred_check
        _
      $region62: #{net_forward.1} parent=5 // pred_check_branch
        %344 = sbr.rel (%p341) target = $region64
      $region63: #{net_forward.1} parent=5 // pred_region
        %s345 = ssub.s32 %s20, 1
        %p346 = scmp.lt.s32.totalorder %s25, 1
        %s347 = scalar_select %p346, %s25, 1
        %s348 = smul.addr %s347, 224
        %s349 = smul.addr %s348, 4
        %s350 = scalar_lea.vmem %s0, %s349
        %p351 = pneg %p46
        %p352 = pneg %p43
        %p353 = pneg %p67
        %p354 = pneg %p64
        %p355 = pneg %p88
        %p356 = pneg %p85
        %p357 = pneg %p109
        %p358 = pneg %p106
        %p359 = pneg %p130
        %p360 = pneg %p127
        %p361 = pneg %p151
        %p362 = pneg %p148
        %p363 = pneg %p172
        %p364 = pneg %p169
        %p365 = pneg %p193
        %p366 = pneg %p190
        %p367 = pneg %p214
        %p368 = pneg %p211
        %p369 = pneg %p235
        %p370 = pneg %p232
        %p371 = pneg %p256
        %p372 = pneg %p253
        %p373 = pneg %p282
        %p374 = pneg %p279
        %s375 = sand.u32 %s269, 1
        %s376 = scalar_lea.sflag [#allocation3], %s375
        %s377 = sand.u32 %s269, 1
        %s378 = scalar_lea.vmem [#allocation2], %s377
        %p379 = scmp.lt.s32.totalorder %s25, 1
        %s380 = scalar_select %p379, %s25, 1
        %s381 = smul.addr %s380, 224
        %s382 = smul.addr %s381, 4
        %s383 = scalar_lea.vmem %s0, %s382
        %v385 = vld [vmem:[%s383] sm:$0xff]
        %v386 = vld [vmem:[%s383 + $0x8] sm:$0xff]
        %v387 = vld [vmem:[%s383 + $0x10] sm:$0xff]
        %v388 = vld [vmem:[%s383 + $0x18] sm:$0xff]
        %v389 = vld [vmem:[%s383 + $0x20] sm:$0xff]
        %v390 = vld [vmem:[%s383 + $0x28] sm:$0xff]
        %v391 = vld [vmem:[%s383 + $0x30] sm:$0xff]
        %v392 = vld [vmem:[%s383 + $0x38] sm:$0xff]
        %v393 = vld [vmem:[%s383 + $0x40] sm:$0xff]
        %v394 = vld [vmem:[%s383 + $0x48] sm:$0xff]
        %v395 = vld [vmem:[%s383 + $0x50] sm:$0xff]
        %v396 = vld [vmem:[%s383 + $0x58] sm:$0xff]
        %v397 = vld [vmem:[%s383 + $0x60] sm:$0xff]
        %v398 = vld [vmem:[%s383 + $0x68] sm:$0xff]
        %v399 = vld [vmem:[%s383 + $0x70] sm:$0xff]
        %v400 = vld [vmem:[%s383 + $0x78] sm:$0xff]
        %v401 = vld [vmem:[%s383 + $0x80] sm:$0xff]
        %v402 = vld [vmem:[%s383 + $0x88] sm:$0xff]
        %v403 = vld [vmem:[%s383 + $0x90] sm:$0xff]
        %v404 = vld [vmem:[%s383 + $0x98] sm:$0xff]
        %v405 = vld [vmem:[%s383 + $0xa0] sm:$0xff]
        %v406 = vld [vmem:[%s383 + $0xa8] sm:$0xff]
        %v407 = vld [vmem:[%s383 + $0xb0] sm:$0xff]
        %v408 = vld [vmem:[%s383 + $0xb8] sm:$0xff]
        %v409 = vld [vmem:[%s383 + $0xc0] sm:$0xff]
        %v410 = vld [vmem:[%s383 + $0xc8] sm:$0xff]
        %v411 = vld [vmem:[%s383 + $0xd0] sm:$0xff]
        %v412 = vld [vmem:[%s383 + $0xd8] sm:$0xff]
        %v413 = vld [vmem:[%s383 + $0xe0] sm:$0xff]
        %v414 = vld [vmem:[%s383 + $0xe8] sm:$0xff]
        %v415 = vld [vmem:[%s383 + $0xf0] sm:$0xff]
        %v416 = vld [vmem:[%s383 + $0xf8] sm:$0xff]
        %v417 = vld [vmem:[%s383 + $0x100] sm:$0xff]
        %v418 = vld [vmem:[%s383 + $0x108] sm:$0xff]
        %v419 = vld [vmem:[%s383 + $0x110] sm:$0xff]
        %v420 = vld [vmem:[%s383 + $0x118] sm:$0xff]
        %v421 = vld [vmem:[%s383 + $0x120] sm:$0xff]
        %v422 = vld [vmem:[%s383 + $0x128] sm:$0xff]
        %v423 = vld [vmem:[%s383 + $0x130] sm:$0xff]
        %v424 = vld [vmem:[%s383 + $0x138] sm:$0xff]
        %v425 = vld [vmem:[%s383 + $0x140] sm:$0xff]
        %v426 = vld [vmem:[%s383 + $0x148] sm:$0xff]
        %v427 = vld [vmem:[%s383 + $0x150] sm:$0xff]
        %v428 = vld [vmem:[%s383 + $0x158] sm:$0xff]
        %v429 = vld [vmem:[%s383 + $0x160] sm:$0xff]
        %v430 = vld [vmem:[%s383 + $0x168] sm:$0xff]
        %v431 = vld [vmem:[%s383 + $0x170] sm:$0xff]
        %v432 = vld [vmem:[%s383 + $0x178] sm:$0xff]
        %v433 = vld [vmem:[%s383 + $0x180] sm:$0xff]
        %v434 = vld [vmem:[%s383 + $0x188] sm:$0xff]
        %v435 = vld [vmem:[%s383 + $0x190] sm:$0xff]
        %v436 = vld [vmem:[%s383 + $0x198] sm:$0xff]
        %v437 = vld [vmem:[%s383 + $0x1a0] sm:$0xff]
        %v438 = vld [vmem:[%s383 + $0x1a8] sm:$0xff]
        %v439 = vld [vmem:[%s383 + $0x1b0] sm:$0xff]
        %v440 = vld [vmem:[%s383 + $0x1b8] sm:$0xff]
        %v441 = vld [vmem:[%s383 + $0x1c0] sm:$0xff]
        %v442 = vld [vmem:[%s383 + $0x1c8] sm:$0xff]
        %v443 = vld [vmem:[%s383 + $0x1d0] sm:$0xff]
        %v444 = vld [vmem:[%s383 + $0x1d8] sm:$0xff]
        %v445 = vld [vmem:[%s383 + $0x1e0] sm:$0xff]
        %v446 = vld [vmem:[%s383 + $0x1e8] sm:$0xff]
        %v447 = vld [vmem:[%s383 + $0x1f0] sm:$0xff]
        %v448 = vld [vmem:[%s383 + $0x1f8] sm:$0xff]
        %v449 = vld [vmem:[%s383 + $0x200] sm:$0xff]
        %v450 = vld [vmem:[%s383 + $0x208] sm:$0xff]
        %v451 = vld [vmem:[%s383 + $0x210] sm:$0xff]
        %v452 = vld [vmem:[%s383 + $0x218] sm:$0xff]
        %v453 = vld [vmem:[%s383 + $0x220] sm:$0xff]
        %v454 = vld [vmem:[%s383 + $0x228] sm:$0xff]
        %v455 = vld [vmem:[%s383 + $0x230] sm:$0xff]
        %v456 = vld [vmem:[%s383 + $0x238] sm:$0xff]
        %v457 = vld [vmem:[%s383 + $0x240] sm:$0xff]
        %v458 = vld [vmem:[%s383 + $0x248] sm:$0xff]
        %v459 = vld [vmem:[%s383 + $0x250] sm:$0xff]
        %v460 = vld [vmem:[%s383 + $0x258] sm:$0xff]
        %v461 = vld [vmem:[%s383 + $0x260] sm:$0xff]
        %v462 = vld [vmem:[%s383 + $0x268] sm:$0xff]
        %v463 = vld [vmem:[%s383 + $0x270] sm:$0xff]
        %v464 = vld [vmem:[%s383 + $0x278] sm:$0xff]
        %v465 = vld [vmem:[%s383 + $0x280] sm:$0xff]
        %v466 = vld [vmem:[%s383 + $0x288] sm:$0xff]
        %v467 = vld [vmem:[%s383 + $0x290] sm:$0xff]
        %v468 = vld [vmem:[%s383 + $0x298] sm:$0xff]
        %v469 = vld [vmem:[%s383 + $0x2a0] sm:$0xff]
        %v470 = vld [vmem:[%s383 + $0x2a8] sm:$0xff]
        %v471 = vld [vmem:[%s383 + $0x2b0] sm:$0xff]
        %v472 = vld [vmem:[%s383 + $0x2b8] sm:$0xff]
        %v473 = vld [vmem:[%s383 + $0x2c0] sm:$0xff]
        %v474 = vld [vmem:[%s383 + $0x2c8] sm:$0xff]
        %v475 = vld [vmem:[%s383 + $0x2d0] sm:$0xff]
        %v476 = vld [vmem:[%s383 + $0x2d8] sm:$0xff]
        %v477 = vld [vmem:[%s383 + $0x2e0] sm:$0xff]
        %v478 = vld [vmem:[%s383 + $0x2e8] sm:$0xff]
        %v479 = vld [vmem:[%s383 + $0x2f0] sm:$0xff]
        %v480 = vld [vmem:[%s383 + $0x2f8] sm:$0xff]
        %v481 = vld [vmem:[%s383 + $0x300] sm:$0xff]
        %v482 = vld [vmem:[%s383 + $0x308] sm:$0xff]
        %v483 = vld [vmem:[%s383 + $0x310] sm:$0xff]
        %v484 = vld [vmem:[%s383 + $0x318] sm:$0xff]
        %v485 = vld [vmem:[%s383 + $0x320] sm:$0xff]
        %v486 = vld [vmem:[%s383 + $0x328] sm:$0xff]
        %v487 = vld [vmem:[%s383 + $0x330] sm:$0xff]
        %v488 = vld [vmem:[%s383 + $0x338] sm:$0xff]
        %v489 = vld [vmem:[%s383 + $0x340] sm:$0xff]
        %v490 = vld [vmem:[%s383 + $0x348] sm:$0xff]
        %v491 = vld [vmem:[%s383 + $0x350] sm:$0xff]
        %v492 = vld [vmem:[%s383 + $0x358] sm:$0xff]
        %v493 = vld [vmem:[%s383 + $0x360] sm:$0xff]
        %v494 = vld [vmem:[%s383 + $0x368] sm:$0xff]
        %v495 = vld [vmem:[%s383 + $0x370] sm:$0xff]
        %v496 = vld [vmem:[%s383 + $0x378] sm:$0xff]
        %v497 = vld [vmem:[%s1] sm:$0xf]
        %v498 = vld [vmem:[%s1 + $0x4] sm:$0xf]
        %v499 = vld [vmem:[%s1 + $0x8] sm:$0xf]
        %v500 = vld [vmem:[%s1 + $0xc] sm:$0xf]
        %v501 = vld [vmem:[%s1 + $0x10] sm:$0xf]
        %v502 = vld [vmem:[%s1 + $0x14] sm:$0xf]
        %v503 = vld [vmem:[%s1 + $0x18] sm:$0xf]
        %v504 = vld [vmem:[%s1 + $0x1c] sm:$0xf]
        %v505 = vld [vmem:[%s1 + $0x20] sm:$0xf]
        %v506 = vld [vmem:[%s1 + $0x24] sm:$0xf]
        %v507 = vld [vmem:[%s1 + $0x28] sm:$0xf]
        %v508 = vld [vmem:[%s1 + $0x2c] sm:$0xf]
        %v509 = vld [vmem:[%s1 + $0x30] sm:$0xf]
        %v510 = vld [vmem:[%s1 + $0x34] sm:$0xf]
        %v511 = vld [vmem:[%s1 + $0x38] sm:$0xf]
        %v512 = vld [vmem:[%s1 + $0x3c] sm:$0xf]
        %v513 = vld [vmem:[%s1 + $0x40] sm:$0xf]
        %v514 = vld [vmem:[%s1 + $0x44] sm:$0xf]
        %v515 = vld [vmem:[%s1 + $0x48] sm:$0xf]
        %v516 = vld [vmem:[%s1 + $0x4c] sm:$0xf]
        %v517 = vld [vmem:[%s1 + $0x50] sm:$0xf]
        %v518 = vld [vmem:[%s1 + $0x54] sm:$0xf]
        %v519 = vld [vmem:[%s1 + $0x58] sm:$0xf]
        %v520 = vld [vmem:[%s1 + $0x5c] sm:$0xf]
        %v521 = vld [vmem:[%s1 + $0x60] sm:$0xf]
        %v522 = vld [vmem:[%s1 + $0x64] sm:$0xf]
        %v523 = vld [vmem:[%s2] sm:$0x1]
        %v525 = vlaneseq
        %v526 = vshrl.u32 %v525, 7
        %v527 = vsub.s32 0, %v526
        %v528 = vrot.slane %v523, %v527
        %v642 = vunpack.c.l.b16 %v385
        %v643 = vunpack.c.h.b16 %v385
        %v644 = vunpack.c.l.b16 %v386
        %v645 = vunpack.c.h.b16 %v386
        %v646 = vunpack.c.l.b16 %v387
        %v647 = vunpack.c.h.b16 %v387
        %v648 = vunpack.c.l.b16 %v388
        %v649 = vunpack.c.h.b16 %v388
        %v650 = vunpack.c.l.b16 %v389
        %v651 = vunpack.c.h.b16 %v389
        %v652 = vunpack.c.l.b16 %v390
        %v653 = vunpack.c.h.b16 %v390
        %v654 = vunpack.c.l.b16 %v391
        %v655 = vunpack.c.h.b16 %v391
        %v656 = vunpack.c.l.b16 %v392
        %v657 = vunpack.c.h.b16 %v392
        %v658 = vunpack.c.l.b16 %v393
        %v659 = vunpack.c.h.b16 %v393
        %v660 = vunpack.c.l.b16 %v394
        %v661 = vunpack.c.h.b16 %v394
        %v662 = vunpack.c.l.b16 %v395
        %v663 = vunpack.c.h.b16 %v395
        %v664 = vunpack.c.l.b16 %v396
        %v665 = vunpack.c.h.b16 %v396
        %v666 = vunpack.c.l.b16 %v397
        %v667 = vunpack.c.h.b16 %v397
        %v668 = vunpack.c.l.b16 %v398
        %v669 = vunpack.c.h.b16 %v398
        %v670 = vunpack.c.l.b16 %v399
        %v671 = vunpack.c.h.b16 %v399
        %v672 = vunpack.c.l.b16 %v400
        %v673 = vunpack.c.h.b16 %v400
        %v674 = vunpack.c.l.b16 %v401
        %v675 = vunpack.c.h.b16 %v401
        %v676 = vunpack.c.l.b16 %v402
        %v677 = vunpack.c.h.b16 %v402
        %v678 = vunpack.c.l.b16 %v403
        %v679 = vunpack.c.h.b16 %v403
        %v680 = vunpack.c.l.b16 %v404
        %v681 = vunpack.c.h.b16 %v404
        %v682 = vunpack.c.l.b16 %v405
        %v683 = vunpack.c.h.b16 %v405
        %v684 = vunpack.c.l.b16 %v406
        %v685 = vunpack.c.h.b16 %v406
        %v686 = vunpack.c.l.b16 %v407
        %v687 = vunpack.c.h.b16 %v407
        %v688 = vunpack.c.l.b16 %v408
        %v689 = vunpack.c.h.b16 %v408
        %v690 = vunpack.c.l.b16 %v409
        %v691 = vunpack.c.h.b16 %v409
        %v692 = vunpack.c.l.b16 %v410
        %v693 = vunpack.c.h.b16 %v410
        %v694 = vunpack.c.l.b16 %v411
        %v695 = vunpack.c.h.b16 %v411
        %v696 = vunpack.c.l.b16 %v412
        %v697 = vunpack.c.h.b16 %v412
        %v698 = vunpack.c.l.b16 %v413
        %v699 = vunpack.c.h.b16 %v413
        %v700 = vunpack.c.l.b16 %v414
        %v701 = vunpack.c.h.b16 %v414
        %v702 = vunpack.c.l.b16 %v415
        %v703 = vunpack.c.h.b16 %v415
        %v704 = vunpack.c.l.b16 %v416
        %v705 = vunpack.c.h.b16 %v416
        %v706 = vunpack.c.l.b16 %v417
        %v707 = vunpack.c.h.b16 %v417
        %v708 = vunpack.c.l.b16 %v418
        %v709 = vunpack.c.h.b16 %v418
        %v710 = vunpack.c.l.b16 %v419
        %v711 = vunpack.c.h.b16 %v419
        %v712 = vunpack.c.l.b16 %v420
        %v713 = vunpack.c.h.b16 %v420
        %v714 = vunpack.c.l.b16 %v421
        %v715 = vunpack.c.h.b16 %v421
        %v716 = vunpack.c.l.b16 %v422
        %v717 = vunpack.c.h.b16 %v422
        %v718 = vunpack.c.l.b16 %v423
        %v719 = vunpack.c.h.b16 %v423
        %v720 = vunpack.c.l.b16 %v424
        %v721 = vunpack.c.h.b16 %v424
        %v722 = vunpack.c.l.b16 %v425
        %v723 = vunpack.c.h.b16 %v425
        %v724 = vunpack.c.l.b16 %v426
        %v725 = vunpack.c.h.b16 %v426
        %v726 = vunpack.c.l.b16 %v427
        %v727 = vunpack.c.h.b16 %v427
        %v728 = vunpack.c.l.b16 %v428
        %v729 = vunpack.c.h.b16 %v428
        %v730 = vunpack.c.l.b16 %v429
        %v731 = vunpack.c.h.b16 %v429
        %v732 = vunpack.c.l.b16 %v430
        %v733 = vunpack.c.h.b16 %v430
        %v734 = vunpack.c.l.b16 %v431
        %v735 = vunpack.c.h.b16 %v431
        %v736 = vunpack.c.l.b16 %v432
        %v737 = vunpack.c.h.b16 %v432
        %v738 = vunpack.c.l.b16 %v433
        %v739 = vunpack.c.h.b16 %v433
        %v740 = vunpack.c.l.b16 %v434
        %v741 = vunpack.c.h.b16 %v434
        %v742 = vunpack.c.l.b16 %v435
        %v743 = vunpack.c.h.b16 %v435
        %v744 = vunpack.c.l.b16 %v436
        %v745 = vunpack.c.h.b16 %v436
        %v746 = vunpack.c.l.b16 %v437
        %v747 = vunpack.c.h.b16 %v437
        %v748 = vunpack.c.l.b16 %v438
        %v749 = vunpack.c.h.b16 %v438
        %v750 = vunpack.c.l.b16 %v439
        %v751 = vunpack.c.h.b16 %v439
        %v752 = vunpack.c.l.b16 %v440
        %v753 = vunpack.c.h.b16 %v440
        %v754 = vunpack.c.l.b16 %v441
        %v755 = vunpack.c.h.b16 %v441
        %v756 = vunpack.c.l.b16 %v442
        %v757 = vunpack.c.h.b16 %v442
        %v758 = vunpack.c.l.b16 %v443
        %v759 = vunpack.c.h.b16 %v443
        %v760 = vunpack.c.l.b16 %v444
        %v761 = vunpack.c.h.b16 %v444
        %v762 = vunpack.c.l.b16 %v445
        %v763 = vunpack.c.h.b16 %v445
        %v764 = vunpack.c.l.b16 %v446
        %v765 = vunpack.c.h.b16 %v446
        %v766 = vunpack.c.l.b16 %v447
        %v767 = vunpack.c.h.b16 %v447
        %v768 = vunpack.c.l.b16 %v448
        %v769 = vunpack.c.h.b16 %v448
        %v770 = vunpack.c.l.b16 %v449
        %v771 = vunpack.c.h.b16 %v449
        %v772 = vunpack.c.l.b16 %v450
        %v773 = vunpack.c.h.b16 %v450
        %v774 = vunpack.c.l.b16 %v451
        %v775 = vunpack.c.h.b16 %v451
        %v776 = vunpack.c.l.b16 %v452
        %v777 = vunpack.c.h.b16 %v452
        %v778 = vunpack.c.l.b16 %v453
        %v779 = vunpack.c.h.b16 %v453
        %v780 = vunpack.c.l.b16 %v454
        %v781 = vunpack.c.h.b16 %v454
        %v782 = vunpack.c.l.b16 %v455
        %v783 = vunpack.c.h.b16 %v455
        %v784 = vunpack.c.l.b16 %v456
        %v785 = vunpack.c.h.b16 %v456
        %v786 = vunpack.c.l.b16 %v457
        %v787 = vunpack.c.h.b16 %v457
        %v788 = vunpack.c.l.b16 %v458
        %v789 = vunpack.c.h.b16 %v458
        %v790 = vunpack.c.l.b16 %v459
        %v791 = vunpack.c.h.b16 %v459
        %v792 = vunpack.c.l.b16 %v460
        %v793 = vunpack.c.h.b16 %v460
        %v794 = vunpack.c.l.b16 %v461
        %v795 = vunpack.c.h.b16 %v461
        %v796 = vunpack.c.l.b16 %v462
        %v797 = vunpack.c.h.b16 %v462
        %v798 = vunpack.c.l.b16 %v463
        %v799 = vunpack.c.h.b16 %v463
        %v800 = vunpack.c.l.b16 %v464
        %v801 = vunpack.c.h.b16 %v464
        %v802 = vunpack.c.l.b16 %v465
        %v803 = vunpack.c.h.b16 %v465
        %v804 = vunpack.c.l.b16 %v466
        %v805 = vunpack.c.h.b16 %v466
        %v806 = vunpack.c.l.b16 %v467
        %v807 = vunpack.c.h.b16 %v467
        %v808 = vunpack.c.l.b16 %v468
        %v809 = vunpack.c.h.b16 %v468
        %v810 = vunpack.c.l.b16 %v469
        %v811 = vunpack.c.h.b16 %v469
        %v812 = vunpack.c.l.b16 %v470
        %v813 = vunpack.c.h.b16 %v470
        %v814 = vunpack.c.l.b16 %v471
        %v815 = vunpack.c.h.b16 %v471
        %v816 = vunpack.c.l.b16 %v472
        %v817 = vunpack.c.h.b16 %v472
        %v818 = vunpack.c.l.b16 %v473
        %v819 = vunpack.c.h.b16 %v473
        %v820 = vunpack.c.l.b16 %v474
        %v821 = vunpack.c.h.b16 %v474
        %v822 = vunpack.c.l.b16 %v475
        %v823 = vunpack.c.h.b16 %v475
        %v824 = vunpack.c.l.b16 %v476
        %v825 = vunpack.c.h.b16 %v476
        %v826 = vunpack.c.l.b16 %v477
        %v827 = vunpack.c.h.b16 %v477
        %v828 = vunpack.c.l.b16 %v478
        %v829 = vunpack.c.h.b16 %v478
        %v830 = vunpack.c.l.b16 %v479
        %v831 = vunpack.c.h.b16 %v479
        %v832 = vunpack.c.l.b16 %v480
        %v833 = vunpack.c.h.b16 %v480
        %v834 = vunpack.c.l.b16 %v481
        %v835 = vunpack.c.h.b16 %v481
        %v836 = vunpack.c.l.b16 %v482
        %v837 = vunpack.c.h.b16 %v482
        %v838 = vunpack.c.l.b16 %v483
        %v839 = vunpack.c.h.b16 %v483
        %v840 = vunpack.c.l.b16 %v484
        %v841 = vunpack.c.h.b16 %v484
        %v842 = vunpack.c.l.b16 %v485
        %v843 = vunpack.c.h.b16 %v485
        %v844 = vunpack.c.l.b16 %v486
        %v845 = vunpack.c.h.b16 %v486
        %v846 = vunpack.c.l.b16 %v487
        %v847 = vunpack.c.h.b16 %v487
        %v848 = vunpack.c.l.b16 %v488
        %v849 = vunpack.c.h.b16 %v488
        %v850 = vunpack.c.l.b16 %v489
        %v851 = vunpack.c.h.b16 %v489
        %v852 = vunpack.c.l.b16 %v490
        %v853 = vunpack.c.h.b16 %v490
        %v854 = vunpack.c.l.b16 %v491
        %v855 = vunpack.c.h.b16 %v491
        %v856 = vunpack.c.l.b16 %v492
        %v857 = vunpack.c.h.b16 %v492
        %v858 = vunpack.c.l.b16 %v493
        %v859 = vunpack.c.h.b16 %v493
        %v860 = vunpack.c.l.b16 %v494
        %v861 = vunpack.c.h.b16 %v494
        %v862 = vunpack.c.l.b16 %v495
        %v863 = vunpack.c.h.b16 %v495
        %v864 = vunpack.c.l.b16 %v496
        %v865 = vunpack.c.h.b16 %v496
        %v866 = vpack.c.b16 %v644, %v642
        %v867 = vpack.c.b16 %v645, %v643
        %v868 = vpack.c.b16 %v648, %v646
        %v869 = vpack.c.b16 %v649, %v647
        %v870 = vpack.c.b16 %v652, %v650
        %v871 = vpack.c.b16 %v653, %v651
        %v872 = vpack.c.b16 %v656, %v654
        %v873 = vpack.c.b16 %v657, %v655
        %v874 = vpack.c.b16 %v660, %v658
        %v875 = vpack.c.b16 %v661, %v659
        %v876 = vpack.c.b16 %v664, %v662
        %v877 = vpack.c.b16 %v665, %v663
        %v878 = vpack.c.b16 %v668, %v666
        %v879 = vpack.c.b16 %v669, %v667
        %v880 = vpack.c.b16 %v672, %v670
        %v881 = vpack.c.b16 %v673, %v671
        %v882 = vpack.c.b16 %v676, %v674
        %v883 = vpack.c.b16 %v677, %v675
        %v884 = vpack.c.b16 %v680, %v678
        %v885 = vpack.c.b16 %v681, %v679
        %v886 = vpack.c.b16 %v684, %v682
        %v887 = vpack.c.b16 %v685, %v683
        %v888 = vpack.c.b16 %v688, %v686
        %v889 = vpack.c.b16 %v689, %v687
        %v890 = vpack.c.b16 %v692, %v690
        %v891 = vpack.c.b16 %v693, %v691
        %v892 = vpack.c.b16 %v696, %v694
        %v893 = vpack.c.b16 %v697, %v695
        %v894 = vpack.c.b16 %v700, %v698
        %v895 = vpack.c.b16 %v701, %v699
        %v896 = vpack.c.b16 %v704, %v702
        %v897 = vpack.c.b16 %v705, %v703
        %v898 = vpack.c.b16 %v708, %v706
        %v899 = vpack.c.b16 %v709, %v707
        %v900 = vpack.c.b16 %v712, %v710
        %v901 = vpack.c.b16 %v713, %v711
        %v902 = vpack.c.b16 %v716, %v714
        %v903 = vpack.c.b16 %v717, %v715
        %v904 = vpack.c.b16 %v720, %v718
        %v905 = vpack.c.b16 %v721, %v719
        %v906 = vpack.c.b16 %v724, %v722
        %v907 = vpack.c.b16 %v725, %v723
        %v908 = vpack.c.b16 %v728, %v726
        %v909 = vpack.c.b16 %v729, %v727
        %v910 = vpack.c.b16 %v732, %v730
        %v911 = vpack.c.b16 %v733, %v731
        %v912 = vpack.c.b16 %v736, %v734
        %v913 = vpack.c.b16 %v737, %v735
        %v914 = vpack.c.b16 %v740, %v738
        %v915 = vpack.c.b16 %v741, %v739
        %v916 = vpack.c.b16 %v744, %v742
        %v917 = vpack.c.b16 %v745, %v743
        %v918 = vpack.c.b16 %v748, %v746
        %v919 = vpack.c.b16 %v749, %v747
        %v920 = vpack.c.b16 %v752, %v750
        %v921 = vpack.c.b16 %v753, %v751
        %v922 = vpack.c.b16 %v756, %v754
        %v923 = vpack.c.b16 %v757, %v755
        %v924 = vpack.c.b16 %v760, %v758
        %v925 = vpack.c.b16 %v761, %v759
        %v926 = vpack.c.b16 %v764, %v762
        %v927 = vpack.c.b16 %v765, %v763
        %v928 = vpack.c.b16 %v768, %v766
        %v929 = vpack.c.b16 %v769, %v767
        %v930 = vpack.c.b16 %v772, %v770
        %v931 = vpack.c.b16 %v773, %v771
        %v932 = vpack.c.b16 %v776, %v774
        %v933 = vpack.c.b16 %v777, %v775
        %v934 = vpack.c.b16 %v780, %v778
        %v935 = vpack.c.b16 %v781, %v779
        %v936 = vpack.c.b16 %v784, %v782
        %v937 = vpack.c.b16 %v785, %v783
        %v938 = vpack.c.b16 %v788, %v786
        %v939 = vpack.c.b16 %v789, %v787
        %v940 = vpack.c.b16 %v792, %v790
        %v941 = vpack.c.b16 %v793, %v791
        %v942 = vpack.c.b16 %v796, %v794
        %v943 = vpack.c.b16 %v797, %v795
        %v944 = vpack.c.b16 %v800, %v798
        %v945 = vpack.c.b16 %v801, %v799
        %v946 = vpack.c.b16 %v804, %v802
        %v947 = vpack.c.b16 %v805, %v803
        %v948 = vpack.c.b16 %v808, %v806
        %v949 = vpack.c.b16 %v809, %v807
        %v950 = vpack.c.b16 %v812, %v810
        %v951 = vpack.c.b16 %v813, %v811
        %v952 = vpack.c.b16 %v816, %v814
        %v953 = vpack.c.b16 %v817, %v815
        %v954 = vpack.c.b16 %v820, %v818
        %v955 = vpack.c.b16 %v821, %v819
        %v956 = vpack.c.b16 %v824, %v822
        %v957 = vpack.c.b16 %v825, %v823
        %v958 = vpack.c.b16 %v828, %v826
        %v959 = vpack.c.b16 %v829, %v827
        %v960 = vpack.c.b16 %v832, %v830
        %v961 = vpack.c.b16 %v833, %v831
        %v962 = vpack.c.b16 %v836, %v834
        %v963 = vpack.c.b16 %v837, %v835
        %v964 = vpack.c.b16 %v840, %v838
        %v965 = vpack.c.b16 %v841, %v839
        %v966 = vpack.c.b16 %v844, %v842
        %v967 = vpack.c.b16 %v845, %v843
        %v968 = vpack.c.b16 %v848, %v846
        %v969 = vpack.c.b16 %v849, %v847
        %v970 = vpack.c.b16 %v852, %v850
        %v971 = vpack.c.b16 %v853, %v851
        %v972 = vpack.c.b16 %v856, %v854
        %v973 = vpack.c.b16 %v857, %v855
        %v974 = vpack.c.b16 %v860, %v858
        %v975 = vpack.c.b16 %v861, %v859
        %v976 = vpack.c.b16 %v864, %v862
        %v977 = vpack.c.b16 %v865, %v863
        %v1060 = vunpack.c.l.b16 %v497
        %v1061 = vunpack.c.l.b16 %v498
        %v1062 = vunpack.c.l.b16 %v499
        %v1063 = vunpack.c.l.b16 %v500
        %v1064 = vunpack.c.l.b16 %v501
        %v1065 = vunpack.c.l.b16 %v502
        %v1066 = vunpack.c.l.b16 %v503
        %v1067 = vunpack.c.l.b16 %v504
        %v1068 = vunpack.c.l.b16 %v505
        %v1069 = vunpack.c.l.b16 %v506
        %v1070 = vunpack.c.l.b16 %v507
        %v1071 = vunpack.c.l.b16 %v508
        %v1072 = vunpack.c.l.b16 %v509
        %v1073 = vunpack.c.l.b16 %v510
        %v1074 = vunpack.c.l.b16 %v511
        %v1075 = vunpack.c.l.b16 %v512
        %v1076 = vunpack.c.l.b16 %v513
        %v1077 = vunpack.c.l.b16 %v514
        %v1078 = vunpack.c.l.b16 %v515
        %v1079 = vunpack.c.l.b16 %v516
        %v1080 = vunpack.c.l.b16 %v517
        %v1081 = vunpack.c.l.b16 %v518
        %v1082 = vunpack.c.l.b16 %v519
        %v1083 = vunpack.c.l.b16 %v520
        %v1084 = vunpack.c.l.b16 %v521
        %v1085 = vunpack.c.l.b16 %v522
        %v1086 = vpack.c.b16 %v1061, %v1060
        %v1087 = vpack.c.b16 %v1063, %v1062
        %v1088 = vpack.c.b16 %v1065, %v1064
        %v1089 = vpack.c.b16 %v1067, %v1066
        %v1090 = vpack.c.b16 %v1069, %v1068
        %v1091 = vpack.c.b16 %v1071, %v1070
        %v1092 = vpack.c.b16 %v1073, %v1072
        %v1093 = vpack.c.b16 %v1075, %v1074
        %v1094 = vpack.c.b16 %v1077, %v1076
        %v1095 = vpack.c.b16 %v1079, %v1078
        %v1096 = vpack.c.b16 %v1081, %v1080
        %v1097 = vpack.c.b16 %v1083, %v1082
        %v1098 = vpack.c.b16 %v1085, %v1084
        %vm1112 = vcmask 654336
        %v1114 = vsel %vm1112, %v867, 0
        %v1117 = vsel %vm1112, %v869, 0
        %v1120 = vsel %vm1112, %v871, 0
        %v1123 = vsel %vm1112, %v873, 0
        %v1126 = vsel %vm1112, %v875, 0
        %v1129 = vsel %vm1112, %v877, 0
        %v1132 = vsel %vm1112, %v879, 0
        %v1135 = vsel %vm1112, %v881, 0
        %v1138 = vsel %vm1112, %v883, 0
        %v1141 = vsel %vm1112, %v885, 0
        %v1144 = vsel %vm1112, %v887, 0
        %v1147 = vsel %vm1112, %v889, 0
        %v1150 = vsel %vm1112, %v891, 0
        %v1153 = vsel %vm1112, %v893, 0
        %v1156 = vsel %vm1112, %v895, 0
        %v1159 = vsel %vm1112, %v897, 0
        %v1162 = vsel %vm1112, %v899, 0
        %v1165 = vsel %vm1112, %v901, 0
        %v1168 = vsel %vm1112, %v903, 0
        %v1171 = vsel %vm1112, %v905, 0
        %v1174 = vsel %vm1112, %v907, 0
        %v1177 = vsel %vm1112, %v909, 0
        %v1180 = vsel %vm1112, %v911, 0
        %v1183 = vsel %vm1112, %v913, 0
        %v1186 = vsel %vm1112, %v915, 0
        %v1189 = vsel %vm1112, %v917, 0
        %v1192 = vsel %vm1112, %v919, 0
        %v1195 = vsel %vm1112, %v921, 0
        %v1198 = vsel %vm1112, %v923, 0
        %v1201 = vsel %vm1112, %v925, 0
        %v1204 = vsel %vm1112, %v927, 0
        %v1207 = vsel %vm1112, %v929, 0
        %v1210 = vsel %vm1112, %v931, 0
        %v1213 = vsel %vm1112, %v933, 0
        %v1216 = vsel %vm1112, %v935, 0
        %v1219 = vsel %vm1112, %v937, 0
        %v1222 = vsel %vm1112, %v939, 0
        %v1225 = vsel %vm1112, %v941, 0
        %v1228 = vsel %vm1112, %v943, 0
        %v1231 = vsel %vm1112, %v945, 0
        %v1234 = vsel %vm1112, %v947, 0
        %v1237 = vsel %vm1112, %v949, 0
        %v1240 = vsel %vm1112, %v951, 0
        %v1243 = vsel %vm1112, %v953, 0
        %v1246 = vsel %vm1112, %v955, 0
        %v1249 = vsel %vm1112, %v957, 0
        %v1252 = vsel %vm1112, %v959, 0
        %v1255 = vsel %vm1112, %v961, 0
        %v1258 = vsel %vm1112, %v963, 0
        %v1261 = vsel %vm1112, %v965, 0
        %v1264 = vsel %vm1112, %v967, 0
        %v1267 = vsel %vm1112, %v969, 0
        %v1270 = vsel %vm1112, %v971, 0
        %v1273 = vsel %vm1112, %v973, 0
        %v1276 = vsel %vm1112, %v975, 0
        %v1279 = vsel %vm1112, %v977, 0
        %1281 = vmatprep.subr.bf16.mxu0 0
        %1282 = vmatpush1.bf16.msra.mxu0 %v1086
        %1283 = vmatprep.subr.bf16.mxu0 0
        %1284 = vmatpush1.bf16.msra.mxu0 %v1087
        %1285 = vmatprep.subr.bf16.mxu0 0
        %1286 = vmatpush1.bf16.msra.mxu0 %v1088
        %1287 = vmatprep.subr.bf16.mxu0 0
        %1288 = vmatpush1.bf16.msra.mxu0 %v1089
        %1289 = vmatprep.subr.bf16.mxu0 0
        %1290 = vmatpush1.bf16.msra.mxu0 %v1090
        %1291 = vmatprep.subr.bf16.mxu0 0
        %1292 = vmatpush1.bf16.msra.mxu0 %v1091
        %1293 = vmatprep.subr.bf16.mxu0 0
        %1294 = vmatpush1.bf16.msra.mxu0 %v1092
        %1295 = vmatprep.subr.bf16.mxu0 0
        %1296 = vmatpush1.bf16.msra.mxu0 %v1093
        %1297 = vmatprep.subr.bf16.mxu0 0
        %1298 = vmatpush1.bf16.msra.mxu0 %v1094
        %1299 = vmatprep.subr.bf16.mxu0 0
        %1300 = vmatpush1.bf16.msra.mxu0 %v1095
        %1301 = vmatprep.subr.bf16.mxu0 0
        %1302 = vmatpush1.bf16.msra.mxu0 %v1096
        %1303 = vmatprep.subr.bf16.mxu0 0
        %1304 = vmatpush1.bf16.msra.mxu0 %v1097
        %1305 = vmatprep.subr.bf16.mxu0 0
        %1306 = vmatpush1.bf16.msra.mxu0 %v1098
        %1307 = vmatprep.subr.bf16.mxu0 0
        %1308 = vmatpush1.bf16.msra.mxu0 0
        %1309 = vmatprep.subr.bf16.mxu0 0
        %1310 = vmatpush1.bf16.msra.mxu0 0
        %1311 = vmatprep.subr.bf16.mxu0 0
        %1312 = vmatpush1.bf16.msra.mxu0 0
        %1313 = vmatprep.mubr.bf16.mxu0 %v1114
        %1314 = vmatmul.mubr.bf16.gmra.mrb[0].mxu0 %v866
        %v1315 = vpop.f32.mrb[0].mxu0
        %v1316 = vadd.f32 %v528, %v1315
        %v1317 = vpop.f32.mrb[0].mxu0
        %v1318 = vpop.f32.mrb[0].mxu0
        %v1319 = vadd.f32 %v528, %v1318
        %v1320 = vpop.f32.mrb[0].mxu0
        %1321 = vmatprep.mubr.bf16.mxu0 %v1117
        %1322 = vmatmul.mubr.bf16.gmra.mrb[0].mxu0 %v868
        %v1323 = vpop.f32.mrb[0].mxu0
        %v1324 = vadd.f32 %v528, %v1323
        %v1325 = vpop.f32.mrb[0].mxu0
        %v1326 = vpop.f32.mrb[0].mxu0
        %v1327 = vadd.f32 %v528, %v1326
        %v1328 = vpop.f32.mrb[0].mxu0
        %1329 = vmatprep.mubr.bf16.mxu0 %v1120
        %1330 = vmatmul.mubr.bf16.gmra.mrb[0].mxu0 %v870
        %v1331 = vpop.f32.mrb[0].mxu0
        %v1332 = vadd.f32 %v528, %v1331
        %v1333 = vpop.f32.mrb[0].mxu0
        %v1334 = vpop.f32.mrb[0].mxu0
        %v1335 = vadd.f32 %v528, %v1334
        %v1336 = vpop.f32.mrb[0].mxu0
        %1337 = vmatprep.mubr.bf16.mxu0 %v1123
        %1338 = vmatmul.mubr.bf16.gmra.mrb[0].mxu0 %v872
        %v1339 = vpop.f32.mrb[0].mxu0
        %v1340 = vadd.f32 %v528, %v1339
        %v1341 = vpop.f32.mrb[0].mxu0
        %v1342 = vpop.f32.mrb[0].mxu0
        %v1343 = vadd.f32 %v528, %v1342
        %v1344 = vpop.f32.mrb[0].mxu0
        %1345 = vmatprep.mubr.bf16.mxu0 %v1126
        %1346 = vmatmul.mubr.bf16.gmra.mrb[0].mxu0 %v874
        %v1347 = vpop.f32.mrb[0].mxu0
        %v1348 = vadd.f32 %v528, %v1347
        %v1349 = vpop.f32.mrb[0].mxu0
        %v1350 = vpop.f32.mrb[0].mxu0
        %v1351 = vadd.f32 %v528, %v1350
        %v1352 = vpop.f32.mrb[0].mxu0
        %1353 = vmatprep.mubr.bf16.mxu0 %v1129
        %1354 = vmatmul.mubr.bf16.gmra.mrb[0].mxu0 %v876
        %v1355 = vpop.f32.mrb[0].mxu0
        %v1356 = vadd.f32 %v528, %v1355
        %v1357 = vpop.f32.mrb[0].mxu0
        %v1358 = vpop.f32.mrb[0].mxu0
        %v1359 = vadd.f32 %v528, %v1358
        %v1360 = vpop.f32.mrb[0].mxu0
        %1361 = vmatprep.mubr.bf16.mxu0 %v1132
        %1362 = vmatmul.mubr.bf16.gmra.mrb[0].mxu0 %v878
        %v1363 = vpop.f32.mrb[0].mxu0
        %v1364 = vadd.f32 %v528, %v1363
        %v1365 = vpop.f32.mrb[0].mxu0
        %v1366 = vpop.f32.mrb[0].mxu0
        %v1367 = vadd.f32 %v528, %v1366
        %v1368 = vpop.f32.mrb[0].mxu0
        %1369 = vmatprep.mubr.bf16.mxu0 %v1135
        %1370 = vmatmul.mubr.bf16.gmra.mrb[0].mxu0 %v880
        %v1371 = vpop.f32.mrb[0].mxu0
        %v1372 = vadd.f32 %v528, %v1371
        %v1373 = vpop.f32.mrb[0].mxu0
        %v1374 = vpop.f32.mrb[0].mxu0
        %v1375 = vadd.f32 %v528, %v1374
        %v1376 = vpop.f32.mrb[0].mxu0
        %1377 = vmatprep.mubr.bf16.mxu0 %v1138
        %1378 = vmatmul.mubr.bf16.gmra.mrb[0].mxu0 %v882
        %v1379 = vpop.f32.mrb[0].mxu0
        %v1380 = vadd.f32 %v528, %v1379
        %v1381 = vpop.f32.mrb[0].mxu0
        %v1382 = vpop.f32.mrb[0].mxu0
        %v1383 = vadd.f32 %v528, %v1382
        %v1384 = vpop.f32.mrb[0].mxu0
        %1385 = vmatprep.mubr.bf16.mxu0 %v1141
        %1386 = vmatmul.mubr.bf16.gmra.mrb[0].mxu0 %v884
        %v1387 = vpop.f32.mrb[0].mxu0
        %v1388 = vadd.f32 %v528, %v1387
        %v1389 = vpop.f32.mrb[0].mxu0
        %v1390 = vpop.f32.mrb[0].mxu0
        %v1391 = vadd.f32 %v528, %v1390
        %v1392 = vpop.f32.mrb[0].mxu0
        %1393 = vmatprep.mubr.bf16.mxu0 %v1144
        %1394 = vmatmul.mubr.bf16.gmra.mrb[0].mxu0 %v886
        %v1395 = vpop.f32.mrb[0].mxu0
        %v1396 = vadd.f32 %v528, %v1395
        %v1397 = vpop.f32.mrb[0].mxu0
        %v1398 = vpop.f32.mrb[0].mxu0
        %v1399 = vadd.f32 %v528, %v1398
        %v1400 = vpop.f32.mrb[0].mxu0
        %1401 = vmatprep.mubr.bf16.mxu0 %v1147
        %1402 = vmatmul.mubr.bf16.gmra.mrb[0].mxu0 %v888
        %v1403 = vpop.f32.mrb[0].mxu0
        %v1404 = vadd.f32 %v528, %v1403
        %v1405 = vpop.f32.mrb[0].mxu0
        %v1406 = vpop.f32.mrb[0].mxu0
        %v1407 = vadd.f32 %v528, %v1406
        %v1408 = vpop.f32.mrb[0].mxu0
        %1409 = vmatprep.mubr.bf16.mxu0 %v1150
        %1410 = vmatmul.mubr.bf16.gmra.mrb[0].mxu0 %v890
        %v1411 = vpop.f32.mrb[0].mxu0
        %v1412 = vadd.f32 %v528, %v1411
        %v1413 = vpop.f32.mrb[0].mxu0
        %v1414 = vpop.f32.mrb[0].mxu0
        %v1415 = vadd.f32 %v528, %v1414
        %v1416 = vpop.f32.mrb[0].mxu0
        %1417 = vmatprep.mubr.bf16.mxu0 %v1153
        %1418 = vmatmul.mubr.bf16.gmra.mrb[0].mxu0 %v892
        %v1419 = vpop.f32.mrb[0].mxu0
        %v1420 = vadd.f32 %v528, %v1419
        %v1421 = vpop.f32.mrb[0].mxu0
        %v1422 = vpop.f32.mrb[0].mxu0
        %v1423 = vadd.f32 %v528, %v1422
        %v1424 = vpop.f32.mrb[0].mxu0
        %1425 = vmatprep.mubr.bf16.mxu0 %v1156
        %1426 = vmatmul.mubr.bf16.gmra.mrb[0].mxu0 %v894
        %v1427 = vpop.f32.mrb[0].mxu0
        %v1428 = vadd.f32 %v528, %v1427
        %v1429 = vpop.f32.mrb[0].mxu0
        %v1430 = vpop.f32.mrb[0].mxu0
        %v1431 = vadd.f32 %v528, %v1430
        %v1432 = vpop.f32.mrb[0].mxu0
        %1433 = vmatprep.mubr.bf16.mxu0 %v1159
        %1434 = vmatmul.mubr.bf16.gmra.mrb[0].mxu0 %v896
        %v1435 = vpop.f32.mrb[0].mxu0
        %v1436 = vadd.f32 %v528, %v1435
        %v1437 = vpop.f32.mrb[0].mxu0
        %v1438 = vpop.f32.mrb[0].mxu0
        %v1439 = vadd.f32 %v528, %v1438
        %v1440 = vpop.f32.mrb[0].mxu0
        %1441 = vmatprep.mubr.bf16.mxu0 %v1162
        %1442 = vmatmul.mubr.bf16.gmra.mrb[0].mxu0 %v898
        %v1443 = vpop.f32.mrb[0].mxu0
        %v1444 = vadd.f32 %v528, %v1443
        %v1445 = vpop.f32.mrb[0].mxu0
        %v1446 = vpop.f32.mrb[0].mxu0
        %v1447 = vadd.f32 %v528, %v1446
        %v1448 = vpop.f32.mrb[0].mxu0
        %1449 = vmatprep.mubr.bf16.mxu0 %v1165
        %1450 = vmatmul.mubr.bf16.gmra.mrb[0].mxu0 %v900
        %v1451 = vpop.f32.mrb[0].mxu0
        %v1452 = vadd.f32 %v528, %v1451
        %v1453 = vpop.f32.mrb[0].mxu0
        %v1454 = vpop.f32.mrb[0].mxu0
        %v1455 = vadd.f32 %v528, %v1454
        %v1456 = vpop.f32.mrb[0].mxu0
        %1457 = vmatprep.mubr.bf16.mxu0 %v1168
        %1458 = vmatmul.mubr.bf16.gmra.mrb[0].mxu0 %v902
        %v1459 = vpop.f32.mrb[0].mxu0
        %v1460 = vadd.f32 %v528, %v1459
        %v1461 = vpop.f32.mrb[0].mxu0
        %v1462 = vpop.f32.mrb[0].mxu0
        %v1463 = vadd.f32 %v528, %v1462
        %v1464 = vpop.f32.mrb[0].mxu0
        %1465 = vmatprep.mubr.bf16.mxu0 %v1171
        %1466 = vmatmul.mubr.bf16.gmra.mrb[0].mxu0 %v904
        %v1467 = vpop.f32.mrb[0].mxu0
        %v1468 = vadd.f32 %v528, %v1467
        %v1469 = vpop.f32.mrb[0].mxu0
        %v1470 = vpop.f32.mrb[0].mxu0
        %v1471 = vadd.f32 %v528, %v1470
        %v1472 = vpop.f32.mrb[0].mxu0
        %1473 = vmatprep.mubr.bf16.mxu0 %v1174
        %1474 = vmatmul.mubr.bf16.gmra.mrb[0].mxu0 %v906
        %v1475 = vpop.f32.mrb[0].mxu0
        %v1476 = vadd.f32 %v528, %v1475
        %v1477 = vpop.f32.mrb[0].mxu0
        %v1478 = vpop.f32.mrb[0].mxu0
        %v1479 = vadd.f32 %v528, %v1478
        %v1480 = vpop.f32.mrb[0].mxu0
        %1481 = vmatprep.mubr.bf16.mxu0 %v1177
        %1482 = vmatmul.mubr.bf16.gmra.mrb[0].mxu0 %v908
        %v1483 = vpop.f32.mrb[0].mxu0
        %v1484 = vadd.f32 %v528, %v1483
        %v1485 = vpop.f32.mrb[0].mxu0
        %v1486 = vpop.f32.mrb[0].mxu0
        %v1487 = vadd.f32 %v528, %v1486
        %v1488 = vpop.f32.mrb[0].mxu0
        %1489 = vmatprep.mubr.bf16.mxu0 %v1180
        %1490 = vmatmul.mubr.bf16.gmra.mrb[0].mxu0 %v910
        %v1491 = vpop.f32.mrb[0].mxu0
        %v1492 = vadd.f32 %v528, %v1491
        %v1493 = vpop.f32.mrb[0].mxu0
        %v1494 = vpop.f32.mrb[0].mxu0
        %v1495 = vadd.f32 %v528, %v1494
        %v1496 = vpop.f32.mrb[0].mxu0
        %1497 = vmatprep.mubr.bf16.mxu0 %v1183
        %1498 = vmatmul.mubr.bf16.gmra.mrb[0].mxu0 %v912
        %v1499 = vpop.f32.mrb[0].mxu0
        %v1500 = vadd.f32 %v528, %v1499
        %v1501 = vpop.f32.mrb[0].mxu0
        %v1502 = vpop.f32.mrb[0].mxu0
        %v1503 = vadd.f32 %v528, %v1502
        %v1504 = vpop.f32.mrb[0].mxu0
        %1505 = vmatprep.mubr.bf16.mxu0 %v1186
        %1506 = vmatmul.mubr.bf16.gmra.mrb[0].mxu0 %v914
        %v1507 = vpop.f32.mrb[0].mxu0
        %v1508 = vadd.f32 %v528, %v1507
        %v1509 = vpop.f32.mrb[0].mxu0
        %v1510 = vpop.f32.mrb[0].mxu0
        %v1511 = vadd.f32 %v528, %v1510
        %v1512 = vpop.f32.mrb[0].mxu0
        %1513 = vmatprep.mubr.bf16.mxu0 %v1189
        %1514 = vmatmul.mubr.bf16.gmra.mrb[0].mxu0 %v916
        %v1515 = vpop.f32.mrb[0].mxu0
        %v1516 = vadd.f32 %v528, %v1515
        %v1517 = vpop.f32.mrb[0].mxu0
        %v1518 = vpop.f32.mrb[0].mxu0
        %v1519 = vadd.f32 %v528, %v1518
        %v1520 = vpop.f32.mrb[0].mxu0
        %1521 = vmatprep.mubr.bf16.mxu0 %v1192
        %1522 = vmatmul.mubr.bf16.gmra.mrb[0].mxu0 %v918
        %v1523 = vpop.f32.mrb[0].mxu0
        %v1524 = vadd.f32 %v528, %v1523
        %v1525 = vpop.f32.mrb[0].mxu0
        %v1526 = vpop.f32.mrb[0].mxu0
        %v1527 = vadd.f32 %v528, %v1526
        %v1528 = vpop.f32.mrb[0].mxu0
        %1529 = vmatprep.mubr.bf16.mxu0 %v1195
        %1530 = vmatmul.mubr.bf16.gmra.mrb[0].mxu0 %v920
        %v1531 = vpop.f32.mrb[0].mxu0
        %v1532 = vadd.f32 %v528, %v1531
        %v1533 = vpop.f32.mrb[0].mxu0
        %v1534 = vpop.f32.mrb[0].mxu0
        %v1535 = vadd.f32 %v528, %v1534
        %v1536 = vpop.f32.mrb[0].mxu0
        %1537 = vmatprep.mubr.bf16.mxu0 %v1198
        %1538 = vmatmul.mubr.bf16.gmra.mrb[0].mxu0 %v922
        %v1539 = vpop.f32.mrb[0].mxu0
        %v1540 = vadd.f32 %v528, %v1539
        %v1541 = vpop.f32.mrb[0].mxu0
        %v1542 = vpop.f32.mrb[0].mxu0
        %v1543 = vadd.f32 %v528, %v1542
        %v1544 = vpop.f32.mrb[0].mxu0
        %1545 = vmatprep.mubr.bf16.mxu0 %v1201
        %1546 = vmatmul.mubr.bf16.gmra.mrb[0].mxu0 %v924
        %v1547 = vpop.f32.mrb[0].mxu0
        %v1548 = vadd.f32 %v528, %v1547
        %v1549 = vpop.f32.mrb[0].mxu0
        %v1550 = vpop.f32.mrb[0].mxu0
        %v1551 = vadd.f32 %v528, %v1550
        %v1552 = vpop.f32.mrb[0].mxu0
        %1553 = vmatprep.mubr.bf16.mxu0 %v1204
        %1554 = vmatmul.mubr.bf16.gmra.mrb[0].mxu0 %v926
        %v1555 = vpop.f32.mrb[0].mxu0
        %v1556 = vadd.f32 %v528, %v1555
        %v1557 = vpop.f32.mrb[0].mxu0
        %v1558 = vpop.f32.mrb[0].mxu0
        %v1559 = vadd.f32 %v528, %v1558
        %v1560 = vpop.f32.mrb[0].mxu0
        %1561 = vmatprep.mubr.bf16.mxu0 %v1207
        %1562 = vmatmul.mubr.bf16.gmra.mrb[0].mxu0 %v928
        %v1563 = vpop.f32.mrb[0].mxu0
        %v1564 = vadd.f32 %v528, %v1563
        %v1565 = vpop.f32.mrb[0].mxu0
        %v1566 = vpop.f32.mrb[0].mxu0
        %v1567 = vadd.f32 %v528, %v1566
        %v1568 = vpop.f32.mrb[0].mxu0
        %1569 = vmatprep.mubr.bf16.mxu0 %v1210
        %1570 = vmatmul.mubr.bf16.gmra.mrb[0].mxu0 %v930
        %v1571 = vpop.f32.mrb[0].mxu0
        %v1572 = vadd.f32 %v528, %v1571
        %v1573 = vpop.f32.mrb[0].mxu0
        %v1574 = vpop.f32.mrb[0].mxu0
        %v1575 = vadd.f32 %v528, %v1574
        %v1576 = vpop.f32.mrb[0].mxu0
        %1577 = vmatprep.mubr.bf16.mxu0 %v1213
        %1578 = vmatmul.mubr.bf16.gmra.mrb[0].mxu0 %v932
        %v1579 = vpop.f32.mrb[0].mxu0
        %v1580 = vadd.f32 %v528, %v1579
        %v1581 = vpop.f32.mrb[0].mxu0
        %v1582 = vpop.f32.mrb[0].mxu0
        %v1583 = vadd.f32 %v528, %v1582
        %v1584 = vpop.f32.mrb[0].mxu0
        %1585 = vmatprep.mubr.bf16.mxu0 %v1216
        %1586 = vmatmul.mubr.bf16.gmra.mrb[0].mxu0 %v934
        %v1587 = vpop.f32.mrb[0].mxu0
        %v1588 = vadd.f32 %v528, %v1587
        %v1589 = vpop.f32.mrb[0].mxu0
        %v1590 = vpop.f32.mrb[0].mxu0
        %v1591 = vadd.f32 %v528, %v1590
        %v1592 = vpop.f32.mrb[0].mxu0
        %1593 = vmatprep.mubr.bf16.mxu0 %v1219
        %1594 = vmatmul.mubr.bf16.gmra.mrb[0].mxu0 %v936
        %v1595 = vpop.f32.mrb[0].mxu0
        %v1596 = vadd.f32 %v528, %v1595
        %v1597 = vpop.f32.mrb[0].mxu0
        %v1598 = vpop.f32.mrb[0].mxu0
        %v1599 = vadd.f32 %v528, %v1598
        %v1600 = vpop.f32.mrb[0].mxu0
        %1601 = vmatprep.mubr.bf16.mxu0 %v1222
        %1602 = vmatmul.mubr.bf16.gmra.mrb[0].mxu0 %v938
        %v1603 = vpop.f32.mrb[0].mxu0
        %v1604 = vadd.f32 %v528, %v1603
        %v1605 = vpop.f32.mrb[0].mxu0
        %v1606 = vpop.f32.mrb[0].mxu0
        %v1607 = vadd.f32 %v528, %v1606
        %v1608 = vpop.f32.mrb[0].mxu0
        %1609 = vmatprep.mubr.bf16.mxu0 %v1225
        %1610 = vmatmul.mubr.bf16.gmra.mrb[0].mxu0 %v940
        %v1611 = vpop.f32.mrb[0].mxu0
        %v1612 = vadd.f32 %v528, %v1611
        %v1613 = vpop.f32.mrb[0].mxu0
        %v1614 = vpop.f32.mrb[0].mxu0
        %v1615 = vadd.f32 %v528, %v1614
        %v1616 = vpop.f32.mrb[0].mxu0
        %1617 = vmatprep.mubr.bf16.mxu0 %v1228
        %1618 = vmatmul.mubr.bf16.gmra.mrb[0].mxu0 %v942
        %v1619 = vpop.f32.mrb[0].mxu0
        %v1620 = vadd.f32 %v528, %v1619
        %v1621 = vpop.f32.mrb[0].mxu0
        %v1622 = vpop.f32.mrb[0].mxu0
        %v1623 = vadd.f32 %v528, %v1622
        %v1624 = vpop.f32.mrb[0].mxu0
        %1625 = vmatprep.mubr.bf16.mxu0 %v1231
        %1626 = vmatmul.mubr.bf16.gmra.mrb[0].mxu0 %v944
        %v1627 = vpop.f32.mrb[0].mxu0
        %v1628 = vadd.f32 %v528, %v1627
        %v1629 = vpop.f32.mrb[0].mxu0
        %v1630 = vpop.f32.mrb[0].mxu0
        %v1631 = vadd.f32 %v528, %v1630
        %v1632 = vpop.f32.mrb[0].mxu0
        %1633 = vmatprep.mubr.bf16.mxu0 %v1234
        %1634 = vmatmul.mubr.bf16.gmra.mrb[0].mxu0 %v946
        %v1635 = vpop.f32.mrb[0].mxu0
        %v1636 = vadd.f32 %v528, %v1635
        %v1637 = vpop.f32.mrb[0].mxu0
        %v1638 = vpop.f32.mrb[0].mxu0
        %v1639 = vadd.f32 %v528, %v1638
        %v1640 = vpop.f32.mrb[0].mxu0
        %1641 = vmatprep.mubr.bf16.mxu0 %v1237
        %1642 = vmatmul.mubr.bf16.gmra.mrb[0].mxu0 %v948
        %v1643 = vpop.f32.mrb[0].mxu0
        %v1644 = vadd.f32 %v528, %v1643
        %v1645 = vpop.f32.mrb[0].mxu0
        %v1646 = vpop.f32.mrb[0].mxu0
        %v1647 = vadd.f32 %v528, %v1646
        %v1648 = vpop.f32.mrb[0].mxu0
        %1649 = vmatprep.mubr.bf16.mxu0 %v1240
        %1650 = vmatmul.mubr.bf16.gmra.mrb[0].mxu0 %v950
        %v1651 = vpop.f32.mrb[0].mxu0
        %v1652 = vadd.f32 %v528, %v1651
        %v1653 = vpop.f32.mrb[0].mxu0
        %v1654 = vpop.f32.mrb[0].mxu0
        %v1655 = vadd.f32 %v528, %v1654
        %v1656 = vpop.f32.mrb[0].mxu0
        %1657 = vmatprep.mubr.bf16.mxu0 %v1243
        %1658 = vmatmul.mubr.bf16.gmra.mrb[0].mxu0 %v952
        %v1659 = vpop.f32.mrb[0].mxu0
        %v1660 = vadd.f32 %v528, %v1659
        %v1661 = vpop.f32.mrb[0].mxu0
        %v1662 = vpop.f32.mrb[0].mxu0
        %v1663 = vadd.f32 %v528, %v1662
        %v1664 = vpop.f32.mrb[0].mxu0
        %1665 = vmatprep.mubr.bf16.mxu0 %v1246
        %1666 = vmatmul.mubr.bf16.gmra.mrb[0].mxu0 %v954
        %v1667 = vpop.f32.mrb[0].mxu0
        %v1668 = vadd.f32 %v528, %v1667
        %v1669 = vpop.f32.mrb[0].mxu0
        %v1670 = vpop.f32.mrb[0].mxu0
        %v1671 = vadd.f32 %v528, %v1670
        %v1672 = vpop.f32.mrb[0].mxu0
        %1673 = vmatprep.mubr.bf16.mxu0 %v1249
        %1674 = vmatmul.mubr.bf16.gmra.mrb[0].mxu0 %v956
        %v1675 = vpop.f32.mrb[0].mxu0
        %v1676 = vadd.f32 %v528, %v1675
        %v1677 = vpop.f32.mrb[0].mxu0
        %v1678 = vpop.f32.mrb[0].mxu0
        %v1679 = vadd.f32 %v528, %v1678
        %v1680 = vpop.f32.mrb[0].mxu0
        %1681 = vmatprep.mubr.bf16.mxu0 %v1252
        %1682 = vmatmul.mubr.bf16.gmra.mrb[0].mxu0 %v958
        %v1683 = vpop.f32.mrb[0].mxu0
        %v1684 = vadd.f32 %v528, %v1683
        %v1685 = vpop.f32.mrb[0].mxu0
        %v1686 = vpop.f32.mrb[0].mxu0
        %v1687 = vadd.f32 %v528, %v1686
        %v1688 = vpop.f32.mrb[0].mxu0
        %1689 = vmatprep.mubr.bf16.mxu0 %v1255
        %1690 = vmatmul.mubr.bf16.gmra.mrb[0].mxu0 %v960
        %v1691 = vpop.f32.mrb[0].mxu0
        %v1692 = vadd.f32 %v528, %v1691
        %v1693 = vpop.f32.mrb[0].mxu0
        %v1694 = vpop.f32.mrb[0].mxu0
        %v1695 = vadd.f32 %v528, %v1694
        %v1696 = vpop.f32.mrb[0].mxu0
        %1697 = vmatprep.mubr.bf16.mxu0 %v1258
        %1698 = vmatmul.mubr.bf16.gmra.mrb[0].mxu0 %v962
        %v1699 = vpop.f32.mrb[0].mxu0
        %v1700 = vadd.f32 %v528, %v1699
        %v1701 = vpop.f32.mrb[0].mxu0
        %v1702 = vpop.f32.mrb[0].mxu0
        %v1703 = vadd.f32 %v528, %v1702
        %v1704 = vpop.f32.mrb[0].mxu0
        %1705 = vmatprep.mubr.bf16.mxu0 %v1261
        %1706 = vmatmul.mubr.bf16.gmra.mrb[0].mxu0 %v964
        %v1707 = vpop.f32.mrb[0].mxu0
        %v1708 = vadd.f32 %v528, %v1707
        %v1709 = vpop.f32.mrb[0].mxu0
        %v1710 = vpop.f32.mrb[0].mxu0
        %v1711 = vadd.f32 %v528, %v1710
        %v1712 = vpop.f32.mrb[0].mxu0
        %1713 = vmatprep.mubr.bf16.mxu0 %v1264
        %1714 = vmatmul.mubr.bf16.gmra.mrb[0].mxu0 %v966
        %v1715 = vpop.f32.mrb[0].mxu0
        %v1716 = vadd.f32 %v528, %v1715
        %v1717 = vpop.f32.mrb[0].mxu0
        %v1718 = vpop.f32.mrb[0].mxu0
        %v1719 = vadd.f32 %v528, %v1718
        %v1720 = vpop.f32.mrb[0].mxu0
        %1721 = vmatprep.mubr.bf16.mxu0 %v1267
        %1722 = vmatmul.mubr.bf16.gmra.mrb[0].mxu0 %v968
        %v1723 = vpop.f32.mrb[0].mxu0
        %v1724 = vadd.f32 %v528, %v1723
        %v1725 = vpop.f32.mrb[0].mxu0
        %v1726 = vpop.f32.mrb[0].mxu0
        %v1727 = vadd.f32 %v528, %v1726
        %v1728 = vpop.f32.mrb[0].mxu0
        %1729 = vmatprep.mubr.bf16.mxu0 %v1270
        %1730 = vmatmul.mubr.bf16.gmra.mrb[0].mxu0 %v970
        %v1731 = vpop.f32.mrb[0].mxu0
        %v1732 = vadd.f32 %v528, %v1731
        %v1733 = vpop.f32.mrb[0].mxu0
        %v1734 = vpop.f32.mrb[0].mxu0
        %v1735 = vadd.f32 %v528, %v1734
        %v1736 = vpop.f32.mrb[0].mxu0
        %1737 = vmatprep.mubr.bf16.mxu0 %v1273
        %1738 = vmatmul.mubr.bf16.gmra.mrb[0].mxu0 %v972
        %v1739 = vpop.f32.mrb[0].mxu0
        %v1740 = vadd.f32 %v528, %v1739
        %v1741 = vpop.f32.mrb[0].mxu0
        %v1742 = vpop.f32.mrb[0].mxu0
        %v1743 = vadd.f32 %v528, %v1742
        %v1744 = vpop.f32.mrb[0].mxu0
        %1745 = vmatprep.mubr.bf16.mxu0 %v1276
        %1746 = vmatmul.mubr.bf16.gmra.mrb[0].mxu0 %v974
        %v1747 = vpop.f32.mrb[0].mxu0
        %v1748 = vadd.f32 %v528, %v1747
        %v1749 = vpop.f32.mrb[0].mxu0
        %v1750 = vpop.f32.mrb[0].mxu0
        %v1751 = vadd.f32 %v528, %v1750
        %v1752 = vpop.f32.mrb[0].mxu0
        %1753 = vmatprep.mubr.bf16.mxu0 %v1279
        %1754 = vmatmul.mubr.bf16.gmra.mrb[0].mxu0 %v976
        %v1755 = vpop.f32.mrb[0].mxu0
        %v1756 = vadd.f32 %v528, %v1755
        %v1757 = vpop.f32.mrb[0].mxu0
        %v1758 = vpop.f32.mrb[0].mxu0
        %v1759 = vadd.f32 %v528, %v1758
        %v1760 = vpop.f32.mrb[0].mxu0
        %1761 = vdwg.mxu0
        %v1762 = vmax.f32 %v1316, 0.0
        %v1763 = vmax.f32 %v1319, 0.0
        %v1764 = vmax.f32 %v1324, 0.0
        %v1765 = vmax.f32 %v1327, 0.0
        %v1766 = vmax.f32 %v1332, 0.0
        %v1767 = vmax.f32 %v1335, 0.0
        %v1768 = vmax.f32 %v1340, 0.0
        %v1769 = vmax.f32 %v1343, 0.0
        %v1770 = vmax.f32 %v1348, 0.0
        %v1771 = vmax.f32 %v1351, 0.0
        %v1772 = vmax.f32 %v1356, 0.0
        %v1773 = vmax.f32 %v1359, 0.0
        %v1774 = vmax.f32 %v1364, 0.0
        %v1775 = vmax.f32 %v1367, 0.0
        %v1776 = vmax.f32 %v1372, 0.0
        %v1777 = vmax.f32 %v1375, 0.0
        %v1778 = vmax.f32 %v1380, 0.0
        %v1779 = vmax.f32 %v1383, 0.0
        %v1780 = vmax.f32 %v1388, 0.0
        %v1781 = vmax.f32 %v1391, 0.0
        %v1782 = vmax.f32 %v1396, 0.0
        %v1783 = vmax.f32 %v1399, 0.0
        %v1784 = vmax.f32 %v1404, 0.0
        %v1785 = vmax.f32 %v1407, 0.0
        %v1786 = vmax.f32 %v1412, 0.0
        %v1787 = vmax.f32 %v1415, 0.0
        %v1788 = vmax.f32 %v1420, 0.0
        %v1789 = vmax.f32 %v1423, 0.0
        %v1790 = vmax.f32 %v1428, 0.0
        %v1791 = vmax.f32 %v1431, 0.0
        %v1792 = vmax.f32 %v1436, 0.0
        %v1793 = vmax.f32 %v1439, 0.0
        %v1794 = vmax.f32 %v1444, 0.0
        %v1795 = vmax.f32 %v1447, 0.0
        %v1796 = vmax.f32 %v1452, 0.0
        %v1797 = vmax.f32 %v1455, 0.0
        %v1798 = vmax.f32 %v1460, 0.0
        %v1799 = vmax.f32 %v1463, 0.0
        %v1800 = vmax.f32 %v1468, 0.0
        %v1801 = vmax.f32 %v1471, 0.0
        %v1802 = vmax.f32 %v1476, 0.0
        %v1803 = vmax.f32 %v1479, 0.0
        %v1804 = vmax.f32 %v1484, 0.0
        %v1805 = vmax.f32 %v1487, 0.0
        %v1806 = vmax.f32 %v1492, 0.0
        %v1807 = vmax.f32 %v1495, 0.0
        %v1808 = vmax.f32 %v1500, 0.0
        %v1809 = vmax.f32 %v1503, 0.0
        %v1810 = vmax.f32 %v1508, 0.0
        %v1811 = vmax.f32 %v1511, 0.0
        %v1812 = vmax.f32 %v1516, 0.0
        %v1813 = vmax.f32 %v1519, 0.0
        %v1814 = vmax.f32 %v1524, 0.0
        %v1815 = vmax.f32 %v1527, 0.0
        %v1816 = vmax.f32 %v1532, 0.0
        %v1817 = vmax.f32 %v1535, 0.0
        %v1818 = vmax.f32 %v1540, 0.0
        %v1819 = vmax.f32 %v1543, 0.0
        %v1820 = vmax.f32 %v1548, 0.0
        %v1821 = vmax.f32 %v1551, 0.0
        %v1822 = vmax.f32 %v1556, 0.0
        %v1823 = vmax.f32 %v1559, 0.0
        %v1824 = vmax.f32 %v1564, 0.0
        %v1825 = vmax.f32 %v1567, 0.0
        %v1826 = vmax.f32 %v1572, 0.0
        %v1827 = vmax.f32 %v1575, 0.0
        %v1828 = vmax.f32 %v1580, 0.0
        %v1829 = vmax.f32 %v1583, 0.0
        %v1830 = vmax.f32 %v1588, 0.0
        %v1831 = vmax.f32 %v1591, 0.0
        %v1832 = vmax.f32 %v1596, 0.0
        %v1833 = vmax.f32 %v1599, 0.0
        %v1834 = vmax.f32 %v1604, 0.0
        %v1835 = vmax.f32 %v1607, 0.0
        %v1836 = vmax.f32 %v1612, 0.0
        %v1837 = vmax.f32 %v1615, 0.0
        %v1838 = vmax.f32 %v1620, 0.0
        %v1839 = vmax.f32 %v1623, 0.0
        %v1840 = vmax.f32 %v1628, 0.0
        %v1841 = vmax.f32 %v1631, 0.0
        %v1842 = vmax.f32 %v1636, 0.0
        %v1843 = vmax.f32 %v1639, 0.0
        %v1844 = vmax.f32 %v1644, 0.0
        %v1845 = vmax.f32 %v1647, 0.0
        %v1846 = vmax.f32 %v1652, 0.0
        %v1847 = vmax.f32 %v1655, 0.0
        %v1848 = vmax.f32 %v1660, 0.0
        %v1849 = vmax.f32 %v1663, 0.0
        %v1850 = vmax.f32 %v1668, 0.0
        %v1851 = vmax.f32 %v1671, 0.0
        %v1852 = vmax.f32 %v1676, 0.0
        %v1853 = vmax.f32 %v1679, 0.0
        %v1854 = vmax.f32 %v1684, 0.0
        %v1855 = vmax.f32 %v1687, 0.0
        %v1856 = vmax.f32 %v1692, 0.0
        %v1857 = vmax.f32 %v1695, 0.0
        %v1858 = vmax.f32 %v1700, 0.0
        %v1859 = vmax.f32 %v1703, 0.0
        %v1860 = vmax.f32 %v1708, 0.0
        %v1861 = vmax.f32 %v1711, 0.0
        %v1862 = vmax.f32 %v1716, 0.0
        %v1863 = vmax.f32 %v1719, 0.0
        %v1864 = vmax.f32 %v1724, 0.0
        %v1865 = vmax.f32 %v1727, 0.0
        %v1866 = vmax.f32 %v1732, 0.0
        %v1867 = vmax.f32 %v1735, 0.0
        %v1868 = vmax.f32 %v1740, 0.0
        %v1869 = vmax.f32 %v1743, 0.0
        %v1870 = vmax.f32 %v1748, 0.0
        %v1871 = vmax.f32 %v1751, 0.0
        %v1872 = vmax.f32 %v1756, 0.0
        %v1873 = vmax.f32 %v1759, 0.0
        %v1874 = vsel %vm1112, %v1762, -inf
        %v1875 = vsel %vm1112, %v1766, -inf
        %v1876 = vmax.f32 %v1874, %v1875
        %v1877 = vsel %vm1112, %v1763, -inf
        %v1878 = vsel %vm1112, %v1767, -inf
        %v1879 = vmax.f32 %v1877, %v1878
        %v1880 = vsel %vm1112, %v1764, -inf
        %v1881 = vsel %vm1112, %v1768, -inf
        %v1882 = vmax.f32 %v1880, %v1881
        %v1883 = vsel %vm1112, %v1765, -inf
        %v1884 = vsel %vm1112, %v1769, -inf
        %v1885 = vmax.f32 %v1883, %v1884
        %v1886 = vsel %vm1112, %v1770, -inf
        %v1887 = vsel %vm1112, %v1774, -inf
        %v1888 = vmax.f32 %v1886, %v1887
        %v1889 = vsel %vm1112, %v1771, -inf
        %v1890 = vsel %vm1112, %v1775, -inf
        %v1891 = vmax.f32 %v1889, %v1890
        %v1892 = vsel %vm1112, %v1772, -inf
        %v1893 = vsel %vm1112, %v1776, -inf
        %v1894 = vmax.f32 %v1892, %v1893
        %v1895 = vsel %vm1112, %v1773, -inf
        %v1896 = vsel %vm1112, %v1777, -inf
        %v1897 = vmax.f32 %v1895, %v1896
        %v1898 = vsel %vm1112, %v1778, -inf
        %v1899 = vsel %vm1112, %v1782, -inf
        %v1900 = vmax.f32 %v1898, %v1899
        %v1901 = vsel %vm1112, %v1779, -inf
        %v1902 = vsel %vm1112, %v1783, -inf
        %v1903 = vmax.f32 %v1901, %v1902
        %v1904 = vsel %vm1112, %v1780, -inf
        %v1905 = vsel %vm1112, %v1784, -inf
        %v1906 = vmax.f32 %v1904, %v1905
        %v1907 = vsel %vm1112, %v1781, -inf
        %v1908 = vsel %vm1112, %v1785, -inf
        %v1909 = vmax.f32 %v1907, %v1908
        %v1910 = vsel %vm1112, %v1786, -inf
        %v1911 = vsel %vm1112, %v1790, -inf
        %v1912 = vmax.f32 %v1910, %v1911
        %v1913 = vsel %vm1112, %v1787, -inf
        %v1914 = vsel %vm1112, %v1791, -inf
        %v1915 = vmax.f32 %v1913, %v1914
        %v1916 = vsel %vm1112, %v1788, -inf
        %v1917 = vsel %vm1112, %v1792, -inf
        %v1918 = vmax.f32 %v1916, %v1917
        %v1919 = vsel %vm1112, %v1789, -inf
        %v1920 = vsel %vm1112, %v1793, -inf
        %v1921 = vmax.f32 %v1919, %v1920
        %v1922 = vsel %vm1112, %v1794, -inf
        %v1923 = vsel %vm1112, %v1798, -inf
        %v1924 = vmax.f32 %v1922, %v1923
        %v1925 = vsel %vm1112, %v1795, -inf
        %v1926 = vsel %vm1112, %v1799, -inf
        %v1927 = vmax.f32 %v1925, %v1926
        %v1928 = vsel %vm1112, %v1796, -inf
        %v1929 = vsel %vm1112, %v1800, -inf
        %v1930 = vmax.f32 %v1928, %v1929
        %v1931 = vsel %vm1112, %v1797, -inf
        %v1932 = vsel %vm1112, %v1801, -inf
        %v1933 = vmax.f32 %v1931, %v1932
        %v1934 = vsel %vm1112, %v1802, -inf
        %v1935 = vsel %vm1112, %v1806, -inf
        %v1936 = vmax.f32 %v1934, %v1935
        %v1937 = vsel %vm1112, %v1803, -inf
        %v1938 = vsel %vm1112, %v1807, -inf
        %v1939 = vmax.f32 %v1937, %v1938
        %v1940 = vsel %vm1112, %v1804, -inf
        %v1941 = vsel %vm1112, %v1808, -inf
        %v1942 = vmax.f32 %v1940, %v1941
        %v1943 = vsel %vm1112, %v1805, -inf
        %v1944 = vsel %vm1112, %v1809, -inf
        %v1945 = vmax.f32 %v1943, %v1944
        %v1946 = vsel %vm1112, %v1810, -inf
        %v1947 = vsel %vm1112, %v1814, -inf
        %v1948 = vmax.f32 %v1946, %v1947
        %v1949 = vsel %vm1112, %v1811, -inf
        %v1950 = vsel %vm1112, %v1815, -inf
        %v1951 = vmax.f32 %v1949, %v1950
        %v1952 = vsel %vm1112, %v1812, -inf
        %v1953 = vsel %vm1112, %v1816, -inf
        %v1954 = vmax.f32 %v1952, %v1953
        %v1955 = vsel %vm1112, %v1813, -inf
        %v1956 = vsel %vm1112, %v1817, -inf
        %v1957 = vmax.f32 %v1955, %v1956
        %v1958 = vsel %vm1112, %v1818, -inf
        %v1959 = vsel %vm1112, %v1822, -inf
        %v1960 = vmax.f32 %v1958, %v1959
        %v1961 = vsel %vm1112, %v1819, -inf
        %v1962 = vsel %vm1112, %v1823, -inf
        %v1963 = vmax.f32 %v1961, %v1962
        %v1964 = vsel %vm1112, %v1820, -inf
        %v1965 = vsel %vm1112, %v1824, -inf
        %v1966 = vmax.f32 %v1964, %v1965
        %v1967 = vsel %vm1112, %v1821, -inf
        %v1968 = vsel %vm1112, %v1825, -inf
        %v1969 = vmax.f32 %v1967, %v1968
        %v1970 = vsel %vm1112, %v1826, -inf
        %v1971 = vsel %vm1112, %v1830, -inf
        %v1972 = vmax.f32 %v1970, %v1971
        %v1973 = vsel %vm1112, %v1827, -inf
        %v1974 = vsel %vm1112, %v1831, -inf
        %v1975 = vmax.f32 %v1973, %v1974
        %v1976 = vsel %vm1112, %v1828, -inf
        %v1977 = vsel %vm1112, %v1832, -inf
        %v1978 = vmax.f32 %v1976, %v1977
        %v1979 = vsel %vm1112, %v1829, -inf
        %v1980 = vsel %vm1112, %v1833, -inf
        %v1981 = vmax.f32 %v1979, %v1980
        %v1982 = vsel %vm1112, %v1834, -inf
        %v1983 = vsel %vm1112, %v1838, -inf
        %v1984 = vmax.f32 %v1982, %v1983
        %v1985 = vsel %vm1112, %v1835, -inf
        %v1986 = vsel %vm1112, %v1839, -inf
        %v1987 = vmax.f32 %v1985, %v1986
        %v1988 = vsel %vm1112, %v1836, -inf
        %v1989 = vsel %vm1112, %v1840, -inf
        %v1990 = vmax.f32 %v1988, %v1989
        %v1991 = vsel %vm1112, %v1837, -inf
        %v1992 = vsel %vm1112, %v1841, -inf
        %v1993 = vmax.f32 %v1991, %v1992
        %v1994 = vsel %vm1112, %v1842, -inf
        %v1995 = vsel %vm1112, %v1846, -inf
        %v1996 = vmax.f32 %v1994, %v1995
        %v1997 = vsel %vm1112, %v1843, -inf
        %v1998 = vsel %vm1112, %v1847, -inf
        %v1999 = vmax.f32 %v1997, %v1998
        %v2000 = vsel %vm1112, %v1844, -inf
        %v2001 = vsel %vm1112, %v1848, -inf
        %v2002 = vmax.f32 %v2000, %v2001
        %v2003 = vsel %vm1112, %v1845, -inf
        %v2004 = vsel %vm1112, %v1849, -inf
        %v2005 = vmax.f32 %v2003, %v2004
        %v2006 = vsel %vm1112, %v1850, -inf
        %v2007 = vsel %vm1112, %v1854, -inf
        %v2008 = vmax.f32 %v2006, %v2007
        %v2009 = vsel %vm1112, %v1851, -inf
        %v2010 = vsel %vm1112, %v1855, -inf
        %v2011 = vmax.f32 %v2009, %v2010
        %v2012 = vsel %vm1112, %v1852, -inf
        %v2013 = vsel %vm1112, %v1856, -inf
        %v2014 = vmax.f32 %v2012, %v2013
        %v2015 = vsel %vm1112, %v1853, -inf
        %v2016 = vsel %vm1112, %v1857, -inf
        %v2017 = vmax.f32 %v2015, %v2016
        %v2018 = vsel %vm1112, %v1858, -inf
        %v2019 = vsel %vm1112, %v1862, -inf
        %v2020 = vmax.f32 %v2018, %v2019
        %v2021 = vsel %vm1112, %v1859, -inf
        %v2022 = vsel %vm1112, %v1863, -inf
        %v2023 = vmax.f32 %v2021, %v2022
        %v2024 = vsel %vm1112, %v1860, -inf
        %v2025 = vsel %vm1112, %v1864, -inf
        %v2026 = vmax.f32 %v2024, %v2025
        %v2027 = vsel %vm1112, %v1861, -inf
        %v2028 = vsel %vm1112, %v1865, -inf
        %v2029 = vmax.f32 %v2027, %v2028
        %v2030 = vsel %vm1112, %v1866, -inf
        %v2031 = vsel %vm1112, %v1870, -inf
        %v2032 = vmax.f32 %v2030, %v2031
        %v2033 = vsel %vm1112, %v1867, -inf
        %v2034 = vsel %vm1112, %v1871, -inf
        %v2035 = vmax.f32 %v2033, %v2034
        %v2036 = vsel %vm1112, %v1868, -inf
        %v2037 = vsel %vm1112, %v1872, -inf
        %v2038 = vmax.f32 %v2036, %v2037
        %v2039 = vsel %vm1112, %v1869, -inf
        %v2040 = vsel %vm1112, %v1873, -inf
        %v2041 = vmax.f32 %v2039, %v2040
        %v2098 = vcombine.high %v1876, %v1876
        %v2100 = vunpack.c.l.s4 1983009808
        %v2101 = vunpack.c.0.s8 %v2100
        %v2102 = vlaneseq
        %v2103 = vshrl.u32 %v2102, 7
        %v2104 = vsub.s32 %v2101, %v2103
        %v2105 = vrot.slane %v1876, %v2104
        %v2107 = vunpack.c.l.s4 1983009808
        %v2108 = vunpack.c.0.s8 %v2107
        %v2109 = vlaneseq
        %v2110 = vshrl.u32 %v2109, 7
        %v2111 = vsub.s32 %v2108, %v2110
        %v2112 = vrot.slane %v2098, %v2111
        %v2113 = vcombine.high %v2105, %v2105
        %v2114 = vcombine.high %v2112, %v2112
        %v2115 = vcombine.high %v1879, %v1879
        %v2117 = vunpack.c.l.s4 1983009808
        %v2118 = vunpack.c.0.s8 %v2117
        %v2119 = vlaneseq
        %v2120 = vshrl.u32 %v2119, 7
        %v2121 = vsub.s32 %v2118, %v2120
        %v2122 = vrot.slane %v1879, %v2121
        %v2124 = vunpack.c.l.s4 1983009808
        %v2125 = vunpack.c.0.s8 %v2124
        %v2126 = vlaneseq
        %v2127 = vshrl.u32 %v2126, 7
        %v2128 = vsub.s32 %v2125, %v2127
        %v2129 = vrot.slane %v2115, %v2128
        %v2130 = vcombine.high %v2122, %v2122
        %v2131 = vcombine.high %v2129, %v2129
        %v2132 = vcombine.high %v1882, %v1882
        %v2134 = vunpack.c.l.s4 1983009808
        %v2135 = vunpack.c.0.s8 %v2134
        %v2136 = vlaneseq
        %v2137 = vshrl.u32 %v2136, 7
        %v2138 = vsub.s32 %v2135, %v2137
        %v2139 = vrot.slane %v1882, %v2138
        %v2141 = vunpack.c.l.s4 1983009808
        %v2142 = vunpack.c.0.s8 %v2141
        %v2143 = vlaneseq
        %v2144 = vshrl.u32 %v2143, 7
        %v2145 = vsub.s32 %v2142, %v2144
        %v2146 = vrot.slane %v2132, %v2145
        %v2147 = vcombine.high %v2139, %v2139
        %v2148 = vcombine.high %v2146, %v2146
        %v2149 = vcombine.high %v1885, %v1885
        %v2151 = vunpack.c.l.s4 1983009808
        %v2152 = vunpack.c.0.s8 %v2151
        %v2153 = vlaneseq
        %v2154 = vshrl.u32 %v2153, 7
        %v2155 = vsub.s32 %v2152, %v2154
        %v2156 = vrot.slane %v1885, %v2155
        %v2158 = vunpack.c.l.s4 1983009808
        %v2159 = vunpack.c.0.s8 %v2158
        %v2160 = vlaneseq
        %v2161 = vshrl.u32 %v2160, 7
        %v2162 = vsub.s32 %v2159, %v2161
        %v2163 = vrot.slane %v2149, %v2162
        %v2164 = vcombine.high %v2156, %v2156
        %v2165 = vcombine.high %v2163, %v2163
        %v2166 = vcombine.high %v1888, %v1888
        %v2168 = vunpack.c.l.s4 1983009808
        %v2169 = vunpack.c.0.s8 %v2168
        %v2170 = vlaneseq
        %v2171 = vshrl.u32 %v2170, 7
        %v2172 = vsub.s32 %v2169, %v2171
        %v2173 = vrot.slane %v1888, %v2172
        %v2175 = vunpack.c.l.s4 1983009808
        %v2176 = vunpack.c.0.s8 %v2175
        %v2177 = vlaneseq
        %v2178 = vshrl.u32 %v2177, 7
        %v2179 = vsub.s32 %v2176, %v2178
        %v2180 = vrot.slane %v2166, %v2179
        %v2181 = vcombine.high %v2173, %v2173
        %v2182 = vcombine.high %v2180, %v2180
        %v2183 = vcombine.high %v1891, %v1891
        %v2185 = vunpack.c.l.s4 1983009808
        %v2186 = vunpack.c.0.s8 %v2185
        %v2187 = vlaneseq
        %v2188 = vshrl.u32 %v2187, 7
        %v2189 = vsub.s32 %v2186, %v2188
        %v2190 = vrot.slane %v1891, %v2189
        %v2192 = vunpack.c.l.s4 1983009808
        %v2193 = vunpack.c.0.s8 %v2192
        %v2194 = vlaneseq
        %v2195 = vshrl.u32 %v2194, 7
        %v2196 = vsub.s32 %v2193, %v2195
        %v2197 = vrot.slane %v2183, %v2196
        %v2198 = vcombine.high %v2190, %v2190
        %v2199 = vcombine.high %v2197, %v2197
        %v2200 = vcombine.high %v1894, %v1894
        %v2202 = vunpack.c.l.s4 1983009808
        %v2203 = vunpack.c.0.s8 %v2202
        %v2204 = vlaneseq
        %v2205 = vshrl.u32 %v2204, 7
        %v2206 = vsub.s32 %v2203, %v2205
        %v2207 = vrot.slane %v1894, %v2206
        %v2209 = vunpack.c.l.s4 1983009808
        %v2210 = vunpack.c.0.s8 %v2209
        %v2211 = vlaneseq
        %v2212 = vshrl.u32 %v2211, 7
        %v2213 = vsub.s32 %v2210, %v2212
        %v2214 = vrot.slane %v2200, %v2213
        %v2215 = vcombine.high %v2207, %v2207
        %v2216 = vcombine.high %v2214, %v2214
        %v2217 = vcombine.high %v1897, %v1897
        %v2219 = vunpack.c.l.s4 1983009808
        %v2220 = vunpack.c.0.s8 %v2219
        %v2221 = vlaneseq
        %v2222 = vshrl.u32 %v2221, 7
        %v2223 = vsub.s32 %v2220, %v2222
        %v2224 = vrot.slane %v1897, %v2223
        %v2226 = vunpack.c.l.s4 1983009808
        %v2227 = vunpack.c.0.s8 %v2226
        %v2228 = vlaneseq
        %v2229 = vshrl.u32 %v2228, 7
        %v2230 = vsub.s32 %v2227, %v2229
        %v2231 = vrot.slane %v2217, %v2230
        %v2232 = vcombine.high %v2224, %v2224
        %v2233 = vcombine.high %v2231, %v2231
        %v2234 = vcombine.high %v1900, %v1900
        %v2236 = vunpack.c.l.s4 1983009808
        %v2237 = vunpack.c.0.s8 %v2236
        %v2238 = vlaneseq
        %v2239 = vshrl.u32 %v2238, 7
        %v2240 = vsub.s32 %v2237, %v2239
        %v2241 = vrot.slane %v1900, %v2240
        %v2243 = vunpack.c.l.s4 1983009808
        %v2244 = vunpack.c.0.s8 %v2243
        %v2245 = vlaneseq
        %v2246 = vshrl.u32 %v2245, 7
        %v2247 = vsub.s32 %v2244, %v2246
        %v2248 = vrot.slane %v2234, %v2247
        %v2249 = vcombine.high %v2241, %v2241
        %v2250 = vcombine.high %v2248, %v2248
        %v2251 = vcombine.high %v1903, %v1903
        %v2253 = vunpack.c.l.s4 1983009808
        %v2254 = vunpack.c.0.s8 %v2253
        %v2255 = vlaneseq
        %v2256 = vshrl.u32 %v2255, 7
        %v2257 = vsub.s32 %v2254, %v2256
        %v2258 = vrot.slane %v1903, %v2257
        %v2260 = vunpack.c.l.s4 1983009808
        %v2261 = vunpack.c.0.s8 %v2260
        %v2262 = vlaneseq
        %v2263 = vshrl.u32 %v2262, 7
        %v2264 = vsub.s32 %v2261, %v2263
        %v2265 = vrot.slane %v2251, %v2264
        %v2266 = vcombine.high %v2258, %v2258
        %v2267 = vcombine.high %v2265, %v2265
        %v2268 = vcombine.high %v1906, %v1906
        %v2270 = vunpack.c.l.s4 1983009808
        %v2271 = vunpack.c.0.s8 %v2270
        %v2272 = vlaneseq
        %v2273 = vshrl.u32 %v2272, 7
        %v2274 = vsub.s32 %v2271, %v2273
        %v2275 = vrot.slane %v1906, %v2274
        %v2277 = vunpack.c.l.s4 1983009808
        %v2278 = vunpack.c.0.s8 %v2277
        %v2279 = vlaneseq
        %v2280 = vshrl.u32 %v2279, 7
        %v2281 = vsub.s32 %v2278, %v2280
        %v2282 = vrot.slane %v2268, %v2281
        %v2283 = vcombine.high %v2275, %v2275
        %v2284 = vcombine.high %v2282, %v2282
        %v2285 = vcombine.high %v1909, %v1909
        %v2287 = vunpack.c.l.s4 1983009808
        %v2288 = vunpack.c.0.s8 %v2287
        %v2289 = vlaneseq
        %v2290 = vshrl.u32 %v2289, 7
        %v2291 = vsub.s32 %v2288, %v2290
        %v2292 = vrot.slane %v1909, %v2291
        %v2294 = vunpack.c.l.s4 1983009808
        %v2295 = vunpack.c.0.s8 %v2294
        %v2296 = vlaneseq
        %v2297 = vshrl.u32 %v2296, 7
        %v2298 = vsub.s32 %v2295, %v2297
        %v2299 = vrot.slane %v2285, %v2298
        %v2300 = vcombine.high %v2292, %v2292
        %v2301 = vcombine.high %v2299, %v2299
        %v2302 = vcombine.high %v1912, %v1912
        %v2304 = vunpack.c.l.s4 1983009808
        %v2305 = vunpack.c.0.s8 %v2304
        %v2306 = vlaneseq
        %v2307 = vshrl.u32 %v2306, 7
        %v2308 = vsub.s32 %v2305, %v2307
        %v2309 = vrot.slane %v1912, %v2308
        %v2311 = vunpack.c.l.s4 1983009808
        %v2312 = vunpack.c.0.s8 %v2311
        %v2313 = vlaneseq
        %v2314 = vshrl.u32 %v2313, 7
        %v2315 = vsub.s32 %v2312, %v2314
        %v2316 = vrot.slane %v2302, %v2315
        %v2317 = vcombine.high %v2309, %v2309
        %v2318 = vcombine.high %v2316, %v2316
        %v2319 = vcombine.high %v1915, %v1915
        %v2321 = vunpack.c.l.s4 1983009808
        %v2322 = vunpack.c.0.s8 %v2321
        %v2323 = vlaneseq
        %v2324 = vshrl.u32 %v2323, 7
        %v2325 = vsub.s32 %v2322, %v2324
        %v2326 = vrot.slane %v1915, %v2325
        %v2328 = vunpack.c.l.s4 1983009808
        %v2329 = vunpack.c.0.s8 %v2328
        %v2330 = vlaneseq
        %v2331 = vshrl.u32 %v2330, 7
        %v2332 = vsub.s32 %v2329, %v2331
        %v2333 = vrot.slane %v2319, %v2332
        %v2334 = vcombine.high %v2326, %v2326
        %v2335 = vcombine.high %v2333, %v2333
        %v2336 = vcombine.high %v1918, %v1918
        %v2338 = vunpack.c.l.s4 1983009808
        %v2339 = vunpack.c.0.s8 %v2338
        %v2340 = vlaneseq
        %v2341 = vshrl.u32 %v2340, 7
        %v2342 = vsub.s32 %v2339, %v2341
        %v2343 = vrot.slane %v1918, %v2342
        %v2345 = vunpack.c.l.s4 1983009808
        %v2346 = vunpack.c.0.s8 %v2345
        %v2347 = vlaneseq
        %v2348 = vshrl.u32 %v2347, 7
        %v2349 = vsub.s32 %v2346, %v2348
        %v2350 = vrot.slane %v2336, %v2349
        %v2351 = vcombine.high %v2343, %v2343
        %v2352 = vcombine.high %v2350, %v2350
        %v2353 = vcombine.high %v1921, %v1921
        %v2355 = vunpack.c.l.s4 1983009808
        %v2356 = vunpack.c.0.s8 %v2355
        %v2357 = vlaneseq
        %v2358 = vshrl.u32 %v2357, 7
        %v2359 = vsub.s32 %v2356, %v2358
        %v2360 = vrot.slane %v1921, %v2359
        %v2362 = vunpack.c.l.s4 1983009808
        %v2363 = vunpack.c.0.s8 %v2362
        %v2364 = vlaneseq
        %v2365 = vshrl.u32 %v2364, 7
        %v2366 = vsub.s32 %v2363, %v2365
        %v2367 = vrot.slane %v2353, %v2366
        %v2368 = vcombine.high %v2360, %v2360
        %v2369 = vcombine.high %v2367, %v2367
        %v2370 = vcombine.high %v1924, %v1924
        %v2372 = vunpack.c.l.s4 1983009808
        %v2373 = vunpack.c.0.s8 %v2372
        %v2374 = vlaneseq
        %v2375 = vshrl.u32 %v2374, 7
        %v2376 = vsub.s32 %v2373, %v2375
        %v2377 = vrot.slane %v1924, %v2376
        %v2379 = vunpack.c.l.s4 1983009808
        %v2380 = vunpack.c.0.s8 %v2379
        %v2381 = vlaneseq
        %v2382 = vshrl.u32 %v2381, 7
        %v2383 = vsub.s32 %v2380, %v2382
        %v2384 = vrot.slane %v2370, %v2383
        %v2385 = vcombine.high %v2377, %v2377
        %v2386 = vcombine.high %v2384, %v2384
        %v2387 = vcombine.high %v1927, %v1927
        %v2389 = vunpack.c.l.s4 1983009808
        %v2390 = vunpack.c.0.s8 %v2389
        %v2391 = vlaneseq
        %v2392 = vshrl.u32 %v2391, 7
        %v2393 = vsub.s32 %v2390, %v2392
        %v2394 = vrot.slane %v1927, %v2393
        %v2396 = vunpack.c.l.s4 1983009808
        %v2397 = vunpack.c.0.s8 %v2396
        %v2398 = vlaneseq
        %v2399 = vshrl.u32 %v2398, 7
        %v2400 = vsub.s32 %v2397, %v2399
        %v2401 = vrot.slane %v2387, %v2400
        %v2402 = vcombine.high %v2394, %v2394
        %v2403 = vcombine.high %v2401, %v2401
        %v2404 = vcombine.high %v1930, %v1930
        %v2406 = vunpack.c.l.s4 1983009808
        %v2407 = vunpack.c.0.s8 %v2406
        %v2408 = vlaneseq
        %v2409 = vshrl.u32 %v2408, 7
        %v2410 = vsub.s32 %v2407, %v2409
        %v2411 = vrot.slane %v1930, %v2410
        %v2413 = vunpack.c.l.s4 1983009808
        %v2414 = vunpack.c.0.s8 %v2413
        %v2415 = vlaneseq
        %v2416 = vshrl.u32 %v2415, 7
        %v2417 = vsub.s32 %v2414, %v2416
        %v2418 = vrot.slane %v2404, %v2417
        %v2419 = vcombine.high %v2411, %v2411
        %v2420 = vcombine.high %v2418, %v2418
        %v2421 = vcombine.high %v1933, %v1933
        %v2423 = vunpack.c.l.s4 1983009808
        %v2424 = vunpack.c.0.s8 %v2423
        %v2425 = vlaneseq
        %v2426 = vshrl.u32 %v2425, 7
        %v2427 = vsub.s32 %v2424, %v2426
        %v2428 = vrot.slane %v1933, %v2427
        %v2430 = vunpack.c.l.s4 1983009808
        %v2431 = vunpack.c.0.s8 %v2430
        %v2432 = vlaneseq
        %v2433 = vshrl.u32 %v2432, 7
        %v2434 = vsub.s32 %v2431, %v2433
        %v2435 = vrot.slane %v2421, %v2434
        %v2436 = vcombine.high %v2428, %v2428
        %v2437 = vcombine.high %v2435, %v2435
        %v2438 = vcombine.high %v1936, %v1936
        %v2440 = vunpack.c.l.s4 1983009808
        %v2441 = vunpack.c.0.s8 %v2440
        %v2442 = vlaneseq
        %v2443 = vshrl.u32 %v2442, 7
        %v2444 = vsub.s32 %v2441, %v2443
        %v2445 = vrot.slane %v1936, %v2444
        %v2447 = vunpack.c.l.s4 1983009808
        %v2448 = vunpack.c.0.s8 %v2447
        %v2449 = vlaneseq
        %v2450 = vshrl.u32 %v2449, 7
        %v2451 = vsub.s32 %v2448, %v2450
        %v2452 = vrot.slane %v2438, %v2451
        %v2453 = vcombine.high %v2445, %v2445
        %v2454 = vcombine.high %v2452, %v2452
        %v2455 = vcombine.high %v1939, %v1939
        %v2457 = vunpack.c.l.s4 1983009808
        %v2458 = vunpack.c.0.s8 %v2457
        %v2459 = vlaneseq
        %v2460 = vshrl.u32 %v2459, 7
        %v2461 = vsub.s32 %v2458, %v2460
        %v2462 = vrot.slane %v1939, %v2461
        %v2464 = vunpack.c.l.s4 1983009808
        %v2465 = vunpack.c.0.s8 %v2464
        %v2466 = vlaneseq
        %v2467 = vshrl.u32 %v2466, 7
        %v2468 = vsub.s32 %v2465, %v2467
        %v2469 = vrot.slane %v2455, %v2468
        %v2470 = vcombine.high %v2462, %v2462
        %v2471 = vcombine.high %v2469, %v2469
        %v2472 = vcombine.high %v1942, %v1942
        %v2474 = vunpack.c.l.s4 1983009808
        %v2475 = vunpack.c.0.s8 %v2474
        %v2476 = vlaneseq
        %v2477 = vshrl.u32 %v2476, 7
        %v2478 = vsub.s32 %v2475, %v2477
        %v2479 = vrot.slane %v1942, %v2478
        %v2481 = vunpack.c.l.s4 1983009808
        %v2482 = vunpack.c.0.s8 %v2481
        %v2483 = vlaneseq
        %v2484 = vshrl.u32 %v2483, 7
        %v2485 = vsub.s32 %v2482, %v2484
        %v2486 = vrot.slane %v2472, %v2485
        %v2487 = vcombine.high %v2479, %v2479
        %v2488 = vcombine.high %v2486, %v2486
        %v2489 = vcombine.high %v1945, %v1945
        %v2491 = vunpack.c.l.s4 1983009808
        %v2492 = vunpack.c.0.s8 %v2491
        %v2493 = vlaneseq
        %v2494 = vshrl.u32 %v2493, 7
        %v2495 = vsub.s32 %v2492, %v2494
        %v2496 = vrot.slane %v1945, %v2495
        %v2498 = vunpack.c.l.s4 1983009808
        %v2499 = vunpack.c.0.s8 %v2498
        %v2500 = vlaneseq
        %v2501 = vshrl.u32 %v2500, 7
        %v2502 = vsub.s32 %v2499, %v2501
        %v2503 = vrot.slane %v2489, %v2502
        %v2504 = vcombine.high %v2496, %v2496
        %v2505 = vcombine.high %v2503, %v2503
        %v2506 = vcombine.high %v1948, %v1948
        %v2508 = vunpack.c.l.s4 1983009808
        %v2509 = vunpack.c.0.s8 %v2508
        %v2510 = vlaneseq
        %v2511 = vshrl.u32 %v2510, 7
        %v2512 = vsub.s32 %v2509, %v2511
        %v2513 = vrot.slane %v1948, %v2512
        %v2515 = vunpack.c.l.s4 1983009808
        %v2516 = vunpack.c.0.s8 %v2515
        %v2517 = vlaneseq
        %v2518 = vshrl.u32 %v2517, 7
        %v2519 = vsub.s32 %v2516, %v2518
        %v2520 = vrot.slane %v2506, %v2519
        %v2521 = vcombine.high %v2513, %v2513
        %v2522 = vcombine.high %v2520, %v2520
        %v2523 = vcombine.high %v1951, %v1951
        %v2525 = vunpack.c.l.s4 1983009808
        %v2526 = vunpack.c.0.s8 %v2525
        %v2527 = vlaneseq
        %v2528 = vshrl.u32 %v2527, 7
        %v2529 = vsub.s32 %v2526, %v2528
        %v2530 = vrot.slane %v1951, %v2529
        %v2532 = vunpack.c.l.s4 1983009808
        %v2533 = vunpack.c.0.s8 %v2532
        %v2534 = vlaneseq
        %v2535 = vshrl.u32 %v2534, 7
        %v2536 = vsub.s32 %v2533, %v2535
        %v2537 = vrot.slane %v2523, %v2536
        %v2538 = vcombine.high %v2530, %v2530
        %v2539 = vcombine.high %v2537, %v2537
        %v2540 = vcombine.high %v1954, %v1954
        %v2542 = vunpack.c.l.s4 1983009808
        %v2543 = vunpack.c.0.s8 %v2542
        %v2544 = vlaneseq
        %v2545 = vshrl.u32 %v2544, 7
        %v2546 = vsub.s32 %v2543, %v2545
        %v2547 = vrot.slane %v1954, %v2546
        %v2549 = vunpack.c.l.s4 1983009808
        %v2550 = vunpack.c.0.s8 %v2549
        %v2551 = vlaneseq
        %v2552 = vshrl.u32 %v2551, 7
        %v2553 = vsub.s32 %v2550, %v2552
        %v2554 = vrot.slane %v2540, %v2553
        %v2555 = vcombine.high %v2547, %v2547
        %v2556 = vcombine.high %v2554, %v2554
        %v2557 = vcombine.high %v1957, %v1957
        %v2559 = vunpack.c.l.s4 1983009808
        %v2560 = vunpack.c.0.s8 %v2559
        %v2561 = vlaneseq
        %v2562 = vshrl.u32 %v2561, 7
        %v2563 = vsub.s32 %v2560, %v2562
        %v2564 = vrot.slane %v1957, %v2563
        %v2566 = vunpack.c.l.s4 1983009808
        %v2567 = vunpack.c.0.s8 %v2566
        %v2568 = vlaneseq
        %v2569 = vshrl.u32 %v2568, 7
        %v2570 = vsub.s32 %v2567, %v2569
        %v2571 = vrot.slane %v2557, %v2570
        %v2572 = vcombine.high %v2564, %v2564
        %v2573 = vcombine.high %v2571, %v2571
        %v2574 = vcombine.high %v1960, %v1960
        %v2576 = vunpack.c.l.s4 1983009808
        %v2577 = vunpack.c.0.s8 %v2576
        %v2578 = vlaneseq
        %v2579 = vshrl.u32 %v2578, 7
        %v2580 = vsub.s32 %v2577, %v2579
        %v2581 = vrot.slane %v1960, %v2580
        %v2583 = vunpack.c.l.s4 1983009808
        %v2584 = vunpack.c.0.s8 %v2583
        %v2585 = vlaneseq
        %v2586 = vshrl.u32 %v2585, 7
        %v2587 = vsub.s32 %v2584, %v2586
        %v2588 = vrot.slane %v2574, %v2587
        %v2589 = vcombine.high %v2581, %v2581
        %v2590 = vcombine.high %v2588, %v2588
        %v2591 = vcombine.high %v1963, %v1963
        %v2593 = vunpack.c.l.s4 1983009808
        %v2594 = vunpack.c.0.s8 %v2593
        %v2595 = vlaneseq
        %v2596 = vshrl.u32 %v2595, 7
        %v2597 = vsub.s32 %v2594, %v2596
        %v2598 = vrot.slane %v1963, %v2597
        %v2600 = vunpack.c.l.s4 1983009808
        %v2601 = vunpack.c.0.s8 %v2600
        %v2602 = vlaneseq
        %v2603 = vshrl.u32 %v2602, 7
        %v2604 = vsub.s32 %v2601, %v2603
        %v2605 = vrot.slane %v2591, %v2604
        %v2606 = vcombine.high %v2598, %v2598
        %v2607 = vcombine.high %v2605, %v2605
        %v2608 = vcombine.high %v1966, %v1966
        %v2610 = vunpack.c.l.s4 1983009808
        %v2611 = vunpack.c.0.s8 %v2610
        %v2612 = vlaneseq
        %v2613 = vshrl.u32 %v2612, 7
        %v2614 = vsub.s32 %v2611, %v2613
        %v2615 = vrot.slane %v1966, %v2614
        %v2617 = vunpack.c.l.s4 1983009808
        %v2618 = vunpack.c.0.s8 %v2617
        %v2619 = vlaneseq
        %v2620 = vshrl.u32 %v2619, 7
        %v2621 = vsub.s32 %v2618, %v2620
        %v2622 = vrot.slane %v2608, %v2621
        %v2623 = vcombine.high %v2615, %v2615
        %v2624 = vcombine.high %v2622, %v2622
        %v2625 = vcombine.high %v1969, %v1969
        %v2627 = vunpack.c.l.s4 1983009808
        %v2628 = vunpack.c.0.s8 %v2627
        %v2629 = vlaneseq
        %v2630 = vshrl.u32 %v2629, 7
        %v2631 = vsub.s32 %v2628, %v2630
        %v2632 = vrot.slane %v1969, %v2631
        %v2634 = vunpack.c.l.s4 1983009808
        %v2635 = vunpack.c.0.s8 %v2634
        %v2636 = vlaneseq
        %v2637 = vshrl.u32 %v2636, 7
        %v2638 = vsub.s32 %v2635, %v2637
        %v2639 = vrot.slane %v2625, %v2638
        %v2640 = vcombine.high %v2632, %v2632
        %v2641 = vcombine.high %v2639, %v2639
        %v2642 = vcombine.high %v1972, %v1972
        %v2644 = vunpack.c.l.s4 1983009808
        %v2645 = vunpack.c.0.s8 %v2644
        %v2646 = vlaneseq
        %v2647 = vshrl.u32 %v2646, 7
        %v2648 = vsub.s32 %v2645, %v2647
        %v2649 = vrot.slane %v1972, %v2648
        %v2651 = vunpack.c.l.s4 1983009808
        %v2652 = vunpack.c.0.s8 %v2651
        %v2653 = vlaneseq
        %v2654 = vshrl.u32 %v2653, 7
        %v2655 = vsub.s32 %v2652, %v2654
        %v2656 = vrot.slane %v2642, %v2655
        %v2657 = vcombine.high %v2649, %v2649
        %v2658 = vcombine.high %v2656, %v2656
        %v2659 = vcombine.high %v1975, %v1975
        %v2661 = vunpack.c.l.s4 1983009808
        %v2662 = vunpack.c.0.s8 %v2661
        %v2663 = vlaneseq
        %v2664 = vshrl.u32 %v2663, 7
        %v2665 = vsub.s32 %v2662, %v2664
        %v2666 = vrot.slane %v1975, %v2665
        %v2668 = vunpack.c.l.s4 1983009808
        %v2669 = vunpack.c.0.s8 %v2668
        %v2670 = vlaneseq
        %v2671 = vshrl.u32 %v2670, 7
        %v2672 = vsub.s32 %v2669, %v2671
        %v2673 = vrot.slane %v2659, %v2672
        %v2674 = vcombine.high %v2666, %v2666
        %v2675 = vcombine.high %v2673, %v2673
        %v2676 = vcombine.high %v1978, %v1978
        %v2678 = vunpack.c.l.s4 1983009808
        %v2679 = vunpack.c.0.s8 %v2678
        %v2680 = vlaneseq
        %v2681 = vshrl.u32 %v2680, 7
        %v2682 = vsub.s32 %v2679, %v2681
        %v2683 = vrot.slane %v1978, %v2682
        %v2685 = vunpack.c.l.s4 1983009808
        %v2686 = vunpack.c.0.s8 %v2685
        %v2687 = vlaneseq
        %v2688 = vshrl.u32 %v2687, 7
        %v2689 = vsub.s32 %v2686, %v2688
        %v2690 = vrot.slane %v2676, %v2689
        %v2691 = vcombine.high %v2683, %v2683
        %v2692 = vcombine.high %v2690, %v2690
        %v2693 = vcombine.high %v1981, %v1981
        %v2695 = vunpack.c.l.s4 1983009808
        %v2696 = vunpack.c.0.s8 %v2695
        %v2697 = vlaneseq
        %v2698 = vshrl.u32 %v2697, 7
        %v2699 = vsub.s32 %v2696, %v2698
        %v2700 = vrot.slane %v1981, %v2699
        %v2702 = vunpack.c.l.s4 1983009808
        %v2703 = vunpack.c.0.s8 %v2702
        %v2704 = vlaneseq
        %v2705 = vshrl.u32 %v2704, 7
        %v2706 = vsub.s32 %v2703, %v2705
        %v2707 = vrot.slane %v2693, %v2706
        %v2708 = vcombine.high %v2700, %v2700
        %v2709 = vcombine.high %v2707, %v2707
        %v2710 = vcombine.high %v1984, %v1984
        %v2712 = vunpack.c.l.s4 1983009808
        %v2713 = vunpack.c.0.s8 %v2712
        %v2714 = vlaneseq
        %v2715 = vshrl.u32 %v2714, 7
        %v2716 = vsub.s32 %v2713, %v2715
        %v2717 = vrot.slane %v1984, %v2716
        %v2719 = vunpack.c.l.s4 1983009808
        %v2720 = vunpack.c.0.s8 %v2719
        %v2721 = vlaneseq
        %v2722 = vshrl.u32 %v2721, 7
        %v2723 = vsub.s32 %v2720, %v2722
        %v2724 = vrot.slane %v2710, %v2723
        %v2725 = vcombine.high %v2717, %v2717
        %v2726 = vcombine.high %v2724, %v2724
        %v2727 = vcombine.high %v1987, %v1987
        %v2729 = vunpack.c.l.s4 1983009808
        %v2730 = vunpack.c.0.s8 %v2729
        %v2731 = vlaneseq
        %v2732 = vshrl.u32 %v2731, 7
        %v2733 = vsub.s32 %v2730, %v2732
        %v2734 = vrot.slane %v1987, %v2733
        %v2736 = vunpack.c.l.s4 1983009808
        %v2737 = vunpack.c.0.s8 %v2736
        %v2738 = vlaneseq
        %v2739 = vshrl.u32 %v2738, 7
        %v2740 = vsub.s32 %v2737, %v2739
        %v2741 = vrot.slane %v2727, %v2740
        %v2742 = vcombine.high %v2734, %v2734
        %v2743 = vcombine.high %v2741, %v2741
        %v2744 = vcombine.high %v1990, %v1990
        %v2746 = vunpack.c.l.s4 1983009808
        %v2747 = vunpack.c.0.s8 %v2746
        %v2748 = vlaneseq
        %v2749 = vshrl.u32 %v2748, 7
        %v2750 = vsub.s32 %v2747, %v2749
        %v2751 = vrot.slane %v1990, %v2750
        %v2753 = vunpack.c.l.s4 1983009808
        %v2754 = vunpack.c.0.s8 %v2753
        %v2755 = vlaneseq
        %v2756 = vshrl.u32 %v2755, 7
        %v2757 = vsub.s32 %v2754, %v2756
        %v2758 = vrot.slane %v2744, %v2757
        %v2759 = vcombine.high %v2751, %v2751
        %v2760 = vcombine.high %v2758, %v2758
        %v2761 = vcombine.high %v1993, %v1993
        %v2763 = vunpack.c.l.s4 1983009808
        %v2764 = vunpack.c.0.s8 %v2763
        %v2765 = vlaneseq
        %v2766 = vshrl.u32 %v2765, 7
        %v2767 = vsub.s32 %v2764, %v2766
        %v2768 = vrot.slane %v1993, %v2767
        %v2770 = vunpack.c.l.s4 1983009808
        %v2771 = vunpack.c.0.s8 %v2770
        %v2772 = vlaneseq
        %v2773 = vshrl.u32 %v2772, 7
        %v2774 = vsub.s32 %v2771, %v2773
        %v2775 = vrot.slane %v2761, %v2774
        %v2776 = vcombine.high %v2768, %v2768
        %v2777 = vcombine.high %v2775, %v2775
        %v2778 = vcombine.high %v1996, %v1996
        %v2780 = vunpack.c.l.s4 1983009808
        %v2781 = vunpack.c.0.s8 %v2780
        %v2782 = vlaneseq
        %v2783 = vshrl.u32 %v2782, 7
        %v2784 = vsub.s32 %v2781, %v2783
        %v2785 = vrot.slane %v1996, %v2784
        %v2787 = vunpack.c.l.s4 1983009808
        %v2788 = vunpack.c.0.s8 %v2787
        %v2789 = vlaneseq
        %v2790 = vshrl.u32 %v2789, 7
        %v2791 = vsub.s32 %v2788, %v2790
        %v2792 = vrot.slane %v2778, %v2791
        %v2793 = vcombine.high %v2785, %v2785
        %v2794 = vcombine.high %v2792, %v2792
        %v2795 = vcombine.high %v1999, %v1999
        %v2797 = vunpack.c.l.s4 1983009808
        %v2798 = vunpack.c.0.s8 %v2797
        %v2799 = vlaneseq
        %v2800 = vshrl.u32 %v2799, 7
        %v2801 = vsub.s32 %v2798, %v2800
        %v2802 = vrot.slane %v1999, %v2801
        %v2804 = vunpack.c.l.s4 1983009808
        %v2805 = vunpack.c.0.s8 %v2804
        %v2806 = vlaneseq
        %v2807 = vshrl.u32 %v2806, 7
        %v2808 = vsub.s32 %v2805, %v2807
        %v2809 = vrot.slane %v2795, %v2808
        %v2810 = vcombine.high %v2802, %v2802
        %v2811 = vcombine.high %v2809, %v2809
        %v2812 = vcombine.high %v2002, %v2002
        %v2814 = vunpack.c.l.s4 1983009808
        %v2815 = vunpack.c.0.s8 %v2814
        %v2816 = vlaneseq
        %v2817 = vshrl.u32 %v2816, 7
        %v2818 = vsub.s32 %v2815, %v2817
        %v2819 = vrot.slane %v2002, %v2818
        %v2821 = vunpack.c.l.s4 1983009808
        %v2822 = vunpack.c.0.s8 %v2821
        %v2823 = vlaneseq
        %v2824 = vshrl.u32 %v2823, 7
        %v2825 = vsub.s32 %v2822, %v2824
        %v2826 = vrot.slane %v2812, %v2825
        %v2827 = vcombine.high %v2819, %v2819
        %v2828 = vcombine.high %v2826, %v2826
        %v2829 = vcombine.high %v2005, %v2005
        %v2831 = vunpack.c.l.s4 1983009808
        %v2832 = vunpack.c.0.s8 %v2831
        %v2833 = vlaneseq
        %v2834 = vshrl.u32 %v2833, 7
        %v2835 = vsub.s32 %v2832, %v2834
        %v2836 = vrot.slane %v2005, %v2835
        %v2838 = vunpack.c.l.s4 1983009808
        %v2839 = vunpack.c.0.s8 %v2838
        %v2840 = vlaneseq
        %v2841 = vshrl.u32 %v2840, 7
        %v2842 = vsub.s32 %v2839, %v2841
        %v2843 = vrot.slane %v2829, %v2842
        %v2844 = vcombine.high %v2836, %v2836
        %v2845 = vcombine.high %v2843, %v2843
        %v2846 = vcombine.high %v2008, %v2008
        %v2848 = vunpack.c.l.s4 1983009808
        %v2849 = vunpack.c.0.s8 %v2848
        %v2850 = vlaneseq
        %v2851 = vshrl.u32 %v2850, 7
        %v2852 = vsub.s32 %v2849, %v2851
        %v2853 = vrot.slane %v2008, %v2852
        %v2855 = vunpack.c.l.s4 1983009808
        %v2856 = vunpack.c.0.s8 %v2855
        %v2857 = vlaneseq
        %v2858 = vshrl.u32 %v2857, 7
        %v2859 = vsub.s32 %v2856, %v2858
        %v2860 = vrot.slane %v2846, %v2859
        %v2861 = vcombine.high %v2853, %v2853
        %v2862 = vcombine.high %v2860, %v2860
        %v2863 = vcombine.high %v2011, %v2011
        %v2865 = vunpack.c.l.s4 1983009808
        %v2866 = vunpack.c.0.s8 %v2865
        %v2867 = vlaneseq
        %v2868 = vshrl.u32 %v2867, 7
        %v2869 = vsub.s32 %v2866, %v2868
        %v2870 = vrot.slane %v2011, %v2869
        %v2872 = vunpack.c.l.s4 1983009808
        %v2873 = vunpack.c.0.s8 %v2872
        %v2874 = vlaneseq
        %v2875 = vshrl.u32 %v2874, 7
        %v2876 = vsub.s32 %v2873, %v2875
        %v2877 = vrot.slane %v2863, %v2876
        %v2878 = vcombine.high %v2870, %v2870
        %v2879 = vcombine.high %v2877, %v2877
        %v2880 = vcombine.high %v2014, %v2014
        %v2882 = vunpack.c.l.s4 1983009808
        %v2883 = vunpack.c.0.s8 %v2882
        %v2884 = vlaneseq
        %v2885 = vshrl.u32 %v2884, 7
        %v2886 = vsub.s32 %v2883, %v2885
        %v2887 = vrot.slane %v2014, %v2886
        %v2889 = vunpack.c.l.s4 1983009808
        %v2890 = vunpack.c.0.s8 %v2889
        %v2891 = vlaneseq
        %v2892 = vshrl.u32 %v2891, 7
        %v2893 = vsub.s32 %v2890, %v2892
        %v2894 = vrot.slane %v2880, %v2893
        %v2895 = vcombine.high %v2887, %v2887
        %v2896 = vcombine.high %v2894, %v2894
        %v2897 = vcombine.high %v2017, %v2017
        %v2899 = vunpack.c.l.s4 1983009808
        %v2900 = vunpack.c.0.s8 %v2899
        %v2901 = vlaneseq
        %v2902 = vshrl.u32 %v2901, 7
        %v2903 = vsub.s32 %v2900, %v2902
        %v2904 = vrot.slane %v2017, %v2903
        %v2906 = vunpack.c.l.s4 1983009808
        %v2907 = vunpack.c.0.s8 %v2906
        %v2908 = vlaneseq
        %v2909 = vshrl.u32 %v2908, 7
        %v2910 = vsub.s32 %v2907, %v2909
        %v2911 = vrot.slane %v2897, %v2910
        %v2912 = vcombine.high %v2904, %v2904
        %v2913 = vcombine.high %v2911, %v2911
        %v2914 = vcombine.high %v2020, %v2020
        %v2916 = vunpack.c.l.s4 1983009808
        %v2917 = vunpack.c.0.s8 %v2916
        %v2918 = vlaneseq
        %v2919 = vshrl.u32 %v2918, 7
        %v2920 = vsub.s32 %v2917, %v2919
        %v2921 = vrot.slane %v2020, %v2920
        %v2923 = vunpack.c.l.s4 1983009808
        %v2924 = vunpack.c.0.s8 %v2923
        %v2925 = vlaneseq
        %v2926 = vshrl.u32 %v2925, 7
        %v2927 = vsub.s32 %v2924, %v2926
        %v2928 = vrot.slane %v2914, %v2927
        %v2929 = vcombine.high %v2921, %v2921
        %v2930 = vcombine.high %v2928, %v2928
        %v2931 = vcombine.high %v2023, %v2023
        %v2933 = vunpack.c.l.s4 1983009808
        %v2934 = vunpack.c.0.s8 %v2933
        %v2935 = vlaneseq
        %v2936 = vshrl.u32 %v2935, 7
        %v2937 = vsub.s32 %v2934, %v2936
        %v2938 = vrot.slane %v2023, %v2937
        %v2940 = vunpack.c.l.s4 1983009808
        %v2941 = vunpack.c.0.s8 %v2940
        %v2942 = vlaneseq
        %v2943 = vshrl.u32 %v2942, 7
        %v2944 = vsub.s32 %v2941, %v2943
        %v2945 = vrot.slane %v2931, %v2944
        %v2946 = vcombine.high %v2938, %v2938
        %v2947 = vcombine.high %v2945, %v2945
        %v2948 = vcombine.high %v2026, %v2026
        %v2950 = vunpack.c.l.s4 1983009808
        %v2951 = vunpack.c.0.s8 %v2950
        %v2952 = vlaneseq
        %v2953 = vshrl.u32 %v2952, 7
        %v2954 = vsub.s32 %v2951, %v2953
        %v2955 = vrot.slane %v2026, %v2954
        %v2957 = vunpack.c.l.s4 1983009808
        %v2958 = vunpack.c.0.s8 %v2957
        %v2959 = vlaneseq
        %v2960 = vshrl.u32 %v2959, 7
        %v2961 = vsub.s32 %v2958, %v2960
        %v2962 = vrot.slane %v2948, %v2961
        %v2963 = vcombine.high %v2955, %v2955
        %v2964 = vcombine.high %v2962, %v2962
        %v2965 = vcombine.high %v2029, %v2029
        %v2967 = vunpack.c.l.s4 1983009808
        %v2968 = vunpack.c.0.s8 %v2967
        %v2969 = vlaneseq
        %v2970 = vshrl.u32 %v2969, 7
        %v2971 = vsub.s32 %v2968, %v2970
        %v2972 = vrot.slane %v2029, %v2971
        %v2974 = vunpack.c.l.s4 1983009808
        %v2975 = vunpack.c.0.s8 %v2974
        %v2976 = vlaneseq
        %v2977 = vshrl.u32 %v2976, 7
        %v2978 = vsub.s32 %v2975, %v2977
        %v2979 = vrot.slane %v2965, %v2978
        %v2980 = vcombine.high %v2972, %v2972
        %v2981 = vcombine.high %v2979, %v2979
        %v2982 = vcombine.high %v2032, %v2032
        %v2984 = vunpack.c.l.s4 1983009808
        %v2985 = vunpack.c.0.s8 %v2984
        %v2986 = vlaneseq
        %v2987 = vshrl.u32 %v2986, 7
        %v2988 = vsub.s32 %v2985, %v2987
        %v2989 = vrot.slane %v2032, %v2988
        %v2991 = vunpack.c.l.s4 1983009808
        %v2992 = vunpack.c.0.s8 %v2991
        %v2993 = vlaneseq
        %v2994 = vshrl.u32 %v2993, 7
        %v2995 = vsub.s32 %v2992, %v2994
        %v2996 = vrot.slane %v2982, %v2995
        %v2997 = vcombine.high %v2989, %v2989
        %v2998 = vcombine.high %v2996, %v2996
        %v2999 = vcombine.high %v2035, %v2035
        %v3001 = vunpack.c.l.s4 1983009808
        %v3002 = vunpack.c.0.s8 %v3001
        %v3003 = vlaneseq
        %v3004 = vshrl.u32 %v3003, 7
        %v3005 = vsub.s32 %v3002, %v3004
        %v3006 = vrot.slane %v2035, %v3005
        %v3008 = vunpack.c.l.s4 1983009808
        %v3009 = vunpack.c.0.s8 %v3008
        %v3010 = vlaneseq
        %v3011 = vshrl.u32 %v3010, 7
        %v3012 = vsub.s32 %v3009, %v3011
        %v3013 = vrot.slane %v2999, %v3012
        %v3014 = vcombine.high %v3006, %v3006
        %v3015 = vcombine.high %v3013, %v3013
        %v3016 = vcombine.high %v2038, %v2038
        %v3018 = vunpack.c.l.s4 1983009808
        %v3019 = vunpack.c.0.s8 %v3018
        %v3020 = vlaneseq
        %v3021 = vshrl.u32 %v3020, 7
        %v3022 = vsub.s32 %v3019, %v3021
        %v3023 = vrot.slane %v2038, %v3022
        %v3025 = vunpack.c.l.s4 1983009808
        %v3026 = vunpack.c.0.s8 %v3025
        %v3027 = vlaneseq
        %v3028 = vshrl.u32 %v3027, 7
        %v3029 = vsub.s32 %v3026, %v3028
        %v3030 = vrot.slane %v3016, %v3029
        %v3031 = vcombine.high %v3023, %v3023
        %v3032 = vcombine.high %v3030, %v3030
        %v3033 = vcombine.high %v2041, %v2041
        %v3035 = vunpack.c.l.s4 1983009808
        %v3036 = vunpack.c.0.s8 %v3035
        %v3037 = vlaneseq
        %v3038 = vshrl.u32 %v3037, 7
        %v3039 = vsub.s32 %v3036, %v3038
        %v3040 = vrot.slane %v2041, %v3039
        %v3042 = vunpack.c.l.s4 1983009808
        %v3043 = vunpack.c.0.s8 %v3042
        %v3044 = vlaneseq
        %v3045 = vshrl.u32 %v3044, 7
        %v3046 = vsub.s32 %v3043, %v3045
        %v3047 = vrot.slane %v3033, %v3046
        %v3048 = vcombine.high %v3040, %v3040
        %v3049 = vcombine.high %v3047, %v3047
        %vm3274 = vcmask 648192
        %v3275 = vsel %vm3274, %v2105, -inf
        %v3276 = vrot.slane %v3275, 4
        %v3277 = vmax.f32 %v3275, %v3276
        %v3278 = vrot.slane %v3277, 2
        %v3279 = vmax.f32 %v3277, %v3278
        %v3280 = vrot.slane %v3279, 1
        %v3281 = vmax.f32 %v3279, %v3280
        %v3282 = vsel %vm3274, %v2113, -inf
        %v3283 = vrot.slane %v3282, 4
        %v3284 = vmax.f32 %v3282, %v3283
        %v3285 = vrot.slane %v3284, 2
        %v3286 = vmax.f32 %v3284, %v3285
        %v3287 = vrot.slane %v3286, 1
        %v3288 = vmax.f32 %v3286, %v3287
        %v3289 = vsel %vm3274, %v2112, -inf
        %v3290 = vrot.slane %v3289, 4
        %v3291 = vmax.f32 %v3289, %v3290
        %v3292 = vrot.slane %v3291, 2
        %v3293 = vmax.f32 %v3291, %v3292
        %v3294 = vrot.slane %v3293, 1
        %v3295 = vmax.f32 %v3293, %v3294
        %v3296 = vsel %vm3274, %v2114, -inf
        %v3297 = vrot.slane %v3296, 4
        %v3298 = vmax.f32 %v3296, %v3297
        %v3299 = vrot.slane %v3298, 2
        %v3300 = vmax.f32 %v3298, %v3299
        %v3301 = vrot.slane %v3300, 1
        %v3302 = vmax.f32 %v3300, %v3301
        %v3303 = vsel %vm3274, %v2122, -inf
        %v3304 = vrot.slane %v3303, 4
        %v3305 = vmax.f32 %v3303, %v3304
        %v3306 = vrot.slane %v3305, 2
        %v3307 = vmax.f32 %v3305, %v3306
        %v3308 = vrot.slane %v3307, 1
        %v3309 = vmax.f32 %v3307, %v3308
        %v3310 = vsel %vm3274, %v2130, -inf
        %v3311 = vrot.slane %v3310, 4
        %v3312 = vmax.f32 %v3310, %v3311
        %v3313 = vrot.slane %v3312, 2
        %v3314 = vmax.f32 %v3312, %v3313
        %v3315 = vrot.slane %v3314, 1
        %v3316 = vmax.f32 %v3314, %v3315
        %v3317 = vsel %vm3274, %v2129, -inf
        %v3318 = vrot.slane %v3317, 4
        %v3319 = vmax.f32 %v3317, %v3318
        %v3320 = vrot.slane %v3319, 2
        %v3321 = vmax.f32 %v3319, %v3320
        %v3322 = vrot.slane %v3321, 1
        %v3323 = vmax.f32 %v3321, %v3322
        %v3324 = vsel %vm3274, %v2131, -inf
        %v3325 = vrot.slane %v3324, 4
        %v3326 = vmax.f32 %v3324, %v3325
        %v3327 = vrot.slane %v3326, 2
        %v3328 = vmax.f32 %v3326, %v3327
        %v3329 = vrot.slane %v3328, 1
        %v3330 = vmax.f32 %v3328, %v3329
        %v3331 = vsel %vm3274, %v2139, -inf
        %v3332 = vrot.slane %v3331, 4
        %v3333 = vmax.f32 %v3331, %v3332
        %v3334 = vrot.slane %v3333, 2
        %v3335 = vmax.f32 %v3333, %v3334
        %v3336 = vrot.slane %v3335, 1
        %v3337 = vmax.f32 %v3335, %v3336
        %v3338 = vsel %vm3274, %v2147, -inf
        %v3339 = vrot.slane %v3338, 4
        %v3340 = vmax.f32 %v3338, %v3339
        %v3341 = vrot.slane %v3340, 2
        %v3342 = vmax.f32 %v3340, %v3341
        %v3343 = vrot.slane %v3342, 1
        %v3344 = vmax.f32 %v3342, %v3343
        %v3345 = vsel %vm3274, %v2146, -inf
        %v3346 = vrot.slane %v3345, 4
        %v3347 = vmax.f32 %v3345, %v3346
        %v3348 = vrot.slane %v3347, 2
        %v3349 = vmax.f32 %v3347, %v3348
        %v3350 = vrot.slane %v3349, 1
        %v3351 = vmax.f32 %v3349, %v3350
        %v3352 = vsel %vm3274, %v2148, -inf
        %v3353 = vrot.slane %v3352, 4
        %v3354 = vmax.f32 %v3352, %v3353
        %v3355 = vrot.slane %v3354, 2
        %v3356 = vmax.f32 %v3354, %v3355
        %v3357 = vrot.slane %v3356, 1
        %v3358 = vmax.f32 %v3356, %v3357
        %v3359 = vsel %vm3274, %v2156, -inf
        %v3360 = vrot.slane %v3359, 4
        %v3361 = vmax.f32 %v3359, %v3360
        %v3362 = vrot.slane %v3361, 2
        %v3363 = vmax.f32 %v3361, %v3362
        %v3364 = vrot.slane %v3363, 1
        %v3365 = vmax.f32 %v3363, %v3364
        %v3366 = vsel %vm3274, %v2164, -inf
        %v3367 = vrot.slane %v3366, 4
        %v3368 = vmax.f32 %v3366, %v3367
        %v3369 = vrot.slane %v3368, 2
        %v3370 = vmax.f32 %v3368, %v3369
        %v3371 = vrot.slane %v3370, 1
        %v3372 = vmax.f32 %v3370, %v3371
        %v3373 = vsel %vm3274, %v2163, -inf
        %v3374 = vrot.slane %v3373, 4
        %v3375 = vmax.f32 %v3373, %v3374
        %v3376 = vrot.slane %v3375, 2
        %v3377 = vmax.f32 %v3375, %v3376
        %v3378 = vrot.slane %v3377, 1
        %v3379 = vmax.f32 %v3377, %v3378
        %v3380 = vsel %vm3274, %v2165, -inf
        %v3381 = vrot.slane %v3380, 4
        %v3382 = vmax.f32 %v3380, %v3381
        %v3383 = vrot.slane %v3382, 2
        %v3384 = vmax.f32 %v3382, %v3383
        %v3385 = vrot.slane %v3384, 1
        %v3386 = vmax.f32 %v3384, %v3385
        %v3387 = vsel %vm3274, %v2173, -inf
        %v3388 = vrot.slane %v3387, 4
        %v3389 = vmax.f32 %v3387, %v3388
        %v3390 = vrot.slane %v3389, 2
        %v3391 = vmax.f32 %v3389, %v3390
        %v3392 = vrot.slane %v3391, 1
        %v3393 = vmax.f32 %v3391, %v3392
        %v3394 = vsel %vm3274, %v2181, -inf
        %v3395 = vrot.slane %v3394, 4
        %v3396 = vmax.f32 %v3394, %v3395
        %v3397 = vrot.slane %v3396, 2
        %v3398 = vmax.f32 %v3396, %v3397
        %v3399 = vrot.slane %v3398, 1
        %v3400 = vmax.f32 %v3398, %v3399
        %v3401 = vsel %vm3274, %v2180, -inf
        %v3402 = vrot.slane %v3401, 4
        %v3403 = vmax.f32 %v3401, %v3402
        %v3404 = vrot.slane %v3403, 2
        %v3405 = vmax.f32 %v3403, %v3404
        %v3406 = vrot.slane %v3405, 1
        %v3407 = vmax.f32 %v3405, %v3406
        %v3408 = vsel %vm3274, %v2182, -inf
        %v3409 = vrot.slane %v3408, 4
        %v3410 = vmax.f32 %v3408, %v3409
        %v3411 = vrot.slane %v3410, 2
        %v3412 = vmax.f32 %v3410, %v3411
        %v3413 = vrot.slane %v3412, 1
        %v3414 = vmax.f32 %v3412, %v3413
        %v3415 = vsel %vm3274, %v2190, -inf
        %v3416 = vrot.slane %v3415, 4
        %v3417 = vmax.f32 %v3415, %v3416
        %v3418 = vrot.slane %v3417, 2
        %v3419 = vmax.f32 %v3417, %v3418
        %v3420 = vrot.slane %v3419, 1
        %v3421 = vmax.f32 %v3419, %v3420
        %v3422 = vsel %vm3274, %v2198, -inf
        %v3423 = vrot.slane %v3422, 4
        %v3424 = vmax.f32 %v3422, %v3423
        %v3425 = vrot.slane %v3424, 2
        %v3426 = vmax.f32 %v3424, %v3425
        %v3427 = vrot.slane %v3426, 1
        %v3428 = vmax.f32 %v3426, %v3427
        %v3429 = vsel %vm3274, %v2197, -inf
        %v3430 = vrot.slane %v3429, 4
        %v3431 = vmax.f32 %v3429, %v3430
        %v3432 = vrot.slane %v3431, 2
        %v3433 = vmax.f32 %v3431, %v3432
        %v3434 = vrot.slane %v3433, 1
        %v3435 = vmax.f32 %v3433, %v3434
        %v3436 = vsel %vm3274, %v2199, -inf
        %v3437 = vrot.slane %v3436, 4
        %v3438 = vmax.f32 %v3436, %v3437
        %v3439 = vrot.slane %v3438, 2
        %v3440 = vmax.f32 %v3438, %v3439
        %v3441 = vrot.slane %v3440, 1
        %v3442 = vmax.f32 %v3440, %v3441
        %v3443 = vsel %vm3274, %v2207, -inf
        %v3444 = vrot.slane %v3443, 4
        %v3445 = vmax.f32 %v3443, %v3444
        %v3446 = vrot.slane %v3445, 2
        %v3447 = vmax.f32 %v3445, %v3446
        %v3448 = vrot.slane %v3447, 1
        %v3449 = vmax.f32 %v3447, %v3448
        %v3450 = vsel %vm3274, %v2215, -inf
        %v3451 = vrot.slane %v3450, 4
        %v3452 = vmax.f32 %v3450, %v3451
        %v3453 = vrot.slane %v3452, 2
        %v3454 = vmax.f32 %v3452, %v3453
        %v3455 = vrot.slane %v3454, 1
        %v3456 = vmax.f32 %v3454, %v3455
        %v3457 = vsel %vm3274, %v2214, -inf
        %v3458 = vrot.slane %v3457, 4
        %v3459 = vmax.f32 %v3457, %v3458
        %v3460 = vrot.slane %v3459, 2
        %v3461 = vmax.f32 %v3459, %v3460
        %v3462 = vrot.slane %v3461, 1
        %v3463 = vmax.f32 %v3461, %v3462
        %v3464 = vsel %vm3274, %v2216, -inf
        %v3465 = vrot.slane %v3464, 4
        %v3466 = vmax.f32 %v3464, %v3465
        %v3467 = vrot.slane %v3466, 2
        %v3468 = vmax.f32 %v3466, %v3467
        %v3469 = vrot.slane %v3468, 1
        %v3470 = vmax.f32 %v3468, %v3469
        %v3471 = vsel %vm3274, %v2224, -inf
        %v3472 = vrot.slane %v3471, 4
        %v3473 = vmax.f32 %v3471, %v3472
        %v3474 = vrot.slane %v3473, 2
        %v3475 = vmax.f32 %v3473, %v3474
        %v3476 = vrot.slane %v3475, 1
        %v3477 = vmax.f32 %v3475, %v3476
        %v3478 = vsel %vm3274, %v2232, -inf
        %v3479 = vrot.slane %v3478, 4
        %v3480 = vmax.f32 %v3478, %v3479
        %v3481 = vrot.slane %v3480, 2
        %v3482 = vmax.f32 %v3480, %v3481
        %v3483 = vrot.slane %v3482, 1
        %v3484 = vmax.f32 %v3482, %v3483
        %v3485 = vsel %vm3274, %v2231, -inf
        %v3486 = vrot.slane %v3485, 4
        %v3487 = vmax.f32 %v3485, %v3486
        %v3488 = vrot.slane %v3487, 2
        %v3489 = vmax.f32 %v3487, %v3488
        %v3490 = vrot.slane %v3489, 1
        %v3491 = vmax.f32 %v3489, %v3490
        %v3492 = vsel %vm3274, %v2233, -inf
        %v3493 = vrot.slane %v3492, 4
        %v3494 = vmax.f32 %v3492, %v3493
        %v3495 = vrot.slane %v3494, 2
        %v3496 = vmax.f32 %v3494, %v3495
        %v3497 = vrot.slane %v3496, 1
        %v3498 = vmax.f32 %v3496, %v3497
        %v3499 = vsel %vm3274, %v2241, -inf
        %v3500 = vrot.slane %v3499, 4
        %v3501 = vmax.f32 %v3499, %v3500
        %v3502 = vrot.slane %v3501, 2
        %v3503 = vmax.f32 %v3501, %v3502
        %v3504 = vrot.slane %v3503, 1
        %v3505 = vmax.f32 %v3503, %v3504
        %v3506 = vsel %vm3274, %v2249, -inf
        %v3507 = vrot.slane %v3506, 4
        %v3508 = vmax.f32 %v3506, %v3507
        %v3509 = vrot.slane %v3508, 2
        %v3510 = vmax.f32 %v3508, %v3509
        %v3511 = vrot.slane %v3510, 1
        %v3512 = vmax.f32 %v3510, %v3511
        %v3513 = vsel %vm3274, %v2248, -inf
        %v3514 = vrot.slane %v3513, 4
        %v3515 = vmax.f32 %v3513, %v3514
        %v3516 = vrot.slane %v3515, 2
        %v3517 = vmax.f32 %v3515, %v3516
        %v3518 = vrot.slane %v3517, 1
        %v3519 = vmax.f32 %v3517, %v3518
        %v3520 = vsel %vm3274, %v2250, -inf
        %v3521 = vrot.slane %v3520, 4
        %v3522 = vmax.f32 %v3520, %v3521
        %v3523 = vrot.slane %v3522, 2
        %v3524 = vmax.f32 %v3522, %v3523
        %v3525 = vrot.slane %v3524, 1
        %v3526 = vmax.f32 %v3524, %v3525
        %v3527 = vsel %vm3274, %v2258, -inf
        %v3528 = vrot.slane %v3527, 4
        %v3529 = vmax.f32 %v3527, %v3528
        %v3530 = vrot.slane %v3529, 2
        %v3531 = vmax.f32 %v3529, %v3530
        %v3532 = vrot.slane %v3531, 1
        %v3533 = vmax.f32 %v3531, %v3532
        %v3534 = vsel %vm3274, %v2266, -inf
        %v3535 = vrot.slane %v3534, 4
        %v3536 = vmax.f32 %v3534, %v3535
        %v3537 = vrot.slane %v3536, 2
        %v3538 = vmax.f32 %v3536, %v3537
        %v3539 = vrot.slane %v3538, 1
        %v3540 = vmax.f32 %v3538, %v3539
        %v3541 = vsel %vm3274, %v2265, -inf
        %v3542 = vrot.slane %v3541, 4
        %v3543 = vmax.f32 %v3541, %v3542
        %v3544 = vrot.slane %v3543, 2
        %v3545 = vmax.f32 %v3543, %v3544
        %v3546 = vrot.slane %v3545, 1
        %v3547 = vmax.f32 %v3545, %v3546
        %v3548 = vsel %vm3274, %v2267, -inf
        %v3549 = vrot.slane %v3548, 4
        %v3550 = vmax.f32 %v3548, %v3549
        %v3551 = vrot.slane %v3550, 2
        %v3552 = vmax.f32 %v3550, %v3551
        %v3553 = vrot.slane %v3552, 1
        %v3554 = vmax.f32 %v3552, %v3553
        %v3555 = vsel %vm3274, %v2275, -inf
        %v3556 = vrot.slane %v3555, 4
        %v3557 = vmax.f32 %v3555, %v3556
        %v3558 = vrot.slane %v3557, 2
        %v3559 = vmax.f32 %v3557, %v3558
        %v3560 = vrot.slane %v3559, 1
        %v3561 = vmax.f32 %v3559, %v3560
        %v3562 = vsel %vm3274, %v2283, -inf
        %v3563 = vrot.slane %v3562, 4
        %v3564 = vmax.f32 %v3562, %v3563
        %v3565 = vrot.slane %v3564, 2
        %v3566 = vmax.f32 %v3564, %v3565
        %v3567 = vrot.slane %v3566, 1
        %v3568 = vmax.f32 %v3566, %v3567
        %v3569 = vsel %vm3274, %v2282, -inf
        %v3570 = vrot.slane %v3569, 4
        %v3571 = vmax.f32 %v3569, %v3570
        %v3572 = vrot.slane %v3571, 2
        %v3573 = vmax.f32 %v3571, %v3572
        %v3574 = vrot.slane %v3573, 1
        %v3575 = vmax.f32 %v3573, %v3574
        %v3576 = vsel %vm3274, %v2284, -inf
        %v3577 = vrot.slane %v3576, 4
        %v3578 = vmax.f32 %v3576, %v3577
        %v3579 = vrot.slane %v3578, 2
        %v3580 = vmax.f32 %v3578, %v3579
        %v3581 = vrot.slane %v3580, 1
        %v3582 = vmax.f32 %v3580, %v3581
        %v3583 = vsel %vm3274, %v2292, -inf
        %v3584 = vrot.slane %v3583, 4
        %v3585 = vmax.f32 %v3583, %v3584
        %v3586 = vrot.slane %v3585, 2
        %v3587 = vmax.f32 %v3585, %v3586
        %v3588 = vrot.slane %v3587, 1
        %v3589 = vmax.f32 %v3587, %v3588
        %v3590 = vsel %vm3274, %v2300, -inf
        %v3591 = vrot.slane %v3590, 4
        %v3592 = vmax.f32 %v3590, %v3591
        %v3593 = vrot.slane %v3592, 2
        %v3594 = vmax.f32 %v3592, %v3593
        %v3595 = vrot.slane %v3594, 1
        %v3596 = vmax.f32 %v3594, %v3595
        %v3597 = vsel %vm3274, %v2299, -inf
        %v3598 = vrot.slane %v3597, 4
        %v3599 = vmax.f32 %v3597, %v3598
        %v3600 = vrot.slane %v3599, 2
        %v3601 = vmax.f32 %v3599, %v3600
        %v3602 = vrot.slane %v3601, 1
        %v3603 = vmax.f32 %v3601, %v3602
        %v3604 = vsel %vm3274, %v2301, -inf
        %v3605 = vrot.slane %v3604, 4
        %v3606 = vmax.f32 %v3604, %v3605
        %v3607 = vrot.slane %v3606, 2
        %v3608 = vmax.f32 %v3606, %v3607
        %v3609 = vrot.slane %v3608, 1
        %v3610 = vmax.f32 %v3608, %v3609
        %v3611 = vsel %vm3274, %v2309, -inf
        %v3612 = vrot.slane %v3611, 4
        %v3613 = vmax.f32 %v3611, %v3612
        %v3614 = vrot.slane %v3613, 2
        %v3615 = vmax.f32 %v3613, %v3614
        %v3616 = vrot.slane %v3615, 1
        %v3617 = vmax.f32 %v3615, %v3616
        %v3618 = vsel %vm3274, %v2317, -inf
        %v3619 = vrot.slane %v3618, 4
        %v3620 = vmax.f32 %v3618, %v3619
        %v3621 = vrot.slane %v3620, 2
        %v3622 = vmax.f32 %v3620, %v3621
        %v3623 = vrot.slane %v3622, 1
        %v3624 = vmax.f32 %v3622, %v3623
        %v3625 = vsel %vm3274, %v2316, -inf
        %v3626 = vrot.slane %v3625, 4
        %v3627 = vmax.f32 %v3625, %v3626
        %v3628 = vrot.slane %v3627, 2
        %v3629 = vmax.f32 %v3627, %v3628
        %v3630 = vrot.slane %v3629, 1
        %v3631 = vmax.f32 %v3629, %v3630
        %v3632 = vsel %vm3274, %v2318, -inf
        %v3633 = vrot.slane %v3632, 4
        %v3634 = vmax.f32 %v3632, %v3633
        %v3635 = vrot.slane %v3634, 2
        %v3636 = vmax.f32 %v3634, %v3635
        %v3637 = vrot.slane %v3636, 1
        %v3638 = vmax.f32 %v3636, %v3637
        %v3639 = vsel %vm3274, %v2326, -inf
        %v3640 = vrot.slane %v3639, 4
        %v3641 = vmax.f32 %v3639, %v3640
        %v3642 = vrot.slane %v3641, 2
        %v3643 = vmax.f32 %v3641, %v3642
        %v3644 = vrot.slane %v3643, 1
        %v3645 = vmax.f32 %v3643, %v3644
        %v3646 = vsel %vm3274, %v2334, -inf
        %v3647 = vrot.slane %v3646, 4
        %v3648 = vmax.f32 %v3646, %v3647
        %v3649 = vrot.slane %v3648, 2
        %v3650 = vmax.f32 %v3648, %v3649
        %v3651 = vrot.slane %v3650, 1
        %v3652 = vmax.f32 %v3650, %v3651
        %v3653 = vsel %vm3274, %v2333, -inf
        %v3654 = vrot.slane %v3653, 4
        %v3655 = vmax.f32 %v3653, %v3654
        %v3656 = vrot.slane %v3655, 2
        %v3657 = vmax.f32 %v3655, %v3656
        %v3658 = vrot.slane %v3657, 1
        %v3659 = vmax.f32 %v3657, %v3658
        %v3660 = vsel %vm3274, %v2335, -inf
        %v3661 = vrot.slane %v3660, 4
        %v3662 = vmax.f32 %v3660, %v3661
        %v3663 = vrot.slane %v3662, 2
        %v3664 = vmax.f32 %v3662, %v3663
        %v3665 = vrot.slane %v3664, 1
        %v3666 = vmax.f32 %v3664, %v3665
        %v3667 = vsel %vm3274, %v2343, -inf
        %v3668 = vrot.slane %v3667, 4
        %v3669 = vmax.f32 %v3667, %v3668
        %v3670 = vrot.slane %v3669, 2
        %v3671 = vmax.f32 %v3669, %v3670
        %v3672 = vrot.slane %v3671, 1
        %v3673 = vmax.f32 %v3671, %v3672
        %v3674 = vsel %vm3274, %v2351, -inf
        %v3675 = vrot.slane %v3674, 4
        %v3676 = vmax.f32 %v3674, %v3675
        %v3677 = vrot.slane %v3676, 2
        %v3678 = vmax.f32 %v3676, %v3677
        %v3679 = vrot.slane %v3678, 1
        %v3680 = vmax.f32 %v3678, %v3679
        %v3681 = vsel %vm3274, %v2350, -inf
        %v3682 = vrot.slane %v3681, 4
        %v3683 = vmax.f32 %v3681, %v3682
        %v3684 = vrot.slane %v3683, 2
        %v3685 = vmax.f32 %v3683, %v3684
        %v3686 = vrot.slane %v3685, 1
        %v3687 = vmax.f32 %v3685, %v3686
        %v3688 = vsel %vm3274, %v2352, -inf
        %v3689 = vrot.slane %v3688, 4
        %v3690 = vmax.f32 %v3688, %v3689
        %v3691 = vrot.slane %v3690, 2
        %v3692 = vmax.f32 %v3690, %v3691
        %v3693 = vrot.slane %v3692, 1
        %v3694 = vmax.f32 %v3692, %v3693
        %v3695 = vsel %vm3274, %v2360, -inf
        %v3696 = vrot.slane %v3695, 4
        %v3697 = vmax.f32 %v3695, %v3696
        %v3698 = vrot.slane %v3697, 2
        %v3699 = vmax.f32 %v3697, %v3698
        %v3700 = vrot.slane %v3699, 1
        %v3701 = vmax.f32 %v3699, %v3700
        %v3702 = vsel %vm3274, %v2368, -inf
        %v3703 = vrot.slane %v3702, 4
        %v3704 = vmax.f32 %v3702, %v3703
        %v3705 = vrot.slane %v3704, 2
        %v3706 = vmax.f32 %v3704, %v3705
        %v3707 = vrot.slane %v3706, 1
        %v3708 = vmax.f32 %v3706, %v3707
        %v3709 = vsel %vm3274, %v2367, -inf
        %v3710 = vrot.slane %v3709, 4
        %v3711 = vmax.f32 %v3709, %v3710
        %v3712 = vrot.slane %v3711, 2
        %v3713 = vmax.f32 %v3711, %v3712
        %v3714 = vrot.slane %v3713, 1
        %v3715 = vmax.f32 %v3713, %v3714
        %v3716 = vsel %vm3274, %v2369, -inf
        %v3717 = vrot.slane %v3716, 4
        %v3718 = vmax.f32 %v3716, %v3717
        %v3719 = vrot.slane %v3718, 2
        %v3720 = vmax.f32 %v3718, %v3719
        %v3721 = vrot.slane %v3720, 1
        %v3722 = vmax.f32 %v3720, %v3721
        %v3723 = vsel %vm3274, %v2377, -inf
        %v3724 = vrot.slane %v3723, 4
        %v3725 = vmax.f32 %v3723, %v3724
        %v3726 = vrot.slane %v3725, 2
        %v3727 = vmax.f32 %v3725, %v3726
        %v3728 = vrot.slane %v3727, 1
        %v3729 = vmax.f32 %v3727, %v3728
        %v3730 = vsel %vm3274, %v2385, -inf
        %v3731 = vrot.slane %v3730, 4
        %v3732 = vmax.f32 %v3730, %v3731
        %v3733 = vrot.slane %v3732, 2
        %v3734 = vmax.f32 %v3732, %v3733
        %v3735 = vrot.slane %v3734, 1
        %v3736 = vmax.f32 %v3734, %v3735
        %v3737 = vsel %vm3274, %v2384, -inf
        %v3738 = vrot.slane %v3737, 4
        %v3739 = vmax.f32 %v3737, %v3738
        %v3740 = vrot.slane %v3739, 2
        %v3741 = vmax.f32 %v3739, %v3740
        %v3742 = vrot.slane %v3741, 1
        %v3743 = vmax.f32 %v3741, %v3742
        %v3744 = vsel %vm3274, %v2386, -inf
        %v3745 = vrot.slane %v3744, 4
        %v3746 = vmax.f32 %v3744, %v3745
        %v3747 = vrot.slane %v3746, 2
        %v3748 = vmax.f32 %v3746, %v3747
        %v3749 = vrot.slane %v3748, 1
        %v3750 = vmax.f32 %v3748, %v3749
        %v3751 = vsel %vm3274, %v2394, -inf
        %v3752 = vrot.slane %v3751, 4
        %v3753 = vmax.f32 %v3751, %v3752
        %v3754 = vrot.slane %v3753, 2
        %v3755 = vmax.f32 %v3753, %v3754
        %v3756 = vrot.slane %v3755, 1
        %v3757 = vmax.f32 %v3755, %v3756
        %v3758 = vsel %vm3274, %v2402, -inf
        %v3759 = vrot.slane %v3758, 4
        %v3760 = vmax.f32 %v3758, %v3759
        %v3761 = vrot.slane %v3760, 2
        %v3762 = vmax.f32 %v3760, %v3761
        %v3763 = vrot.slane %v3762, 1
        %v3764 = vmax.f32 %v3762, %v3763
        %v3765 = vsel %vm3274, %v2401, -inf
        %v3766 = vrot.slane %v3765, 4
        %v3767 = vmax.f32 %v3765, %v3766
        %v3768 = vrot.slane %v3767, 2
        %v3769 = vmax.f32 %v3767, %v3768
        %v3770 = vrot.slane %v3769, 1
        %v3771 = vmax.f32 %v3769, %v3770
        %v3772 = vsel %vm3274, %v2403, -inf
        %v3773 = vrot.slane %v3772, 4
        %v3774 = vmax.f32 %v3772, %v3773
        %v3775 = vrot.slane %v3774, 2
        %v3776 = vmax.f32 %v3774, %v3775
        %v3777 = vrot.slane %v3776, 1
        %v3778 = vmax.f32 %v3776, %v3777
        %v3779 = vsel %vm3274, %v2411, -inf
        %v3780 = vrot.slane %v3779, 4
        %v3781 = vmax.f32 %v3779, %v3780
        %v3782 = vrot.slane %v3781, 2
        %v3783 = vmax.f32 %v3781, %v3782
        %v3784 = vrot.slane %v3783, 1
        %v3785 = vmax.f32 %v3783, %v3784
        %v3786 = vsel %vm3274, %v2419, -inf
        %v3787 = vrot.slane %v3786, 4
        %v3788 = vmax.f32 %v3786, %v3787
        %v3789 = vrot.slane %v3788, 2
        %v3790 = vmax.f32 %v3788, %v3789
        %v3791 = vrot.slane %v3790, 1
        %v3792 = vmax.f32 %v3790, %v3791
        %v3793 = vsel %vm3274, %v2418, -inf
        %v3794 = vrot.slane %v3793, 4
        %v3795 = vmax.f32 %v3793, %v3794
        %v3796 = vrot.slane %v3795, 2
        %v3797 = vmax.f32 %v3795, %v3796
        %v3798 = vrot.slane %v3797, 1
        %v3799 = vmax.f32 %v3797, %v3798
        %v3800 = vsel %vm3274, %v2420, -inf
        %v3801 = vrot.slane %v3800, 4
        %v3802 = vmax.f32 %v3800, %v3801
        %v3803 = vrot.slane %v3802, 2
        %v3804 = vmax.f32 %v3802, %v3803
        %v3805 = vrot.slane %v3804, 1
        %v3806 = vmax.f32 %v3804, %v3805
        %v3807 = vsel %vm3274, %v2428, -inf
        %v3808 = vrot.slane %v3807, 4
        %v3809 = vmax.f32 %v3807, %v3808
        %v3810 = vrot.slane %v3809, 2
        %v3811 = vmax.f32 %v3809, %v3810
        %v3812 = vrot.slane %v3811, 1
        %v3813 = vmax.f32 %v3811, %v3812
        %v3814 = vsel %vm3274, %v2436, -inf
        %v3815 = vrot.slane %v3814, 4
        %v3816 = vmax.f32 %v3814, %v3815
        %v3817 = vrot.slane %v3816, 2
        %v3818 = vmax.f32 %v3816, %v3817
        %v3819 = vrot.slane %v3818, 1
        %v3820 = vmax.f32 %v3818, %v3819
        %v3821 = vsel %vm3274, %v2435, -inf
        %v3822 = vrot.slane %v3821, 4
        %v3823 = vmax.f32 %v3821, %v3822
        %v3824 = vrot.slane %v3823, 2
        %v3825 = vmax.f32 %v3823, %v3824
        %v3826 = vrot.slane %v3825, 1
        %v3827 = vmax.f32 %v3825, %v3826
        %v3828 = vsel %vm3274, %v2437, -inf
        %v3829 = vrot.slane %v3828, 4
        %v3830 = vmax.f32 %v3828, %v3829
        %v3831 = vrot.slane %v3830, 2
        %v3832 = vmax.f32 %v3830, %v3831
        %v3833 = vrot.slane %v3832, 1
        %v3834 = vmax.f32 %v3832, %v3833
        %v3835 = vsel %vm3274, %v2445, -inf
        %v3836 = vrot.slane %v3835, 4
        %v3837 = vmax.f32 %v3835, %v3836
        %v3838 = vrot.slane %v3837, 2
        %v3839 = vmax.f32 %v3837, %v3838
        %v3840 = vrot.slane %v3839, 1
        %v3841 = vmax.f32 %v3839, %v3840
        %v3842 = vsel %vm3274, %v2453, -inf
        %v3843 = vrot.slane %v3842, 4
        %v3844 = vmax.f32 %v3842, %v3843
        %v3845 = vrot.slane %v3844, 2
        %v3846 = vmax.f32 %v3844, %v3845
        %v3847 = vrot.slane %v3846, 1
        %v3848 = vmax.f32 %v3846, %v3847
        %v3849 = vsel %vm3274, %v2452, -inf
        %v3850 = vrot.slane %v3849, 4
        %v3851 = vmax.f32 %v3849, %v3850
        %v3852 = vrot.slane %v3851, 2
        %v3853 = vmax.f32 %v3851, %v3852
        %v3854 = vrot.slane %v3853, 1
        %v3855 = vmax.f32 %v3853, %v3854
        %v3856 = vsel %vm3274, %v2454, -inf
        %v3857 = vrot.slane %v3856, 4
        %v3858 = vmax.f32 %v3856, %v3857
        %v3859 = vrot.slane %v3858, 2
        %v3860 = vmax.f32 %v3858, %v3859
        %v3861 = vrot.slane %v3860, 1
        %v3862 = vmax.f32 %v3860, %v3861
        %v3863 = vsel %vm3274, %v2462, -inf
        %v3864 = vrot.slane %v3863, 4
        %v3865 = vmax.f32 %v3863, %v3864
        %v3866 = vrot.slane %v3865, 2
        %v3867 = vmax.f32 %v3865, %v3866
        %v3868 = vrot.slane %v3867, 1
        %v3869 = vmax.f32 %v3867, %v3868
        %v3870 = vsel %vm3274, %v2470, -inf
        %v3871 = vrot.slane %v3870, 4
        %v3872 = vmax.f32 %v3870, %v3871
        %v3873 = vrot.slane %v3872, 2
        %v3874 = vmax.f32 %v3872, %v3873
        %v3875 = vrot.slane %v3874, 1
        %v3876 = vmax.f32 %v3874, %v3875
        %v3877 = vsel %vm3274, %v2469, -inf
        %v3878 = vrot.slane %v3877, 4
        %v3879 = vmax.f32 %v3877, %v3878
        %v3880 = vrot.slane %v3879, 2
        %v3881 = vmax.f32 %v3879, %v3880
        %v3882 = vrot.slane %v3881, 1
        %v3883 = vmax.f32 %v3881, %v3882
        %v3884 = vsel %vm3274, %v2471, -inf
        %v3885 = vrot.slane %v3884, 4
        %v3886 = vmax.f32 %v3884, %v3885
        %v3887 = vrot.slane %v3886, 2
        %v3888 = vmax.f32 %v3886, %v3887
        %v3889 = vrot.slane %v3888, 1
        %v3890 = vmax.f32 %v3888, %v3889
        %v3891 = vsel %vm3274, %v2479, -inf
        %v3892 = vrot.slane %v3891, 4
        %v3893 = vmax.f32 %v3891, %v3892
        %v3894 = vrot.slane %v3893, 2
        %v3895 = vmax.f32 %v3893, %v3894
        %v3896 = vrot.slane %v3895, 1
        %v3897 = vmax.f32 %v3895, %v3896
        %v3898 = vsel %vm3274, %v2487, -inf
        %v3899 = vrot.slane %v3898, 4
        %v3900 = vmax.f32 %v3898, %v3899
        %v3901 = vrot.slane %v3900, 2
        %v3902 = vmax.f32 %v3900, %v3901
        %v3903 = vrot.slane %v3902, 1
        %v3904 = vmax.f32 %v3902, %v3903
        %v3905 = vsel %vm3274, %v2486, -inf
        %v3906 = vrot.slane %v3905, 4
        %v3907 = vmax.f32 %v3905, %v3906
        %v3908 = vrot.slane %v3907, 2
        %v3909 = vmax.f32 %v3907, %v3908
        %v3910 = vrot.slane %v3909, 1
        %v3911 = vmax.f32 %v3909, %v3910
        %v3912 = vsel %vm3274, %v2488, -inf
        %v3913 = vrot.slane %v3912, 4
        %v3914 = vmax.f32 %v3912, %v3913
        %v3915 = vrot.slane %v3914, 2
        %v3916 = vmax.f32 %v3914, %v3915
        %v3917 = vrot.slane %v3916, 1
        %v3918 = vmax.f32 %v3916, %v3917
        %v3919 = vsel %vm3274, %v2496, -inf
        %v3920 = vrot.slane %v3919, 4
        %v3921 = vmax.f32 %v3919, %v3920
        %v3922 = vrot.slane %v3921, 2
        %v3923 = vmax.f32 %v3921, %v3922
        %v3924 = vrot.slane %v3923, 1
        %v3925 = vmax.f32 %v3923, %v3924
        %v3926 = vsel %vm3274, %v2504, -inf
        %v3927 = vrot.slane %v3926, 4
        %v3928 = vmax.f32 %v3926, %v3927
        %v3929 = vrot.slane %v3928, 2
        %v3930 = vmax.f32 %v3928, %v3929
        %v3931 = vrot.slane %v3930, 1
        %v3932 = vmax.f32 %v3930, %v3931
        %v3933 = vsel %vm3274, %v2503, -inf
        %v3934 = vrot.slane %v3933, 4
        %v3935 = vmax.f32 %v3933, %v3934
        %v3936 = vrot.slane %v3935, 2
        %v3937 = vmax.f32 %v3935, %v3936
        %v3938 = vrot.slane %v3937, 1
        %v3939 = vmax.f32 %v3937, %v3938
        %v3940 = vsel %vm3274, %v2505, -inf
        %v3941 = vrot.slane %v3940, 4
        %v3942 = vmax.f32 %v3940, %v3941
        %v3943 = vrot.slane %v3942, 2
        %v3944 = vmax.f32 %v3942, %v3943
        %v3945 = vrot.slane %v3944, 1
        %v3946 = vmax.f32 %v3944, %v3945
        %v3947 = vsel %vm3274, %v2513, -inf
        %v3948 = vrot.slane %v3947, 4
        %v3949 = vmax.f32 %v3947, %v3948
        %v3950 = vrot.slane %v3949, 2
        %v3951 = vmax.f32 %v3949, %v3950
        %v3952 = vrot.slane %v3951, 1
        %v3953 = vmax.f32 %v3951, %v3952
        %v3954 = vsel %vm3274, %v2521, -inf
        %v3955 = vrot.slane %v3954, 4
        %v3956 = vmax.f32 %v3954, %v3955
        %v3957 = vrot.slane %v3956, 2
        %v3958 = vmax.f32 %v3956, %v3957
        %v3959 = vrot.slane %v3958, 1
        %v3960 = vmax.f32 %v3958, %v3959
        %v3961 = vsel %vm3274, %v2520, -inf
        %v3962 = vrot.slane %v3961, 4
        %v3963 = vmax.f32 %v3961, %v3962
        %v3964 = vrot.slane %v3963, 2
        %v3965 = vmax.f32 %v3963, %v3964
        %v3966 = vrot.slane %v3965, 1
        %v3967 = vmax.f32 %v3965, %v3966
        %v3968 = vsel %vm3274, %v2522, -inf
        %v3969 = vrot.slane %v3968, 4
        %v3970 = vmax.f32 %v3968, %v3969
        %v3971 = vrot.slane %v3970, 2
        %v3972 = vmax.f32 %v3970, %v3971
        %v3973 = vrot.slane %v3972, 1
        %v3974 = vmax.f32 %v3972, %v3973
        %v3975 = vsel %vm3274, %v2530, -inf
        %v3976 = vrot.slane %v3975, 4
        %v3977 = vmax.f32 %v3975, %v3976
        %v3978 = vrot.slane %v3977, 2
        %v3979 = vmax.f32 %v3977, %v3978
        %v3980 = vrot.slane %v3979, 1
        %v3981 = vmax.f32 %v3979, %v3980
        %v3982 = vsel %vm3274, %v2538, -inf
        %v3983 = vrot.slane %v3982, 4
        %v3984 = vmax.f32 %v3982, %v3983
        %v3985 = vrot.slane %v3984, 2
        %v3986 = vmax.f32 %v3984, %v3985
        %v3987 = vrot.slane %v3986, 1
        %v3988 = vmax.f32 %v3986, %v3987
        %v3989 = vsel %vm3274, %v2537, -inf
        %v3990 = vrot.slane %v3989, 4
        %v3991 = vmax.f32 %v3989, %v3990
        %v3992 = vrot.slane %v3991, 2
        %v3993 = vmax.f32 %v3991, %v3992
        %v3994 = vrot.slane %v3993, 1
        %v3995 = vmax.f32 %v3993, %v3994
        %v3996 = vsel %vm3274, %v2539, -inf
        %v3997 = vrot.slane %v3996, 4
        %v3998 = vmax.f32 %v3996, %v3997
        %v3999 = vrot.slane %v3998, 2
        %v4000 = vmax.f32 %v3998, %v3999
        %v4001 = vrot.slane %v4000, 1
        %v4002 = vmax.f32 %v4000, %v4001
        %v4003 = vsel %vm3274, %v2547, -inf
        %v4004 = vrot.slane %v4003, 4
        %v4005 = vmax.f32 %v4003, %v4004
        %v4006 = vrot.slane %v4005, 2
        %v4007 = vmax.f32 %v4005, %v4006
        %v4008 = vrot.slane %v4007, 1
        %v4009 = vmax.f32 %v4007, %v4008
        %v4010 = vsel %vm3274, %v2555, -inf
        %v4011 = vrot.slane %v4010, 4
        %v4012 = vmax.f32 %v4010, %v4011
        %v4013 = vrot.slane %v4012, 2
        %v4014 = vmax.f32 %v4012, %v4013
        %v4015 = vrot.slane %v4014, 1
        %v4016 = vmax.f32 %v4014, %v4015
        %v4017 = vsel %vm3274, %v2554, -inf
        %v4018 = vrot.slane %v4017, 4
        %v4019 = vmax.f32 %v4017, %v4018
        %v4020 = vrot.slane %v4019, 2
        %v4021 = vmax.f32 %v4019, %v4020
        %v4022 = vrot.slane %v4021, 1
        %v4023 = vmax.f32 %v4021, %v4022
        %v4024 = vsel %vm3274, %v2556, -inf
        %v4025 = vrot.slane %v4024, 4
        %v4026 = vmax.f32 %v4024, %v4025
        %v4027 = vrot.slane %v4026, 2
        %v4028 = vmax.f32 %v4026, %v4027
        %v4029 = vrot.slane %v4028, 1
        %v4030 = vmax.f32 %v4028, %v4029
        %v4031 = vsel %vm3274, %v2564, -inf
        %v4032 = vrot.slane %v4031, 4
        %v4033 = vmax.f32 %v4031, %v4032
        %v4034 = vrot.slane %v4033, 2
        %v4035 = vmax.f32 %v4033, %v4034
        %v4036 = vrot.slane %v4035, 1
        %v4037 = vmax.f32 %v4035, %v4036
        %v4038 = vsel %vm3274, %v2572, -inf
        %v4039 = vrot.slane %v4038, 4
        %v4040 = vmax.f32 %v4038, %v4039
        %v4041 = vrot.slane %v4040, 2
        %v4042 = vmax.f32 %v4040, %v4041
        %v4043 = vrot.slane %v4042, 1
        %v4044 = vmax.f32 %v4042, %v4043
        %v4045 = vsel %vm3274, %v2571, -inf
        %v4046 = vrot.slane %v4045, 4
        %v4047 = vmax.f32 %v4045, %v4046
        %v4048 = vrot.slane %v4047, 2
        %v4049 = vmax.f32 %v4047, %v4048
        %v4050 = vrot.slane %v4049, 1
        %v4051 = vmax.f32 %v4049, %v4050
        %v4052 = vsel %vm3274, %v2573, -inf
        %v4053 = vrot.slane %v4052, 4
        %v4054 = vmax.f32 %v4052, %v4053
        %v4055 = vrot.slane %v4054, 2
        %v4056 = vmax.f32 %v4054, %v4055
        %v4057 = vrot.slane %v4056, 1
        %v4058 = vmax.f32 %v4056, %v4057
        %v4059 = vsel %vm3274, %v2581, -inf
        %v4060 = vrot.slane %v4059, 4
        %v4061 = vmax.f32 %v4059, %v4060
        %v4062 = vrot.slane %v4061, 2
        %v4063 = vmax.f32 %v4061, %v4062
        %v4064 = vrot.slane %v4063, 1
        %v4065 = vmax.f32 %v4063, %v4064
        %v4066 = vsel %vm3274, %v2589, -inf
        %v4067 = vrot.slane %v4066, 4
        %v4068 = vmax.f32 %v4066, %v4067
        %v4069 = vrot.slane %v4068, 2
        %v4070 = vmax.f32 %v4068, %v4069
        %v4071 = vrot.slane %v4070, 1
        %v4072 = vmax.f32 %v4070, %v4071
        %v4073 = vsel %vm3274, %v2588, -inf
        %v4074 = vrot.slane %v4073, 4
        %v4075 = vmax.f32 %v4073, %v4074
        %v4076 = vrot.slane %v4075, 2
        %v4077 = vmax.f32 %v4075, %v4076
        %v4078 = vrot.slane %v4077, 1
        %v4079 = vmax.f32 %v4077, %v4078
        %v4080 = vsel %vm3274, %v2590, -inf
        %v4081 = vrot.slane %v4080, 4
        %v4082 = vmax.f32 %v4080, %v4081
        %v4083 = vrot.slane %v4082, 2
        %v4084 = vmax.f32 %v4082, %v4083
        %v4085 = vrot.slane %v4084, 1
        %v4086 = vmax.f32 %v4084, %v4085
        %v4087 = vsel %vm3274, %v2598, -inf
        %v4088 = vrot.slane %v4087, 4
        %v4089 = vmax.f32 %v4087, %v4088
        %v4090 = vrot.slane %v4089, 2
        %v4091 = vmax.f32 %v4089, %v4090
        %v4092 = vrot.slane %v4091, 1
        %v4093 = vmax.f32 %v4091, %v4092
        %v4094 = vsel %vm3274, %v2606, -inf
        %v4095 = vrot.slane %v4094, 4
        %v4096 = vmax.f32 %v4094, %v4095
        %v4097 = vrot.slane %v4096, 2
        %v4098 = vmax.f32 %v4096, %v4097
        %v4099 = vrot.slane %v4098, 1
        %v4100 = vmax.f32 %v4098, %v4099
        %v4101 = vsel %vm3274, %v2605, -inf
        %v4102 = vrot.slane %v4101, 4
        %v4103 = vmax.f32 %v4101, %v4102
        %v4104 = vrot.slane %v4103, 2
        %v4105 = vmax.f32 %v4103, %v4104
        %v4106 = vrot.slane %v4105, 1
        %v4107 = vmax.f32 %v4105, %v4106
        %v4108 = vsel %vm3274, %v2607, -inf
        %v4109 = vrot.slane %v4108, 4
        %v4110 = vmax.f32 %v4108, %v4109
        %v4111 = vrot.slane %v4110, 2
        %v4112 = vmax.f32 %v4110, %v4111
        %v4113 = vrot.slane %v4112, 1
        %v4114 = vmax.f32 %v4112, %v4113
        %v4115 = vsel %vm3274, %v2615, -inf
        %v4116 = vrot.slane %v4115, 4
        %v4117 = vmax.f32 %v4115, %v4116
        %v4118 = vrot.slane %v4117, 2
        %v4119 = vmax.f32 %v4117, %v4118
        %v4120 = vrot.slane %v4119, 1
        %v4121 = vmax.f32 %v4119, %v4120
        %v4122 = vsel %vm3274, %v2623, -inf
        %v4123 = vrot.slane %v4122, 4
        %v4124 = vmax.f32 %v4122, %v4123
        %v4125 = vrot.slane %v4124, 2
        %v4126 = vmax.f32 %v4124, %v4125
        %v4127 = vrot.slane %v4126, 1
        %v4128 = vmax.f32 %v4126, %v4127
        %v4129 = vsel %vm3274, %v2622, -inf
        %v4130 = vrot.slane %v4129, 4
        %v4131 = vmax.f32 %v4129, %v4130
        %v4132 = vrot.slane %v4131, 2
        %v4133 = vmax.f32 %v4131, %v4132
        %v4134 = vrot.slane %v4133, 1
        %v4135 = vmax.f32 %v4133, %v4134
        %v4136 = vsel %vm3274, %v2624, -inf
        %v4137 = vrot.slane %v4136, 4
        %v4138 = vmax.f32 %v4136, %v4137
        %v4139 = vrot.slane %v4138, 2
        %v4140 = vmax.f32 %v4138, %v4139
        %v4141 = vrot.slane %v4140, 1
        %v4142 = vmax.f32 %v4140, %v4141
        %v4143 = vsel %vm3274, %v2632, -inf
        %v4144 = vrot.slane %v4143, 4
        %v4145 = vmax.f32 %v4143, %v4144
        %v4146 = vrot.slane %v4145, 2
        %v4147 = vmax.f32 %v4145, %v4146
        %v4148 = vrot.slane %v4147, 1
        %v4149 = vmax.f32 %v4147, %v4148
        %v4150 = vsel %vm3274, %v2640, -inf
        %v4151 = vrot.slane %v4150, 4
        %v4152 = vmax.f32 %v4150, %v4151
        %v4153 = vrot.slane %v4152, 2
        %v4154 = vmax.f32 %v4152, %v4153
        %v4155 = vrot.slane %v4154, 1
        %v4156 = vmax.f32 %v4154, %v4155
        %v4157 = vsel %vm3274, %v2639, -inf
        %v4158 = vrot.slane %v4157, 4
        %v4159 = vmax.f32 %v4157, %v4158
        %v4160 = vrot.slane %v4159, 2
        %v4161 = vmax.f32 %v4159, %v4160
        %v4162 = vrot.slane %v4161, 1
        %v4163 = vmax.f32 %v4161, %v4162
        %v4164 = vsel %vm3274, %v2641, -inf
        %v4165 = vrot.slane %v4164, 4
        %v4166 = vmax.f32 %v4164, %v4165
        %v4167 = vrot.slane %v4166, 2
        %v4168 = vmax.f32 %v4166, %v4167
        %v4169 = vrot.slane %v4168, 1
        %v4170 = vmax.f32 %v4168, %v4169
        %v4171 = vsel %vm3274, %v2649, -inf
        %v4172 = vrot.slane %v4171, 4
        %v4173 = vmax.f32 %v4171, %v4172
        %v4174 = vrot.slane %v4173, 2
        %v4175 = vmax.f32 %v4173, %v4174
        %v4176 = vrot.slane %v4175, 1
        %v4177 = vmax.f32 %v4175, %v4176
        %v4178 = vsel %vm3274, %v2657, -inf
        %v4179 = vrot.slane %v4178, 4
        %v4180 = vmax.f32 %v4178, %v4179
        %v4181 = vrot.slane %v4180, 2
        %v4182 = vmax.f32 %v4180, %v4181
        %v4183 = vrot.slane %v4182, 1
        %v4184 = vmax.f32 %v4182, %v4183
        %v4185 = vsel %vm3274, %v2656, -inf
        %v4186 = vrot.slane %v4185, 4
        %v4187 = vmax.f32 %v4185, %v4186
        %v4188 = vrot.slane %v4187, 2
        %v4189 = vmax.f32 %v4187, %v4188
        %v4190 = vrot.slane %v4189, 1
        %v4191 = vmax.f32 %v4189, %v4190
        %v4192 = vsel %vm3274, %v2658, -inf
        %v4193 = vrot.slane %v4192, 4
        %v4194 = vmax.f32 %v4192, %v4193
        %v4195 = vrot.slane %v4194, 2
        %v4196 = vmax.f32 %v4194, %v4195
        %v4197 = vrot.slane %v4196, 1
        %v4198 = vmax.f32 %v4196, %v4197
        %v4199 = vsel %vm3274, %v2666, -inf
        %v4200 = vrot.slane %v4199, 4
        %v4201 = vmax.f32 %v4199, %v4200
        %v4202 = vrot.slane %v4201, 2
        %v4203 = vmax.f32 %v4201, %v4202
        %v4204 = vrot.slane %v4203, 1
        %v4205 = vmax.f32 %v4203, %v4204
        %v4206 = vsel %vm3274, %v2674, -inf
        %v4207 = vrot.slane %v4206, 4
        %v4208 = vmax.f32 %v4206, %v4207
        %v4209 = vrot.slane %v4208, 2
        %v4210 = vmax.f32 %v4208, %v4209
        %v4211 = vrot.slane %v4210, 1
        %v4212 = vmax.f32 %v4210, %v4211
        %v4213 = vsel %vm3274, %v2673, -inf
        %v4214 = vrot.slane %v4213, 4
        %v4215 = vmax.f32 %v4213, %v4214
        %v4216 = vrot.slane %v4215, 2
        %v4217 = vmax.f32 %v4215, %v4216
        %v4218 = vrot.slane %v4217, 1
        %v4219 = vmax.f32 %v4217, %v4218
        %v4220 = vsel %vm3274, %v2675, -inf
        %v4221 = vrot.slane %v4220, 4
        %v4222 = vmax.f32 %v4220, %v4221
        %v4223 = vrot.slane %v4222, 2
        %v4224 = vmax.f32 %v4222, %v4223
        %v4225 = vrot.slane %v4224, 1
        %v4226 = vmax.f32 %v4224, %v4225
        %v4227 = vsel %vm3274, %v2683, -inf
        %v4228 = vrot.slane %v4227, 4
        %v4229 = vmax.f32 %v4227, %v4228
        %v4230 = vrot.slane %v4229, 2
        %v4231 = vmax.f32 %v4229, %v4230
        %v4232 = vrot.slane %v4231, 1
        %v4233 = vmax.f32 %v4231, %v4232
        %v4234 = vsel %vm3274, %v2691, -inf
        %v4235 = vrot.slane %v4234, 4
        %v4236 = vmax.f32 %v4234, %v4235
        %v4237 = vrot.slane %v4236, 2
        %v4238 = vmax.f32 %v4236, %v4237
        %v4239 = vrot.slane %v4238, 1
        %v4240 = vmax.f32 %v4238, %v4239
        %v4241 = vsel %vm3274, %v2690, -inf
        %v4242 = vrot.slane %v4241, 4
        %v4243 = vmax.f32 %v4241, %v4242
        %v4244 = vrot.slane %v4243, 2
        %v4245 = vmax.f32 %v4243, %v4244
        %v4246 = vrot.slane %v4245, 1
        %v4247 = vmax.f32 %v4245, %v4246
        %v4248 = vsel %vm3274, %v2692, -inf
        %v4249 = vrot.slane %v4248, 4
        %v4250 = vmax.f32 %v4248, %v4249
        %v4251 = vrot.slane %v4250, 2
        %v4252 = vmax.f32 %v4250, %v4251
        %v4253 = vrot.slane %v4252, 1
        %v4254 = vmax.f32 %v4252, %v4253
        %v4255 = vsel %vm3274, %v2700, -inf
        %v4256 = vrot.slane %v4255, 4
        %v4257 = vmax.f32 %v4255, %v4256
        %v4258 = vrot.slane %v4257, 2
        %v4259 = vmax.f32 %v4257, %v4258
        %v4260 = vrot.slane %v4259, 1
        %v4261 = vmax.f32 %v4259, %v4260
        %v4262 = vsel %vm3274, %v2708, -inf
        %v4263 = vrot.slane %v4262, 4
        %v4264 = vmax.f32 %v4262, %v4263
        %v4265 = vrot.slane %v4264, 2
        %v4266 = vmax.f32 %v4264, %v4265
        %v4267 = vrot.slane %v4266, 1
        %v4268 = vmax.f32 %v4266, %v4267
        %v4269 = vsel %vm3274, %v2707, -inf
        %v4270 = vrot.slane %v4269, 4
        %v4271 = vmax.f32 %v4269, %v4270
        %v4272 = vrot.slane %v4271, 2
        %v4273 = vmax.f32 %v4271, %v4272
        %v4274 = vrot.slane %v4273, 1
        %v4275 = vmax.f32 %v4273, %v4274
        %v4276 = vsel %vm3274, %v2709, -inf
        %v4277 = vrot.slane %v4276, 4
        %v4278 = vmax.f32 %v4276, %v4277
        %v4279 = vrot.slane %v4278, 2
        %v4280 = vmax.f32 %v4278, %v4279
        %v4281 = vrot.slane %v4280, 1
        %v4282 = vmax.f32 %v4280, %v4281
        %v4283 = vsel %vm3274, %v2717, -inf
        %v4284 = vrot.slane %v4283, 4
        %v4285 = vmax.f32 %v4283, %v4284
        %v4286 = vrot.slane %v4285, 2
        %v4287 = vmax.f32 %v4285, %v4286
        %v4288 = vrot.slane %v4287, 1
        %v4289 = vmax.f32 %v4287, %v4288
        %v4290 = vsel %vm3274, %v2725, -inf
        %v4291 = vrot.slane %v4290, 4
        %v4292 = vmax.f32 %v4290, %v4291
        %v4293 = vrot.slane %v4292, 2
        %v4294 = vmax.f32 %v4292, %v4293
        %v4295 = vrot.slane %v4294, 1
        %v4296 = vmax.f32 %v4294, %v4295
        %v4297 = vsel %vm3274, %v2724, -inf
        %v4298 = vrot.slane %v4297, 4
        %v4299 = vmax.f32 %v4297, %v4298
        %v4300 = vrot.slane %v4299, 2
        %v4301 = vmax.f32 %v4299, %v4300
        %v4302 = vrot.slane %v4301, 1
        %v4303 = vmax.f32 %v4301, %v4302
        %v4304 = vsel %vm3274, %v2726, -inf
        %v4305 = vrot.slane %v4304, 4
        %v4306 = vmax.f32 %v4304, %v4305
        %v4307 = vrot.slane %v4306, 2
        %v4308 = vmax.f32 %v4306, %v4307
        %v4309 = vrot.slane %v4308, 1
        %v4310 = vmax.f32 %v4308, %v4309
        %v4311 = vsel %vm3274, %v2734, -inf
        %v4312 = vrot.slane %v4311, 4
        %v4313 = vmax.f32 %v4311, %v4312
        %v4314 = vrot.slane %v4313, 2
        %v4315 = vmax.f32 %v4313, %v4314
        %v4316 = vrot.slane %v4315, 1
        %v4317 = vmax.f32 %v4315, %v4316
        %v4318 = vsel %vm3274, %v2742, -inf
        %v4319 = vrot.slane %v4318, 4
        %v4320 = vmax.f32 %v4318, %v4319
        %v4321 = vrot.slane %v4320, 2
        %v4322 = vmax.f32 %v4320, %v4321
        %v4323 = vrot.slane %v4322, 1
        %v4324 = vmax.f32 %v4322, %v4323
        %v4325 = vsel %vm3274, %v2741, -inf
        %v4326 = vrot.slane %v4325, 4
        %v4327 = vmax.f32 %v4325, %v4326
        %v4328 = vrot.slane %v4327, 2
        %v4329 = vmax.f32 %v4327, %v4328
        %v4330 = vrot.slane %v4329, 1
        %v4331 = vmax.f32 %v4329, %v4330
        %v4332 = vsel %vm3274, %v2743, -inf
        %v4333 = vrot.slane %v4332, 4
        %v4334 = vmax.f32 %v4332, %v4333
        %v4335 = vrot.slane %v4334, 2
        %v4336 = vmax.f32 %v4334, %v4335
        %v4337 = vrot.slane %v4336, 1
        %v4338 = vmax.f32 %v4336, %v4337
        %v4339 = vsel %vm3274, %v2751, -inf
        %v4340 = vrot.slane %v4339, 4
        %v4341 = vmax.f32 %v4339, %v4340
        %v4342 = vrot.slane %v4341, 2
        %v4343 = vmax.f32 %v4341, %v4342
        %v4344 = vrot.slane %v4343, 1
        %v4345 = vmax.f32 %v4343, %v4344
        %v4346 = vsel %vm3274, %v2759, -inf
        %v4347 = vrot.slane %v4346, 4
        %v4348 = vmax.f32 %v4346, %v4347
        %v4349 = vrot.slane %v4348, 2
        %v4350 = vmax.f32 %v4348, %v4349
        %v4351 = vrot.slane %v4350, 1
        %v4352 = vmax.f32 %v4350, %v4351
        %v4353 = vsel %vm3274, %v2758, -inf
        %v4354 = vrot.slane %v4353, 4
        %v4355 = vmax.f32 %v4353, %v4354
        %v4356 = vrot.slane %v4355, 2
        %v4357 = vmax.f32 %v4355, %v4356
        %v4358 = vrot.slane %v4357, 1
        %v4359 = vmax.f32 %v4357, %v4358
        %v4360 = vsel %vm3274, %v2760, -inf
        %v4361 = vrot.slane %v4360, 4
        %v4362 = vmax.f32 %v4360, %v4361
        %v4363 = vrot.slane %v4362, 2
        %v4364 = vmax.f32 %v4362, %v4363
        %v4365 = vrot.slane %v4364, 1
        %v4366 = vmax.f32 %v4364, %v4365
        %v4367 = vsel %vm3274, %v2768, -inf
        %v4368 = vrot.slane %v4367, 4
        %v4369 = vmax.f32 %v4367, %v4368
        %v4370 = vrot.slane %v4369, 2
        %v4371 = vmax.f32 %v4369, %v4370
        %v4372 = vrot.slane %v4371, 1
        %v4373 = vmax.f32 %v4371, %v4372
        %v4374 = vsel %vm3274, %v2776, -inf
        %v4375 = vrot.slane %v4374, 4
        %v4376 = vmax.f32 %v4374, %v4375
        %v4377 = vrot.slane %v4376, 2
        %v4378 = vmax.f32 %v4376, %v4377
        %v4379 = vrot.slane %v4378, 1
        %v4380 = vmax.f32 %v4378, %v4379
        %v4381 = vsel %vm3274, %v2775, -inf
        %v4382 = vrot.slane %v4381, 4
        %v4383 = vmax.f32 %v4381, %v4382
        %v4384 = vrot.slane %v4383, 2
        %v4385 = vmax.f32 %v4383, %v4384
        %v4386 = vrot.slane %v4385, 1
        %v4387 = vmax.f32 %v4385, %v4386
        %v4388 = vsel %vm3274, %v2777, -inf
        %v4389 = vrot.slane %v4388, 4
        %v4390 = vmax.f32 %v4388, %v4389
        %v4391 = vrot.slane %v4390, 2
        %v4392 = vmax.f32 %v4390, %v4391
        %v4393 = vrot.slane %v4392, 1
        %v4394 = vmax.f32 %v4392, %v4393
        %v4395 = vsel %vm3274, %v2785, -inf
        %v4396 = vrot.slane %v4395, 4
        %v4397 = vmax.f32 %v4395, %v4396
        %v4398 = vrot.slane %v4397, 2
        %v4399 = vmax.f32 %v4397, %v4398
        %v4400 = vrot.slane %v4399, 1
        %v4401 = vmax.f32 %v4399, %v4400
        %v4402 = vsel %vm3274, %v2793, -inf
        %v4403 = vrot.slane %v4402, 4
        %v4404 = vmax.f32 %v4402, %v4403
        %v4405 = vrot.slane %v4404, 2
        %v4406 = vmax.f32 %v4404, %v4405
        %v4407 = vrot.slane %v4406, 1
        %v4408 = vmax.f32 %v4406, %v4407
        %v4409 = vsel %vm3274, %v2792, -inf
        %v4410 = vrot.slane %v4409, 4
        %v4411 = vmax.f32 %v4409, %v4410
        %v4412 = vrot.slane %v4411, 2
        %v4413 = vmax.f32 %v4411, %v4412
        %v4414 = vrot.slane %v4413, 1
        %v4415 = vmax.f32 %v4413, %v4414
        %v4416 = vsel %vm3274, %v2794, -inf
        %v4417 = vrot.slane %v4416, 4
        %v4418 = vmax.f32 %v4416, %v4417
        %v4419 = vrot.slane %v4418, 2
        %v4420 = vmax.f32 %v4418, %v4419
        %v4421 = vrot.slane %v4420, 1
        %v4422 = vmax.f32 %v4420, %v4421
        %v4423 = vsel %vm3274, %v2802, -inf
        %v4424 = vrot.slane %v4423, 4
        %v4425 = vmax.f32 %v4423, %v4424
        %v4426 = vrot.slane %v4425, 2
        %v4427 = vmax.f32 %v4425, %v4426
        %v4428 = vrot.slane %v4427, 1
        %v4429 = vmax.f32 %v4427, %v4428
        %v4430 = vsel %vm3274, %v2810, -inf
        %v4431 = vrot.slane %v4430, 4
        %v4432 = vmax.f32 %v4430, %v4431
        %v4433 = vrot.slane %v4432, 2
        %v4434 = vmax.f32 %v4432, %v4433
        %v4435 = vrot.slane %v4434, 1
        %v4436 = vmax.f32 %v4434, %v4435
        %v4437 = vsel %vm3274, %v2809, -inf
        %v4438 = vrot.slane %v4437, 4
        %v4439 = vmax.f32 %v4437, %v4438
        %v4440 = vrot.slane %v4439, 2
        %v4441 = vmax.f32 %v4439, %v4440
        %v4442 = vrot.slane %v4441, 1
        %v4443 = vmax.f32 %v4441, %v4442
        %v4444 = vsel %vm3274, %v2811, -inf
        %v4445 = vrot.slane %v4444, 4
        %v4446 = vmax.f32 %v4444, %v4445
        %v4447 = vrot.slane %v4446, 2
        %v4448 = vmax.f32 %v4446, %v4447
        %v4449 = vrot.slane %v4448, 1
        %v4450 = vmax.f32 %v4448, %v4449
        %v4451 = vsel %vm3274, %v2819, -inf
        %v4452 = vrot.slane %v4451, 4
        %v4453 = vmax.f32 %v4451, %v4452
        %v4454 = vrot.slane %v4453, 2
        %v4455 = vmax.f32 %v4453, %v4454
        %v4456 = vrot.slane %v4455, 1
        %v4457 = vmax.f32 %v4455, %v4456
        %v4458 = vsel %vm3274, %v2827, -inf
        %v4459 = vrot.slane %v4458, 4
        %v4460 = vmax.f32 %v4458, %v4459
        %v4461 = vrot.slane %v4460, 2
        %v4462 = vmax.f32 %v4460, %v4461
        %v4463 = vrot.slane %v4462, 1
        %v4464 = vmax.f32 %v4462, %v4463
        %v4465 = vsel %vm3274, %v2826, -inf
        %v4466 = vrot.slane %v4465, 4
        %v4467 = vmax.f32 %v4465, %v4466
        %v4468 = vrot.slane %v4467, 2
        %v4469 = vmax.f32 %v4467, %v4468
        %v4470 = vrot.slane %v4469, 1
        %v4471 = vmax.f32 %v4469, %v4470
        %v4472 = vsel %vm3274, %v2828, -inf
        %v4473 = vrot.slane %v4472, 4
        %v4474 = vmax.f32 %v4472, %v4473
        %v4475 = vrot.slane %v4474, 2
        %v4476 = vmax.f32 %v4474, %v4475
        %v4477 = vrot.slane %v4476, 1
        %v4478 = vmax.f32 %v4476, %v4477
        %v4479 = vsel %vm3274, %v2836, -inf
        %v4480 = vrot.slane %v4479, 4
        %v4481 = vmax.f32 %v4479, %v4480
        %v4482 = vrot.slane %v4481, 2
        %v4483 = vmax.f32 %v4481, %v4482
        %v4484 = vrot.slane %v4483, 1
        %v4485 = vmax.f32 %v4483, %v4484
        %v4486 = vsel %vm3274, %v2844, -inf
        %v4487 = vrot.slane %v4486, 4
        %v4488 = vmax.f32 %v4486, %v4487
        %v4489 = vrot.slane %v4488, 2
        %v4490 = vmax.f32 %v4488, %v4489
        %v4491 = vrot.slane %v4490, 1
        %v4492 = vmax.f32 %v4490, %v4491
        %v4493 = vsel %vm3274, %v2843, -inf
        %v4494 = vrot.slane %v4493, 4
        %v4495 = vmax.f32 %v4493, %v4494
        %v4496 = vrot.slane %v4495, 2
        %v4497 = vmax.f32 %v4495, %v4496
        %v4498 = vrot.slane %v4497, 1
        %v4499 = vmax.f32 %v4497, %v4498
        %v4500 = vsel %vm3274, %v2845, -inf
        %v4501 = vrot.slane %v4500, 4
        %v4502 = vmax.f32 %v4500, %v4501
        %v4503 = vrot.slane %v4502, 2
        %v4504 = vmax.f32 %v4502, %v4503
        %v4505 = vrot.slane %v4504, 1
        %v4506 = vmax.f32 %v4504, %v4505
        %v4507 = vsel %vm3274, %v2853, -inf
        %v4508 = vrot.slane %v4507, 4
        %v4509 = vmax.f32 %v4507, %v4508
        %v4510 = vrot.slane %v4509, 2
        %v4511 = vmax.f32 %v4509, %v4510
        %v4512 = vrot.slane %v4511, 1
        %v4513 = vmax.f32 %v4511, %v4512
        %v4514 = vsel %vm3274, %v2861, -inf
        %v4515 = vrot.slane %v4514, 4
        %v4516 = vmax.f32 %v4514, %v4515
        %v4517 = vrot.slane %v4516, 2
        %v4518 = vmax.f32 %v4516, %v4517
        %v4519 = vrot.slane %v4518, 1
        %v4520 = vmax.f32 %v4518, %v4519
        %v4521 = vsel %vm3274, %v2860, -inf
        %v4522 = vrot.slane %v4521, 4
        %v4523 = vmax.f32 %v4521, %v4522
        %v4524 = vrot.slane %v4523, 2
        %v4525 = vmax.f32 %v4523, %v4524
        %v4526 = vrot.slane %v4525, 1
        %v4527 = vmax.f32 %v4525, %v4526
        %v4528 = vsel %vm3274, %v2862, -inf
        %v4529 = vrot.slane %v4528, 4
        %v4530 = vmax.f32 %v4528, %v4529
        %v4531 = vrot.slane %v4530, 2
        %v4532 = vmax.f32 %v4530, %v4531
        %v4533 = vrot.slane %v4532, 1
        %v4534 = vmax.f32 %v4532, %v4533
        %v4535 = vsel %vm3274, %v2870, -inf
        %v4536 = vrot.slane %v4535, 4
        %v4537 = vmax.f32 %v4535, %v4536
        %v4538 = vrot.slane %v4537, 2
        %v4539 = vmax.f32 %v4537, %v4538
        %v4540 = vrot.slane %v4539, 1
        %v4541 = vmax.f32 %v4539, %v4540
        %v4542 = vsel %vm3274, %v2878, -inf
        %v4543 = vrot.slane %v4542, 4
        %v4544 = vmax.f32 %v4542, %v4543
        %v4545 = vrot.slane %v4544, 2
        %v4546 = vmax.f32 %v4544, %v4545
        %v4547 = vrot.slane %v4546, 1
        %v4548 = vmax.f32 %v4546, %v4547
        %v4549 = vsel %vm3274, %v2877, -inf
        %v4550 = vrot.slane %v4549, 4
        %v4551 = vmax.f32 %v4549, %v4550
        %v4552 = vrot.slane %v4551, 2
        %v4553 = vmax.f32 %v4551, %v4552
        %v4554 = vrot.slane %v4553, 1
        %v4555 = vmax.f32 %v4553, %v4554
        %v4556 = vsel %vm3274, %v2879, -inf
        %v4557 = vrot.slane %v4556, 4
        %v4558 = vmax.f32 %v4556, %v4557
        %v4559 = vrot.slane %v4558, 2
        %v4560 = vmax.f32 %v4558, %v4559
        %v4561 = vrot.slane %v4560, 1
        %v4562 = vmax.f32 %v4560, %v4561
        %v4563 = vsel %vm3274, %v2887, -inf
        %v4564 = vrot.slane %v4563, 4
        %v4565 = vmax.f32 %v4563, %v4564
        %v4566 = vrot.slane %v4565, 2
        %v4567 = vmax.f32 %v4565, %v4566
        %v4568 = vrot.slane %v4567, 1
        %v4569 = vmax.f32 %v4567, %v4568
        %v4570 = vsel %vm3274, %v2895, -inf
        %v4571 = vrot.slane %v4570, 4
        %v4572 = vmax.f32 %v4570, %v4571
        %v4573 = vrot.slane %v4572, 2
        %v4574 = vmax.f32 %v4572, %v4573
        %v4575 = vrot.slane %v4574, 1
        %v4576 = vmax.f32 %v4574, %v4575
        %v4577 = vsel %vm3274, %v2894, -inf
        %v4578 = vrot.slane %v4577, 4
        %v4579 = vmax.f32 %v4577, %v4578
        %v4580 = vrot.slane %v4579, 2
        %v4581 = vmax.f32 %v4579, %v4580
        %v4582 = vrot.slane %v4581, 1
        %v4583 = vmax.f32 %v4581, %v4582
        %v4584 = vsel %vm3274, %v2896, -inf
        %v4585 = vrot.slane %v4584, 4
        %v4586 = vmax.f32 %v4584, %v4585
        %v4587 = vrot.slane %v4586, 2
        %v4588 = vmax.f32 %v4586, %v4587
        %v4589 = vrot.slane %v4588, 1
        %v4590 = vmax.f32 %v4588, %v4589
        %v4591 = vsel %vm3274, %v2904, -inf
        %v4592 = vrot.slane %v4591, 4
        %v4593 = vmax.f32 %v4591, %v4592
        %v4594 = vrot.slane %v4593, 2
        %v4595 = vmax.f32 %v4593, %v4594
        %v4596 = vrot.slane %v4595, 1
        %v4597 = vmax.f32 %v4595, %v4596
        %v4598 = vsel %vm3274, %v2912, -inf
        %v4599 = vrot.slane %v4598, 4
        %v4600 = vmax.f32 %v4598, %v4599
        %v4601 = vrot.slane %v4600, 2
        %v4602 = vmax.f32 %v4600, %v4601
        %v4603 = vrot.slane %v4602, 1
        %v4604 = vmax.f32 %v4602, %v4603
        %v4605 = vsel %vm3274, %v2911, -inf
        %v4606 = vrot.slane %v4605, 4
        %v4607 = vmax.f32 %v4605, %v4606
        %v4608 = vrot.slane %v4607, 2
        %v4609 = vmax.f32 %v4607, %v4608
        %v4610 = vrot.slane %v4609, 1
        %v4611 = vmax.f32 %v4609, %v4610
        %v4612 = vsel %vm3274, %v2913, -inf
        %v4613 = vrot.slane %v4612, 4
        %v4614 = vmax.f32 %v4612, %v4613
        %v4615 = vrot.slane %v4614, 2
        %v4616 = vmax.f32 %v4614, %v4615
        %v4617 = vrot.slane %v4616, 1
        %v4618 = vmax.f32 %v4616, %v4617
        %v4619 = vsel %vm3274, %v2921, -inf
        %v4620 = vrot.slane %v4619, 4
        %v4621 = vmax.f32 %v4619, %v4620
        %v4622 = vrot.slane %v4621, 2
        %v4623 = vmax.f32 %v4621, %v4622
        %v4624 = vrot.slane %v4623, 1
        %v4625 = vmax.f32 %v4623, %v4624
        %v4626 = vsel %vm3274, %v2929, -inf
        %v4627 = vrot.slane %v4626, 4
        %v4628 = vmax.f32 %v4626, %v4627
        %v4629 = vrot.slane %v4628, 2
        %v4630 = vmax.f32 %v4628, %v4629
        %v4631 = vrot.slane %v4630, 1
        %v4632 = vmax.f32 %v4630, %v4631
        %v4633 = vsel %vm3274, %v2928, -inf
        %v4634 = vrot.slane %v4633, 4
        %v4635 = vmax.f32 %v4633, %v4634
        %v4636 = vrot.slane %v4635, 2
        %v4637 = vmax.f32 %v4635, %v4636
        %v4638 = vrot.slane %v4637, 1
        %v4639 = vmax.f32 %v4637, %v4638
        %v4640 = vsel %vm3274, %v2930, -inf
        %v4641 = vrot.slane %v4640, 4
        %v4642 = vmax.f32 %v4640, %v4641
        %v4643 = vrot.slane %v4642, 2
        %v4644 = vmax.f32 %v4642, %v4643
        %v4645 = vrot.slane %v4644, 1
        %v4646 = vmax.f32 %v4644, %v4645
        %v4647 = vsel %vm3274, %v2938, -inf
        %v4648 = vrot.slane %v4647, 4
        %v4649 = vmax.f32 %v4647, %v4648
        %v4650 = vrot.slane %v4649, 2
        %v4651 = vmax.f32 %v4649, %v4650
        %v4652 = vrot.slane %v4651, 1
        %v4653 = vmax.f32 %v4651, %v4652
        %v4654 = vsel %vm3274, %v2946, -inf
        %v4655 = vrot.slane %v4654, 4
        %v4656 = vmax.f32 %v4654, %v4655
        %v4657 = vrot.slane %v4656, 2
        %v4658 = vmax.f32 %v4656, %v4657
        %v4659 = vrot.slane %v4658, 1
        %v4660 = vmax.f32 %v4658, %v4659
        %v4661 = vsel %vm3274, %v2945, -inf
        %v4662 = vrot.slane %v4661, 4
        %v4663 = vmax.f32 %v4661, %v4662
        %v4664 = vrot.slane %v4663, 2
        %v4665 = vmax.f32 %v4663, %v4664
        %v4666 = vrot.slane %v4665, 1
        %v4667 = vmax.f32 %v4665, %v4666
        %v4668 = vsel %vm3274, %v2947, -inf
        %v4669 = vrot.slane %v4668, 4
        %v4670 = vmax.f32 %v4668, %v4669
        %v4671 = vrot.slane %v4670, 2
        %v4672 = vmax.f32 %v4670, %v4671
        %v4673 = vrot.slane %v4672, 1
        %v4674 = vmax.f32 %v4672, %v4673
        %v4675 = vsel %vm3274, %v2955, -inf
        %v4676 = vrot.slane %v4675, 4
        %v4677 = vmax.f32 %v4675, %v4676
        %v4678 = vrot.slane %v4677, 2
        %v4679 = vmax.f32 %v4677, %v4678
        %v4680 = vrot.slane %v4679, 1
        %v4681 = vmax.f32 %v4679, %v4680
        %v4682 = vsel %vm3274, %v2963, -inf
        %v4683 = vrot.slane %v4682, 4
        %v4684 = vmax.f32 %v4682, %v4683
        %v4685 = vrot.slane %v4684, 2
        %v4686 = vmax.f32 %v4684, %v4685
        %v4687 = vrot.slane %v4686, 1
        %v4688 = vmax.f32 %v4686, %v4687
        %v4689 = vsel %vm3274, %v2962, -inf
        %v4690 = vrot.slane %v4689, 4
        %v4691 = vmax.f32 %v4689, %v4690
        %v4692 = vrot.slane %v4691, 2
        %v4693 = vmax.f32 %v4691, %v4692
        %v4694 = vrot.slane %v4693, 1
        %v4695 = vmax.f32 %v4693, %v4694
        %v4696 = vsel %vm3274, %v2964, -inf
        %v4697 = vrot.slane %v4696, 4
        %v4698 = vmax.f32 %v4696, %v4697
        %v4699 = vrot.slane %v4698, 2
        %v4700 = vmax.f32 %v4698, %v4699
        %v4701 = vrot.slane %v4700, 1
        %v4702 = vmax.f32 %v4700, %v4701
        %v4703 = vsel %vm3274, %v2972, -inf
        %v4704 = vrot.slane %v4703, 4
        %v4705 = vmax.f32 %v4703, %v4704
        %v4706 = vrot.slane %v4705, 2
        %v4707 = vmax.f32 %v4705, %v4706
        %v4708 = vrot.slane %v4707, 1
        %v4709 = vmax.f32 %v4707, %v4708
        %v4710 = vsel %vm3274, %v2980, -inf
        %v4711 = vrot.slane %v4710, 4
        %v4712 = vmax.f32 %v4710, %v4711
        %v4713 = vrot.slane %v4712, 2
        %v4714 = vmax.f32 %v4712, %v4713
        %v4715 = vrot.slane %v4714, 1
        %v4716 = vmax.f32 %v4714, %v4715
        %v4717 = vsel %vm3274, %v2979, -inf
        %v4718 = vrot.slane %v4717, 4
        %v4719 = vmax.f32 %v4717, %v4718
        %v4720 = vrot.slane %v4719, 2
        %v4721 = vmax.f32 %v4719, %v4720
        %v4722 = vrot.slane %v4721, 1
        %v4723 = vmax.f32 %v4721, %v4722
        %v4724 = vsel %vm3274, %v2981, -inf
        %v4725 = vrot.slane %v4724, 4
        %v4726 = vmax.f32 %v4724, %v4725
        %v4727 = vrot.slane %v4726, 2
        %v4728 = vmax.f32 %v4726, %v4727
        %v4729 = vrot.slane %v4728, 1
        %v4730 = vmax.f32 %v4728, %v4729
        %v4731 = vsel %vm3274, %v2989, -inf
        %v4732 = vrot.slane %v4731, 4
        %v4733 = vmax.f32 %v4731, %v4732
        %v4734 = vrot.slane %v4733, 2
        %v4735 = vmax.f32 %v4733, %v4734
        %v4736 = vrot.slane %v4735, 1
        %v4737 = vmax.f32 %v4735, %v4736
        %v4738 = vsel %vm3274, %v2997, -inf
        %v4739 = vrot.slane %v4738, 4
        %v4740 = vmax.f32 %v4738, %v4739
        %v4741 = vrot.slane %v4740, 2
        %v4742 = vmax.f32 %v4740, %v4741
        %v4743 = vrot.slane %v4742, 1
        %v4744 = vmax.f32 %v4742, %v4743
        %v4745 = vsel %vm3274, %v2996, -inf
        %v4746 = vrot.slane %v4745, 4
        %v4747 = vmax.f32 %v4745, %v4746
        %v4748 = vrot.slane %v4747, 2
        %v4749 = vmax.f32 %v4747, %v4748
        %v4750 = vrot.slane %v4749, 1
        %v4751 = vmax.f32 %v4749, %v4750
        %v4752 = vsel %vm3274, %v2998, -inf
        %v4753 = vrot.slane %v4752, 4
        %v4754 = vmax.f32 %v4752, %v4753
        %v4755 = vrot.slane %v4754, 2
        %v4756 = vmax.f32 %v4754, %v4755
        %v4757 = vrot.slane %v4756, 1
        %v4758 = vmax.f32 %v4756, %v4757
        %v4759 = vsel %vm3274, %v3006, -inf
        %v4760 = vrot.slane %v4759, 4
        %v4761 = vmax.f32 %v4759, %v4760
        %v4762 = vrot.slane %v4761, 2
        %v4763 = vmax.f32 %v4761, %v4762
        %v4764 = vrot.slane %v4763, 1
        %v4765 = vmax.f32 %v4763, %v4764
        %v4766 = vsel %vm3274, %v3014, -inf
        %v4767 = vrot.slane %v4766, 4
        %v4768 = vmax.f32 %v4766, %v4767
        %v4769 = vrot.slane %v4768, 2
        %v4770 = vmax.f32 %v4768, %v4769
        %v4771 = vrot.slane %v4770, 1
        %v4772 = vmax.f32 %v4770, %v4771
        %v4773 = vsel %vm3274, %v3013, -inf
        %v4774 = vrot.slane %v4773, 4
        %v4775 = vmax.f32 %v4773, %v4774
        %v4776 = vrot.slane %v4775, 2
        %v4777 = vmax.f32 %v4775, %v4776
        %v4778 = vrot.slane %v4777, 1
        %v4779 = vmax.f32 %v4777, %v4778
        %v4780 = vsel %vm3274, %v3015, -inf
        %v4781 = vrot.slane %v4780, 4
        %v4782 = vmax.f32 %v4780, %v4781
        %v4783 = vrot.slane %v4782, 2
        %v4784 = vmax.f32 %v4782, %v4783
        %v4785 = vrot.slane %v4784, 1
        %v4786 = vmax.f32 %v4784, %v4785
        %v4787 = vsel %vm3274, %v3023, -inf
        %v4788 = vrot.slane %v4787, 4
        %v4789 = vmax.f32 %v4787, %v4788
        %v4790 = vrot.slane %v4789, 2
        %v4791 = vmax.f32 %v4789, %v4790
        %v4792 = vrot.slane %v4791, 1
        %v4793 = vmax.f32 %v4791, %v4792
        %v4794 = vsel %vm3274, %v3031, -inf
        %v4795 = vrot.slane %v4794, 4
        %v4796 = vmax.f32 %v4794, %v4795
        %v4797 = vrot.slane %v4796, 2
        %v4798 = vmax.f32 %v4796, %v4797
        %v4799 = vrot.slane %v4798, 1
        %v4800 = vmax.f32 %v4798, %v4799
        %v4801 = vsel %vm3274, %v3030, -inf
        %v4802 = vrot.slane %v4801, 4
        %v4803 = vmax.f32 %v4801, %v4802
        %v4804 = vrot.slane %v4803, 2
        %v4805 = vmax.f32 %v4803, %v4804
        %v4806 = vrot.slane %v4805, 1
        %v4807 = vmax.f32 %v4805, %v4806
        %v4808 = vsel %vm3274, %v3032, -inf
        %v4809 = vrot.slane %v4808, 4
        %v4810 = vmax.f32 %v4808, %v4809
        %v4811 = vrot.slane %v4810, 2
        %v4812 = vmax.f32 %v4810, %v4811
        %v4813 = vrot.slane %v4812, 1
        %v4814 = vmax.f32 %v4812, %v4813
        %v4815 = vsel %vm3274, %v3040, -inf
        %v4816 = vrot.slane %v4815, 4
        %v4817 = vmax.f32 %v4815, %v4816
        %v4818 = vrot.slane %v4817, 2
        %v4819 = vmax.f32 %v4817, %v4818
        %v4820 = vrot.slane %v4819, 1
        %v4821 = vmax.f32 %v4819, %v4820
        %v4822 = vsel %vm3274, %v3048, -inf
        %v4823 = vrot.slane %v4822, 4
        %v4824 = vmax.f32 %v4822, %v4823
        %v4825 = vrot.slane %v4824, 2
        %v4826 = vmax.f32 %v4824, %v4825
        %v4827 = vrot.slane %v4826, 1
        %v4828 = vmax.f32 %v4826, %v4827
        %v4829 = vsel %vm3274, %v3047, -inf
        %v4830 = vrot.slane %v4829, 4
        %v4831 = vmax.f32 %v4829, %v4830
        %v4832 = vrot.slane %v4831, 2
        %v4833 = vmax.f32 %v4831, %v4832
        %v4834 = vrot.slane %v4833, 1
        %v4835 = vmax.f32 %v4833, %v4834
        %v4836 = vsel %vm3274, %v3049, -inf
        %v4837 = vrot.slane %v4836, 4
        %v4838 = vmax.f32 %v4836, %v4837
        %v4839 = vrot.slane %v4838, 2
        %v4840 = vmax.f32 %v4838, %v4839
        %v4841 = vrot.slane %v4840, 1
        %v4842 = vmax.f32 %v4840, %v4841
        %v4843 = vpack.c.bf16 %v3281, %v3281
        %v4844 = vpack.c.bf16 %v3288, %v3288
        %v4845 = vpack.c.bf16 %v3295, %v3295
        %v4846 = vpack.c.bf16 %v3302, %v3302
        %v4847 = vpack.c.bf16 %v3309, %v3309
        %v4848 = vpack.c.bf16 %v3316, %v3316
        %v4849 = vpack.c.bf16 %v3323, %v3323
        %v4850 = vpack.c.bf16 %v3330, %v3330
        %v4851 = vpack.c.bf16 %v3337, %v3337
        %v4852 = vpack.c.bf16 %v3344, %v3344
        %v4853 = vpack.c.bf16 %v3351, %v3351
        %v4854 = vpack.c.bf16 %v3358, %v3358
        %v4855 = vpack.c.bf16 %v3365, %v3365
        %v4856 = vpack.c.bf16 %v3372, %v3372
        %v4857 = vpack.c.bf16 %v3379, %v3379
        %v4858 = vpack.c.bf16 %v3386, %v3386
        %v4859 = vpack.c.bf16 %v3393, %v3393
        %v4860 = vpack.c.bf16 %v3400, %v3400
        %v4861 = vpack.c.bf16 %v3407, %v3407
        %v4862 = vpack.c.bf16 %v3414, %v3414
        %v4863 = vpack.c.bf16 %v3421, %v3421
        %v4864 = vpack.c.bf16 %v3428, %v3428
        %v4865 = vpack.c.bf16 %v3435, %v3435
        %v4866 = vpack.c.bf16 %v3442, %v3442
        %v4867 = vpack.c.bf16 %v3449, %v3449
        %v4868 = vpack.c.bf16 %v3456, %v3456
        %v4869 = vpack.c.bf16 %v3463, %v3463
        %v4870 = vpack.c.bf16 %v3470, %v3470
        %v4871 = vpack.c.bf16 %v3477, %v3477
        %v4872 = vpack.c.bf16 %v3484, %v3484
        %v4873 = vpack.c.bf16 %v3491, %v3491
        %v4874 = vpack.c.bf16 %v3498, %v3498
        %v4875 = vpack.c.bf16 %v3505, %v3505
        %v4876 = vpack.c.bf16 %v3512, %v3512
        %v4877 = vpack.c.bf16 %v3519, %v3519
        %v4878 = vpack.c.bf16 %v3526, %v3526
        %v4879 = vpack.c.bf16 %v3533, %v3533
        %v4880 = vpack.c.bf16 %v3540, %v3540
        %v4881 = vpack.c.bf16 %v3547, %v3547
        %v4882 = vpack.c.bf16 %v3554, %v3554
        %v4883 = vpack.c.bf16 %v3561, %v3561
        %v4884 = vpack.c.bf16 %v3568, %v3568
        %v4885 = vpack.c.bf16 %v3575, %v3575
        %v4886 = vpack.c.bf16 %v3582, %v3582
        %v4887 = vpack.c.bf16 %v3589, %v3589
        %v4888 = vpack.c.bf16 %v3596, %v3596
        %v4889 = vpack.c.bf16 %v3603, %v3603
        %v4890 = vpack.c.bf16 %v3610, %v3610
        %v4891 = vpack.c.bf16 %v3617, %v3617
        %v4892 = vpack.c.bf16 %v3624, %v3624
        %v4893 = vpack.c.bf16 %v3631, %v3631
        %v4894 = vpack.c.bf16 %v3638, %v3638
        %v4895 = vpack.c.bf16 %v3645, %v3645
        %v4896 = vpack.c.bf16 %v3652, %v3652
        %v4897 = vpack.c.bf16 %v3659, %v3659
        %v4898 = vpack.c.bf16 %v3666, %v3666
        %v4899 = vpack.c.bf16 %v3673, %v3673
        %v4900 = vpack.c.bf16 %v3680, %v3680
        %v4901 = vpack.c.bf16 %v3687, %v3687
        %v4902 = vpack.c.bf16 %v3694, %v3694
        %v4903 = vpack.c.bf16 %v3701, %v3701
        %v4904 = vpack.c.bf16 %v3708, %v3708
        %v4905 = vpack.c.bf16 %v3715, %v3715
        %v4906 = vpack.c.bf16 %v3722, %v3722
        %v4907 = vpack.c.bf16 %v3729, %v3729
        %v4908 = vpack.c.bf16 %v3736, %v3736
        %v4909 = vpack.c.bf16 %v3743, %v3743
        %v4910 = vpack.c.bf16 %v3750, %v3750
        %v4911 = vpack.c.bf16 %v3757, %v3757
        %v4912 = vpack.c.bf16 %v3764, %v3764
        %v4913 = vpack.c.bf16 %v3771, %v3771
        %v4914 = vpack.c.bf16 %v3778, %v3778
        %v4915 = vpack.c.bf16 %v3785, %v3785
        %v4916 = vpack.c.bf16 %v3792, %v3792
        %v4917 = vpack.c.bf16 %v3799, %v3799
        %v4918 = vpack.c.bf16 %v3806, %v3806
        %v4919 = vpack.c.bf16 %v3813, %v3813
        %v4920 = vpack.c.bf16 %v3820, %v3820
        %v4921 = vpack.c.bf16 %v3827, %v3827
        %v4922 = vpack.c.bf16 %v3834, %v3834
        %v4923 = vpack.c.bf16 %v3841, %v3841
        %v4924 = vpack.c.bf16 %v3848, %v3848
        %v4925 = vpack.c.bf16 %v3855, %v3855
        %v4926 = vpack.c.bf16 %v3862, %v3862
        %v4927 = vpack.c.bf16 %v3869, %v3869
        %v4928 = vpack.c.bf16 %v3876, %v3876
        %v4929 = vpack.c.bf16 %v3883, %v3883
        %v4930 = vpack.c.bf16 %v3890, %v3890
        %v4931 = vpack.c.bf16 %v3897, %v3897
        %v4932 = vpack.c.bf16 %v3904, %v3904
        %v4933 = vpack.c.bf16 %v3911, %v3911
        %v4934 = vpack.c.bf16 %v3918, %v3918
        %v4935 = vpack.c.bf16 %v3925, %v3925
        %v4936 = vpack.c.bf16 %v3932, %v3932
        %v4937 = vpack.c.bf16 %v3939, %v3939
        %v4938 = vpack.c.bf16 %v3946, %v3946
        %v4939 = vpack.c.bf16 %v3953, %v3953
        %v4940 = vpack.c.bf16 %v3960, %v3960
        %v4941 = vpack.c.bf16 %v3967, %v3967
        %v4942 = vpack.c.bf16 %v3974, %v3974
        %v4943 = vpack.c.bf16 %v3981, %v3981
        %v4944 = vpack.c.bf16 %v3988, %v3988
        %v4945 = vpack.c.bf16 %v3995, %v3995
        %v4946 = vpack.c.bf16 %v4002, %v4002
        %v4947 = vpack.c.bf16 %v4009, %v4009
        %v4948 = vpack.c.bf16 %v4016, %v4016
        %v4949 = vpack.c.bf16 %v4023, %v4023
        %v4950 = vpack.c.bf16 %v4030, %v4030
        %v4951 = vpack.c.bf16 %v4037, %v4037
        %v4952 = vpack.c.bf16 %v4044, %v4044
        %v4953 = vpack.c.bf16 %v4051, %v4051
        %v4954 = vpack.c.bf16 %v4058, %v4058
        %v4955 = vpack.c.bf16 %v4065, %v4065
        %v4956 = vpack.c.bf16 %v4072, %v4072
        %v4957 = vpack.c.bf16 %v4079, %v4079
        %v4958 = vpack.c.bf16 %v4086, %v4086
        %v4959 = vpack.c.bf16 %v4093, %v4093
        %v4960 = vpack.c.bf16 %v4100, %v4100
        %v4961 = vpack.c.bf16 %v4107, %v4107
        %v4962 = vpack.c.bf16 %v4114, %v4114
        %v4963 = vpack.c.bf16 %v4121, %v4121
        %v4964 = vpack.c.bf16 %v4128, %v4128
        %v4965 = vpack.c.bf16 %v4135, %v4135
        %v4966 = vpack.c.bf16 %v4142, %v4142
        %v4967 = vpack.c.bf16 %v4149, %v4149
        %v4968 = vpack.c.bf16 %v4156, %v4156
        %v4969 = vpack.c.bf16 %v4163, %v4163
        %v4970 = vpack.c.bf16 %v4170, %v4170
        %v4971 = vpack.c.bf16 %v4177, %v4177
        %v4972 = vpack.c.bf16 %v4184, %v4184
        %v4973 = vpack.c.bf16 %v4191, %v4191
        %v4974 = vpack.c.bf16 %v4198, %v4198
        %v4975 = vpack.c.bf16 %v4205, %v4205
        %v4976 = vpack.c.bf16 %v4212, %v4212
        %v4977 = vpack.c.bf16 %v4219, %v4219
        %v4978 = vpack.c.bf16 %v4226, %v4226
        %v4979 = vpack.c.bf16 %v4233, %v4233
        %v4980 = vpack.c.bf16 %v4240, %v4240
        %v4981 = vpack.c.bf16 %v4247, %v4247
        %v4982 = vpack.c.bf16 %v4254, %v4254
        %v4983 = vpack.c.bf16 %v4261, %v4261
        %v4984 = vpack.c.bf16 %v4268, %v4268
        %v4985 = vpack.c.bf16 %v4275, %v4275
        %v4986 = vpack.c.bf16 %v4282, %v4282
        %v4987 = vpack.c.bf16 %v4289, %v4289
        %v4988 = vpack.c.bf16 %v4296, %v4296
        %v4989 = vpack.c.bf16 %v4303, %v4303
        %v4990 = vpack.c.bf16 %v4310, %v4310
        %v4991 = vpack.c.bf16 %v4317, %v4317
        %v4992 = vpack.c.bf16 %v4324, %v4324
        %v4993 = vpack.c.bf16 %v4331, %v4331
        %v4994 = vpack.c.bf16 %v4338, %v4338
        %v4995 = vpack.c.bf16 %v4345, %v4345
        %v4996 = vpack.c.bf16 %v4352, %v4352
        %v4997 = vpack.c.bf16 %v4359, %v4359
        %v4998 = vpack.c.bf16 %v4366, %v4366
        %v4999 = vpack.c.bf16 %v4373, %v4373
        %v5000 = vpack.c.bf16 %v4380, %v4380
        %v5001 = vpack.c.bf16 %v4387, %v4387
        %v5002 = vpack.c.bf16 %v4394, %v4394
        %v5003 = vpack.c.bf16 %v4401, %v4401
        %v5004 = vpack.c.bf16 %v4408, %v4408
        %v5005 = vpack.c.bf16 %v4415, %v4415
        %v5006 = vpack.c.bf16 %v4422, %v4422
        %v5007 = vpack.c.bf16 %v4429, %v4429
        %v5008 = vpack.c.bf16 %v4436, %v4436
        %v5009 = vpack.c.bf16 %v4443, %v4443
        %v5010 = vpack.c.bf16 %v4450, %v4450
        %v5011 = vpack.c.bf16 %v4457, %v4457
        %v5012 = vpack.c.bf16 %v4464, %v4464
        %v5013 = vpack.c.bf16 %v4471, %v4471
        %v5014 = vpack.c.bf16 %v4478, %v4478
        %v5015 = vpack.c.bf16 %v4485, %v4485
        %v5016 = vpack.c.bf16 %v4492, %v4492
        %v5017 = vpack.c.bf16 %v4499, %v4499
        %v5018 = vpack.c.bf16 %v4506, %v4506
        %v5019 = vpack.c.bf16 %v4513, %v4513
        %v5020 = vpack.c.bf16 %v4520, %v4520
        %v5021 = vpack.c.bf16 %v4527, %v4527
        %v5022 = vpack.c.bf16 %v4534, %v4534
        %v5023 = vpack.c.bf16 %v4541, %v4541
        %v5024 = vpack.c.bf16 %v4548, %v4548
        %v5025 = vpack.c.bf16 %v4555, %v4555
        %v5026 = vpack.c.bf16 %v4562, %v4562
        %v5027 = vpack.c.bf16 %v4569, %v4569
        %v5028 = vpack.c.bf16 %v4576, %v4576
        %v5029 = vpack.c.bf16 %v4583, %v4583
        %v5030 = vpack.c.bf16 %v4590, %v4590
        %v5031 = vpack.c.bf16 %v4597, %v4597
        %v5032 = vpack.c.bf16 %v4604, %v4604
        %v5033 = vpack.c.bf16 %v4611, %v4611
        %v5034 = vpack.c.bf16 %v4618, %v4618
        %v5035 = vpack.c.bf16 %v4625, %v4625
        %v5036 = vpack.c.bf16 %v4632, %v4632
        %v5037 = vpack.c.bf16 %v4639, %v4639
        %v5038 = vpack.c.bf16 %v4646, %v4646
        %v5039 = vpack.c.bf16 %v4653, %v4653
        %v5040 = vpack.c.bf16 %v4660, %v4660
        %v5041 = vpack.c.bf16 %v4667, %v4667
        %v5042 = vpack.c.bf16 %v4674, %v4674
        %v5043 = vpack.c.bf16 %v4681, %v4681
        %v5044 = vpack.c.bf16 %v4688, %v4688
        %v5045 = vpack.c.bf16 %v4695, %v4695
        %v5046 = vpack.c.bf16 %v4702, %v4702
        %v5047 = vpack.c.bf16 %v4709, %v4709
        %v5048 = vpack.c.bf16 %v4716, %v4716
        %v5049 = vpack.c.bf16 %v4723, %v4723
        %v5050 = vpack.c.bf16 %v4730, %v4730
        %v5051 = vpack.c.bf16 %v4737, %v4737
        %v5052 = vpack.c.bf16 %v4744, %v4744
        %v5053 = vpack.c.bf16 %v4751, %v4751
        %v5054 = vpack.c.bf16 %v4758, %v4758
        %v5055 = vpack.c.bf16 %v4765, %v4765
        %v5056 = vpack.c.bf16 %v4772, %v4772
        %v5057 = vpack.c.bf16 %v4779, %v4779
        %v5058 = vpack.c.bf16 %v4786, %v4786
        %v5059 = vpack.c.bf16 %v4793, %v4793
        %v5060 = vpack.c.bf16 %v4800, %v4800
        %v5061 = vpack.c.bf16 %v4807, %v4807
        %v5062 = vpack.c.bf16 %v4814, %v4814
        %v5063 = vpack.c.bf16 %v4821, %v4821
        %v5064 = vpack.c.bf16 %v4828, %v4828
        %v5065 = vpack.c.bf16 %v4835, %v4835
        %v5066 = vpack.c.bf16 %v4842, %v4842
        %v5291 = vunpack.c.l.b16 %v4843
        %v5292 = vunpack.c.l.b16 %v4844
        %v5293 = vunpack.c.l.b16 %v4845
        %v5294 = vunpack.c.l.b16 %v4846
        %v5295 = vunpack.c.l.b16 %v4847
        %v5296 = vunpack.c.l.b16 %v4848
        %v5297 = vunpack.c.l.b16 %v4849
        %v5298 = vunpack.c.l.b16 %v4850
        %v5299 = vunpack.c.l.b16 %v4851
        %v5300 = vunpack.c.l.b16 %v4852
        %v5301 = vunpack.c.l.b16 %v4853
        %v5302 = vunpack.c.l.b16 %v4854
        %v5303 = vunpack.c.l.b16 %v4855
        %v5304 = vunpack.c.l.b16 %v4856
        %v5305 = vunpack.c.l.b16 %v4857
        %v5306 = vunpack.c.l.b16 %v4858
        %v5307 = vunpack.c.l.b16 %v4859
        %v5308 = vunpack.c.l.b16 %v4860
        %v5309 = vunpack.c.l.b16 %v4861
        %v5310 = vunpack.c.l.b16 %v4862
        %v5311 = vunpack.c.l.b16 %v4863
        %v5312 = vunpack.c.l.b16 %v4864
        %v5313 = vunpack.c.l.b16 %v4865
        %v5314 = vunpack.c.l.b16 %v4866
        %v5315 = vunpack.c.l.b16 %v4867
        %v5316 = vunpack.c.l.b16 %v4868
        %v5317 = vunpack.c.l.b16 %v4869
        %v5318 = vunpack.c.l.b16 %v4870
        %v5319 = vunpack.c.l.b16 %v4871
        %v5320 = vunpack.c.l.b16 %v4872
        %v5321 = vunpack.c.l.b16 %v4873
        %v5322 = vunpack.c.l.b16 %v4874
        %v5323 = vunpack.c.l.b16 %v4875
        %v5324 = vunpack.c.l.b16 %v4876
        %v5325 = vunpack.c.l.b16 %v4877
        %v5326 = vunpack.c.l.b16 %v4878
        %v5327 = vunpack.c.l.b16 %v4879
        %v5328 = vunpack.c.l.b16 %v4880
        %v5329 = vunpack.c.l.b16 %v4881
        %v5330 = vunpack.c.l.b16 %v4882
        %v5331 = vunpack.c.l.b16 %v4883
        %v5332 = vunpack.c.l.b16 %v4884
        %v5333 = vunpack.c.l.b16 %v4885
        %v5334 = vunpack.c.l.b16 %v4886
        %v5335 = vunpack.c.l.b16 %v4887
        %v5336 = vunpack.c.l.b16 %v4888
        %v5337 = vunpack.c.l.b16 %v4889
        %v5338 = vunpack.c.l.b16 %v4890
        %v5339 = vunpack.c.l.b16 %v4891
        %v5340 = vunpack.c.l.b16 %v4892
        %v5341 = vunpack.c.l.b16 %v4893
        %v5342 = vunpack.c.l.b16 %v4894
        %v5343 = vunpack.c.l.b16 %v4895
        %v5344 = vunpack.c.l.b16 %v4896
        %v5345 = vunpack.c.l.b16 %v4897
        %v5346 = vunpack.c.l.b16 %v4898
        %v5347 = vunpack.c.l.b16 %v4899
        %v5348 = vunpack.c.l.b16 %v4900
        %v5349 = vunpack.c.l.b16 %v4901
        %v5350 = vunpack.c.l.b16 %v4902
        %v5351 = vunpack.c.l.b16 %v4903
        %v5352 = vunpack.c.l.b16 %v4904
        %v5353 = vunpack.c.l.b16 %v4905
        %v5354 = vunpack.c.l.b16 %v4906
        %v5355 = vunpack.c.l.b16 %v4907
        %v5356 = vunpack.c.l.b16 %v4908
        %v5357 = vunpack.c.l.b16 %v4909
        %v5358 = vunpack.c.l.b16 %v4910
        %v5359 = vunpack.c.l.b16 %v4911
        %v5360 = vunpack.c.l.b16 %v4912
        %v5361 = vunpack.c.l.b16 %v4913
        %v5362 = vunpack.c.l.b16 %v4914
        %v5363 = vunpack.c.l.b16 %v4915
        %v5364 = vunpack.c.l.b16 %v4916
        %v5365 = vunpack.c.l.b16 %v4917
        %v5366 = vunpack.c.l.b16 %v4918
        %v5367 = vunpack.c.l.b16 %v4919
        %v5368 = vunpack.c.l.b16 %v4920
        %v5369 = vunpack.c.l.b16 %v4921
        %v5370 = vunpack.c.l.b16 %v4922
        %v5371 = vunpack.c.l.b16 %v4923
        %v5372 = vunpack.c.l.b16 %v4924
        %v5373 = vunpack.c.l.b16 %v4925
        %v5374 = vunpack.c.l.b16 %v4926
        %v5375 = vunpack.c.l.b16 %v4927
        %v5376 = vunpack.c.l.b16 %v4928
        %v5377 = vunpack.c.l.b16 %v4929
        %v5378 = vunpack.c.l.b16 %v4930
        %v5379 = vunpack.c.l.b16 %v4931
        %v5380 = vunpack.c.l.b16 %v4932
        %v5381 = vunpack.c.l.b16 %v4933
        %v5382 = vunpack.c.l.b16 %v4934
        %v5383 = vunpack.c.l.b16 %v4935
        %v5384 = vunpack.c.l.b16 %v4936
        %v5385 = vunpack.c.l.b16 %v4937
        %v5386 = vunpack.c.l.b16 %v4938
        %v5387 = vunpack.c.l.b16 %v4939
        %v5388 = vunpack.c.l.b16 %v4940
        %v5389 = vunpack.c.l.b16 %v4941
        %v5390 = vunpack.c.l.b16 %v4942
        %v5391 = vunpack.c.l.b16 %v4943
        %v5392 = vunpack.c.l.b16 %v4944
        %v5393 = vunpack.c.l.b16 %v4945
        %v5394 = vunpack.c.l.b16 %v4946
        %v5395 = vunpack.c.l.b16 %v4947
        %v5396 = vunpack.c.l.b16 %v4948
        %v5397 = vunpack.c.l.b16 %v4949
        %v5398 = vunpack.c.l.b16 %v4950
        %v5399 = vunpack.c.l.b16 %v4951
        %v5400 = vunpack.c.l.b16 %v4952
        %v5401 = vunpack.c.l.b16 %v4953
        %v5402 = vunpack.c.l.b16 %v4954
        %v5403 = vunpack.c.l.b16 %v4955
        %v5404 = vunpack.c.l.b16 %v4956
        %v5405 = vunpack.c.l.b16 %v4957
        %v5406 = vunpack.c.l.b16 %v4958
        %v5407 = vunpack.c.l.b16 %v4959
        %v5408 = vunpack.c.l.b16 %v4960
        %v5409 = vunpack.c.l.b16 %v4961
        %v5410 = vunpack.c.l.b16 %v4962
        %v5411 = vunpack.c.l.b16 %v4963
        %v5412 = vunpack.c.l.b16 %v4964
        %v5413 = vunpack.c.l.b16 %v4965
        %v5414 = vunpack.c.l.b16 %v4966
        %v5415 = vunpack.c.l.b16 %v4967
        %v5416 = vunpack.c.l.b16 %v4968
        %v5417 = vunpack.c.l.b16 %v4969
        %v5418 = vunpack.c.l.b16 %v4970
        %v5419 = vunpack.c.l.b16 %v4971
        %v5420 = vunpack.c.l.b16 %v4972
        %v5421 = vunpack.c.l.b16 %v4973
        %v5422 = vunpack.c.l.b16 %v4974
        %v5423 = vunpack.c.l.b16 %v4975
        %v5424 = vunpack.c.l.b16 %v4976
        %v5425 = vunpack.c.l.b16 %v4977
        %v5426 = vunpack.c.l.b16 %v4978
        %v5427 = vunpack.c.l.b16 %v4979
        %v5428 = vunpack.c.l.b16 %v4980
        %v5429 = vunpack.c.l.b16 %v4981
        %v5430 = vunpack.c.l.b16 %v4982
        %v5431 = vunpack.c.l.b16 %v4983
        %v5432 = vunpack.c.l.b16 %v4984
        %v5433 = vunpack.c.l.b16 %v4985
        %v5434 = vunpack.c.l.b16 %v4986
        %v5435 = vunpack.c.l.b16 %v4987
        %v5436 = vunpack.c.l.b16 %v4988
        %v5437 = vunpack.c.l.b16 %v4989
        %v5438 = vunpack.c.l.b16 %v4990
        %v5439 = vunpack.c.l.b16 %v4991
        %v5440 = vunpack.c.l.b16 %v4992
        %v5441 = vunpack.c.l.b16 %v4993
        %v5442 = vunpack.c.l.b16 %v4994
        %v5443 = vunpack.c.l.b16 %v4995
        %v5444 = vunpack.c.l.b16 %v4996
        %v5445 = vunpack.c.l.b16 %v4997
        %v5446 = vunpack.c.l.b16 %v4998
        %v5447 = vunpack.c.l.b16 %v4999
        %v5448 = vunpack.c.l.b16 %v5000
        %v5449 = vunpack.c.l.b16 %v5001
        %v5450 = vunpack.c.l.b16 %v5002
        %v5451 = vunpack.c.l.b16 %v5003
        %v5452 = vunpack.c.l.b16 %v5004
        %v5453 = vunpack.c.l.b16 %v5005
        %v5454 = vunpack.c.l.b16 %v5006
        %v5455 = vunpack.c.l.b16 %v5007
        %v5456 = vunpack.c.l.b16 %v5008
        %v5457 = vunpack.c.l.b16 %v5009
        %v5458 = vunpack.c.l.b16 %v5010
        %v5459 = vunpack.c.l.b16 %v5011
        %v5460 = vunpack.c.l.b16 %v5012
        %v5461 = vunpack.c.l.b16 %v5013
        %v5462 = vunpack.c.l.b16 %v5014
        %v5463 = vunpack.c.l.b16 %v5015
        %v5464 = vunpack.c.l.b16 %v5016
        %v5465 = vunpack.c.l.b16 %v5017
        %v5466 = vunpack.c.l.b16 %v5018
        %v5467 = vunpack.c.l.b16 %v5019
        %v5468 = vunpack.c.l.b16 %v5020
        %v5469 = vunpack.c.l.b16 %v5021
        %v5470 = vunpack.c.l.b16 %v5022
        %v5471 = vunpack.c.l.b16 %v5023
        %v5472 = vunpack.c.l.b16 %v5024
        %v5473 = vunpack.c.l.b16 %v5025
        %v5474 = vunpack.c.l.b16 %v5026
        %v5475 = vunpack.c.l.b16 %v5027
        %v5476 = vunpack.c.l.b16 %v5028
        %v5477 = vunpack.c.l.b16 %v5029
        %v5478 = vunpack.c.l.b16 %v5030
        %v5479 = vunpack.c.l.b16 %v5031
        %v5480 = vunpack.c.l.b16 %v5032
        %v5481 = vunpack.c.l.b16 %v5033
        %v5482 = vunpack.c.l.b16 %v5034
        %v5483 = vunpack.c.l.b16 %v5035
        %v5484 = vunpack.c.l.b16 %v5036
        %v5485 = vunpack.c.l.b16 %v5037
        %v5486 = vunpack.c.l.b16 %v5038
        %v5487 = vunpack.c.l.b16 %v5039
        %v5488 = vunpack.c.l.b16 %v5040
        %v5489 = vunpack.c.l.b16 %v5041
        %v5490 = vunpack.c.l.b16 %v5042
        %v5491 = vunpack.c.l.b16 %v5043
        %v5492 = vunpack.c.l.b16 %v5044
        %v5493 = vunpack.c.l.b16 %v5045
        %v5494 = vunpack.c.l.b16 %v5046
        %v5495 = vunpack.c.l.b16 %v5047
        %v5496 = vunpack.c.l.b16 %v5048
        %v5497 = vunpack.c.l.b16 %v5049
        %v5498 = vunpack.c.l.b16 %v5050
        %v5499 = vunpack.c.l.b16 %v5051
        %v5500 = vunpack.c.l.b16 %v5052
        %v5501 = vunpack.c.l.b16 %v5053
        %v5502 = vunpack.c.l.b16 %v5054
        %v5503 = vunpack.c.l.b16 %v5055
        %v5504 = vunpack.c.l.b16 %v5056
        %v5505 = vunpack.c.l.b16 %v5057
        %v5506 = vunpack.c.l.b16 %v5058
        %v5507 = vunpack.c.l.b16 %v5059
        %v5508 = vunpack.c.l.b16 %v5060
        %v5509 = vunpack.c.l.b16 %v5061
        %v5510 = vunpack.c.l.b16 %v5062
        %v5511 = vunpack.c.l.b16 %v5063
        %v5512 = vunpack.c.l.b16 %v5064
        %v5513 = vunpack.c.l.b16 %v5065
        %v5514 = vunpack.c.l.b16 %v5066
        %vm5515 = vcmask 1041409
        %v5516 = vsel %vm5515, %v5292, %v5291
        %vm5517 = vcmask 1042434
        %v5518 = vsel %vm5517, %v5293, %v5516
        %vm5519 = vcmask 1043459
        %v5520 = vsel %vm5519, %v5294, %v5518
        %vm5521 = vcmask 1044484
        %v5522 = vsel %vm5521, %v5295, %v5520
        %vm5523 = vcmask 1045509
        %v5524 = vsel %vm5523, %v5296, %v5522
        %vm5525 = vcmask 1046534
        %v5526 = vsel %vm5525, %v5297, %v5524
        %vm5527 = vcmask 1047559
        %v5528 = vsel %vm5527, %v5298, %v5526
        %v5529 = vsel %vm5515, %v5300, %v5299
        %v5530 = vsel %vm5517, %v5301, %v5529
        %v5531 = vsel %vm5519, %v5302, %v5530
        %v5532 = vsel %vm5521, %v5303, %v5531
        %v5533 = vsel %vm5523, %v5304, %v5532
        %v5534 = vsel %vm5525, %v5305, %v5533
        %v5535 = vsel %vm5527, %v5306, %v5534
        %v5536 = vsel %vm5515, %v5308, %v5307
        %v5537 = vsel %vm5517, %v5309, %v5536
        %v5538 = vsel %vm5519, %v5310, %v5537
        %v5539 = vsel %vm5521, %v5311, %v5538
        %v5540 = vsel %vm5523, %v5312, %v5539
        %v5541 = vsel %vm5525, %v5313, %v5540
        %v5542 = vsel %vm5527, %v5314, %v5541
        %v5543 = vsel %vm5515, %v5316, %v5315
        %v5544 = vsel %vm5517, %v5317, %v5543
        %v5545 = vsel %vm5519, %v5318, %v5544
        %v5546 = vsel %vm5521, %v5319, %v5545
        %v5547 = vsel %vm5523, %v5320, %v5546
        %v5548 = vsel %vm5525, %v5321, %v5547
        %v5549 = vsel %vm5527, %v5322, %v5548
        %v5550 = vsel %vm5515, %v5324, %v5323
        %v5551 = vsel %vm5517, %v5325, %v5550
        %v5552 = vsel %vm5519, %v5326, %v5551
        %v5553 = vsel %vm5521, %v5327, %v5552
        %v5554 = vsel %vm5523, %v5328, %v5553
        %v5555 = vsel %vm5525, %v5329, %v5554
        %v5556 = vsel %vm5527, %v5330, %v5555
        %v5557 = vsel %vm5515, %v5332, %v5331
        %v5558 = vsel %vm5517, %v5333, %v5557
        %v5559 = vsel %vm5519, %v5334, %v5558
        %v5560 = vsel %vm5521, %v5335, %v5559
        %v5561 = vsel %vm5523, %v5336, %v5560
        %v5562 = vsel %vm5525, %v5337, %v5561
        %v5563 = vsel %vm5527, %v5338, %v5562
        %v5564 = vsel %vm5515, %v5340, %v5339
        %v5565 = vsel %vm5517, %v5341, %v5564
        %v5566 = vsel %vm5519, %v5342, %v5565
        %v5567 = vsel %vm5521, %v5343, %v5566
        %v5568 = vsel %vm5523, %v5344, %v5567
        %v5569 = vsel %vm5525, %v5345, %v5568
        %v5570 = vsel %vm5527, %v5346, %v5569
        %v5571 = vsel %vm5515, %v5348, %v5347
        %v5572 = vsel %vm5517, %v5349, %v5571
        %v5573 = vsel %vm5519, %v5350, %v5572
        %v5574 = vsel %vm5521, %v5351, %v5573
        %v5575 = vsel %vm5523, %v5352, %v5574
        %v5576 = vsel %vm5525, %v5353, %v5575
        %v5577 = vsel %vm5527, %v5354, %v5576
        %v5578 = vsel %vm5515, %v5356, %v5355
        %v5579 = vsel %vm5517, %v5357, %v5578
        %v5580 = vsel %vm5519, %v5358, %v5579
        %v5581 = vsel %vm5521, %v5359, %v5580
        %v5582 = vsel %vm5523, %v5360, %v5581
        %v5583 = vsel %vm5525, %v5361, %v5582
        %v5584 = vsel %vm5527, %v5362, %v5583
        %v5585 = vsel %vm5515, %v5364, %v5363
        %v5586 = vsel %vm5517, %v5365, %v5585
        %v5587 = vsel %vm5519, %v5366, %v5586
        %v5588 = vsel %vm5521, %v5367, %v5587
        %v5589 = vsel %vm5523, %v5368, %v5588
        %v5590 = vsel %vm5525, %v5369, %v5589
        %v5591 = vsel %vm5527, %v5370, %v5590
        %v5592 = vsel %vm5515, %v5372, %v5371
        %v5593 = vsel %vm5517, %v5373, %v5592
        %v5594 = vsel %vm5519, %v5374, %v5593
        %v5595 = vsel %vm5521, %v5375, %v5594
        %v5596 = vsel %vm5523, %v5376, %v5595
        %v5597 = vsel %vm5525, %v5377, %v5596
        %v5598 = vsel %vm5527, %v5378, %v5597
        %v5599 = vsel %vm5515, %v5380, %v5379
        %v5600 = vsel %vm5517, %v5381, %v5599
        %v5601 = vsel %vm5519, %v5382, %v5600
        %v5602 = vsel %vm5521, %v5383, %v5601
        %v5603 = vsel %vm5523, %v5384, %v5602
        %v5604 = vsel %vm5525, %v5385, %v5603
        %v5605 = vsel %vm5527, %v5386, %v5604
        %v5606 = vsel %vm5515, %v5388, %v5387
        %v5607 = vsel %vm5517, %v5389, %v5606
        %v5608 = vsel %vm5519, %v5390, %v5607
        %v5609 = vsel %vm5521, %v5391, %v5608
        %v5610 = vsel %vm5523, %v5392, %v5609
        %v5611 = vsel %vm5525, %v5393, %v5610
        %v5612 = vsel %vm5527, %v5394, %v5611
        %v5613 = vsel %vm5515, %v5396, %v5395
        %v5614 = vsel %vm5517, %v5397, %v5613
        %v5615 = vsel %vm5519, %v5398, %v5614
        %v5616 = vsel %vm5521, %v5399, %v5615
        %v5617 = vsel %vm5523, %v5400, %v5616
        %v5618 = vsel %vm5525, %v5401, %v5617
        %v5619 = vsel %vm5527, %v5402, %v5618
        %v5620 = vsel %vm5515, %v5404, %v5403
        %v5621 = vsel %vm5517, %v5405, %v5620
        %v5622 = vsel %vm5519, %v5406, %v5621
        %v5623 = vsel %vm5521, %v5407, %v5622
        %v5624 = vsel %vm5523, %v5408, %v5623
        %v5625 = vsel %vm5525, %v5409, %v5624
        %v5626 = vsel %vm5527, %v5410, %v5625
        %v5627 = vsel %vm5515, %v5412, %v5411
        %v5628 = vsel %vm5517, %v5413, %v5627
        %v5629 = vsel %vm5519, %v5414, %v5628
        %v5630 = vsel %vm5521, %v5415, %v5629
        %v5631 = vsel %vm5523, %v5416, %v5630
        %v5632 = vsel %vm5525, %v5417, %v5631
        %v5633 = vsel %vm5527, %v5418, %v5632
        %v5634 = vsel %vm5515, %v5420, %v5419
        %v5635 = vsel %vm5517, %v5421, %v5634
        %v5636 = vsel %vm5519, %v5422, %v5635
        %v5637 = vsel %vm5521, %v5423, %v5636
        %v5638 = vsel %vm5523, %v5424, %v5637
        %v5639 = vsel %vm5525, %v5425, %v5638
        %v5640 = vsel %vm5527, %v5426, %v5639
        %v5641 = vsel %vm5515, %v5428, %v5427
        %v5642 = vsel %vm5517, %v5429, %v5641
        %v5643 = vsel %vm5519, %v5430, %v5642
        %v5644 = vsel %vm5521, %v5431, %v5643
        %v5645 = vsel %vm5523, %v5432, %v5644
        %v5646 = vsel %vm5525, %v5433, %v5645
        %v5647 = vsel %vm5527, %v5434, %v5646
        %v5648 = vsel %vm5515, %v5436, %v5435
        %v5649 = vsel %vm5517, %v5437, %v5648
        %v5650 = vsel %vm5519, %v5438, %v5649
        %v5651 = vsel %vm5521, %v5439, %v5650
        %v5652 = vsel %vm5523, %v5440, %v5651
        %v5653 = vsel %vm5525, %v5441, %v5652
        %v5654 = vsel %vm5527, %v5442, %v5653
        %v5655 = vsel %vm5515, %v5444, %v5443
        %v5656 = vsel %vm5517, %v5445, %v5655
        %v5657 = vsel %vm5519, %v5446, %v5656
        %v5658 = vsel %vm5521, %v5447, %v5657
        %v5659 = vsel %vm5523, %v5448, %v5658
        %v5660 = vsel %vm5525, %v5449, %v5659
        %v5661 = vsel %vm5527, %v5450, %v5660
        %v5662 = vsel %vm5515, %v5452, %v5451
        %v5663 = vsel %vm5517, %v5453, %v5662
        %v5664 = vsel %vm5519, %v5454, %v5663
        %v5665 = vsel %vm5521, %v5455, %v5664
        %v5666 = vsel %vm5523, %v5456, %v5665
        %v5667 = vsel %vm5525, %v5457, %v5666
        %v5668 = vsel %vm5527, %v5458, %v5667
        %v5669 = vsel %vm5515, %v5460, %v5459
        %v5670 = vsel %vm5517, %v5461, %v5669
        %v5671 = vsel %vm5519, %v5462, %v5670
        %v5672 = vsel %vm5521, %v5463, %v5671
        %v5673 = vsel %vm5523, %v5464, %v5672
        %v5674 = vsel %vm5525, %v5465, %v5673
        %v5675 = vsel %vm5527, %v5466, %v5674
        %v5676 = vsel %vm5515, %v5468, %v5467
        %v5677 = vsel %vm5517, %v5469, %v5676
        %v5678 = vsel %vm5519, %v5470, %v5677
        %v5679 = vsel %vm5521, %v5471, %v5678
        %v5680 = vsel %vm5523, %v5472, %v5679
        %v5681 = vsel %vm5525, %v5473, %v5680
        %v5682 = vsel %vm5527, %v5474, %v5681
        %v5683 = vsel %vm5515, %v5476, %v5475
        %v5684 = vsel %vm5517, %v5477, %v5683
        %v5685 = vsel %vm5519, %v5478, %v5684
        %v5686 = vsel %vm5521, %v5479, %v5685
        %v5687 = vsel %vm5523, %v5480, %v5686
        %v5688 = vsel %vm5525, %v5481, %v5687
        %v5689 = vsel %vm5527, %v5482, %v5688
        %v5690 = vsel %vm5515, %v5484, %v5483
        %v5691 = vsel %vm5517, %v5485, %v5690
        %v5692 = vsel %vm5519, %v5486, %v5691
        %v5693 = vsel %vm5521, %v5487, %v5692
        %v5694 = vsel %vm5523, %v5488, %v5693
        %v5695 = vsel %vm5525, %v5489, %v5694
        %v5696 = vsel %vm5527, %v5490, %v5695
        %v5697 = vsel %vm5515, %v5492, %v5491
        %v5698 = vsel %vm5517, %v5493, %v5697
        %v5699 = vsel %vm5519, %v5494, %v5698
        %v5700 = vsel %vm5521, %v5495, %v5699
        %v5701 = vsel %vm5523, %v5496, %v5700
        %v5702 = vsel %vm5525, %v5497, %v5701
        %v5703 = vsel %vm5527, %v5498, %v5702
        %v5704 = vsel %vm5515, %v5500, %v5499
        %v5705 = vsel %vm5517, %v5501, %v5704
        %v5706 = vsel %vm5519, %v5502, %v5705
        %v5707 = vsel %vm5521, %v5503, %v5706
        %v5708 = vsel %vm5523, %v5504, %v5707
        %v5709 = vsel %vm5525, %v5505, %v5708
        %v5710 = vsel %vm5527, %v5506, %v5709
        %v5711 = vsel %vm5515, %v5508, %v5507
        %v5712 = vsel %vm5517, %v5509, %v5711
        %v5713 = vsel %vm5519, %v5510, %v5712
        %v5714 = vsel %vm5521, %v5511, %v5713
        %v5715 = vsel %vm5523, %v5512, %v5714
        %v5716 = vsel %vm5525, %v5513, %v5715
        %v5717 = vsel %vm5527, %v5514, %v5716
        %v5718 = vpack.c.b16 %v5535, %v5528
        %v5719 = vpack.c.b16 %v5549, %v5542
        %v5720 = vpack.c.b16 %v5563, %v5556
        %v5721 = vpack.c.b16 %v5577, %v5570
        %v5722 = vpack.c.b16 %v5591, %v5584
        %v5723 = vpack.c.b16 %v5605, %v5598
        %v5724 = vpack.c.b16 %v5619, %v5612
        %v5725 = vpack.c.b16 %v5633, %v5626
        %v5726 = vpack.c.b16 %v5647, %v5640
        %v5727 = vpack.c.b16 %v5661, %v5654
        %v5728 = vpack.c.b16 %v5675, %v5668
        %v5729 = vpack.c.b16 %v5689, %v5682
        %v5730 = vpack.c.b16 %v5703, %v5696
        %v5731 = vpack.c.b16 %v5717, %v5710
        %v5732 = vld [vmem:[%s3] sm:$0xf]
        %v5733 = vld [vmem:[%s3 + $0x4] sm:$0xf]
        %v5734 = vld [vmem:[%s3 + $0x8] sm:$0xf]
        %v5735 = vld [vmem:[%s3 + $0xc] sm:$0xf]
        %v5736 = vld [vmem:[%s3 + $0x10] sm:$0xf]
        %v5737 = vld [vmem:[%s3 + $0x14] sm:$0xf]
        %v5738 = vld [vmem:[%s3 + $0x18] sm:$0xf]
        %v5739 = vld [vmem:[%s3 + $0x1c] sm:$0xf]
        %v5740 = vld [vmem:[%s3 + $0x20] sm:$0xf]
        %v5741 = vld [vmem:[%s3 + $0x24] sm:$0xf]
        %s5742 = scalar_lea.vmem %s3, 40
        %v5743 = vld [vmem:[%s5742] sm:$0xf]
        %v5744 = vld [vmem:[%s5742 + $0x4] sm:$0xf]
        %v5745 = vld [vmem:[%s5742 + $0x8] sm:$0xf]
        %v5746 = vld [vmem:[%s5742 + $0xc] sm:$0xf]
        %v5747 = vld [vmem:[%s5742 + $0x10] sm:$0xf]
        %v5748 = vld [vmem:[%s5742 + $0x14] sm:$0xf]
        %v5749 = vld [vmem:[%s5742 + $0x18] sm:$0xf]
        %v5750 = vld [vmem:[%s5742 + $0x1c] sm:$0xf]
        %v5751 = vld [vmem:[%s5742 + $0x20] sm:$0xf]
        %v5752 = vld [vmem:[%s5742 + $0x24] sm:$0xf]
        %v5763 = vunpack.c.l.b16 %v5743
        %v5764 = vunpack.c.l.b16 %v5744
        %v5765 = vunpack.c.l.b16 %v5745
        %v5766 = vunpack.c.l.b16 %v5746
        %v5767 = vunpack.c.l.b16 %v5747
        %v5768 = vunpack.c.l.b16 %v5748
        %v5769 = vunpack.c.l.b16 %v5749
        %v5770 = vunpack.c.l.b16 %v5750
        %v5771 = vunpack.c.l.b16 %v5751
        %v5772 = vunpack.c.l.b16 %v5752
        %v5773 = vpack.c.b16 %v5764, %v5763
        %v5774 = vpack.c.b16 %v5766, %v5765
        %v5775 = vpack.c.b16 %v5768, %v5767
        %v5776 = vpack.c.b16 %v5770, %v5769
        %v5777 = vpack.c.b16 %v5772, %v5771
        %v5784 = vsel %vm1112, %v5719, 0
        %v5787 = vsel %vm1112, %v5720, 0
        %v5790 = vsel %vm1112, %v5721, 0
        %v5793 = vsel %vm1112, %v5722, 0
        %v5796 = vsel %vm1112, %v5723, 0
        %v5799 = vsel %vm1112, %v5724, 0
        %v5802 = vsel %vm1112, %v5725, 0
        %v5805 = vsel %vm1112, %v5726, 0
        %v5808 = vsel %vm1112, %v5727, 0
        %v5811 = vsel %vm1112, %v5728, 0
        %v5814 = vsel %vm1112, %v5729, 0
        %v5817 = vsel %vm1112, %v5730, 0
        %v5820 = vsel %vm1112, %v5731, 0
        %v5823 = vsel %vm1112, 0, 0
        %5825 = vmatprep.subr.bf16.mxu0 0
        %5826 = vmatpush1.bf16.msra.mxu0 %v5773
        %5827 = vmatprep.subr.bf16.mxu0 0
        %5828 = vmatpush1.bf16.msra.mxu0 %v5774
        %5829 = vmatprep.subr.bf16.mxu0 0
        %5830 = vmatpush1.bf16.msra.mxu0 %v5775
        %5831 = vmatprep.subr.bf16.mxu0 0
        %5832 = vmatpush1.bf16.msra.mxu0 %v5776
        %5833 = vmatprep.subr.bf16.mxu0 0
        %5834 = vmatpush1.bf16.msra.mxu0 %v5777
        %5835 = vmatprep.subr.bf16.mxu0 0
        %5836 = vmatpush1.bf16.msra.mxu0 0
        %5837 = vmatprep.subr.bf16.mxu0 0
        %5838 = vmatpush1.bf16.msra.mxu0 0
        %5839 = vmatprep.subr.bf16.mxu0 0
        %5840 = vmatpush1.bf16.msra.mxu0 0
        %5841 = vmatprep.subr.bf16.mxu0 0
        %5842 = vmatpush1.bf16.msra.mxu0 0
        %5843 = vmatprep.subr.bf16.mxu0 0
        %5844 = vmatpush1.bf16.msra.mxu0 0
        %5845 = vmatprep.subr.bf16.mxu0 0
        %5846 = vmatpush1.bf16.msra.mxu0 0
        %5847 = vmatprep.subr.bf16.mxu0 0
        %5848 = vmatpush1.bf16.msra.mxu0 0
        %5849 = vmatprep.subr.bf16.mxu0 0
        %5850 = vmatpush1.bf16.msra.mxu0 0
        %5851 = vmatprep.subr.bf16.mxu0 0
        %5852 = vmatpush1.bf16.msra.mxu0 0
        %5853 = vmatprep.subr.bf16.mxu0 0
        %5854 = vmatpush1.bf16.msra.mxu0 0
        %5855 = vmatprep.subr.bf16.mxu0 0
        %5856 = vmatpush1.bf16.msra.mxu0 0
        %5857 = vmatprep.mubr.bf16.mxu0 0
        %5858 = vmatmul.mubr.bf16.gmra.mrb[0].mxu0 %v5784
        %v5859 = vpop.f32.mrb[0].mxu0
        %v5860 = vadd.f32 0.0, %v5859
        %v5861 = vpop.f32.mrb[0].mxu0
        %v5862 = vpop.f32.mrb[0].mxu0
        %v5863 = vadd.f32 0.0, %v5862
        %v5864 = vpop.f32.mrb[0].mxu0
        %5865 = vmatprep.mubr.bf16.mxu0 0
        %5866 = vmatmul.mubr.bf16.gmra.mrb[0].mxu0 %v5787
        %v5867 = vpop.f32.mrb[0].mxu0
        %v5868 = vadd.f32 0.0, %v5867
        %v5869 = vpop.f32.mrb[0].mxu0
        %v5870 = vpop.f32.mrb[0].mxu0
        %v5871 = vadd.f32 0.0, %v5870
        %v5872 = vpop.f32.mrb[0].mxu0
        %5873 = vmatprep.mubr.bf16.mxu0 0
        %5874 = vmatmul.mubr.bf16.gmra.mrb[0].mxu0 %v5790
        %v5875 = vpop.f32.mrb[0].mxu0
        %v5876 = vadd.f32 0.0, %v5875
        %v5877 = vpop.f32.mrb[0].mxu0
        %v5878 = vpop.f32.mrb[0].mxu0
        %v5879 = vadd.f32 0.0, %v5878
        %v5880 = vpop.f32.mrb[0].mxu0
        %5881 = vmatprep.mubr.bf16.mxu0 0
        %5882 = vmatmul.mubr.bf16.gmra.mrb[0].mxu0 %v5793
        %v5883 = vpop.f32.mrb[0].mxu0
        %v5884 = vadd.f32 0.0, %v5883
        %v5885 = vpop.f32.mrb[0].mxu0
        %v5886 = vpop.f32.mrb[0].mxu0
        %v5887 = vadd.f32 0.0, %v5886
        %v5888 = vpop.f32.mrb[0].mxu0
        %5889 = vmatprep.mubr.bf16.mxu0 0
        %5890 = vmatmul.mubr.bf16.gmra.mrb[0].mxu0 %v5796
        %v5891 = vpop.f32.mrb[0].mxu0
        %v5892 = vadd.f32 0.0, %v5891
        %v5893 = vpop.f32.mrb[0].mxu0
        %v5894 = vpop.f32.mrb[0].mxu0
        %v5895 = vadd.f32 0.0, %v5894
        %v5896 = vpop.f32.mrb[0].mxu0
        %5897 = vmatprep.mubr.bf16.mxu0 0
        %5898 = vmatmul.mubr.bf16.gmra.mrb[0].mxu0 %v5799
        %v5899 = vpop.f32.mrb[0].mxu0
        %v5900 = vadd.f32 0.0, %v5899
        %v5901 = vpop.f32.mrb[0].mxu0
        %v5902 = vpop.f32.mrb[0].mxu0
        %v5903 = vadd.f32 0.0, %v5902
        %v5904 = vpop.f32.mrb[0].mxu0
        %5905 = vmatprep.mubr.bf16.mxu0 0
        %5906 = vmatmul.mubr.bf16.gmra.mrb[0].mxu0 %v5802
        %v5907 = vpop.f32.mrb[0].mxu0
        %v5908 = vadd.f32 0.0, %v5907
        %v5909 = vpop.f32.mrb[0].mxu0
        %v5910 = vpop.f32.mrb[0].mxu0
        %v5911 = vadd.f32 0.0, %v5910
        %v5912 = vpop.f32.mrb[0].mxu0
        %5913 = vmatprep.mubr.bf16.mxu0 0
        %5914 = vmatmul.mubr.bf16.gmra.mrb[0].mxu0 %v5805
        %v5915 = vpop.f32.mrb[0].mxu0
        %v5916 = vadd.f32 0.0, %v5915
        %v5917 = vpop.f32.mrb[0].mxu0
        %v5918 = vpop.f32.mrb[0].mxu0
        %v5919 = vadd.f32 0.0, %v5918
        %v5920 = vpop.f32.mrb[0].mxu0
        %5921 = vmatprep.mubr.bf16.mxu0 0
        %5922 = vmatmul.mubr.bf16.gmra.mrb[0].mxu0 %v5808
        %v5923 = vpop.f32.mrb[0].mxu0
        %v5924 = vadd.f32 0.0, %v5923
        %v5925 = vpop.f32.mrb[0].mxu0
        %v5926 = vpop.f32.mrb[0].mxu0
        %v5927 = vadd.f32 0.0, %v5926
        %v5928 = vpop.f32.mrb[0].mxu0
        %5929 = vmatprep.mubr.bf16.mxu0 0
        %5930 = vmatmul.mubr.bf16.gmra.mrb[0].mxu0 %v5811
        %v5931 = vpop.f32.mrb[0].mxu0
        %v5932 = vadd.f32 0.0, %v5931
        %v5933 = vpop.f32.mrb[0].mxu0
        %v5934 = vpop.f32.mrb[0].mxu0
        %v5935 = vadd.f32 0.0, %v5934
        %v5936 = vpop.f32.mrb[0].mxu0
        %5937 = vmatprep.mubr.bf16.mxu0 0
        %5938 = vmatmul.mubr.bf16.gmra.mrb[0].mxu0 %v5814
        %v5939 = vpop.f32.mrb[0].mxu0
        %v5940 = vpop.f32.mrb[0].mxu0
        %v5941 = vpop.f32.mrb[0].mxu0
        %v5942 = vpop.f32.mrb[0].mxu0
        %5943 = vmatprep.mubr.bf16.mxu0 0
        %5944 = vmatmul.mubr.bf16.gmra.mrb[0].mxu0 %v5817
        %v5945 = vpop.f32.mrb[0].mxu0
        %v5946 = vpop.f32.mrb[0].mxu0
        %v5947 = vpop.f32.mrb[0].mxu0
        %v5948 = vpop.f32.mrb[0].mxu0
        %5949 = vmatprep.mubr.bf16.mxu0 0
        %5950 = vmatmul.mubr.bf16.gmra.mrb[0].mxu0 %v5820
        %v5951 = vpop.f32.mrb[0].mxu0
        %v5952 = vpop.f32.mrb[0].mxu0
        %v5953 = vpop.f32.mrb[0].mxu0
        %v5954 = vpop.f32.mrb[0].mxu0
        %5955 = vmatprep.mubr.bf16.mxu0 0
        %5956 = vmatmul.mubr.bf16.gmra.mrb[0].mxu0 %v5823
        %v5957 = vpop.f32.mrb[0].mxu0
        %v5958 = vpop.f32.mrb[0].mxu0
        %v5959 = vpop.f32.mrb[0].mxu0
        %v5960 = vpop.f32.mrb[0].mxu0
        %5961 = vdwg.mxu0
        %v5972 = vunpack.c.l.b16 %v5732
        %v5973 = vunpack.c.l.b16 %v5733
        %v5974 = vunpack.c.l.b16 %v5734
        %v5975 = vunpack.c.l.b16 %v5735
        %v5976 = vunpack.c.l.b16 %v5736
        %v5977 = vunpack.c.l.b16 %v5737
        %v5978 = vunpack.c.l.b16 %v5738
        %v5979 = vunpack.c.l.b16 %v5739
        %v5980 = vunpack.c.l.b16 %v5740
        %v5981 = vunpack.c.l.b16 %v5741
        %v5982 = vpack.c.b16 %v5973, %v5972
        %v5983 = vpack.c.b16 %v5975, %v5974
        %v5984 = vpack.c.b16 %v5977, %v5976
        %v5985 = vpack.c.b16 %v5979, %v5978
        %v5986 = vpack.c.b16 %v5981, %v5980
        %v5993 = vsel %vm1112, %v5718, 0
        %5995 = vmatprep.subr.bf16.mxu0 0
        %5996 = vmatpush1.bf16.msra.mxu0 %v5982
        %5997 = vmatprep.subr.bf16.mxu0 0
        %5998 = vmatpush1.bf16.msra.mxu0 %v5983
        %5999 = vmatprep.subr.bf16.mxu0 0
        %6000 = vmatpush1.bf16.msra.mxu0 %v5984
        %6001 = vmatprep.subr.bf16.mxu0 0
        %6002 = vmatpush1.bf16.msra.mxu0 %v5985
        %6003 = vmatprep.subr.bf16.mxu0 0
        %6004 = vmatpush1.bf16.msra.mxu0 %v5986
        %6005 = vmatprep.subr.bf16.mxu0 0
        %6006 = vmatpush1.bf16.msra.mxu0 0
        %6007 = vmatprep.subr.bf16.mxu0 0
        %6008 = vmatpush1.bf16.msra.mxu0 0
        %6009 = vmatprep.subr.bf16.mxu0 0
        %6010 = vmatpush1.bf16.msra.mxu0 0
        %6011 = vmatprep.subr.bf16.mxu0 0
        %6012 = vmatpush1.bf16.msra.mxu0 0
        %6013 = vmatprep.subr.bf16.mxu0 0
        %6014 = vmatpush1.bf16.msra.mxu0 0
        %6015 = vmatprep.subr.bf16.mxu0 0
        %6016 = vmatpush1.bf16.msra.mxu0 0
        %6017 = vmatprep.subr.bf16.mxu0 0
        %6018 = vmatpush1.bf16.msra.mxu0 0
        %6019 = vmatprep.subr.bf16.mxu0 0
        %6020 = vmatpush1.bf16.msra.mxu0 0
        %6021 = vmatprep.subr.bf16.mxu0 0
        %6022 = vmatpush1.bf16.msra.mxu0 0
        %6023 = vmatprep.subr.bf16.mxu0 0
        %6024 = vmatpush1.bf16.msra.mxu0 0
        %6025 = vmatprep.subr.bf16.mxu0 0
        %6026 = vmatpush1.bf16.msra.mxu0 0
        %6027 = vmatprep.mubr.bf16.mxu0 0
        %6028 = vmatmul.mubr.bf16.gmra.mrb[0].mxu0 %v5993
        %v6029 = vpop.f32.mrb[0].mxu0
        %v6030 = vadd.f32 %v5860, %v6029
        %v6031 = vpop.f32.mrb[0].mxu0
        %v6032 = vpop.f32.mrb[0].mxu0
        %v6033 = vadd.f32 %v5863, %v6032
        %v6034 = vpop.f32.mrb[0].mxu0
        %6035 = vmatprep.mubr.bf16.mxu0 0
        %6036 = vmatmul.mubr.bf16.gmra.mrb[0].mxu0 %v5784
        %v6037 = vpop.f32.mrb[0].mxu0
        %v6038 = vadd.f32 %v5868, %v6037
        %v6039 = vpop.f32.mrb[0].mxu0
        %v6040 = vpop.f32.mrb[0].mxu0
        %v6041 = vadd.f32 %v5871, %v6040
        %v6042 = vpop.f32.mrb[0].mxu0
        %6043 = vmatprep.mubr.bf16.mxu0 0
        %6044 = vmatmul.mubr.bf16.gmra.mrb[0].mxu0 %v5787
        %v6045 = vpop.f32.mrb[0].mxu0
        %v6046 = vadd.f32 %v5876, %v6045
        %v6047 = vpop.f32.mrb[0].mxu0
        %v6048 = vpop.f32.mrb[0].mxu0
        %v6049 = vadd.f32 %v5879, %v6048
        %v6050 = vpop.f32.mrb[0].mxu0
        %6051 = vmatprep.mubr.bf16.mxu0 0
        %6052 = vmatmul.mubr.bf16.gmra.mrb[0].mxu0 %v5790
        %v6053 = vpop.f32.mrb[0].mxu0
        %v6054 = vadd.f32 %v5884, %v6053
        %v6055 = vpop.f32.mrb[0].mxu0
        %v6056 = vpop.f32.mrb[0].mxu0
        %v6057 = vadd.f32 %v5887, %v6056
        %v6058 = vpop.f32.mrb[0].mxu0
        %6059 = vmatprep.mubr.bf16.mxu0 0
        %6060 = vmatmul.mubr.bf16.gmra.mrb[0].mxu0 %v5793
        %v6061 = vpop.f32.mrb[0].mxu0
        %v6062 = vadd.f32 %v5892, %v6061
        %v6063 = vpop.f32.mrb[0].mxu0
        %v6064 = vpop.f32.mrb[0].mxu0
        %v6065 = vadd.f32 %v5895, %v6064
        %v6066 = vpop.f32.mrb[0].mxu0
        %6067 = vmatprep.mubr.bf16.mxu0 0
        %6068 = vmatmul.mubr.bf16.gmra.mrb[0].mxu0 %v5796
        %v6069 = vpop.f32.mrb[0].mxu0
        %v6070 = vadd.f32 %v5900, %v6069
        %v6071 = vpop.f32.mrb[0].mxu0
        %v6072 = vpop.f32.mrb[0].mxu0
        %v6073 = vadd.f32 %v5903, %v6072
        %v6074 = vpop.f32.mrb[0].mxu0
        %6075 = vmatprep.mubr.bf16.mxu0 0
        %6076 = vmatmul.mubr.bf16.gmra.mrb[0].mxu0 %v5799
        %v6077 = vpop.f32.mrb[0].mxu0
        %v6078 = vadd.f32 %v5908, %v6077
        %v6079 = vpop.f32.mrb[0].mxu0
        %v6080 = vpop.f32.mrb[0].mxu0
        %v6081 = vadd.f32 %v5911, %v6080
        %v6082 = vpop.f32.mrb[0].mxu0
        %6083 = vmatprep.mubr.bf16.mxu0 0
        %6084 = vmatmul.mubr.bf16.gmra.mrb[0].mxu0 %v5802
        %v6085 = vpop.f32.mrb[0].mxu0
        %v6086 = vadd.f32 %v5916, %v6085
        %v6087 = vpop.f32.mrb[0].mxu0
        %v6088 = vpop.f32.mrb[0].mxu0
        %v6089 = vadd.f32 %v5919, %v6088
        %v6090 = vpop.f32.mrb[0].mxu0
        %6091 = vmatprep.mubr.bf16.mxu0 0
        %6092 = vmatmul.mubr.bf16.gmra.mrb[0].mxu0 %v5805
        %v6093 = vpop.f32.mrb[0].mxu0
        %v6094 = vadd.f32 %v5924, %v6093
        %v6095 = vpop.f32.mrb[0].mxu0
        %v6096 = vpop.f32.mrb[0].mxu0
        %v6097 = vadd.f32 %v5927, %v6096
        %v6098 = vpop.f32.mrb[0].mxu0
        %6099 = vmatprep.mubr.bf16.mxu0 0
        %6100 = vmatmul.mubr.bf16.gmra.mrb[0].mxu0 %v5808
        %v6101 = vpop.f32.mrb[0].mxu0
        %v6102 = vadd.f32 %v5932, %v6101
        %v6103 = vpop.f32.mrb[0].mxu0
        %v6104 = vpop.f32.mrb[0].mxu0
        %v6105 = vadd.f32 %v5935, %v6104
        %v6106 = vpop.f32.mrb[0].mxu0
        %6107 = vmatprep.mubr.bf16.mxu0 0
        %6108 = vmatmul.mubr.bf16.gmra.mrb[0].mxu0 %v5811
        %v6109 = vpop.f32.mrb[0].mxu0
        %v6110 = vpop.f32.mrb[0].mxu0
        %v6111 = vpop.f32.mrb[0].mxu0
        %v6112 = vpop.f32.mrb[0].mxu0
        %6113 = vmatprep.mubr.bf16.mxu0 0
        %6114 = vmatmul.mubr.bf16.gmra.mrb[0].mxu0 %v5814
        %v6115 = vpop.f32.mrb[0].mxu0
        %v6116 = vpop.f32.mrb[0].mxu0
        %v6117 = vpop.f32.mrb[0].mxu0
        %v6118 = vpop.f32.mrb[0].mxu0
        %6119 = vmatprep.mubr.bf16.mxu0 0
        %6120 = vmatmul.mubr.bf16.gmra.mrb[0].mxu0 %v5817
        %v6121 = vpop.f32.mrb[0].mxu0
        %v6122 = vpop.f32.mrb[0].mxu0
        %v6123 = vpop.f32.mrb[0].mxu0
        %v6124 = vpop.f32.mrb[0].mxu0
        %6125 = vmatprep.mubr.bf16.mxu0 0
        %6126 = vmatmul.mubr.bf16.gmra.mrb[0].mxu0 %v5820
        %v6127 = vpop.f32.mrb[0].mxu0
        %v6128 = vpop.f32.mrb[0].mxu0
        %v6129 = vpop.f32.mrb[0].mxu0
        %v6130 = vpop.f32.mrb[0].mxu0
        %6131 = vdwg.mxu0
        %s6132 = scalar_lea.vmem %s3, 80
        %v6133 = vld [vmem:[%s6132] sm:$0xf]
        %v6134 = vld [vmem:[%s6132 + $0x4] sm:$0xf]
        %v6135 = vld [vmem:[%s6132 + $0x8] sm:$0xf]
        %v6136 = vld [vmem:[%s6132 + $0xc] sm:$0xf]
        %v6137 = vld [vmem:[%s6132 + $0x10] sm:$0xf]
        %v6138 = vld [vmem:[%s6132 + $0x14] sm:$0xf]
        %v6139 = vld [vmem:[%s6132 + $0x18] sm:$0xf]
        %v6140 = vld [vmem:[%s6132 + $0x1c] sm:$0xf]
        %v6141 = vld [vmem:[%s6132 + $0x20] sm:$0xf]
        %v6142 = vld [vmem:[%s6132 + $0x24] sm:$0xf]
        %v6153 = vunpack.c.l.b16 %v6133
        %v6154 = vunpack.c.l.b16 %v6134
        %v6155 = vunpack.c.l.b16 %v6135
        %v6156 = vunpack.c.l.b16 %v6136
        %v6157 = vunpack.c.l.b16 %v6137
        %v6158 = vunpack.c.l.b16 %v6138
        %v6159 = vunpack.c.l.b16 %v6139
        %v6160 = vunpack.c.l.b16 %v6140
        %v6161 = vunpack.c.l.b16 %v6141
        %v6162 = vunpack.c.l.b16 %v6142
        %v6163 = vpack.c.b16 %v6154, %v6153
        %v6164 = vpack.c.b16 %v6156, %v6155
        %v6165 = vpack.c.b16 %v6158, %v6157
        %v6166 = vpack.c.b16 %v6160, %v6159
        %v6167 = vpack.c.b16 %v6162, %v6161
        %6173 = vmatprep.subr.bf16.mxu0 0
        %6174 = vmatpush1.bf16.msra.mxu0 %v6163
        %6175 = vmatprep.subr.bf16.mxu0 0
        %6176 = vmatpush1.bf16.msra.mxu0 %v6164
        %6177 = vmatprep.subr.bf16.mxu0 0
        %6178 = vmatpush1.bf16.msra.mxu0 %v6165
        %6179 = vmatprep.subr.bf16.mxu0 0
        %6180 = vmatpush1.bf16.msra.mxu0 %v6166
        %6181 = vmatprep.subr.bf16.mxu0 0
        %6182 = vmatpush1.bf16.msra.mxu0 %v6167
        %6183 = vmatprep.subr.bf16.mxu0 0
        %6184 = vmatpush1.bf16.msra.mxu0 0
        %6185 = vmatprep.subr.bf16.mxu0 0
        %6186 = vmatpush1.bf16.msra.mxu0 0
        %6187 = vmatprep.subr.bf16.mxu0 0
        %6188 = vmatpush1.bf16.msra.mxu0 0
        %6189 = vmatprep.subr.bf16.mxu0 0
        %6190 = vmatpush1.bf16.msra.mxu0 0
        %6191 = vmatprep.subr.bf16.mxu0 0
        %6192 = vmatpush1.bf16.msra.mxu0 0
        %6193 = vmatprep.subr.bf16.mxu0 0
        %6194 = vmatpush1.bf16.msra.mxu0 0
        %6195 = vmatprep.subr.bf16.mxu0 0
        %6196 = vmatpush1.bf16.msra.mxu0 0
        %6197 = vmatprep.subr.bf16.mxu0 0
        %6198 = vmatpush1.bf16.msra.mxu0 0
        %6199 = vmatprep.subr.bf16.mxu0 0
        %6200 = vmatpush1.bf16.msra.mxu0 0
        %6201 = vmatprep.subr.bf16.mxu0 0
        %6202 = vmatpush1.bf16.msra.mxu0 0
        %6203 = vmatprep.subr.bf16.mxu0 0
        %6204 = vmatpush1.bf16.msra.mxu0 0
        %6205 = vmatprep.mubr.bf16.mxu0 0
        %6206 = vmatmul.mubr.bf16.gmra.mrb[0].mxu0 %v5787
        %v6207 = vpop.f32.mrb[0].mxu0
        %v6208 = vadd.f32 0.0, %v6207
        %v6209 = vpop.f32.mrb[0].mxu0
        %v6210 = vpop.f32.mrb[0].mxu0
        %v6211 = vadd.f32 0.0, %v6210
        %v6212 = vpop.f32.mrb[0].mxu0
        %6213 = vmatprep.mubr.bf16.mxu0 0
        %6214 = vmatmul.mubr.bf16.gmra.mrb[0].mxu0 %v5790
        %v6215 = vpop.f32.mrb[0].mxu0
        %v6216 = vadd.f32 0.0, %v6215
        %v6217 = vpop.f32.mrb[0].mxu0
        %v6218 = vpop.f32.mrb[0].mxu0
        %v6219 = vadd.f32 0.0, %v6218
        %v6220 = vpop.f32.mrb[0].mxu0
        %6221 = vmatprep.mubr.bf16.mxu0 0
        %6222 = vmatmul.mubr.bf16.gmra.mrb[0].mxu0 %v5793
        %v6223 = vpop.f32.mrb[0].mxu0
        %v6224 = vadd.f32 0.0, %v6223
        %v6225 = vpop.f32.mrb[0].mxu0
        %v6226 = vpop.f32.mrb[0].mxu0
        %v6227 = vadd.f32 0.0, %v6226
        %v6228 = vpop.f32.mrb[0].mxu0
        %6229 = vmatprep.mubr.bf16.mxu0 0
        %6230 = vmatmul.mubr.bf16.gmra.mrb[0].mxu0 %v5796
        %v6231 = vpop.f32.mrb[0].mxu0
        %v6232 = vadd.f32 0.0, %v6231
        %v6233 = vpop.f32.mrb[0].mxu0
        %v6234 = vpop.f32.mrb[0].mxu0
        %v6235 = vadd.f32 0.0, %v6234
        %v6236 = vpop.f32.mrb[0].mxu0
        %6237 = vmatprep.mubr.bf16.mxu0 0
        %6238 = vmatmul.mubr.bf16.gmra.mrb[0].mxu0 %v5799
        %v6239 = vpop.f32.mrb[0].mxu0
        %v6240 = vadd.f32 0.0, %v6239
        %v6241 = vpop.f32.mrb[0].mxu0
        %v6242 = vpop.f32.mrb[0].mxu0
        %v6243 = vadd.f32 0.0, %v6242
        %v6244 = vpop.f32.mrb[0].mxu0
        %6245 = vmatprep.mubr.bf16.mxu0 0
        %6246 = vmatmul.mubr.bf16.gmra.mrb[0].mxu0 %v5802
        %v6247 = vpop.f32.mrb[0].mxu0
        %v6248 = vadd.f32 0.0, %v6247
        %v6249 = vpop.f32.mrb[0].mxu0
        %v6250 = vpop.f32.mrb[0].mxu0
        %v6251 = vadd.f32 0.0, %v6250
        %v6252 = vpop.f32.mrb[0].mxu0
        %6253 = vmatprep.mubr.bf16.mxu0 0
        %6254 = vmatmul.mubr.bf16.gmra.mrb[0].mxu0 %v5805
        %v6255 = vpop.f32.mrb[0].mxu0
        %v6256 = vadd.f32 0.0, %v6255
        %v6257 = vpop.f32.mrb[0].mxu0
        %v6258 = vpop.f32.mrb[0].mxu0
        %v6259 = vadd.f32 0.0, %v6258
        %v6260 = vpop.f32.mrb[0].mxu0
        %6261 = vmatprep.mubr.bf16.mxu0 0
        %6262 = vmatmul.mubr.bf16.gmra.mrb[0].mxu0 %v5808
        %v6263 = vpop.f32.mrb[0].mxu0
        %v6264 = vadd.f32 0.0, %v6263
        %v6265 = vpop.f32.mrb[0].mxu0
        %v6266 = vpop.f32.mrb[0].mxu0
        %v6267 = vadd.f32 0.0, %v6266
        %v6268 = vpop.f32.mrb[0].mxu0
        %6269 = vmatprep.mubr.bf16.mxu0 0
        %6270 = vmatmul.mubr.bf16.gmra.mrb[0].mxu0 %v5811
        %v6271 = vpop.f32.mrb[0].mxu0
        %v6272 = vadd.f32 0.0, %v6271
        %v6273 = vpop.f32.mrb[0].mxu0
        %v6274 = vpop.f32.mrb[0].mxu0
        %v6275 = vadd.f32 0.0, %v6274
        %v6276 = vpop.f32.mrb[0].mxu0
        %6277 = vmatprep.mubr.bf16.mxu0 0
        %6278 = vmatmul.mubr.bf16.gmra.mrb[0].mxu0 %v5814
        %v6279 = vpop.f32.mrb[0].mxu0
        %v6280 = vadd.f32 0.0, %v6279
        %v6281 = vpop.f32.mrb[0].mxu0
        %v6282 = vpop.f32.mrb[0].mxu0
        %v6283 = vadd.f32 0.0, %v6282
        %v6284 = vpop.f32.mrb[0].mxu0
        %6285 = vmatprep.mubr.bf16.mxu0 0
        %6286 = vmatmul.mubr.bf16.gmra.mrb[0].mxu0 %v5817
        %v6287 = vpop.f32.mrb[0].mxu0
        %v6288 = vpop.f32.mrb[0].mxu0
        %v6289 = vpop.f32.mrb[0].mxu0
        %v6290 = vpop.f32.mrb[0].mxu0
        %6291 = vmatprep.mubr.bf16.mxu0 0
        %6292 = vmatmul.mubr.bf16.gmra.mrb[0].mxu0 %v5820
        %v6293 = vpop.f32.mrb[0].mxu0
        %v6294 = vpop.f32.mrb[0].mxu0
        %v6295 = vpop.f32.mrb[0].mxu0
        %v6296 = vpop.f32.mrb[0].mxu0
        %6297 = vmatprep.mubr.bf16.mxu0 0
        %6298 = vmatmul.mubr.bf16.gmra.mrb[0].mxu0 %v5823
        %v6299 = vpop.f32.mrb[0].mxu0
        %v6300 = vpop.f32.mrb[0].mxu0
        %v6301 = vpop.f32.mrb[0].mxu0
        %v6302 = vpop.f32.mrb[0].mxu0
        %6303 = vmatprep.mubr.bf16.mxu0 0
        %6304 = vmatmul.mubr.bf16.gmra.mrb[0].mxu0 %v5823
        %v6305 = vpop.f32.mrb[0].mxu0
        %v6306 = vpop.f32.mrb[0].mxu0
        %v6307 = vpop.f32.mrb[0].mxu0
        %v6308 = vpop.f32.mrb[0].mxu0
        %6309 = vdwg.mxu0
        %v6310 = vadd.f32 %v6030, %v6208
        %v6311 = vadd.f32 %v6033, %v6211
        %v6312 = vadd.f32 %v6038, %v6216
        %v6313 = vadd.f32 %v6041, %v6219
        %v6314 = vadd.f32 %v6046, %v6224
        %v6315 = vadd.f32 %v6049, %v6227
        %v6316 = vadd.f32 %v6054, %v6232
        %v6317 = vadd.f32 %v6057, %v6235
        %v6318 = vadd.f32 %v6062, %v6240
        %v6319 = vadd.f32 %v6065, %v6243
        %v6320 = vadd.f32 %v6070, %v6248
        %v6321 = vadd.f32 %v6073, %v6251
        %v6322 = vadd.f32 %v6078, %v6256
        %v6323 = vadd.f32 %v6081, %v6259
        %v6324 = vadd.f32 %v6086, %v6264
        %v6325 = vadd.f32 %v6089, %v6267
        %v6326 = vadd.f32 %v6094, %v6272
        %v6327 = vadd.f32 %v6097, %v6275
        %v6328 = vadd.f32 %v6102, %v6280
        %v6329 = vadd.f32 %v6105, %v6283
        %s6330 = scalar_lea.vmem %s3, 120
        %v6331 = vld [vmem:[%s6330] sm:$0xf]
        %v6332 = vld [vmem:[%s6330 + $0x4] sm:$0xf]
        %v6333 = vld [vmem:[%s6330 + $0x8] sm:$0xf]
        %v6334 = vld [vmem:[%s6330 + $0xc] sm:$0xf]
        %v6335 = vld [vmem:[%s6330 + $0x10] sm:$0xf]
        %v6336 = vld [vmem:[%s6330 + $0x14] sm:$0xf]
        %v6337 = vld [vmem:[%s6330 + $0x18] sm:$0xf]
        %v6338 = vld [vmem:[%s6330 + $0x1c] sm:$0xf]
        %v6339 = vld [vmem:[%s6330 + $0x20] sm:$0xf]
        %v6340 = vld [vmem:[%s6330 + $0x24] sm:$0xf]
        %v6351 = vunpack.c.l.b16 %v6331
        %v6352 = vunpack.c.l.b16 %v6332
        %v6353 = vunpack.c.l.b16 %v6333
        %v6354 = vunpack.c.l.b16 %v6334
        %v6355 = vunpack.c.l.b16 %v6335
        %v6356 = vunpack.c.l.b16 %v6336
        %v6357 = vunpack.c.l.b16 %v6337
        %v6358 = vunpack.c.l.b16 %v6338
        %v6359 = vunpack.c.l.b16 %v6339
        %v6360 = vunpack.c.l.b16 %v6340
        %v6361 = vpack.c.b16 %v6352, %v6351
        %v6362 = vpack.c.b16 %v6354, %v6353
        %v6363 = vpack.c.b16 %v6356, %v6355
        %v6364 = vpack.c.b16 %v6358, %v6357
        %v6365 = vpack.c.b16 %v6360, %v6359
        %6371 = vmatprep.subr.bf16.mxu0 0
        %6372 = vmatpush1.bf16.msra.mxu0 %v6361
        %6373 = vmatprep.subr.bf16.mxu0 0
        %6374 = vmatpush1.bf16.msra.mxu0 %v6362
        %6375 = vmatprep.subr.bf16.mxu0 0
        %6376 = vmatpush1.bf16.msra.mxu0 %v6363
        %6377 = vmatprep.subr.bf16.mxu0 0
        %6378 = vmatpush1.bf16.msra.mxu0 %v6364
        %6379 = vmatprep.subr.bf16.mxu0 0
        %6380 = vmatpush1.bf16.msra.mxu0 %v6365
        %6381 = vmatprep.subr.bf16.mxu0 0
        %6382 = vmatpush1.bf16.msra.mxu0 0
        %6383 = vmatprep.subr.bf16.mxu0 0
        %6384 = vmatpush1.bf16.msra.mxu0 0
        %6385 = vmatprep.subr.bf16.mxu0 0
        %6386 = vmatpush1.bf16.msra.mxu0 0
        %6387 = vmatprep.subr.bf16.mxu0 0
        %6388 = vmatpush1.bf16.msra.mxu0 0
        %6389 = vmatprep.subr.bf16.mxu0 0
        %6390 = vmatpush1.bf16.msra.mxu0 0
        %6391 = vmatprep.subr.bf16.mxu0 0
        %6392 = vmatpush1.bf16.msra.mxu0 0
        %6393 = vmatprep.subr.bf16.mxu0 0
        %6394 = vmatpush1.bf16.msra.mxu0 0
        %6395 = vmatprep.subr.bf16.mxu0 0
        %6396 = vmatpush1.bf16.msra.mxu0 0
        %6397 = vmatprep.subr.bf16.mxu0 0
        %6398 = vmatpush1.bf16.msra.mxu0 0
        %6399 = vmatprep.subr.bf16.mxu0 0
        %6400 = vmatpush1.bf16.msra.mxu0 0
        %6401 = vmatprep.subr.bf16.mxu0 0
        %6402 = vmatpush1.bf16.msra.mxu0 0
        %6403 = vmatprep.mubr.bf16.mxu0 0
        %6404 = vmatmul.mubr.bf16.gmra.mrb[0].mxu0 %v5790
        %v6405 = vpop.f32.mrb[0].mxu0
        %v6406 = vadd.f32 0.0, %v6405
        %v6407 = vpop.f32.mrb[0].mxu0
        %v6408 = vpop.f32.mrb[0].mxu0
        %v6409 = vadd.f32 0.0, %v6408
        %v6410 = vpop.f32.mrb[0].mxu0
        %6411 = vmatprep.mubr.bf16.mxu0 0
        %6412 = vmatmul.mubr.bf16.gmra.mrb[0].mxu0 %v5793
        %v6413 = vpop.f32.mrb[0].mxu0
        %v6414 = vadd.f32 0.0, %v6413
        %v6415 = vpop.f32.mrb[0].mxu0
        %v6416 = vpop.f32.mrb[0].mxu0
        %v6417 = vadd.f32 0.0, %v6416
        %v6418 = vpop.f32.mrb[0].mxu0
        %6419 = vmatprep.mubr.bf16.mxu0 0
        %6420 = vmatmul.mubr.bf16.gmra.mrb[0].mxu0 %v5796
        %v6421 = vpop.f32.mrb[0].mxu0
        %v6422 = vadd.f32 0.0, %v6421
        %v6423 = vpop.f32.mrb[0].mxu0
        %v6424 = vpop.f32.mrb[0].mxu0
        %v6425 = vadd.f32 0.0, %v6424
        %v6426 = vpop.f32.mrb[0].mxu0
        %6427 = vmatprep.mubr.bf16.mxu0 0
        %6428 = vmatmul.mubr.bf16.gmra.mrb[0].mxu0 %v5799
        %v6429 = vpop.f32.mrb[0].mxu0
        %v6430 = vadd.f32 0.0, %v6429
        %v6431 = vpop.f32.mrb[0].mxu0
        %v6432 = vpop.f32.mrb[0].mxu0
        %v6433 = vadd.f32 0.0, %v6432
        %v6434 = vpop.f32.mrb[0].mxu0
        %6435 = vmatprep.mubr.bf16.mxu0 0
        %6436 = vmatmul.mubr.bf16.gmra.mrb[0].mxu0 %v5802
        %v6437 = vpop.f32.mrb[0].mxu0
        %v6438 = vadd.f32 0.0, %v6437
        %v6439 = vpop.f32.mrb[0].mxu0
        %v6440 = vpop.f32.mrb[0].mxu0
        %v6441 = vadd.f32 0.0, %v6440
        %v6442 = vpop.f32.mrb[0].mxu0
        %6443 = vmatprep.mubr.bf16.mxu0 0
        %6444 = vmatmul.mubr.bf16.gmra.mrb[0].mxu0 %v5805
        %v6445 = vpop.f32.mrb[0].mxu0
        %v6446 = vadd.f32 0.0, %v6445
        %v6447 = vpop.f32.mrb[0].mxu0
        %v6448 = vpop.f32.mrb[0].mxu0
        %v6449 = vadd.f32 0.0, %v6448
        %v6450 = vpop.f32.mrb[0].mxu0
        %6451 = vmatprep.mubr.bf16.mxu0 0
        %6452 = vmatmul.mubr.bf16.gmra.mrb[0].mxu0 %v5808
        %v6453 = vpop.f32.mrb[0].mxu0
        %v6454 = vadd.f32 0.0, %v6453
        %v6455 = vpop.f32.mrb[0].mxu0
        %v6456 = vpop.f32.mrb[0].mxu0
        %v6457 = vadd.f32 0.0, %v6456
        %v6458 = vpop.f32.mrb[0].mxu0
        %6459 = vmatprep.mubr.bf16.mxu0 0
        %6460 = vmatmul.mubr.bf16.gmra.mrb[0].mxu0 %v5811
        %v6461 = vpop.f32.mrb[0].mxu0
        %v6462 = vadd.f32 0.0, %v6461
        %v6463 = vpop.f32.mrb[0].mxu0
        %v6464 = vpop.f32.mrb[0].mxu0
        %v6465 = vadd.f32 0.0, %v6464
        %v6466 = vpop.f32.mrb[0].mxu0
        %6467 = vmatprep.mubr.bf16.mxu0 0
        %6468 = vmatmul.mubr.bf16.gmra.mrb[0].mxu0 %v5814
        %v6469 = vpop.f32.mrb[0].mxu0
        %v6470 = vadd.f32 0.0, %v6469
        %v6471 = vpop.f32.mrb[0].mxu0
        %v6472 = vpop.f32.mrb[0].mxu0
        %v6473 = vadd.f32 0.0, %v6472
        %v6474 = vpop.f32.mrb[0].mxu0
        %6475 = vmatprep.mubr.bf16.mxu0 0
        %6476 = vmatmul.mubr.bf16.gmra.mrb[0].mxu0 %v5817
        %v6477 = vpop.f32.mrb[0].mxu0
        %v6478 = vadd.f32 0.0, %v6477
        %v6479 = vpop.f32.mrb[0].mxu0
        %v6480 = vpop.f32.mrb[0].mxu0
        %v6481 = vadd.f32 0.0, %v6480
        %v6482 = vpop.f32.mrb[0].mxu0
        %6483 = vmatprep.mubr.bf16.mxu0 0
        %6484 = vmatmul.mubr.bf16.gmra.mrb[0].mxu0 %v5820
        %v6485 = vpop.f32.mrb[0].mxu0
        %v6486 = vpop.f32.mrb[0].mxu0
        %v6487 = vpop.f32.mrb[0].mxu0
        %v6488 = vpop.f32.mrb[0].mxu0
        %6489 = vmatprep.mubr.bf16.mxu0 0
        %6490 = vmatmul.mubr.bf16.gmra.mrb[0].mxu0 %v5823
        %v6491 = vpop.f32.mrb[0].mxu0
        %v6492 = vpop.f32.mrb[0].mxu0
        %v6493 = vpop.f32.mrb[0].mxu0
        %v6494 = vpop.f32.mrb[0].mxu0
        %6495 = vmatprep.mubr.bf16.mxu0 0
        %6496 = vmatmul.mubr.bf16.gmra.mrb[0].mxu0 %v5823
        %v6497 = vpop.f32.mrb[0].mxu0
        %v6498 = vpop.f32.mrb[0].mxu0
        %v6499 = vpop.f32.mrb[0].mxu0
        %v6500 = vpop.f32.mrb[0].mxu0
        %6501 = vmatprep.mubr.bf16.mxu0 0
        %6502 = vmatmul.mubr.bf16.gmra.mrb[0].mxu0 %v5823
        %v6503 = vpop.f32.mrb[0].mxu0
        %v6504 = vpop.f32.mrb[0].mxu0
        %v6505 = vpop.f32.mrb[0].mxu0
        %v6506 = vpop.f32.mrb[0].mxu0
        %6507 = vdwg.mxu0
        %v6508 = vadd.f32 %v6310, %v6406
        %v6509 = vadd.f32 %v6311, %v6409
        %v6510 = vadd.f32 %v6312, %v6414
        %v6511 = vadd.f32 %v6313, %v6417
        %v6512 = vadd.f32 %v6314, %v6422
        %v6513 = vadd.f32 %v6315, %v6425
        %v6514 = vadd.f32 %v6316, %v6430
        %v6515 = vadd.f32 %v6317, %v6433
        %v6516 = vadd.f32 %v6318, %v6438
        %v6517 = vadd.f32 %v6319, %v6441
        %v6518 = vadd.f32 %v6320, %v6446
        %v6519 = vadd.f32 %v6321, %v6449
        %v6520 = vadd.f32 %v6322, %v6454
        %v6521 = vadd.f32 %v6323, %v6457
        %v6522 = vadd.f32 %v6324, %v6462
        %v6523 = vadd.f32 %v6325, %v6465
        %v6524 = vadd.f32 %v6326, %v6470
        %v6525 = vadd.f32 %v6327, %v6473
        %v6526 = vadd.f32 %v6328, %v6478
        %v6527 = vadd.f32 %v6329, %v6481
        %s6528 = scalar_lea.vmem %s3, 160
        %v6529 = vld [vmem:[%s6528] sm:$0xf]
        %v6530 = vld [vmem:[%s6528 + $0x4] sm:$0xf]
        %v6531 = vld [vmem:[%s6528 + $0x8] sm:$0xf]
        %v6532 = vld [vmem:[%s6528 + $0xc] sm:$0xf]
        %v6533 = vld [vmem:[%s6528 + $0x10] sm:$0xf]
        %v6534 = vld [vmem:[%s6528 + $0x14] sm:$0xf]
        %v6535 = vld [vmem:[%s6528 + $0x18] sm:$0xf]
        %v6536 = vld [vmem:[%s6528 + $0x1c] sm:$0xf]
        %v6537 = vld [vmem:[%s6528 + $0x20] sm:$0xf]
        %v6538 = vld [vmem:[%s6528 + $0x24] sm:$0xf]
        %v6549 = vunpack.c.l.b16 %v6529
        %v6550 = vunpack.c.l.b16 %v6530
        %v6551 = vunpack.c.l.b16 %v6531
        %v6552 = vunpack.c.l.b16 %v6532
        %v6553 = vunpack.c.l.b16 %v6533
        %v6554 = vunpack.c.l.b16 %v6534
        %v6555 = vunpack.c.l.b16 %v6535
        %v6556 = vunpack.c.l.b16 %v6536
        %v6557 = vunpack.c.l.b16 %v6537
        %v6558 = vunpack.c.l.b16 %v6538
        %v6559 = vpack.c.b16 %v6550, %v6549
        %v6560 = vpack.c.b16 %v6552, %v6551
        %v6561 = vpack.c.b16 %v6554, %v6553
        %v6562 = vpack.c.b16 %v6556, %v6555
        %v6563 = vpack.c.b16 %v6558, %v6557
        %6569 = vmatprep.subr.bf16.mxu0 0
        %6570 = vmatpush1.bf16.msra.mxu0 %v6559
        %6571 = vmatprep.subr.bf16.mxu0 0
        %6572 = vmatpush1.bf16.msra.mxu0 %v6560
        %6573 = vmatprep.subr.bf16.mxu0 0
        %6574 = vmatpush1.bf16.msra.mxu0 %v6561
        %6575 = vmatprep.subr.bf16.mxu0 0
        %6576 = vmatpush1.bf16.msra.mxu0 %v6562
        %6577 = vmatprep.subr.bf16.mxu0 0
        %6578 = vmatpush1.bf16.msra.mxu0 %v6563
        %6579 = vmatprep.subr.bf16.mxu0 0
        %6580 = vmatpush1.bf16.msra.mxu0 0
        %6581 = vmatprep.subr.bf16.mxu0 0
        %6582 = vmatpush1.bf16.msra.mxu0 0
        %6583 = vmatprep.subr.bf16.mxu0 0
        %6584 = vmatpush1.bf16.msra.mxu0 0
        %6585 = vmatprep.subr.bf16.mxu0 0
        %6586 = vmatpush1.bf16.msra.mxu0 0
        %6587 = vmatprep.subr.bf16.mxu0 0
        %6588 = vmatpush1.bf16.msra.mxu0 0
        %6589 = vmatprep.subr.bf16.mxu0 0
        %6590 = vmatpush1.bf16.msra.mxu0 0
        %6591 = vmatprep.subr.bf16.mxu0 0
        %6592 = vmatpush1.bf16.msra.mxu0 0
        %6593 = vmatprep.subr.bf16.mxu0 0
        %6594 = vmatpush1.bf16.msra.mxu0 0
        %6595 = vmatprep.subr.bf16.mxu0 0
        %6596 = vmatpush1.bf16.msra.mxu0 0
        %6597 = vmatprep.subr.bf16.mxu0 0
        %6598 = vmatpush1.bf16.msra.mxu0 0
        %6599 = vmatprep.subr.bf16.mxu0 0
        %6600 = vmatpush1.bf16.msra.mxu0 0
        %6601 = vmatprep.mubr.bf16.mxu0 0
        %6602 = vmatmul.mubr.bf16.gmra.mrb[0].mxu0 %v5793
        %v6603 = vpop.f32.mrb[0].mxu0
        %v6604 = vadd.f32 0.0, %v6603
        %v6605 = vpop.f32.mrb[0].mxu0
        %v6606 = vpop.f32.mrb[0].mxu0
        %v6607 = vadd.f32 0.0, %v6606
        %v6608 = vpop.f32.mrb[0].mxu0
        %6609 = vmatprep.mubr.bf16.mxu0 0
        %6610 = vmatmul.mubr.bf16.gmra.mrb[0].mxu0 %v5796
        %v6611 = vpop.f32.mrb[0].mxu0
        %v6612 = vadd.f32 0.0, %v6611
        %v6613 = vpop.f32.mrb[0].mxu0
        %v6614 = vpop.f32.mrb[0].mxu0
        %v6615 = vadd.f32 0.0, %v6614
        %v6616 = vpop.f32.mrb[0].mxu0
        %6617 = vmatprep.mubr.bf16.mxu0 0
        %6618 = vmatmul.mubr.bf16.gmra.mrb[0].mxu0 %v5799
        %v6619 = vpop.f32.mrb[0].mxu0
        %v6620 = vadd.f32 0.0, %v6619
        %v6621 = vpop.f32.mrb[0].mxu0
        %v6622 = vpop.f32.mrb[0].mxu0
        %v6623 = vadd.f32 0.0, %v6622
        %v6624 = vpop.f32.mrb[0].mxu0
        %6625 = vmatprep.mubr.bf16.mxu0 0
        %6626 = vmatmul.mubr.bf16.gmra.mrb[0].mxu0 %v5802
        %v6627 = vpop.f32.mrb[0].mxu0
        %v6628 = vadd.f32 0.0, %v6627
        %v6629 = vpop.f32.mrb[0].mxu0
        %v6630 = vpop.f32.mrb[0].mxu0
        %v6631 = vadd.f32 0.0, %v6630
        %v6632 = vpop.f32.mrb[0].mxu0
        %6633 = vmatprep.mubr.bf16.mxu0 0
        %6634 = vmatmul.mubr.bf16.gmra.mrb[0].mxu0 %v5805
        %v6635 = vpop.f32.mrb[0].mxu0
        %v6636 = vadd.f32 0.0, %v6635
        %v6637 = vpop.f32.mrb[0].mxu0
        %v6638 = vpop.f32.mrb[0].mxu0
        %v6639 = vadd.f32 0.0, %v6638
        %v6640 = vpop.f32.mrb[0].mxu0
        %6641 = vmatprep.mubr.bf16.mxu0 0
        %6642 = vmatmul.mubr.bf16.gmra.mrb[0].mxu0 %v5808
        %v6643 = vpop.f32.mrb[0].mxu0
        %v6644 = vadd.f32 0.0, %v6643
        %v6645 = vpop.f32.mrb[0].mxu0
        %v6646 = vpop.f32.mrb[0].mxu0
        %v6647 = vadd.f32 0.0, %v6646
        %v6648 = vpop.f32.mrb[0].mxu0
        %6649 = vmatprep.mubr.bf16.mxu0 0
        %6650 = vmatmul.mubr.bf16.gmra.mrb[0].mxu0 %v5811
        %v6651 = vpop.f32.mrb[0].mxu0
        %v6652 = vadd.f32 0.0, %v6651
        %v6653 = vpop.f32.mrb[0].mxu0
        %v6654 = vpop.f32.mrb[0].mxu0
        %v6655 = vadd.f32 0.0, %v6654
        %v6656 = vpop.f32.mrb[0].mxu0
        %6657 = vmatprep.mubr.bf16.mxu0 0
        %6658 = vmatmul.mubr.bf16.gmra.mrb[0].mxu0 %v5814
        %v6659 = vpop.f32.mrb[0].mxu0
        %v6660 = vadd.f32 0.0, %v6659
        %v6661 = vpop.f32.mrb[0].mxu0
        %v6662 = vpop.f32.mrb[0].mxu0
        %v6663 = vadd.f32 0.0, %v6662
        %v6664 = vpop.f32.mrb[0].mxu0
        %6665 = vmatprep.mubr.bf16.mxu0 0
        %6666 = vmatmul.mubr.bf16.gmra.mrb[0].mxu0 %v5817
        %v6667 = vpop.f32.mrb[0].mxu0
        %v6668 = vadd.f32 0.0, %v6667
        %v6669 = vpop.f32.mrb[0].mxu0
        %v6670 = vpop.f32.mrb[0].mxu0
        %v6671 = vadd.f32 0.0, %v6670
        %v6672 = vpop.f32.mrb[0].mxu0
        %6673 = vmatprep.mubr.bf16.mxu0 0
        %6674 = vmatmul.mubr.bf16.gmra.mrb[0].mxu0 %v5820
        %v6675 = vpop.f32.mrb[0].mxu0
        %v6676 = vadd.f32 0.0, %v6675
        %v6677 = vpop.f32.mrb[0].mxu0
        %v6678 = vpop.f32.mrb[0].mxu0
        %v6679 = vadd.f32 0.0, %v6678
        %v6680 = vpop.f32.mrb[0].mxu0
        %6681 = vmatprep.mubr.bf16.mxu0 0
        %6682 = vmatmul.mubr.bf16.gmra.mrb[0].mxu0 %v5823
        %v6683 = vpop.f32.mrb[0].mxu0
        %v6684 = vpop.f32.mrb[0].mxu0
        %v6685 = vpop.f32.mrb[0].mxu0
        %v6686 = vpop.f32.mrb[0].mxu0
        %6687 = vmatprep.mubr.bf16.mxu0 0
        %6688 = vmatmul.mubr.bf16.gmra.mrb[0].mxu0 %v5823
        %v6689 = vpop.f32.mrb[0].mxu0
        %v6690 = vpop.f32.mrb[0].mxu0
        %v6691 = vpop.f32.mrb[0].mxu0
        %v6692 = vpop.f32.mrb[0].mxu0
        %6693 = vmatprep.mubr.bf16.mxu0 0
        %6694 = vmatmul.mubr.bf16.gmra.mrb[0].mxu0 %v5823
        %v6695 = vpop.f32.mrb[0].mxu0
        %v6696 = vpop.f32.mrb[0].mxu0
        %v6697 = vpop.f32.mrb[0].mxu0
        %v6698 = vpop.f32.mrb[0].mxu0
        %6699 = vmatprep.mubr.bf16.mxu0 0
        %6700 = vmatmul.mubr.bf16.gmra.mrb[0].mxu0 %v5823
        %v6701 = vpop.f32.mrb[0].mxu0
        %v6702 = vpop.f32.mrb[0].mxu0
        %v6703 = vpop.f32.mrb[0].mxu0
        %v6704 = vpop.f32.mrb[0].mxu0
        %6705 = vdwg.mxu0
        %v6706 = vadd.f32 %v6508, %v6604
        %v6707 = vadd.f32 %v6509, %v6607
        %v6708 = vadd.f32 %v6510, %v6612
        %v6709 = vadd.f32 %v6511, %v6615
        %v6710 = vadd.f32 %v6512, %v6620
        %v6711 = vadd.f32 %v6513, %v6623
        %v6712 = vadd.f32 %v6514, %v6628
        %v6713 = vadd.f32 %v6515, %v6631
        %v6714 = vadd.f32 %v6516, %v6636
        %v6715 = vadd.f32 %v6517, %v6639
        %v6716 = vadd.f32 %v6518, %v6644
        %v6717 = vadd.f32 %v6519, %v6647
        %v6718 = vadd.f32 %v6520, %v6652
        %v6719 = vadd.f32 %v6521, %v6655
        %v6720 = vadd.f32 %v6522, %v6660
        %v6721 = vadd.f32 %v6523, %v6663
        %v6722 = vadd.f32 %v6524, %v6668
        %v6723 = vadd.f32 %v6525, %v6671
        %v6724 = vadd.f32 %v6526, %v6676
        %v6725 = vadd.f32 %v6527, %v6679
        %v6726 = vld [vmem:[%s4] sm:$0x1]
        %v6728 = vlaneseq
        %v6729 = vshrl.u32 %v6728, 7
        %v6730 = vsub.s32 0, %v6729
        %v6731 = vrot.slane %v6726, %v6730
        %v6733 = vadd.f32 %v6706, %v6731
        %v6734 = vadd.f32 %v6707, %v6731
        %v6735 = vadd.f32 %v6708, %v6731
        %v6736 = vadd.f32 %v6709, %v6731
        %v6737 = vadd.f32 %v6710, %v6731
        %v6738 = vadd.f32 %v6711, %v6731
        %v6739 = vadd.f32 %v6712, %v6731
        %v6740 = vadd.f32 %v6713, %v6731
        %v6741 = vadd.f32 %v6714, %v6731
        %v6742 = vadd.f32 %v6715, %v6731
        %v6743 = vadd.f32 %v6716, %v6731
        %v6744 = vadd.f32 %v6717, %v6731
        %v6745 = vadd.f32 %v6718, %v6731
        %v6746 = vadd.f32 %v6719, %v6731
        %v6747 = vadd.f32 %v6720, %v6731
        %v6748 = vadd.f32 %v6721, %v6731
        %v6749 = vadd.f32 %v6722, %v6731
        %v6750 = vadd.f32 %v6723, %v6731
        %v6751 = vadd.f32 %v6724, %v6731
        %v6752 = vadd.f32 %v6725, %v6731
        %v6753 = vmax.f32 %v6733, 0.0
        %v6754 = vmax.f32 %v6734, 0.0
        %v6755 = vmax.f32 %v6735, 0.0
        %v6756 = vmax.f32 %v6736, 0.0
        %v6757 = vmax.f32 %v6737, 0.0
        %v6758 = vmax.f32 %v6738, 0.0
        %v6759 = vmax.f32 %v6739, 0.0
        %v6760 = vmax.f32 %v6740, 0.0
        %v6761 = vmax.f32 %v6741, 0.0
        %v6762 = vmax.f32 %v6742, 0.0
        %v6763 = vmax.f32 %v6743, 0.0
        %v6764 = vmax.f32 %v6744, 0.0
        %v6765 = vmax.f32 %v6745, 0.0
        %v6766 = vmax.f32 %v6746, 0.0
        %v6767 = vmax.f32 %v6747, 0.0
        %v6768 = vmax.f32 %v6748, 0.0
        %v6769 = vmax.f32 %v6749, 0.0
        %v6770 = vmax.f32 %v6750, 0.0
        %v6771 = vmax.f32 %v6751, 0.0
        %v6772 = vmax.f32 %v6752, 0.0
        %vm6773 = vcmask 130048
        %v6774 = vsel %vm6773, %v6753, -inf
        %v6775 = vsel %vm6773, %v6755, -inf
        %v6776 = vmax.f32 %v6774, %v6775
        %v6777 = vsel %vm6773, %v6754, -inf
        %v6778 = vsel %vm6773, %v6756, -inf
        %v6779 = vmax.f32 %v6777, %v6778
        %v6780 = vsel %vm6773, %v6757, -inf
        %v6781 = vsel %vm6773, %v6759, -inf
        %v6782 = vmax.f32 %v6780, %v6781
        %v6783 = vsel %vm6773, %v6758, -inf
        %v6784 = vsel %vm6773, %v6760, -inf
        %v6785 = vmax.f32 %v6783, %v6784
        %v6786 = vsel %vm6773, %v6761, -inf
        %v6787 = vsel %vm6773, %v6763, -inf
        %v6788 = vmax.f32 %v6786, %v6787
        %v6789 = vsel %vm6773, %v6762, -inf
        %v6790 = vsel %vm6773, %v6764, -inf
        %v6791 = vmax.f32 %v6789, %v6790
        %v6792 = vsel %vm6773, %v6765, -inf
        %v6793 = vsel %vm6773, %v6767, -inf
        %v6794 = vmax.f32 %v6792, %v6793
        %v6795 = vsel %vm6773, %v6766, -inf
        %v6796 = vsel %vm6773, %v6768, -inf
        %v6797 = vmax.f32 %v6795, %v6796
        %v6798 = vsel %vm6773, %v6769, -inf
        %v6799 = vsel %vm6773, %v6771, -inf
        %v6800 = vmax.f32 %v6798, %v6799
        %v6801 = vsel %vm6773, %v6770, -inf
        %v6802 = vsel %vm6773, %v6772, -inf
        %v6803 = vmax.f32 %v6801, %v6802
        %v6814 = vcombine.high %v6776, %v6776
        %v6816 = vunpack.c.l.s4 1983009808
        %v6817 = vunpack.c.0.s8 %v6816
        %v6818 = vlaneseq
        %v6819 = vshrl.u32 %v6818, 7
        %v6820 = vsub.s32 %v6817, %v6819
        %v6821 = vrot.slane %v6776, %v6820
        %v6823 = vunpack.c.l.s4 1983009808
        %v6824 = vunpack.c.0.s8 %v6823
        %v6825 = vlaneseq
        %v6826 = vshrl.u32 %v6825, 7
        %v6827 = vsub.s32 %v6824, %v6826
        %v6828 = vrot.slane %v6814, %v6827
        %v6829 = vcombine.high %v6821, %v6821
        %v6830 = vcombine.high %v6828, %v6828
        %v6832 = vunpack.c.l.s4 1983009808
        %v6833 = vunpack.c.0.s8 %v6832
        %v6834 = vlaneseq
        %v6835 = vshrl.u32 %v6834, 7
        %v6836 = vsub.s32 %v6833, %v6835
        %v6837 = vrot.slane %v6779, %v6836
        %v6838 = vcombine.high %v6782, %v6782
        %v6840 = vunpack.c.l.s4 1983009808
        %v6841 = vunpack.c.0.s8 %v6840
        %v6842 = vlaneseq
        %v6843 = vshrl.u32 %v6842, 7
        %v6844 = vsub.s32 %v6841, %v6843
        %v6845 = vrot.slane %v6782, %v6844
        %v6847 = vunpack.c.l.s4 1983009808
        %v6848 = vunpack.c.0.s8 %v6847
        %v6849 = vlaneseq
        %v6850 = vshrl.u32 %v6849, 7
        %v6851 = vsub.s32 %v6848, %v6850
        %v6852 = vrot.slane %v6838, %v6851
        %v6853 = vcombine.high %v6845, %v6845
        %v6854 = vcombine.high %v6852, %v6852
        %v6856 = vunpack.c.l.s4 1983009808
        %v6857 = vunpack.c.0.s8 %v6856
        %v6858 = vlaneseq
        %v6859 = vshrl.u32 %v6858, 7
        %v6860 = vsub.s32 %v6857, %v6859
        %v6861 = vrot.slane %v6785, %v6860
        %v6862 = vcombine.high %v6788, %v6788
        %v6864 = vunpack.c.l.s4 1983009808
        %v6865 = vunpack.c.0.s8 %v6864
        %v6866 = vlaneseq
        %v6867 = vshrl.u32 %v6866, 7
        %v6868 = vsub.s32 %v6865, %v6867
        %v6869 = vrot.slane %v6788, %v6868
        %v6871 = vunpack.c.l.s4 1983009808
        %v6872 = vunpack.c.0.s8 %v6871
        %v6873 = vlaneseq
        %v6874 = vshrl.u32 %v6873, 7
        %v6875 = vsub.s32 %v6872, %v6874
        %v6876 = vrot.slane %v6862, %v6875
        %v6877 = vcombine.high %v6869, %v6869
        %v6878 = vcombine.high %v6876, %v6876
        %v6880 = vunpack.c.l.s4 1983009808
        %v6881 = vunpack.c.0.s8 %v6880
        %v6882 = vlaneseq
        %v6883 = vshrl.u32 %v6882, 7
        %v6884 = vsub.s32 %v6881, %v6883
        %v6885 = vrot.slane %v6791, %v6884
        %v6886 = vcombine.high %v6794, %v6794
        %v6888 = vunpack.c.l.s4 1983009808
        %v6889 = vunpack.c.0.s8 %v6888
        %v6890 = vlaneseq
        %v6891 = vshrl.u32 %v6890, 7
        %v6892 = vsub.s32 %v6889, %v6891
        %v6893 = vrot.slane %v6794, %v6892
        %v6895 = vunpack.c.l.s4 1983009808
        %v6896 = vunpack.c.0.s8 %v6895
        %v6897 = vlaneseq
        %v6898 = vshrl.u32 %v6897, 7
        %v6899 = vsub.s32 %v6896, %v6898
        %v6900 = vrot.slane %v6886, %v6899
        %v6901 = vcombine.high %v6893, %v6893
        %v6902 = vcombine.high %v6900, %v6900
        %v6904 = vunpack.c.l.s4 1983009808
        %v6905 = vunpack.c.0.s8 %v6904
        %v6906 = vlaneseq
        %v6907 = vshrl.u32 %v6906, 7
        %v6908 = vsub.s32 %v6905, %v6907
        %v6909 = vrot.slane %v6797, %v6908
        %v6910 = vcombine.high %v6800, %v6800
        %v6912 = vunpack.c.l.s4 1983009808
        %v6913 = vunpack.c.0.s8 %v6912
        %v6914 = vlaneseq
        %v6915 = vshrl.u32 %v6914, 7
        %v6916 = vsub.s32 %v6913, %v6915
        %v6917 = vrot.slane %v6800, %v6916
        %v6919 = vunpack.c.l.s4 1983009808
        %v6920 = vunpack.c.0.s8 %v6919
        %v6921 = vlaneseq
        %v6922 = vshrl.u32 %v6921, 7
        %v6923 = vsub.s32 %v6920, %v6922
        %v6924 = vrot.slane %v6910, %v6923
        %v6925 = vcombine.high %v6917, %v6917
        %v6926 = vcombine.high %v6924, %v6924
        %v6928 = vunpack.c.l.s4 1983009808
        %v6929 = vunpack.c.0.s8 %v6928
        %v6930 = vlaneseq
        %v6931 = vshrl.u32 %v6930, 7
        %v6932 = vsub.s32 %v6929, %v6931
        %v6933 = vrot.slane %v6803, %v6932
        %vm6959 = vcmask 123904
        %v6960 = vsel %vm6959, %v6821, -inf
        %v6961 = vrot.slane %v6960, 4
        %v6962 = vmax.f32 %v6960, %v6961
        %v6963 = vrot.slane %v6962, 2
        %v6964 = vmax.f32 %v6962, %v6963
        %v6965 = vrot.slane %v6964, 1
        %v6966 = vmax.f32 %v6964, %v6965
        %v6967 = vsel %vm6959, %v6829, -inf
        %v6968 = vrot.slane %v6967, 4
        %v6969 = vmax.f32 %v6967, %v6968
        %v6970 = vrot.slane %v6969, 2
        %v6971 = vmax.f32 %v6969, %v6970
        %v6972 = vrot.slane %v6971, 1
        %v6973 = vmax.f32 %v6971, %v6972
        %v6974 = vsel %vm6959, %v6828, -inf
        %v6975 = vrot.slane %v6974, 4
        %v6976 = vmax.f32 %v6974, %v6975
        %v6977 = vrot.slane %v6976, 2
        %v6978 = vmax.f32 %v6976, %v6977
        %v6979 = vrot.slane %v6978, 1
        %v6980 = vmax.f32 %v6978, %v6979
        %v6981 = vsel %vm6959, %v6830, -inf
        %v6982 = vrot.slane %v6981, 4
        %v6983 = vmax.f32 %v6981, %v6982
        %v6984 = vrot.slane %v6983, 2
        %v6985 = vmax.f32 %v6983, %v6984
        %v6986 = vrot.slane %v6985, 1
        %v6987 = vmax.f32 %v6985, %v6986
        %v6988 = vsel %vm6959, %v6837, -inf
        %v6989 = vrot.slane %v6988, 4
        %v6990 = vmax.f32 %v6988, %v6989
        %v6991 = vrot.slane %v6990, 2
        %v6992 = vmax.f32 %v6990, %v6991
        %v6993 = vrot.slane %v6992, 1
        %v6994 = vmax.f32 %v6992, %v6993
        %v6995 = vsel %vm6959, %v6845, -inf
        %v6996 = vrot.slane %v6995, 4
        %v6997 = vmax.f32 %v6995, %v6996
        %v6998 = vrot.slane %v6997, 2
        %v6999 = vmax.f32 %v6997, %v6998
        %v7000 = vrot.slane %v6999, 1
        %v7001 = vmax.f32 %v6999, %v7000
        %v7002 = vsel %vm6959, %v6853, -inf
        %v7003 = vrot.slane %v7002, 4
        %v7004 = vmax.f32 %v7002, %v7003
        %v7005 = vrot.slane %v7004, 2
        %v7006 = vmax.f32 %v7004, %v7005
        %v7007 = vrot.slane %v7006, 1
        %v7008 = vmax.f32 %v7006, %v7007
        %v7009 = vsel %vm6959, %v6852, -inf
        %v7010 = vrot.slane %v7009, 4
        %v7011 = vmax.f32 %v7009, %v7010
        %v7012 = vrot.slane %v7011, 2
        %v7013 = vmax.f32 %v7011, %v7012
        %v7014 = vrot.slane %v7013, 1
        %v7015 = vmax.f32 %v7013, %v7014
        %v7016 = vsel %vm6959, %v6854, -inf
        %v7017 = vrot.slane %v7016, 4
        %v7018 = vmax.f32 %v7016, %v7017
        %v7019 = vrot.slane %v7018, 2
        %v7020 = vmax.f32 %v7018, %v7019
        %v7021 = vrot.slane %v7020, 1
        %v7022 = vmax.f32 %v7020, %v7021
        %v7023 = vsel %vm6959, %v6861, -inf
        %v7024 = vrot.slane %v7023, 4
        %v7025 = vmax.f32 %v7023, %v7024
        %v7026 = vrot.slane %v7025, 2
        %v7027 = vmax.f32 %v7025, %v7026
        %v7028 = vrot.slane %v7027, 1
        %v7029 = vmax.f32 %v7027, %v7028
        %v7030 = vsel %vm6959, %v6869, -inf
        %v7031 = vrot.slane %v7030, 4
        %v7032 = vmax.f32 %v7030, %v7031
        %v7033 = vrot.slane %v7032, 2
        %v7034 = vmax.f32 %v7032, %v7033
        %v7035 = vrot.slane %v7034, 1
        %v7036 = vmax.f32 %v7034, %v7035
        %v7037 = vsel %vm6959, %v6877, -inf
        %v7038 = vrot.slane %v7037, 4
        %v7039 = vmax.f32 %v7037, %v7038
        %v7040 = vrot.slane %v7039, 2
        %v7041 = vmax.f32 %v7039, %v7040
        %v7042 = vrot.slane %v7041, 1
        %v7043 = vmax.f32 %v7041, %v7042
        %v7044 = vsel %vm6959, %v6876, -inf
        %v7045 = vrot.slane %v7044, 4
        %v7046 = vmax.f32 %v7044, %v7045
        %v7047 = vrot.slane %v7046, 2
        %v7048 = vmax.f32 %v7046, %v7047
        %v7049 = vrot.slane %v7048, 1
        %v7050 = vmax.f32 %v7048, %v7049
        %v7051 = vsel %vm6959, %v6878, -inf
        %v7052 = vrot.slane %v7051, 4
        %v7053 = vmax.f32 %v7051, %v7052
        %v7054 = vrot.slane %v7053, 2
        %v7055 = vmax.f32 %v7053, %v7054
        %v7056 = vrot.slane %v7055, 1
        %v7057 = vmax.f32 %v7055, %v7056
        %v7058 = vsel %vm6959, %v6885, -inf
        %v7059 = vrot.slane %v7058, 4
        %v7060 = vmax.f32 %v7058, %v7059
        %v7061 = vrot.slane %v7060, 2
        %v7062 = vmax.f32 %v7060, %v7061
        %v7063 = vrot.slane %v7062, 1
        %v7064 = vmax.f32 %v7062, %v7063
        %v7065 = vsel %vm6959, %v6893, -inf
        %v7066 = vrot.slane %v7065, 4
        %v7067 = vmax.f32 %v7065, %v7066
        %v7068 = vrot.slane %v7067, 2
        %v7069 = vmax.f32 %v7067, %v7068
        %v7070 = vrot.slane %v7069, 1
        %v7071 = vmax.f32 %v7069, %v7070
        %v7072 = vsel %vm6959, %v6901, -inf
        %v7073 = vrot.slane %v7072, 4
        %v7074 = vmax.f32 %v7072, %v7073
        %v7075 = vrot.slane %v7074, 2
        %v7076 = vmax.f32 %v7074, %v7075
        %v7077 = vrot.slane %v7076, 1
        %v7078 = vmax.f32 %v7076, %v7077
        %v7079 = vsel %vm6959, %v6900, -inf
        %v7080 = vrot.slane %v7079, 4
        %v7081 = vmax.f32 %v7079, %v7080
        %v7082 = vrot.slane %v7081, 2
        %v7083 = vmax.f32 %v7081, %v7082
        %v7084 = vrot.slane %v7083, 1
        %v7085 = vmax.f32 %v7083, %v7084
        %v7086 = vsel %vm6959, %v6902, -inf
        %v7087 = vrot.slane %v7086, 4
        %v7088 = vmax.f32 %v7086, %v7087
        %v7089 = vrot.slane %v7088, 2
        %v7090 = vmax.f32 %v7088, %v7089
        %v7091 = vrot.slane %v7090, 1
        %v7092 = vmax.f32 %v7090, %v7091
        %v7093 = vsel %vm6959, %v6909, -inf
        %v7094 = vrot.slane %v7093, 4
        %v7095 = vmax.f32 %v7093, %v7094
        %v7096 = vrot.slane %v7095, 2
        %v7097 = vmax.f32 %v7095, %v7096
        %v7098 = vrot.slane %v7097, 1
        %v7099 = vmax.f32 %v7097, %v7098
        %v7100 = vsel %vm6959, %v6917, -inf
        %v7101 = vrot.slane %v7100, 4
        %v7102 = vmax.f32 %v7100, %v7101
        %v7103 = vrot.slane %v7102, 2
        %v7104 = vmax.f32 %v7102, %v7103
        %v7105 = vrot.slane %v7104, 1
        %v7106 = vmax.f32 %v7104, %v7105
        %v7107 = vsel %vm6959, %v6925, -inf
        %v7108 = vrot.slane %v7107, 4
        %v7109 = vmax.f32 %v7107, %v7108
        %v7110 = vrot.slane %v7109, 2
        %v7111 = vmax.f32 %v7109, %v7110
        %v7112 = vrot.slane %v7111, 1
        %v7113 = vmax.f32 %v7111, %v7112
        %v7114 = vsel %vm6959, %v6924, -inf
        %v7115 = vrot.slane %v7114, 4
        %v7116 = vmax.f32 %v7114, %v7115
        %v7117 = vrot.slane %v7116, 2
        %v7118 = vmax.f32 %v7116, %v7117
        %v7119 = vrot.slane %v7118, 1
        %v7120 = vmax.f32 %v7118, %v7119
        %v7121 = vsel %vm6959, %v6926, -inf
        %v7122 = vrot.slane %v7121, 4
        %v7123 = vmax.f32 %v7121, %v7122
        %v7124 = vrot.slane %v7123, 2
        %v7125 = vmax.f32 %v7123, %v7124
        %v7126 = vrot.slane %v7125, 1
        %v7127 = vmax.f32 %v7125, %v7126
        %v7128 = vsel %vm6959, %v6933, -inf
        %v7129 = vrot.slane %v7128, 4
        %v7130 = vmax.f32 %v7128, %v7129
        %v7131 = vrot.slane %v7130, 2
        %v7132 = vmax.f32 %v7130, %v7131
        %v7133 = vrot.slane %v7132, 1
        %v7134 = vmax.f32 %v7132, %v7133
        %v7135 = vpack.c.bf16 %v6966, %v6966
        %v7136 = vld [vmem:[%s5] sm:$0xf]
        %v7137 = vld [vmem:[%s5 + $0x4] sm:$0xf]
        %v7138 = vpack.c.bf16 %v6973, %v6973
        %s7139 = scalar_lea.vmem %s5, 8
        %v7140 = vld [vmem:[%s7139] sm:$0xf]
        %v7141 = vld [vmem:[%s7139 + $0x4] sm:$0xf]
        %v7144 = vunpack.c.l.b16 %v7140
        %v7145 = vunpack.c.l.b16 %v7141
        %v7146 = vpack.c.b16 %v7145, %v7144
        %v7149 = vsel %vm6773, %v7138, 0
        %7151 = vmatprep.subr.bf16.mxu0 0
        %7152 = vmatpush1.bf16.msra.mxu0 %v7146
        %7153 = vmatprep.subr.bf16.mxu0 0
        %7154 = vmatpush1.bf16.msra.mxu0 0
        %7155 = vmatprep.subr.bf16.mxu0 0
        %7156 = vmatpush1.bf16.msra.mxu0 0
        %7157 = vmatprep.subr.bf16.mxu0 0
        %7158 = vmatpush1.bf16.msra.mxu0 0
        %7159 = vmatprep.subr.bf16.mxu0 0
        %7160 = vmatpush1.bf16.msra.mxu0 0
        %7161 = vmatprep.subr.bf16.mxu0 0
        %7162 = vmatpush1.bf16.msra.mxu0 0
        %7163 = vmatprep.subr.bf16.mxu0 0
        %7164 = vmatpush1.bf16.msra.mxu0 0
        %7165 = vmatprep.subr.bf16.mxu0 0
        %7166 = vmatpush1.bf16.msra.mxu0 0
        %7167 = vmatprep.subr.bf16.mxu0 0
        %7168 = vmatpush1.bf16.msra.mxu0 0
        %7169 = vmatprep.subr.bf16.mxu0 0
        %7170 = vmatpush1.bf16.msra.mxu0 0
        %7171 = vmatprep.subr.bf16.mxu0 0
        %7172 = vmatpush1.bf16.msra.mxu0 0
        %7173 = vmatprep.subr.bf16.mxu0 0
        %7174 = vmatpush1.bf16.msra.mxu0 0
        %7175 = vmatprep.subr.bf16.mxu0 0
        %7176 = vmatpush1.bf16.msra.mxu0 0
        %7177 = vmatprep.subr.bf16.mxu0 0
        %7178 = vmatpush1.bf16.msra.mxu0 0
        %7179 = vmatprep.subr.bf16.mxu0 0
        %7180 = vmatpush1.bf16.msra.mxu0 0
        %7181 = vmatprep.subr.bf16.mxu0 0
        %7182 = vmatpush1.bf16.msra.mxu0 0
        %7183 = vmatprep.mubr.bf16.mxu0 0
        %7184 = vmatmul.mubr.bf16.gmra.mrb[0].mxu0 %v7149
        %v7185 = vpop.f32.mrb[0].mxu0
        %v7186 = vadd.f32 0.0, %v7185
        %v7187 = vpop.f32.mrb[0].mxu0
        %v7188 = vpop.f32.mrb[0].mxu0
        %v7189 = vpop.f32.mrb[0].mxu0
        %7190 = vdwg.mxu0
        %v7193 = vunpack.c.l.b16 %v7136
        %v7194 = vunpack.c.l.b16 %v7137
        %v7195 = vpack.c.b16 %v7194, %v7193
        %v7198 = vsel %vm6773, %v7135, 0
        %7200 = vmatprep.subr.bf16.mxu0 0
        %7201 = vmatpush1.bf16.msra.mxu0 %v7195
        %7202 = vmatprep.subr.bf16.mxu0 0
        %7203 = vmatpush1.bf16.msra.mxu0 0
        %7204 = vmatprep.subr.bf16.mxu0 0
        %7205 = vmatpush1.bf16.msra.mxu0 0
        %7206 = vmatprep.subr.bf16.mxu0 0
        %7207 = vmatpush1.bf16.msra.mxu0 0
        %7208 = vmatprep.subr.bf16.mxu0 0
        %7209 = vmatpush1.bf16.msra.mxu0 0
        %7210 = vmatprep.subr.bf16.mxu0 0
        %7211 = vmatpush1.bf16.msra.mxu0 0
        %7212 = vmatprep.subr.bf16.mxu0 0
        %7213 = vmatpush1.bf16.msra.mxu0 0
        %7214 = vmatprep.subr.bf16.mxu0 0
        %7215 = vmatpush1.bf16.msra.mxu0 0
        %7216 = vmatprep.subr.bf16.mxu0 0
        %7217 = vmatpush1.bf16.msra.mxu0 0
        %7218 = vmatprep.subr.bf16.mxu0 0
        %7219 = vmatpush1.bf16.msra.mxu0 0
        %7220 = vmatprep.subr.bf16.mxu0 0
        %7221 = vmatpush1.bf16.msra.mxu0 0
        %7222 = vmatprep.subr.bf16.mxu0 0
        %7223 = vmatpush1.bf16.msra.mxu0 0
        %7224 = vmatprep.subr.bf16.mxu0 0
        %7225 = vmatpush1.bf16.msra.mxu0 0
        %7226 = vmatprep.subr.bf16.mxu0 0
        %7227 = vmatpush1.bf16.msra.mxu0 0
        %7228 = vmatprep.subr.bf16.mxu0 0
        %7229 = vmatpush1.bf16.msra.mxu0 0
        %7230 = vmatprep.subr.bf16.mxu0 0
        %7231 = vmatpush1.bf16.msra.mxu0 0
        %7232 = vmatprep.mubr.bf16.mxu0 0
        %7233 = vmatmul.mubr.bf16.gmra.mrb[0].mxu0 %v7198
        %v7234 = vpop.f32.mrb[0].mxu0
        %v7235 = vadd.f32 %v7186, %v7234
        %v7236 = vpop.f32.mrb[0].mxu0
        %v7237 = vpop.f32.mrb[0].mxu0
        %v7238 = vpop.f32.mrb[0].mxu0
        %7239 = vdwg.mxu0
        %v7240 = vpack.c.bf16 %v6980, %v6980
        %s7241 = scalar_lea.vmem %s5, 16
        %v7242 = vld [vmem:[%s7241] sm:$0xf]
        %v7243 = vld [vmem:[%s7241 + $0x4] sm:$0xf]
        %v7246 = vunpack.c.l.b16 %v7242
        %v7247 = vunpack.c.l.b16 %v7243
        %v7248 = vpack.c.b16 %v7247, %v7246
        %v7251 = vsel %vm6773, %v7240, 0
        %7253 = vmatprep.subr.bf16.mxu0 0
        %7254 = vmatpush1.bf16.msra.mxu0 %v7248
        %7255 = vmatprep.subr.bf16.mxu0 0
        %7256 = vmatpush1.bf16.msra.mxu0 0
        %7257 = vmatprep.subr.bf16.mxu0 0
        %7258 = vmatpush1.bf16.msra.mxu0 0
        %7259 = vmatprep.subr.bf16.mxu0 0
        %7260 = vmatpush1.bf16.msra.mxu0 0
        %7261 = vmatprep.subr.bf16.mxu0 0
        %7262 = vmatpush1.bf16.msra.mxu0 0
        %7263 = vmatprep.subr.bf16.mxu0 0
        %7264 = vmatpush1.bf16.msra.mxu0 0
        %7265 = vmatprep.subr.bf16.mxu0 0
        %7266 = vmatpush1.bf16.msra.mxu0 0
        %7267 = vmatprep.subr.bf16.mxu0 0
        %7268 = vmatpush1.bf16.msra.mxu0 0
        %7269 = vmatprep.subr.bf16.mxu0 0
        %7270 = vmatpush1.bf16.msra.mxu0 0
        %7271 = vmatprep.subr.bf16.mxu0 0
        %7272 = vmatpush1.bf16.msra.mxu0 0
        %7273 = vmatprep.subr.bf16.mxu0 0
        %7274 = vmatpush1.bf16.msra.mxu0 0
        %7275 = vmatprep.subr.bf16.mxu0 0
        %7276 = vmatpush1.bf16.msra.mxu0 0
        %7277 = vmatprep.subr.bf16.mxu0 0
        %7278 = vmatpush1.bf16.msra.mxu0 0
        %7279 = vmatprep.subr.bf16.mxu0 0
        %7280 = vmatpush1.bf16.msra.mxu0 0
        %7281 = vmatprep.subr.bf16.mxu0 0
        %7282 = vmatpush1.bf16.msra.mxu0 0
        %7283 = vmatprep.subr.bf16.mxu0 0
        %7284 = vmatpush1.bf16.msra.mxu0 0
        %7285 = vmatprep.mubr.bf16.mxu0 0
        %7286 = vmatmul.mubr.bf16.gmra.mrb[0].mxu0 %v7251
        %v7287 = vpop.f32.mrb[0].mxu0
        %v7288 = vadd.f32 0.0, %v7287
        %v7289 = vpop.f32.mrb[0].mxu0
        %v7290 = vpop.f32.mrb[0].mxu0
        %v7291 = vpop.f32.mrb[0].mxu0
        %7292 = vdwg.mxu0
        %v7293 = vadd.f32 %v7235, %v7288
        %v7294 = vpack.c.bf16 %v6987, %v6987
        %s7295 = scalar_lea.vmem %s5, 24
        %v7296 = vld [vmem:[%s7295] sm:$0xf]
        %v7297 = vld [vmem:[%s7295 + $0x4] sm:$0xf]
        %v7300 = vunpack.c.l.b16 %v7296
        %v7301 = vunpack.c.l.b16 %v7297
        %v7302 = vpack.c.b16 %v7301, %v7300
        %v7305 = vsel %vm6773, %v7294, 0
        %7307 = vmatprep.subr.bf16.mxu0 0
        %7308 = vmatpush1.bf16.msra.mxu0 %v7302
        %7309 = vmatprep.subr.bf16.mxu0 0
        %7310 = vmatpush1.bf16.msra.mxu0 0
        %7311 = vmatprep.subr.bf16.mxu0 0
        %7312 = vmatpush1.bf16.msra.mxu0 0
        %7313 = vmatprep.subr.bf16.mxu0 0
        %7314 = vmatpush1.bf16.msra.mxu0 0
        %7315 = vmatprep.subr.bf16.mxu0 0
        %7316 = vmatpush1.bf16.msra.mxu0 0
        %7317 = vmatprep.subr.bf16.mxu0 0
        %7318 = vmatpush1.bf16.msra.mxu0 0
        %7319 = vmatprep.subr.bf16.mxu0 0
        %7320 = vmatpush1.bf16.msra.mxu0 0
        %7321 = vmatprep.subr.bf16.mxu0 0
        %7322 = vmatpush1.bf16.msra.mxu0 0
        %7323 = vmatprep.subr.bf16.mxu0 0
        %7324 = vmatpush1.bf16.msra.mxu0 0
        %7325 = vmatprep.subr.bf16.mxu0 0
        %7326 = vmatpush1.bf16.msra.mxu0 0
        %7327 = vmatprep.subr.bf16.mxu0 0
        %7328 = vmatpush1.bf16.msra.mxu0 0
        %7329 = vmatprep.subr.bf16.mxu0 0
        %7330 = vmatpush1.bf16.msra.mxu0 0
        %7331 = vmatprep.subr.bf16.mxu0 0
        %7332 = vmatpush1.bf16.msra.mxu0 0
        %7333 = vmatprep.subr.bf16.mxu0 0
        %7334 = vmatpush1.bf16.msra.mxu0 0
        %7335 = vmatprep.subr.bf16.mxu0 0
        %7336 = vmatpush1.bf16.msra.mxu0 0
        %7337 = vmatprep.subr.bf16.mxu0 0
        %7338 = vmatpush1.bf16.msra.mxu0 0
        %7339 = vmatprep.mubr.bf16.mxu0 0
        %7340 = vmatmul.mubr.bf16.gmra.mrb[0].mxu0 %v7305
        %v7341 = vpop.f32.mrb[0].mxu0
        %v7342 = vadd.f32 0.0, %v7341
        %v7343 = vpop.f32.mrb[0].mxu0
        %v7344 = vpop.f32.mrb[0].mxu0
        %v7345 = vpop.f32.mrb[0].mxu0
        %7346 = vdwg.mxu0
        %v7347 = vadd.f32 %v7293, %v7342
        %v7348 = vpack.c.bf16 %v6994, %v6994
        %s7349 = scalar_lea.vmem %s5, 32
        %v7350 = vld [vmem:[%s7349] sm:$0xf]
        %v7351 = vld [vmem:[%s7349 + $0x4] sm:$0xf]
        %v7354 = vunpack.c.l.b16 %v7350
        %v7355 = vunpack.c.l.b16 %v7351
        %v7356 = vpack.c.b16 %v7355, %v7354
        %v7359 = vsel %vm6773, %v7348, 0
        %7361 = vmatprep.subr.bf16.mxu0 0
        %7362 = vmatpush1.bf16.msra.mxu0 %v7356
        %7363 = vmatprep.subr.bf16.mxu0 0
        %7364 = vmatpush1.bf16.msra.mxu0 0
        %7365 = vmatprep.subr.bf16.mxu0 0
        %7366 = vmatpush1.bf16.msra.mxu0 0
        %7367 = vmatprep.subr.bf16.mxu0 0
        %7368 = vmatpush1.bf16.msra.mxu0 0
        %7369 = vmatprep.subr.bf16.mxu0 0
        %7370 = vmatpush1.bf16.msra.mxu0 0
        %7371 = vmatprep.subr.bf16.mxu0 0
        %7372 = vmatpush1.bf16.msra.mxu0 0
        %7373 = vmatprep.subr.bf16.mxu0 0
        %7374 = vmatpush1.bf16.msra.mxu0 0
        %7375 = vmatprep.subr.bf16.mxu0 0
        %7376 = vmatpush1.bf16.msra.mxu0 0
        %7377 = vmatprep.subr.bf16.mxu0 0
        %7378 = vmatpush1.bf16.msra.mxu0 0
        %7379 = vmatprep.subr.bf16.mxu0 0
        %7380 = vmatpush1.bf16.msra.mxu0 0
        %7381 = vmatprep.subr.bf16.mxu0 0
        %7382 = vmatpush1.bf16.msra.mxu0 0
        %7383 = vmatprep.subr.bf16.mxu0 0
        %7384 = vmatpush1.bf16.msra.mxu0 0
        %7385 = vmatprep.subr.bf16.mxu0 0
        %7386 = vmatpush1.bf16.msra.mxu0 0
        %7387 = vmatprep.subr.bf16.mxu0 0
        %7388 = vmatpush1.bf16.msra.mxu0 0
        %7389 = vmatprep.subr.bf16.mxu0 0
        %7390 = vmatpush1.bf16.msra.mxu0 0
        %7391 = vmatprep.subr.bf16.mxu0 0
        %7392 = vmatpush1.bf16.msra.mxu0 0
        %7393 = vmatprep.mubr.bf16.mxu0 0
        %7394 = vmatmul.mubr.bf16.gmra.mrb[0].mxu0 %v7359
        %v7395 = vpop.f32.mrb[0].mxu0
        %v7396 = vadd.f32 0.0, %v7395
        %v7397 = vpop.f32.mrb[0].mxu0
        %v7398 = vpop.f32.mrb[0].mxu0
        %v7399 = vpop.f32.mrb[0].mxu0
        %7400 = vdwg.mxu0
        %v7401 = vadd.f32 %v7347, %v7396
        %v7402 = vpack.c.bf16 %v7001, %v7001
        %s7403 = scalar_lea.vmem %s5, 40
        %v7404 = vld [vmem:[%s7403] sm:$0xf]
        %v7405 = vld [vmem:[%s7403 + $0x4] sm:$0xf]
        %v7408 = vunpack.c.l.b16 %v7404
        %v7409 = vunpack.c.l.b16 %v7405
        %v7410 = vpack.c.b16 %v7409, %v7408
        %v7413 = vsel %vm6773, %v7402, 0
        %7415 = vmatprep.subr.bf16.mxu0 0
        %7416 = vmatpush1.bf16.msra.mxu0 %v7410
        %7417 = vmatprep.subr.bf16.mxu0 0
        %7418 = vmatpush1.bf16.msra.mxu0 0
        %7419 = vmatprep.subr.bf16.mxu0 0
        %7420 = vmatpush1.bf16.msra.mxu0 0
        %7421 = vmatprep.subr.bf16.mxu0 0
        %7422 = vmatpush1.bf16.msra.mxu0 0
        %7423 = vmatprep.subr.bf16.mxu0 0
        %7424 = vmatpush1.bf16.msra.mxu0 0
        %7425 = vmatprep.subr.bf16.mxu0 0
        %7426 = vmatpush1.bf16.msra.mxu0 0
        %7427 = vmatprep.subr.bf16.mxu0 0
        %7428 = vmatpush1.bf16.msra.mxu0 0
        %7429 = vmatprep.subr.bf16.mxu0 0
        %7430 = vmatpush1.bf16.msra.mxu0 0
        %7431 = vmatprep.subr.bf16.mxu0 0
        %7432 = vmatpush1.bf16.msra.mxu0 0
        %7433 = vmatprep.subr.bf16.mxu0 0
        %7434 = vmatpush1.bf16.msra.mxu0 0
        %7435 = vmatprep.subr.bf16.mxu0 0
        %7436 = vmatpush1.bf16.msra.mxu0 0
        %7437 = vmatprep.subr.bf16.mxu0 0
        %7438 = vmatpush1.bf16.msra.mxu0 0
        %7439 = vmatprep.subr.bf16.mxu0 0
        %7440 = vmatpush1.bf16.msra.mxu0 0
        %7441 = vmatprep.subr.bf16.mxu0 0
        %7442 = vmatpush1.bf16.msra.mxu0 0
        %7443 = vmatprep.subr.bf16.mxu0 0
        %7444 = vmatpush1.bf16.msra.mxu0 0
        %7445 = vmatprep.subr.bf16.mxu0 0
        %7446 = vmatpush1.bf16.msra.mxu0 0
        %7447 = vmatprep.mubr.bf16.mxu0 0
        %7448 = vmatmul.mubr.bf16.gmra.mrb[0].mxu0 %v7413
        %v7449 = vpop.f32.mrb[0].mxu0
        %v7450 = vadd.f32 0.0, %v7449
        %v7451 = vpop.f32.mrb[0].mxu0
        %v7452 = vpop.f32.mrb[0].mxu0
        %v7453 = vpop.f32.mrb[0].mxu0
        %7454 = vdwg.mxu0
        %v7455 = vadd.f32 %v7401, %v7450
        %v7456 = vpack.c.bf16 %v7008, %v7008
        %s7457 = scalar_lea.vmem %s5, 48
        %v7458 = vld [vmem:[%s7457] sm:$0xf]
        %v7459 = vld [vmem:[%s7457 + $0x4] sm:$0xf]
        %v7462 = vunpack.c.l.b16 %v7458
        %v7463 = vunpack.c.l.b16 %v7459
        %v7464 = vpack.c.b16 %v7463, %v7462
        %v7467 = vsel %vm6773, %v7456, 0
        %7469 = vmatprep.subr.bf16.mxu0 0
        %7470 = vmatpush1.bf16.msra.mxu0 %v7464
        %7471 = vmatprep.subr.bf16.mxu0 0
        %7472 = vmatpush1.bf16.msra.mxu0 0
        %7473 = vmatprep.subr.bf16.mxu0 0
        %7474 = vmatpush1.bf16.msra.mxu0 0
        %7475 = vmatprep.subr.bf16.mxu0 0
        %7476 = vmatpush1.bf16.msra.mxu0 0
        %7477 = vmatprep.subr.bf16.mxu0 0
        %7478 = vmatpush1.bf16.msra.mxu0 0
        %7479 = vmatprep.subr.bf16.mxu0 0
        %7480 = vmatpush1.bf16.msra.mxu0 0
        %7481 = vmatprep.subr.bf16.mxu0 0
        %7482 = vmatpush1.bf16.msra.mxu0 0
        %7483 = vmatprep.subr.bf16.mxu0 0
        %7484 = vmatpush1.bf16.msra.mxu0 0
        %7485 = vmatprep.subr.bf16.mxu0 0
        %7486 = vmatpush1.bf16.msra.mxu0 0
        %7487 = vmatprep.subr.bf16.mxu0 0
        %7488 = vmatpush1.bf16.msra.mxu0 0
        %7489 = vmatprep.subr.bf16.mxu0 0
        %7490 = vmatpush1.bf16.msra.mxu0 0
        %7491 = vmatprep.subr.bf16.mxu0 0
        %7492 = vmatpush1.bf16.msra.mxu0 0
        %7493 = vmatprep.subr.bf16.mxu0 0
        %7494 = vmatpush1.bf16.msra.mxu0 0
        %7495 = vmatprep.subr.bf16.mxu0 0
        %7496 = vmatpush1.bf16.msra.mxu0 0
        %7497 = vmatprep.subr.bf16.mxu0 0
        %7498 = vmatpush1.bf16.msra.mxu0 0
        %7499 = vmatprep.subr.bf16.mxu0 0
        %7500 = vmatpush1.bf16.msra.mxu0 0
        %7501 = vmatprep.mubr.bf16.mxu0 0
        %7502 = vmatmul.mubr.bf16.gmra.mrb[0].mxu0 %v7467
        %v7503 = vpop.f32.mrb[0].mxu0
        %v7504 = vadd.f32 0.0, %v7503
        %v7505 = vpop.f32.mrb[0].mxu0
        %v7506 = vpop.f32.mrb[0].mxu0
        %v7507 = vpop.f32.mrb[0].mxu0
        %7508 = vdwg.mxu0
        %v7509 = vadd.f32 %v7455, %v7504
        %v7510 = vpack.c.bf16 %v7015, %v7015
        %s7511 = scalar_lea.vmem %s5, 56
        %v7512 = vld [vmem:[%s7511] sm:$0xf]
        %v7513 = vld [vmem:[%s7511 + $0x4] sm:$0xf]
        %v7516 = vunpack.c.l.b16 %v7512
        %v7517 = vunpack.c.l.b16 %v7513
        %v7518 = vpack.c.b16 %v7517, %v7516
        %v7521 = vsel %vm6773, %v7510, 0
        %7523 = vmatprep.subr.bf16.mxu0 0
        %7524 = vmatpush1.bf16.msra.mxu0 %v7518
        %7525 = vmatprep.subr.bf16.mxu0 0
        %7526 = vmatpush1.bf16.msra.mxu0 0
        %7527 = vmatprep.subr.bf16.mxu0 0
        %7528 = vmatpush1.bf16.msra.mxu0 0
        %7529 = vmatprep.subr.bf16.mxu0 0
        %7530 = vmatpush1.bf16.msra.mxu0 0
        %7531 = vmatprep.subr.bf16.mxu0 0
        %7532 = vmatpush1.bf16.msra.mxu0 0
        %7533 = vmatprep.subr.bf16.mxu0 0
        %7534 = vmatpush1.bf16.msra.mxu0 0
        %7535 = vmatprep.subr.bf16.mxu0 0
        %7536 = vmatpush1.bf16.msra.mxu0 0
        %7537 = vmatprep.subr.bf16.mxu0 0
        %7538 = vmatpush1.bf16.msra.mxu0 0
        %7539 = vmatprep.subr.bf16.mxu0 0
        %7540 = vmatpush1.bf16.msra.mxu0 0
        %7541 = vmatprep.subr.bf16.mxu0 0
        %7542 = vmatpush1.bf16.msra.mxu0 0
        %7543 = vmatprep.subr.bf16.mxu0 0
        %7544 = vmatpush1.bf16.msra.mxu0 0
        %7545 = vmatprep.subr.bf16.mxu0 0
        %7546 = vmatpush1.bf16.msra.mxu0 0
        %7547 = vmatprep.subr.bf16.mxu0 0
        %7548 = vmatpush1.bf16.msra.mxu0 0
        %7549 = vmatprep.subr.bf16.mxu0 0
        %7550 = vmatpush1.bf16.msra.mxu0 0
        %7551 = vmatprep.subr.bf16.mxu0 0
        %7552 = vmatpush1.bf16.msra.mxu0 0
        %7553 = vmatprep.subr.bf16.mxu0 0
        %7554 = vmatpush1.bf16.msra.mxu0 0
        %7555 = vmatprep.mubr.bf16.mxu0 0
        %7556 = vmatmul.mubr.bf16.gmra.mrb[0].mxu0 %v7521
        %v7557 = vpop.f32.mrb[0].mxu0
        %v7558 = vadd.f32 0.0, %v7557
        %v7559 = vpop.f32.mrb[0].mxu0
        %v7560 = vpop.f32.mrb[0].mxu0
        %v7561 = vpop.f32.mrb[0].mxu0
        %7562 = vdwg.mxu0
        %v7563 = vadd.f32 %v7509, %v7558
        %v7564 = vpack.c.bf16 %v7022, %v7022
        %s7565 = scalar_lea.vmem %s5, 64
        %v7566 = vld [vmem:[%s7565] sm:$0xf]
        %v7567 = vld [vmem:[%s7565 + $0x4] sm:$0xf]
        %v7570 = vunpack.c.l.b16 %v7566
        %v7571 = vunpack.c.l.b16 %v7567
        %v7572 = vpack.c.b16 %v7571, %v7570
        %v7575 = vsel %vm6773, %v7564, 0
        %7577 = vmatprep.subr.bf16.mxu0 0
        %7578 = vmatpush1.bf16.msra.mxu0 %v7572
        %7579 = vmatprep.subr.bf16.mxu0 0
        %7580 = vmatpush1.bf16.msra.mxu0 0
        %7581 = vmatprep.subr.bf16.mxu0 0
        %7582 = vmatpush1.bf16.msra.mxu0 0
        %7583 = vmatprep.subr.bf16.mxu0 0
        %7584 = vmatpush1.bf16.msra.mxu0 0
        %7585 = vmatprep.subr.bf16.mxu0 0
        %7586 = vmatpush1.bf16.msra.mxu0 0
        %7587 = vmatprep.subr.bf16.mxu0 0
        %7588 = vmatpush1.bf16.msra.mxu0 0
        %7589 = vmatprep.subr.bf16.mxu0 0
        %7590 = vmatpush1.bf16.msra.mxu0 0
        %7591 = vmatprep.subr.bf16.mxu0 0
        %7592 = vmatpush1.bf16.msra.mxu0 0
        %7593 = vmatprep.subr.bf16.mxu0 0
        %7594 = vmatpush1.bf16.msra.mxu0 0
        %7595 = vmatprep.subr.bf16.mxu0 0
        %7596 = vmatpush1.bf16.msra.mxu0 0
        %7597 = vmatprep.subr.bf16.mxu0 0
        %7598 = vmatpush1.bf16.msra.mxu0 0
        %7599 = vmatprep.subr.bf16.mxu0 0
        %7600 = vmatpush1.bf16.msra.mxu0 0
        %7601 = vmatprep.subr.bf16.mxu0 0
        %7602 = vmatpush1.bf16.msra.mxu0 0
        %7603 = vmatprep.subr.bf16.mxu0 0
        %7604 = vmatpush1.bf16.msra.mxu0 0
        %7605 = vmatprep.subr.bf16.mxu0 0
        %7606 = vmatpush1.bf16.msra.mxu0 0
        %7607 = vmatprep.subr.bf16.mxu0 0
        %7608 = vmatpush1.bf16.msra.mxu0 0
        %7609 = vmatprep.mubr.bf16.mxu0 0
        %7610 = vmatmul.mubr.bf16.gmra.mrb[0].mxu0 %v7575
        %v7611 = vpop.f32.mrb[0].mxu0
        %v7612 = vadd.f32 0.0, %v7611
        %v7613 = vpop.f32.mrb[0].mxu0
        %v7614 = vpop.f32.mrb[0].mxu0
        %v7615 = vpop.f32.mrb[0].mxu0
        %7616 = vdwg.mxu0
        %v7617 = vadd.f32 %v7563, %v7612
        %v7618 = vpack.c.bf16 %v7029, %v7029
        %s7619 = scalar_lea.vmem %s5, 72
        %v7620 = vld [vmem:[%s7619] sm:$0xf]
        %v7621 = vld [vmem:[%s7619 + $0x4] sm:$0xf]
        %v7624 = vunpack.c.l.b16 %v7620
        %v7625 = vunpack.c.l.b16 %v7621
        %v7626 = vpack.c.b16 %v7625, %v7624
        %v7629 = vsel %vm6773, %v7618, 0
        %7631 = vmatprep.subr.bf16.mxu0 0
        %7632 = vmatpush1.bf16.msra.mxu0 %v7626
        %7633 = vmatprep.subr.bf16.mxu0 0
        %7634 = vmatpush1.bf16.msra.mxu0 0
        %7635 = vmatprep.subr.bf16.mxu0 0
        %7636 = vmatpush1.bf16.msra.mxu0 0
        %7637 = vmatprep.subr.bf16.mxu0 0
        %7638 = vmatpush1.bf16.msra.mxu0 0
        %7639 = vmatprep.subr.bf16.mxu0 0
        %7640 = vmatpush1.bf16.msra.mxu0 0
        %7641 = vmatprep.subr.bf16.mxu0 0
        %7642 = vmatpush1.bf16.msra.mxu0 0
        %7643 = vmatprep.subr.bf16.mxu0 0
        %7644 = vmatpush1.bf16.msra.mxu0 0
        %7645 = vmatprep.subr.bf16.mxu0 0
        %7646 = vmatpush1.bf16.msra.mxu0 0
        %7647 = vmatprep.subr.bf16.mxu0 0
        %7648 = vmatpush1.bf16.msra.mxu0 0
        %7649 = vmatprep.subr.bf16.mxu0 0
        %7650 = vmatpush1.bf16.msra.mxu0 0
        %7651 = vmatprep.subr.bf16.mxu0 0
        %7652 = vmatpush1.bf16.msra.mxu0 0
        %7653 = vmatprep.subr.bf16.mxu0 0
        %7654 = vmatpush1.bf16.msra.mxu0 0
        %7655 = vmatprep.subr.bf16.mxu0 0
        %7656 = vmatpush1.bf16.msra.mxu0 0
        %7657 = vmatprep.subr.bf16.mxu0 0
        %7658 = vmatpush1.bf16.msra.mxu0 0
        %7659 = vmatprep.subr.bf16.mxu0 0
        %7660 = vmatpush1.bf16.msra.mxu0 0
        %7661 = vmatprep.subr.bf16.mxu0 0
        %7662 = vmatpush1.bf16.msra.mxu0 0
        %7663 = vmatprep.mubr.bf16.mxu0 0
        %7664 = vmatmul.mubr.bf16.gmra.mrb[0].mxu0 %v7629
        %v7665 = vpop.f32.mrb[0].mxu0
        %v7666 = vadd.f32 0.0, %v7665
        %v7667 = vpop.f32.mrb[0].mxu0
        %v7668 = vpop.f32.mrb[0].mxu0
        %v7669 = vpop.f32.mrb[0].mxu0
        %7670 = vdwg.mxu0
        %v7671 = vadd.f32 %v7617, %v7666
        %v7672 = vpack.c.bf16 %v7036, %v7036
        %s7673 = scalar_lea.vmem %s5, 80
        %v7674 = vld [vmem:[%s7673] sm:$0xf]
        %v7675 = vld [vmem:[%s7673 + $0x4] sm:$0xf]
        %v7678 = vunpack.c.l.b16 %v7674
        %v7679 = vunpack.c.l.b16 %v7675
        %v7680 = vpack.c.b16 %v7679, %v7678
        %v7683 = vsel %vm6773, %v7672, 0
        %7685 = vmatprep.subr.bf16.mxu0 0
        %7686 = vmatpush1.bf16.msra.mxu0 %v7680
        %7687 = vmatprep.subr.bf16.mxu0 0
        %7688 = vmatpush1.bf16.msra.mxu0 0
        %7689 = vmatprep.subr.bf16.mxu0 0
        %7690 = vmatpush1.bf16.msra.mxu0 0
        %7691 = vmatprep.subr.bf16.mxu0 0
        %7692 = vmatpush1.bf16.msra.mxu0 0
        %7693 = vmatprep.subr.bf16.mxu0 0
        %7694 = vmatpush1.bf16.msra.mxu0 0
        %7695 = vmatprep.subr.bf16.mxu0 0
        %7696 = vmatpush1.bf16.msra.mxu0 0
        %7697 = vmatprep.subr.bf16.mxu0 0
        %7698 = vmatpush1.bf16.msra.mxu0 0
        %7699 = vmatprep.subr.bf16.mxu0 0
        %7700 = vmatpush1.bf16.msra.mxu0 0
        %7701 = vmatprep.subr.bf16.mxu0 0
        %7702 = vmatpush1.bf16.msra.mxu0 0
        %7703 = vmatprep.subr.bf16.mxu0 0
        %7704 = vmatpush1.bf16.msra.mxu0 0
        %7705 = vmatprep.subr.bf16.mxu0 0
        %7706 = vmatpush1.bf16.msra.mxu0 0
        %7707 = vmatprep.subr.bf16.mxu0 0
        %7708 = vmatpush1.bf16.msra.mxu0 0
        %7709 = vmatprep.subr.bf16.mxu0 0
        %7710 = vmatpush1.bf16.msra.mxu0 0
        %7711 = vmatprep.subr.bf16.mxu0 0
        %7712 = vmatpush1.bf16.msra.mxu0 0
        %7713 = vmatprep.subr.bf16.mxu0 0
        %7714 = vmatpush1.bf16.msra.mxu0 0
        %7715 = vmatprep.subr.bf16.mxu0 0
        %7716 = vmatpush1.bf16.msra.mxu0 0
        %7717 = vmatprep.mubr.bf16.mxu0 0
        %7718 = vmatmul.mubr.bf16.gmra.mrb[0].mxu0 %v7683
        %v7719 = vpop.f32.mrb[0].mxu0
        %v7720 = vadd.f32 0.0, %v7719
        %v7721 = vpop.f32.mrb[0].mxu0
        %v7722 = vpop.f32.mrb[0].mxu0
        %v7723 = vpop.f32.mrb[0].mxu0
        %7724 = vdwg.mxu0
        %v7725 = vadd.f32 %v7671, %v7720
        %v7726 = vpack.c.bf16 %v7043, %v7043
        %s7727 = scalar_lea.vmem %s5, 88
        %v7728 = vld [vmem:[%s7727] sm:$0xf]
        %v7729 = vld [vmem:[%s7727 + $0x4] sm:$0xf]
        %v7732 = vunpack.c.l.b16 %v7728
        %v7733 = vunpack.c.l.b16 %v7729
        %v7734 = vpack.c.b16 %v7733, %v7732
        %v7737 = vsel %vm6773, %v7726, 0
        %7739 = vmatprep.subr.bf16.mxu0 0
        %7740 = vmatpush1.bf16.msra.mxu0 %v7734
        %7741 = vmatprep.subr.bf16.mxu0 0
        %7742 = vmatpush1.bf16.msra.mxu0 0
        %7743 = vmatprep.subr.bf16.mxu0 0
        %7744 = vmatpush1.bf16.msra.mxu0 0
        %7745 = vmatprep.subr.bf16.mxu0 0
        %7746 = vmatpush1.bf16.msra.mxu0 0
        %7747 = vmatprep.subr.bf16.mxu0 0
        %7748 = vmatpush1.bf16.msra.mxu0 0
        %7749 = vmatprep.subr.bf16.mxu0 0
        %7750 = vmatpush1.bf16.msra.mxu0 0
        %7751 = vmatprep.subr.bf16.mxu0 0
        %7752 = vmatpush1.bf16.msra.mxu0 0
        %7753 = vmatprep.subr.bf16.mxu0 0
        %7754 = vmatpush1.bf16.msra.mxu0 0
        %7755 = vmatprep.subr.bf16.mxu0 0
        %7756 = vmatpush1.bf16.msra.mxu0 0
        %7757 = vmatprep.subr.bf16.mxu0 0
        %7758 = vmatpush1.bf16.msra.mxu0 0
        %7759 = vmatprep.subr.bf16.mxu0 0
        %7760 = vmatpush1.bf16.msra.mxu0 0
        %7761 = vmatprep.subr.bf16.mxu0 0
        %7762 = vmatpush1.bf16.msra.mxu0 0
        %7763 = vmatprep.subr.bf16.mxu0 0
        %7764 = vmatpush1.bf16.msra.mxu0 0
        %7765 = vmatprep.subr.bf16.mxu0 0
        %7766 = vmatpush1.bf16.msra.mxu0 0
        %7767 = vmatprep.subr.bf16.mxu0 0
        %7768 = vmatpush1.bf16.msra.mxu0 0
        %7769 = vmatprep.subr.bf16.mxu0 0
        %7770 = vmatpush1.bf16.msra.mxu0 0
        %7771 = vmatprep.mubr.bf16.mxu0 0
        %7772 = vmatmul.mubr.bf16.gmra.mrb[0].mxu0 %v7737
        %v7773 = vpop.f32.mrb[0].mxu0
        %v7774 = vadd.f32 0.0, %v7773
        %v7775 = vpop.f32.mrb[0].mxu0
        %v7776 = vpop.f32.mrb[0].mxu0
        %v7777 = vpop.f32.mrb[0].mxu0
        %7778 = vdwg.mxu0
        %v7779 = vadd.f32 %v7725, %v7774
        %v7780 = vpack.c.bf16 %v7050, %v7050
        %s7781 = scalar_lea.vmem %s5, 96
        %v7782 = vld [vmem:[%s7781] sm:$0xf]
        %v7783 = vld [vmem:[%s7781 + $0x4] sm:$0xf]
        %v7786 = vunpack.c.l.b16 %v7782
        %v7787 = vunpack.c.l.b16 %v7783
        %v7788 = vpack.c.b16 %v7787, %v7786
        %v7791 = vsel %vm6773, %v7780, 0
        %7793 = vmatprep.subr.bf16.mxu0 0
        %7794 = vmatpush1.bf16.msra.mxu0 %v7788
        %7795 = vmatprep.subr.bf16.mxu0 0
        %7796 = vmatpush1.bf16.msra.mxu0 0
        %7797 = vmatprep.subr.bf16.mxu0 0
        %7798 = vmatpush1.bf16.msra.mxu0 0
        %7799 = vmatprep.subr.bf16.mxu0 0
        %7800 = vmatpush1.bf16.msra.mxu0 0
        %7801 = vmatprep.subr.bf16.mxu0 0
        %7802 = vmatpush1.bf16.msra.mxu0 0
        %7803 = vmatprep.subr.bf16.mxu0 0
        %7804 = vmatpush1.bf16.msra.mxu0 0
        %7805 = vmatprep.subr.bf16.mxu0 0
        %7806 = vmatpush1.bf16.msra.mxu0 0
        %7807 = vmatprep.subr.bf16.mxu0 0
        %7808 = vmatpush1.bf16.msra.mxu0 0
        %7809 = vmatprep.subr.bf16.mxu0 0
        %7810 = vmatpush1.bf16.msra.mxu0 0
        %7811 = vmatprep.subr.bf16.mxu0 0
        %7812 = vmatpush1.bf16.msra.mxu0 0
        %7813 = vmatprep.subr.bf16.mxu0 0
        %7814 = vmatpush1.bf16.msra.mxu0 0
        %7815 = vmatprep.subr.bf16.mxu0 0
        %7816 = vmatpush1.bf16.msra.mxu0 0
        %7817 = vmatprep.subr.bf16.mxu0 0
        %7818 = vmatpush1.bf16.msra.mxu0 0
        %7819 = vmatprep.subr.bf16.mxu0 0
        %7820 = vmatpush1.bf16.msra.mxu0 0
        %7821 = vmatprep.subr.bf16.mxu0 0
        %7822 = vmatpush1.bf16.msra.mxu0 0
        %7823 = vmatprep.subr.bf16.mxu0 0
        %7824 = vmatpush1.bf16.msra.mxu0 0
        %7825 = vmatprep.mubr.bf16.mxu0 0
        %7826 = vmatmul.mubr.bf16.gmra.mrb[0].mxu0 %v7791
        %v7827 = vpop.f32.mrb[0].mxu0
        %v7828 = vadd.f32 0.0, %v7827
        %v7829 = vpop.f32.mrb[0].mxu0
        %v7830 = vpop.f32.mrb[0].mxu0
        %v7831 = vpop.f32.mrb[0].mxu0
        %7832 = vdwg.mxu0
        %v7833 = vadd.f32 %v7779, %v7828
        %v7834 = vpack.c.bf16 %v7057, %v7057
        %s7835 = scalar_lea.vmem %s5, 104
        %v7836 = vld [vmem:[%s7835] sm:$0xf]
        %v7837 = vld [vmem:[%s7835 + $0x4] sm:$0xf]
        %v7840 = vunpack.c.l.b16 %v7836
        %v7841 = vunpack.c.l.b16 %v7837
        %v7842 = vpack.c.b16 %v7841, %v7840
        %v7845 = vsel %vm6773, %v7834, 0
        %7847 = vmatprep.subr.bf16.mxu0 0
        %7848 = vmatpush1.bf16.msra.mxu0 %v7842
        %7849 = vmatprep.subr.bf16.mxu0 0
        %7850 = vmatpush1.bf16.msra.mxu0 0
        %7851 = vmatprep.subr.bf16.mxu0 0
        %7852 = vmatpush1.bf16.msra.mxu0 0
        %7853 = vmatprep.subr.bf16.mxu0 0
        %7854 = vmatpush1.bf16.msra.mxu0 0
        %7855 = vmatprep.subr.bf16.mxu0 0
        %7856 = vmatpush1.bf16.msra.mxu0 0
        %7857 = vmatprep.subr.bf16.mxu0 0
        %7858 = vmatpush1.bf16.msra.mxu0 0
        %7859 = vmatprep.subr.bf16.mxu0 0
        %7860 = vmatpush1.bf16.msra.mxu0 0
        %7861 = vmatprep.subr.bf16.mxu0 0
        %7862 = vmatpush1.bf16.msra.mxu0 0
        %7863 = vmatprep.subr.bf16.mxu0 0
        %7864 = vmatpush1.bf16.msra.mxu0 0
        %7865 = vmatprep.subr.bf16.mxu0 0
        %7866 = vmatpush1.bf16.msra.mxu0 0
        %7867 = vmatprep.subr.bf16.mxu0 0
        %7868 = vmatpush1.bf16.msra.mxu0 0
        %7869 = vmatprep.subr.bf16.mxu0 0
        %7870 = vmatpush1.bf16.msra.mxu0 0
        %7871 = vmatprep.subr.bf16.mxu0 0
        %7872 = vmatpush1.bf16.msra.mxu0 0
        %7873 = vmatprep.subr.bf16.mxu0 0
        %7874 = vmatpush1.bf16.msra.mxu0 0
        %7875 = vmatprep.subr.bf16.mxu0 0
        %7876 = vmatpush1.bf16.msra.mxu0 0
        %7877 = vmatprep.subr.bf16.mxu0 0
        %7878 = vmatpush1.bf16.msra.mxu0 0
        %7879 = vmatprep.mubr.bf16.mxu0 0
        %7880 = vmatmul.mubr.bf16.gmra.mrb[0].mxu0 %v7845
        %v7881 = vpop.f32.mrb[0].mxu0
        %v7882 = vadd.f32 0.0, %v7881
        %v7883 = vpop.f32.mrb[0].mxu0
        %v7884 = vpop.f32.mrb[0].mxu0
        %v7885 = vpop.f32.mrb[0].mxu0
        %7886 = vdwg.mxu0
        %v7887 = vadd.f32 %v7833, %v7882
        %v7888 = vpack.c.bf16 %v7064, %v7064
        %s7889 = scalar_lea.vmem %s5, 112
        %v7890 = vld [vmem:[%s7889] sm:$0xf]
        %v7891 = vld [vmem:[%s7889 + $0x4] sm:$0xf]
        %v7894 = vunpack.c.l.b16 %v7890
        %v7895 = vunpack.c.l.b16 %v7891
        %v7896 = vpack.c.b16 %v7895, %v7894
        %v7899 = vsel %vm6773, %v7888, 0
        %7901 = vmatprep.subr.bf16.mxu0 0
        %7902 = vmatpush1.bf16.msra.mxu0 %v7896
        %7903 = vmatprep.subr.bf16.mxu0 0
        %7904 = vmatpush1.bf16.msra.mxu0 0
        %7905 = vmatprep.subr.bf16.mxu0 0
        %7906 = vmatpush1.bf16.msra.mxu0 0
        %7907 = vmatprep.subr.bf16.mxu0 0
        %7908 = vmatpush1.bf16.msra.mxu0 0
        %7909 = vmatprep.subr.bf16.mxu0 0
        %7910 = vmatpush1.bf16.msra.mxu0 0
        %7911 = vmatprep.subr.bf16.mxu0 0
        %7912 = vmatpush1.bf16.msra.mxu0 0
        %7913 = vmatprep.subr.bf16.mxu0 0
        %7914 = vmatpush1.bf16.msra.mxu0 0
        %7915 = vmatprep.subr.bf16.mxu0 0
        %7916 = vmatpush1.bf16.msra.mxu0 0
        %7917 = vmatprep.subr.bf16.mxu0 0
        %7918 = vmatpush1.bf16.msra.mxu0 0
        %7919 = vmatprep.subr.bf16.mxu0 0
        %7920 = vmatpush1.bf16.msra.mxu0 0
        %7921 = vmatprep.subr.bf16.mxu0 0
        %7922 = vmatpush1.bf16.msra.mxu0 0
        %7923 = vmatprep.subr.bf16.mxu0 0
        %7924 = vmatpush1.bf16.msra.mxu0 0
        %7925 = vmatprep.subr.bf16.mxu0 0
        %7926 = vmatpush1.bf16.msra.mxu0 0
        %7927 = vmatprep.subr.bf16.mxu0 0
        %7928 = vmatpush1.bf16.msra.mxu0 0
        %7929 = vmatprep.subr.bf16.mxu0 0
        %7930 = vmatpush1.bf16.msra.mxu0 0
        %7931 = vmatprep.subr.bf16.mxu0 0
        %7932 = vmatpush1.bf16.msra.mxu0 0
        %7933 = vmatprep.mubr.bf16.mxu0 0
        %7934 = vmatmul.mubr.bf16.gmra.mrb[0].mxu0 %v7899
        %v7935 = vpop.f32.mrb[0].mxu0
        %v7936 = vadd.f32 0.0, %v7935
        %v7937 = vpop.f32.mrb[0].mxu0
        %v7938 = vpop.f32.mrb[0].mxu0
        %v7939 = vpop.f32.mrb[0].mxu0
        %7940 = vdwg.mxu0
        %v7941 = vadd.f32 %v7887, %v7936
        %v7942 = vpack.c.bf16 %v7071, %v7071
        %s7943 = scalar_lea.vmem %s5, 120
        %v7944 = vld [vmem:[%s7943] sm:$0xf]
        %v7945 = vld [vmem:[%s7943 + $0x4] sm:$0xf]
        %v7948 = vunpack.c.l.b16 %v7944
        %v7949 = vunpack.c.l.b16 %v7945
        %v7950 = vpack.c.b16 %v7949, %v7948
        %v7953 = vsel %vm6773, %v7942, 0
        %7955 = vmatprep.subr.bf16.mxu0 0
        %7956 = vmatpush1.bf16.msra.mxu0 %v7950
        %7957 = vmatprep.subr.bf16.mxu0 0
        %7958 = vmatpush1.bf16.msra.mxu0 0
        %7959 = vmatprep.subr.bf16.mxu0 0
        %7960 = vmatpush1.bf16.msra.mxu0 0
        %7961 = vmatprep.subr.bf16.mxu0 0
        %7962 = vmatpush1.bf16.msra.mxu0 0
        %7963 = vmatprep.subr.bf16.mxu0 0
        %7964 = vmatpush1.bf16.msra.mxu0 0
        %7965 = vmatprep.subr.bf16.mxu0 0
        %7966 = vmatpush1.bf16.msra.mxu0 0
        %7967 = vmatprep.subr.bf16.mxu0 0
        %7968 = vmatpush1.bf16.msra.mxu0 0
        %7969 = vmatprep.subr.bf16.mxu0 0
        %7970 = vmatpush1.bf16.msra.mxu0 0
        %7971 = vmatprep.subr.bf16.mxu0 0
        %7972 = vmatpush1.bf16.msra.mxu0 0
        %7973 = vmatprep.subr.bf16.mxu0 0
        %7974 = vmatpush1.bf16.msra.mxu0 0
        %7975 = vmatprep.subr.bf16.mxu0 0
        %7976 = vmatpush1.bf16.msra.mxu0 0
        %7977 = vmatprep.subr.bf16.mxu0 0
        %7978 = vmatpush1.bf16.msra.mxu0 0
        %7979 = vmatprep.subr.bf16.mxu0 0
        %7980 = vmatpush1.bf16.msra.mxu0 0
        %7981 = vmatprep.subr.bf16.mxu0 0
        %7982 = vmatpush1.bf16.msra.mxu0 0
        %7983 = vmatprep.subr.bf16.mxu0 0
        %7984 = vmatpush1.bf16.msra.mxu0 0
        %7985 = vmatprep.subr.bf16.mxu0 0
        %7986 = vmatpush1.bf16.msra.mxu0 0
        %7987 = vmatprep.mubr.bf16.mxu0 0
        %7988 = vmatmul.mubr.bf16.gmra.mrb[0].mxu0 %v7953
        %v7989 = vpop.f32.mrb[0].mxu0
        %v7990 = vadd.f32 0.0, %v7989
        %v7991 = vpop.f32.mrb[0].mxu0
        %v7992 = vpop.f32.mrb[0].mxu0
        %v7993 = vpop.f32.mrb[0].mxu0
        %7994 = vdwg.mxu0
        %v7995 = vadd.f32 %v7941, %v7990
        %v7996 = vpack.c.bf16 %v7078, %v7078
        %s7997 = scalar_lea.vmem %s5, 128
        %v7998 = vld [vmem:[%s7997] sm:$0xf]
        %v7999 = vld [vmem:[%s7997 + $0x4] sm:$0xf]
        %v8002 = vunpack.c.l.b16 %v7998
        %v8003 = vunpack.c.l.b16 %v7999
        %v8004 = vpack.c.b16 %v8003, %v8002
        %v8007 = vsel %vm6773, %v7996, 0
        %8009 = vmatprep.subr.bf16.mxu0 0
        %8010 = vmatpush1.bf16.msra.mxu0 %v8004
        %8011 = vmatprep.subr.bf16.mxu0 0
        %8012 = vmatpush1.bf16.msra.mxu0 0
        %8013 = vmatprep.subr.bf16.mxu0 0
        %8014 = vmatpush1.bf16.msra.mxu0 0
        %8015 = vmatprep.subr.bf16.mxu0 0
        %8016 = vmatpush1.bf16.msra.mxu0 0
        %8017 = vmatprep.subr.bf16.mxu0 0
        %8018 = vmatpush1.bf16.msra.mxu0 0
        %8019 = vmatprep.subr.bf16.mxu0 0
        %8020 = vmatpush1.bf16.msra.mxu0 0
        %8021 = vmatprep.subr.bf16.mxu0 0
        %8022 = vmatpush1.bf16.msra.mxu0 0
        %8023 = vmatprep.subr.bf16.mxu0 0
        %8024 = vmatpush1.bf16.msra.mxu0 0
        %8025 = vmatprep.subr.bf16.mxu0 0
        %8026 = vmatpush1.bf16.msra.mxu0 0
        %8027 = vmatprep.subr.bf16.mxu0 0
        %8028 = vmatpush1.bf16.msra.mxu0 0
        %8029 = vmatprep.subr.bf16.mxu0 0
        %8030 = vmatpush1.bf16.msra.mxu0 0
        %8031 = vmatprep.subr.bf16.mxu0 0
        %8032 = vmatpush1.bf16.msra.mxu0 0
        %8033 = vmatprep.subr.bf16.mxu0 0
        %8034 = vmatpush1.bf16.msra.mxu0 0
        %8035 = vmatprep.subr.bf16.mxu0 0
        %8036 = vmatpush1.bf16.msra.mxu0 0
        %8037 = vmatprep.subr.bf16.mxu0 0
        %8038 = vmatpush1.bf16.msra.mxu0 0
        %8039 = vmatprep.subr.bf16.mxu0 0
        %8040 = vmatpush1.bf16.msra.mxu0 0
        %8041 = vmatprep.mubr.bf16.mxu0 0
        %8042 = vmatmul.mubr.bf16.gmra.mrb[0].mxu0 %v8007
        %v8043 = vpop.f32.mrb[0].mxu0
        %v8044 = vadd.f32 0.0, %v8043
        %v8045 = vpop.f32.mrb[0].mxu0
        %v8046 = vpop.f32.mrb[0].mxu0
        %v8047 = vpop.f32.mrb[0].mxu0
        %8048 = vdwg.mxu0
        %v8049 = vadd.f32 %v7995, %v8044
        %v8050 = vpack.c.bf16 %v7085, %v7085
        %s8051 = scalar_lea.vmem %s5, 136
        %v8052 = vld [vmem:[%s8051] sm:$0xf]
        %v8053 = vld [vmem:[%s8051 + $0x4] sm:$0xf]
        %v8056 = vunpack.c.l.b16 %v8052
        %v8057 = vunpack.c.l.b16 %v8053
        %v8058 = vpack.c.b16 %v8057, %v8056
        %v8061 = vsel %vm6773, %v8050, 0
        %8063 = vmatprep.subr.bf16.mxu0 0
        %8064 = vmatpush1.bf16.msra.mxu0 %v8058
        %8065 = vmatprep.subr.bf16.mxu0 0
        %8066 = vmatpush1.bf16.msra.mxu0 0
        %8067 = vmatprep.subr.bf16.mxu0 0
        %8068 = vmatpush1.bf16.msra.mxu0 0
        %8069 = vmatprep.subr.bf16.mxu0 0
        %8070 = vmatpush1.bf16.msra.mxu0 0
        %8071 = vmatprep.subr.bf16.mxu0 0
        %8072 = vmatpush1.bf16.msra.mxu0 0
        %8073 = vmatprep.subr.bf16.mxu0 0
        %8074 = vmatpush1.bf16.msra.mxu0 0
        %8075 = vmatprep.subr.bf16.mxu0 0
        %8076 = vmatpush1.bf16.msra.mxu0 0
        %8077 = vmatprep.subr.bf16.mxu0 0
        %8078 = vmatpush1.bf16.msra.mxu0 0
        %8079 = vmatprep.subr.bf16.mxu0 0
        %8080 = vmatpush1.bf16.msra.mxu0 0
        %8081 = vmatprep.subr.bf16.mxu0 0
        %8082 = vmatpush1.bf16.msra.mxu0 0
        %8083 = vmatprep.subr.bf16.mxu0 0
        %8084 = vmatpush1.bf16.msra.mxu0 0
        %8085 = vmatprep.subr.bf16.mxu0 0
        %8086 = vmatpush1.bf16.msra.mxu0 0
        %8087 = vmatprep.subr.bf16.mxu0 0
        %8088 = vmatpush1.bf16.msra.mxu0 0
        %8089 = vmatprep.subr.bf16.mxu0 0
        %8090 = vmatpush1.bf16.msra.mxu0 0
        %8091 = vmatprep.subr.bf16.mxu0 0
        %8092 = vmatpush1.bf16.msra.mxu0 0
        %8093 = vmatprep.subr.bf16.mxu0 0
        %8094 = vmatpush1.bf16.msra.mxu0 0
        %8095 = vmatprep.mubr.bf16.mxu0 0
        %8096 = vmatmul.mubr.bf16.gmra.mrb[0].mxu0 %v8061
        %v8097 = vpop.f32.mrb[0].mxu0
        %v8098 = vadd.f32 0.0, %v8097
        %v8099 = vpop.f32.mrb[0].mxu0
        %v8100 = vpop.f32.mrb[0].mxu0
        %v8101 = vpop.f32.mrb[0].mxu0
        %8102 = vdwg.mxu0
        %v8103 = vadd.f32 %v8049, %v8098
        %v8104 = vpack.c.bf16 %v7092, %v7092
        %s8105 = scalar_lea.vmem %s5, 144
        %v8106 = vld [vmem:[%s8105] sm:$0xf]
        %v8107 = vld [vmem:[%s8105 + $0x4] sm:$0xf]
        %v8110 = vunpack.c.l.b16 %v8106
        %v8111 = vunpack.c.l.b16 %v8107
        %v8112 = vpack.c.b16 %v8111, %v8110
        %v8115 = vsel %vm6773, %v8104, 0
        %8117 = vmatprep.subr.bf16.mxu0 0
        %8118 = vmatpush1.bf16.msra.mxu0 %v8112
        %8119 = vmatprep.subr.bf16.mxu0 0
        %8120 = vmatpush1.bf16.msra.mxu0 0
        %8121 = vmatprep.subr.bf16.mxu0 0
        %8122 = vmatpush1.bf16.msra.mxu0 0
        %8123 = vmatprep.subr.bf16.mxu0 0
        %8124 = vmatpush1.bf16.msra.mxu0 0
        %8125 = vmatprep.subr.bf16.mxu0 0
        %8126 = vmatpush1.bf16.msra.mxu0 0
        %8127 = vmatprep.subr.bf16.mxu0 0
        %8128 = vmatpush1.bf16.msra.mxu0 0
        %8129 = vmatprep.subr.bf16.mxu0 0
        %8130 = vmatpush1.bf16.msra.mxu0 0
        %8131 = vmatprep.subr.bf16.mxu0 0
        %8132 = vmatpush1.bf16.msra.mxu0 0
        %8133 = vmatprep.subr.bf16.mxu0 0
        %8134 = vmatpush1.bf16.msra.mxu0 0
        %8135 = vmatprep.subr.bf16.mxu0 0
        %8136 = vmatpush1.bf16.msra.mxu0 0
        %8137 = vmatprep.subr.bf16.mxu0 0
        %8138 = vmatpush1.bf16.msra.mxu0 0
        %8139 = vmatprep.subr.bf16.mxu0 0
        %8140 = vmatpush1.bf16.msra.mxu0 0
        %8141 = vmatprep.subr.bf16.mxu0 0
        %8142 = vmatpush1.bf16.msra.mxu0 0
        %8143 = vmatprep.subr.bf16.mxu0 0
        %8144 = vmatpush1.bf16.msra.mxu0 0
        %8145 = vmatprep.subr.bf16.mxu0 0
        %8146 = vmatpush1.bf16.msra.mxu0 0
        %8147 = vmatprep.subr.bf16.mxu0 0
        %8148 = vmatpush1.bf16.msra.mxu0 0
        %8149 = vmatprep.mubr.bf16.mxu0 0
        %8150 = vmatmul.mubr.bf16.gmra.mrb[0].mxu0 %v8115
        %v8151 = vpop.f32.mrb[0].mxu0
        %v8152 = vadd.f32 0.0, %v8151
        %v8153 = vpop.f32.mrb[0].mxu0
        %v8154 = vpop.f32.mrb[0].mxu0
        %v8155 = vpop.f32.mrb[0].mxu0
        %8156 = vdwg.mxu0
        %v8157 = vadd.f32 %v8103, %v8152
        %v8158 = vpack.c.bf16 %v7099, %v7099
        %s8159 = scalar_lea.vmem %s5, 152
        %v8160 = vld [vmem:[%s8159] sm:$0xf]
        %v8161 = vld [vmem:[%s8159 + $0x4] sm:$0xf]
        %v8164 = vunpack.c.l.b16 %v8160
        %v8165 = vunpack.c.l.b16 %v8161
        %v8166 = vpack.c.b16 %v8165, %v8164
        %v8169 = vsel %vm6773, %v8158, 0
        %8171 = vmatprep.subr.bf16.mxu0 0
        %8172 = vmatpush1.bf16.msra.mxu0 %v8166
        %8173 = vmatprep.subr.bf16.mxu0 0
        %8174 = vmatpush1.bf16.msra.mxu0 0
        %8175 = vmatprep.subr.bf16.mxu0 0
        %8176 = vmatpush1.bf16.msra.mxu0 0
        %8177 = vmatprep.subr.bf16.mxu0 0
        %8178 = vmatpush1.bf16.msra.mxu0 0
        %8179 = vmatprep.subr.bf16.mxu0 0
        %8180 = vmatpush1.bf16.msra.mxu0 0
        %8181 = vmatprep.subr.bf16.mxu0 0
        %8182 = vmatpush1.bf16.msra.mxu0 0
        %8183 = vmatprep.subr.bf16.mxu0 0
        %8184 = vmatpush1.bf16.msra.mxu0 0
        %8185 = vmatprep.subr.bf16.mxu0 0
        %8186 = vmatpush1.bf16.msra.mxu0 0
        %8187 = vmatprep.subr.bf16.mxu0 0
        %8188 = vmatpush1.bf16.msra.mxu0 0
        %8189 = vmatprep.subr.bf16.mxu0 0
        %8190 = vmatpush1.bf16.msra.mxu0 0
        %8191 = vmatprep.subr.bf16.mxu0 0
        %8192 = vmatpush1.bf16.msra.mxu0 0
        %8193 = vmatprep.subr.bf16.mxu0 0
        %8194 = vmatpush1.bf16.msra.mxu0 0
        %8195 = vmatprep.subr.bf16.mxu0 0
        %8196 = vmatpush1.bf16.msra.mxu0 0
        %8197 = vmatprep.subr.bf16.mxu0 0
        %8198 = vmatpush1.bf16.msra.mxu0 0
        %8199 = vmatprep.subr.bf16.mxu0 0
        %8200 = vmatpush1.bf16.msra.mxu0 0
        %8201 = vmatprep.subr.bf16.mxu0 0
        %8202 = vmatpush1.bf16.msra.mxu0 0
        %8203 = vmatprep.mubr.bf16.mxu0 0
        %8204 = vmatmul.mubr.bf16.gmra.mrb[0].mxu0 %v8169
        %v8205 = vpop.f32.mrb[0].mxu0
        %v8206 = vadd.f32 0.0, %v8205
        %v8207 = vpop.f32.mrb[0].mxu0
        %v8208 = vpop.f32.mrb[0].mxu0
        %v8209 = vpop.f32.mrb[0].mxu0
        %8210 = vdwg.mxu0
        %v8211 = vadd.f32 %v8157, %v8206
        %v8212 = vpack.c.bf16 %v7106, %v7106
        %s8213 = scalar_lea.vmem %s5, 160
        %v8214 = vld [vmem:[%s8213] sm:$0xf]
        %v8215 = vld [vmem:[%s8213 + $0x4] sm:$0xf]
        %v8218 = vunpack.c.l.b16 %v8214
        %v8219 = vunpack.c.l.b16 %v8215
        %v8220 = vpack.c.b16 %v8219, %v8218
        %v8223 = vsel %vm6773, %v8212, 0
        %8225 = vmatprep.subr.bf16.mxu0 0
        %8226 = vmatpush1.bf16.msra.mxu0 %v8220
        %8227 = vmatprep.subr.bf16.mxu0 0
        %8228 = vmatpush1.bf16.msra.mxu0 0
        %8229 = vmatprep.subr.bf16.mxu0 0
        %8230 = vmatpush1.bf16.msra.mxu0 0
        %8231 = vmatprep.subr.bf16.mxu0 0
        %8232 = vmatpush1.bf16.msra.mxu0 0
        %8233 = vmatprep.subr.bf16.mxu0 0
        %8234 = vmatpush1.bf16.msra.mxu0 0
        %8235 = vmatprep.subr.bf16.mxu0 0
        %8236 = vmatpush1.bf16.msra.mxu0 0
        %8237 = vmatprep.subr.bf16.mxu0 0
        %8238 = vmatpush1.bf16.msra.mxu0 0
        %8239 = vmatprep.subr.bf16.mxu0 0
        %8240 = vmatpush1.bf16.msra.mxu0 0
        %8241 = vmatprep.subr.bf16.mxu0 0
        %8242 = vmatpush1.bf16.msra.mxu0 0
        %8243 = vmatprep.subr.bf16.mxu0 0
        %8244 = vmatpush1.bf16.msra.mxu0 0
        %8245 = vmatprep.subr.bf16.mxu0 0
        %8246 = vmatpush1.bf16.msra.mxu0 0
        %8247 = vmatprep.subr.bf16.mxu0 0
        %8248 = vmatpush1.bf16.msra.mxu0 0
        %8249 = vmatprep.subr.bf16.mxu0 0
        %8250 = vmatpush1.bf16.msra.mxu0 0
        %8251 = vmatprep.subr.bf16.mxu0 0
        %8252 = vmatpush1.bf16.msra.mxu0 0
        %8253 = vmatprep.subr.bf16.mxu0 0
        %8254 = vmatpush1.bf16.msra.mxu0 0
        %8255 = vmatprep.subr.bf16.mxu0 0
        %8256 = vmatpush1.bf16.msra.mxu0 0
        %8257 = vmatprep.mubr.bf16.mxu0 0
        %8258 = vmatmul.mubr.bf16.gmra.mrb[0].mxu0 %v8223
        %v8259 = vpop.f32.mrb[0].mxu0
        %v8260 = vadd.f32 0.0, %v8259
        %v8261 = vpop.f32.mrb[0].mxu0
        %v8262 = vpop.f32.mrb[0].mxu0
        %v8263 = vpop.f32.mrb[0].mxu0
        %8264 = vdwg.mxu0
        %v8265 = vadd.f32 %v8211, %v8260
        %v8266 = vpack.c.bf16 %v7113, %v7113
        %s8267 = scalar_lea.vmem %s5, 168
        %v8268 = vld [vmem:[%s8267] sm:$0xf]
        %v8269 = vld [vmem:[%s8267 + $0x4] sm:$0xf]
        %v8272 = vunpack.c.l.b16 %v8268
        %v8273 = vunpack.c.l.b16 %v8269
        %v8274 = vpack.c.b16 %v8273, %v8272
        %v8277 = vsel %vm6773, %v8266, 0
        %8279 = vmatprep.subr.bf16.mxu0 0
        %8280 = vmatpush1.bf16.msra.mxu0 %v8274
        %8281 = vmatprep.subr.bf16.mxu0 0
        %8282 = vmatpush1.bf16.msra.mxu0 0
        %8283 = vmatprep.subr.bf16.mxu0 0
        %8284 = vmatpush1.bf16.msra.mxu0 0
        %8285 = vmatprep.subr.bf16.mxu0 0
        %8286 = vmatpush1.bf16.msra.mxu0 0
        %8287 = vmatprep.subr.bf16.mxu0 0
        %8288 = vmatpush1.bf16.msra.mxu0 0
        %8289 = vmatprep.subr.bf16.mxu0 0
        %8290 = vmatpush1.bf16.msra.mxu0 0
        %8291 = vmatprep.subr.bf16.mxu0 0
        %8292 = vmatpush1.bf16.msra.mxu0 0
        %8293 = vmatprep.subr.bf16.mxu0 0
        %8294 = vmatpush1.bf16.msra.mxu0 0
        %8295 = vmatprep.subr.bf16.mxu0 0
        %8296 = vmatpush1.bf16.msra.mxu0 0
        %8297 = vmatprep.subr.bf16.mxu0 0
        %8298 = vmatpush1.bf16.msra.mxu0 0
        %8299 = vmatprep.subr.bf16.mxu0 0
        %8300 = vmatpush1.bf16.msra.mxu0 0
        %8301 = vmatprep.subr.bf16.mxu0 0
        %8302 = vmatpush1.bf16.msra.mxu0 0
        %8303 = vmatprep.subr.bf16.mxu0 0
        %8304 = vmatpush1.bf16.msra.mxu0 0
        %8305 = vmatprep.subr.bf16.mxu0 0
        %8306 = vmatpush1.bf16.msra.mxu0 0
        %8307 = vmatprep.subr.bf16.mxu0 0
        %8308 = vmatpush1.bf16.msra.mxu0 0
        %8309 = vmatprep.subr.bf16.mxu0 0
        %8310 = vmatpush1.bf16.msra.mxu0 0
        %8311 = vmatprep.mubr.bf16.mxu0 0
        %8312 = vmatmul.mubr.bf16.gmra.mrb[0].mxu0 %v8277
        %v8313 = vpop.f32.mrb[0].mxu0
        %v8314 = vadd.f32 0.0, %v8313
        %v8315 = vpop.f32.mrb[0].mxu0
        %v8316 = vpop.f32.mrb[0].mxu0
        %v8317 = vpop.f32.mrb[0].mxu0
        %8318 = vdwg.mxu0
        %v8319 = vadd.f32 %v8265, %v8314
        %v8320 = vpack.c.bf16 %v7120, %v7120
        %s8321 = scalar_lea.vmem %s5, 176
        %v8322 = vld [vmem:[%s8321] sm:$0xf]
        %v8323 = vld [vmem:[%s8321 + $0x4] sm:$0xf]
        %v8326 = vunpack.c.l.b16 %v8322
        %v8327 = vunpack.c.l.b16 %v8323
        %v8328 = vpack.c.b16 %v8327, %v8326
        %v8331 = vsel %vm6773, %v8320, 0
        %8333 = vmatprep.subr.bf16.mxu0 0
        %8334 = vmatpush1.bf16.msra.mxu0 %v8328
        %8335 = vmatprep.subr.bf16.mxu0 0
        %8336 = vmatpush1.bf16.msra.mxu0 0
        %8337 = vmatprep.subr.bf16.mxu0 0
        %8338 = vmatpush1.bf16.msra.mxu0 0
        %8339 = vmatprep.subr.bf16.mxu0 0
        %8340 = vmatpush1.bf16.msra.mxu0 0
        %8341 = vmatprep.subr.bf16.mxu0 0
        %8342 = vmatpush1.bf16.msra.mxu0 0
        %8343 = vmatprep.subr.bf16.mxu0 0
        %8344 = vmatpush1.bf16.msra.mxu0 0
        %8345 = vmatprep.subr.bf16.mxu0 0
        %8346 = vmatpush1.bf16.msra.mxu0 0
        %8347 = vmatprep.subr.bf16.mxu0 0
        %8348 = vmatpush1.bf16.msra.mxu0 0
        %8349 = vmatprep.subr.bf16.mxu0 0
        %8350 = vmatpush1.bf16.msra.mxu0 0
        %8351 = vmatprep.subr.bf16.mxu0 0
        %8352 = vmatpush1.bf16.msra.mxu0 0
        %8353 = vmatprep.subr.bf16.mxu0 0
        %8354 = vmatpush1.bf16.msra.mxu0 0
        %8355 = vmatprep.subr.bf16.mxu0 0
        %8356 = vmatpush1.bf16.msra.mxu0 0
        %8357 = vmatprep.subr.bf16.mxu0 0
        %8358 = vmatpush1.bf16.msra.mxu0 0
        %8359 = vmatprep.subr.bf16.mxu0 0
        %8360 = vmatpush1.bf16.msra.mxu0 0
        %8361 = vmatprep.subr.bf16.mxu0 0
        %8362 = vmatpush1.bf16.msra.mxu0 0
        %8363 = vmatprep.subr.bf16.mxu0 0
        %8364 = vmatpush1.bf16.msra.mxu0 0
        %8365 = vmatprep.mubr.bf16.mxu0 0
        %8366 = vmatmul.mubr.bf16.gmra.mrb[0].mxu0 %v8331
        %v8367 = vpop.f32.mrb[0].mxu0
        %v8368 = vadd.f32 0.0, %v8367
        %v8369 = vpop.f32.mrb[0].mxu0
        %v8370 = vpop.f32.mrb[0].mxu0
        %v8371 = vpop.f32.mrb[0].mxu0
        %8372 = vdwg.mxu0
        %v8373 = vadd.f32 %v8319, %v8368
        %v8374 = vpack.c.bf16 %v7127, %v7127
        %s8375 = scalar_lea.vmem %s5, 184
        %v8376 = vld [vmem:[%s8375] sm:$0xf]
        %v8377 = vld [vmem:[%s8375 + $0x4] sm:$0xf]
        %v8380 = vunpack.c.l.b16 %v8376
        %v8381 = vunpack.c.l.b16 %v8377
        %v8382 = vpack.c.b16 %v8381, %v8380
        %v8385 = vsel %vm6773, %v8374, 0
        %8387 = vmatprep.subr.bf16.mxu0 0
        %8388 = vmatpush1.bf16.msra.mxu0 %v8382
        %8389 = vmatprep.subr.bf16.mxu0 0
        %8390 = vmatpush1.bf16.msra.mxu0 0
        %8391 = vmatprep.subr.bf16.mxu0 0
        %8392 = vmatpush1.bf16.msra.mxu0 0
        %8393 = vmatprep.subr.bf16.mxu0 0
        %8394 = vmatpush1.bf16.msra.mxu0 0
        %8395 = vmatprep.subr.bf16.mxu0 0
        %8396 = vmatpush1.bf16.msra.mxu0 0
        %8397 = vmatprep.subr.bf16.mxu0 0
        %8398 = vmatpush1.bf16.msra.mxu0 0
        %8399 = vmatprep.subr.bf16.mxu0 0
        %8400 = vmatpush1.bf16.msra.mxu0 0
        %8401 = vmatprep.subr.bf16.mxu0 0
        %8402 = vmatpush1.bf16.msra.mxu0 0
        %8403 = vmatprep.subr.bf16.mxu0 0
        %8404 = vmatpush1.bf16.msra.mxu0 0
        %8405 = vmatprep.subr.bf16.mxu0 0
        %8406 = vmatpush1.bf16.msra.mxu0 0
        %8407 = vmatprep.subr.bf16.mxu0 0
        %8408 = vmatpush1.bf16.msra.mxu0 0
        %8409 = vmatprep.subr.bf16.mxu0 0
        %8410 = vmatpush1.bf16.msra.mxu0 0
        %8411 = vmatprep.subr.bf16.mxu0 0
        %8412 = vmatpush1.bf16.msra.mxu0 0
        %8413 = vmatprep.subr.bf16.mxu0 0
        %8414 = vmatpush1.bf16.msra.mxu0 0
        %8415 = vmatprep.subr.bf16.mxu0 0
        %8416 = vmatpush1.bf16.msra.mxu0 0
        %8417 = vmatprep.subr.bf16.mxu0 0
        %8418 = vmatpush1.bf16.msra.mxu0 0
        %8419 = vmatprep.mubr.bf16.mxu0 0
        %8420 = vmatmul.mubr.bf16.gmra.mrb[0].mxu0 %v8385
        %v8421 = vpop.f32.mrb[0].mxu0
        %v8422 = vadd.f32 0.0, %v8421
        %v8423 = vpop.f32.mrb[0].mxu0
        %v8424 = vpop.f32.mrb[0].mxu0
        %v8425 = vpop.f32.mrb[0].mxu0
        %8426 = vdwg.mxu0
        %v8427 = vadd.f32 %v8373, %v8422
        %v8428 = vpack.c.bf16 %v7134, %v7134
        %s8429 = scalar_lea.vmem %s5, 192
        %v8430 = vld [vmem:[%s8429] sm:$0xf]
        %v8431 = vld [vmem:[%s8429 + $0x4] sm:$0xf]
        %v8434 = vunpack.c.l.b16 %v8430
        %v8435 = vunpack.c.l.b16 %v8431
        %v8436 = vpack.c.b16 %v8435, %v8434
        %v8439 = vsel %vm6773, %v8428, 0
        %8441 = vmatprep.subr.bf16.mxu0 0
        %8442 = vmatpush1.bf16.msra.mxu0 %v8436
        %8443 = vmatprep.subr.bf16.mxu0 0
        %8444 = vmatpush1.bf16.msra.mxu0 0
        %8445 = vmatprep.subr.bf16.mxu0 0
        %8446 = vmatpush1.bf16.msra.mxu0 0
        %8447 = vmatprep.subr.bf16.mxu0 0
        %8448 = vmatpush1.bf16.msra.mxu0 0
        %8449 = vmatprep.subr.bf16.mxu0 0
        %8450 = vmatpush1.bf16.msra.mxu0 0
        %8451 = vmatprep.subr.bf16.mxu0 0
        %8452 = vmatpush1.bf16.msra.mxu0 0
        %8453 = vmatprep.subr.bf16.mxu0 0
        %8454 = vmatpush1.bf16.msra.mxu0 0
        %8455 = vmatprep.subr.bf16.mxu0 0
        %8456 = vmatpush1.bf16.msra.mxu0 0
        %8457 = vmatprep.subr.bf16.mxu0 0
        %8458 = vmatpush1.bf16.msra.mxu0 0
        %8459 = vmatprep.subr.bf16.mxu0 0
        %8460 = vmatpush1.bf16.msra.mxu0 0
        %8461 = vmatprep.subr.bf16.mxu0 0
        %8462 = vmatpush1.bf16.msra.mxu0 0
        %8463 = vmatprep.subr.bf16.mxu0 0
        %8464 = vmatpush1.bf16.msra.mxu0 0
        %8465 = vmatprep.subr.bf16.mxu0 0
        %8466 = vmatpush1.bf16.msra.mxu0 0
        %8467 = vmatprep.subr.bf16.mxu0 0
        %8468 = vmatpush1.bf16.msra.mxu0 0
        %8469 = vmatprep.subr.bf16.mxu0 0
        %8470 = vmatpush1.bf16.msra.mxu0 0
        %8471 = vmatprep.subr.bf16.mxu0 0
        %8472 = vmatpush1.bf16.msra.mxu0 0
        %8473 = vmatprep.mubr.bf16.mxu0 0
        %8474 = vmatmul.mubr.bf16.gmra.mrb[0].mxu0 %v8439
        %v8475 = vpop.f32.mrb[0].mxu0
        %v8476 = vadd.f32 0.0, %v8475
        %v8477 = vpop.f32.mrb[0].mxu0
        %v8478 = vpop.f32.mrb[0].mxu0
        %v8479 = vpop.f32.mrb[0].mxu0
        %8480 = vdwg.mxu0
        %v8481 = vadd.f32 %v8427, %v8476
        %v8482 = vld [vmem:[%s6] sm:$0x1]
        %v8483 = vadd.f32 %v8481, %v8482
        %v8484 = vmax.f32 %v8483, 0.0
        %v8485 = vpack.c.bf16 %v8484, %v8484
        %v8486 = vld [vmem:[%s7] sm:$0xf]
        %v8487 = vld [vmem:[%s7 + $0x4] sm:$0xf]
        %v8488 = vld [vmem:[%s7 + $0x8] sm:$0xf]
        %v8489 = vld [vmem:[%s7 + $0xc] sm:$0xf]
        %v8490 = vld [vmem:[%s7 + $0x10] sm:$0xf]
        %v8491 = vld [vmem:[%s7 + $0x14] sm:$0xf]
        %v8492 = vld [vmem:[%s7 + $0x18] sm:$0xf]
        %v8493 = vld [vmem:[%s7 + $0x1c] sm:$0xf]
        %v8494 = vld [vmem:[%s7 + $0x20] sm:$0xf]
        %v8495 = vld [vmem:[%s7 + $0x24] sm:$0xf]
        %v8496 = vld [vmem:[%s7 + $0x28] sm:$0xf]
        %v8497 = vld [vmem:[%s7 + $0x2c] sm:$0xf]
        %v8498 = vld [vmem:[%s7 + $0x30] sm:$0xf]
        %v8499 = vld [vmem:[%s7 + $0x34] sm:$0xf]
        %v8500 = vld [vmem:[%s7 + $0x38] sm:$0xf]
        %v8501 = vld [vmem:[%s7 + $0x3c] sm:$0xf]
        %v8502 = vld [vmem:[%s8] sm:$0x1]
        %v8519 = vunpack.c.l.b16 %v8486
        %v8520 = vunpack.c.l.b16 %v8487
        %v8521 = vunpack.c.l.b16 %v8488
        %v8522 = vunpack.c.l.b16 %v8489
        %v8523 = vunpack.c.l.b16 %v8490
        %v8524 = vunpack.c.l.b16 %v8491
        %v8525 = vunpack.c.l.b16 %v8492
        %v8526 = vunpack.c.l.b16 %v8493
        %v8527 = vunpack.c.l.b16 %v8494
        %v8528 = vunpack.c.l.b16 %v8495
        %v8529 = vunpack.c.l.b16 %v8496
        %v8530 = vunpack.c.l.b16 %v8497
        %v8531 = vunpack.c.l.b16 %v8498
        %v8532 = vunpack.c.l.b16 %v8499
        %v8533 = vunpack.c.l.b16 %v8500
        %v8534 = vunpack.c.l.b16 %v8501
        %v8535 = vpack.c.b16 %v8520, %v8519
        %v8536 = vpack.c.b16 %v8522, %v8521
        %v8537 = vpack.c.b16 %v8524, %v8523
        %v8538 = vpack.c.b16 %v8526, %v8525
        %v8539 = vpack.c.b16 %v8528, %v8527
        %v8540 = vpack.c.b16 %v8530, %v8529
        %v8541 = vpack.c.b16 %v8532, %v8531
        %v8542 = vpack.c.b16 %v8534, %v8533
        %8551 = vmatprep.subr.bf16.mxu0 0
        %8552 = vmatpush1.bf16.msra.mxu0 %v8535
        %8553 = vmatprep.subr.bf16.mxu0 0
        %8554 = vmatpush1.bf16.msra.mxu0 %v8536
        %8555 = vmatprep.subr.bf16.mxu0 0
        %8556 = vmatpush1.bf16.msra.mxu0 %v8537
        %8557 = vmatprep.subr.bf16.mxu0 0
        %8558 = vmatpush1.bf16.msra.mxu0 %v8538
        %8559 = vmatprep.subr.bf16.mxu0 0
        %8560 = vmatpush1.bf16.msra.mxu0 %v8539
        %8561 = vmatprep.subr.bf16.mxu0 0
        %8562 = vmatpush1.bf16.msra.mxu0 %v8540
        %8563 = vmatprep.subr.bf16.mxu0 0
        %8564 = vmatpush1.bf16.msra.mxu0 %v8541
        %8565 = vmatprep.subr.bf16.mxu0 0
        %8566 = vmatpush1.bf16.msra.mxu0 %v8542
        %8567 = vmatprep.subr.bf16.mxu0 0
        %8568 = vmatpush1.bf16.msra.mxu0 0
        %8569 = vmatprep.subr.bf16.mxu0 0
        %8570 = vmatpush1.bf16.msra.mxu0 0
        %8571 = vmatprep.subr.bf16.mxu0 0
        %8572 = vmatpush1.bf16.msra.mxu0 0
        %8573 = vmatprep.subr.bf16.mxu0 0
        %8574 = vmatpush1.bf16.msra.mxu0 0
        %8575 = vmatprep.subr.bf16.mxu0 0
        %8576 = vmatpush1.bf16.msra.mxu0 0
        %8577 = vmatprep.subr.bf16.mxu0 0
        %8578 = vmatpush1.bf16.msra.mxu0 0
        %8579 = vmatprep.subr.bf16.mxu0 0
        %8580 = vmatpush1.bf16.msra.mxu0 0
        %8581 = vmatprep.subr.bf16.mxu0 0
        %8582 = vmatpush1.bf16.msra.mxu0 0
        %8583 = vmatprep.mubr.bf16.mxu0 0
        %8584 = vmatmul.mubr.bf16.gmra.mrb[0].mxu0 %v8485
        %v8585 = vpop.f32.mrb[0].mxu0
        %v8586 = vadd.f32 %v8502, %v8585
        %v8587 = vpop.f32.mrb[0].mxu0
        %v8588 = vpop.f32.mrb[0].mxu0
        %v8589 = vpop.f32.mrb[0].mxu0
        %8590 = vdwg.mxu0
        %v8591 = vmax.f32 %v8586, 0.0
        %v8592 = vpack.c.bf16 %v8591, %v8591
        %v8593 = vld [vmem:[%s9] sm:$0xf]
        %v8594 = vld [vmem:[%s9 + $0x4] sm:$0xf]
        %v8595 = vld [vmem:[%s9 + $0x8] sm:$0xf]
        %v8596 = vld [vmem:[%s9 + $0xc] sm:$0xf]
        %v8597 = vld [vmem:[%s9 + $0x10] sm:$0xf]
        %v8598 = vld [vmem:[%s9 + $0x14] sm:$0xf]
        %v8599 = vld [vmem:[%s9 + $0x18] sm:$0xf]
        %v8600 = vld [vmem:[%s9 + $0x1c] sm:$0xf]
        %v8601 = vld [vmem:[%s9 + $0x20] sm:$0xf]
        %v8602 = vld [vmem:[%s9 + $0x24] sm:$0xf]
        %v8603 = vld [vmem:[%s9 + $0x28] sm:$0xf]
        %v8604 = vld [vmem:[%s9 + $0x2c] sm:$0xf]
        %v8605 = vld [vmem:[%s9 + $0x30] sm:$0xf]
        %v8606 = vld [vmem:[%s9 + $0x34] sm:$0xf]
        %v8607 = vld [vmem:[%s9 + $0x38] sm:$0xf]
        %v8608 = vld [vmem:[%s9 + $0x3c] sm:$0xf]
        %v8609 = vld [vmem:[%s10] sm:$0x1]
        %v8626 = vunpack.c.l.b16 %v8593
        %v8627 = vunpack.c.l.b16 %v8594
        %v8628 = vunpack.c.l.b16 %v8595
        %v8629 = vunpack.c.l.b16 %v8596
        %v8630 = vunpack.c.l.b16 %v8597
        %v8631 = vunpack.c.l.b16 %v8598
        %v8632 = vunpack.c.l.b16 %v8599
        %v8633 = vunpack.c.l.b16 %v8600
        %v8634 = vunpack.c.l.b16 %v8601
        %v8635 = vunpack.c.l.b16 %v8602
        %v8636 = vunpack.c.l.b16 %v8603
        %v8637 = vunpack.c.l.b16 %v8604
        %v8638 = vunpack.c.l.b16 %v8605
        %v8639 = vunpack.c.l.b16 %v8606
        %v8640 = vunpack.c.l.b16 %v8607
        %v8641 = vunpack.c.l.b16 %v8608
        %v8642 = vpack.c.b16 %v8627, %v8626
        %v8643 = vpack.c.b16 %v8629, %v8628
        %v8644 = vpack.c.b16 %v8631, %v8630
        %v8645 = vpack.c.b16 %v8633, %v8632
        %v8646 = vpack.c.b16 %v8635, %v8634
        %v8647 = vpack.c.b16 %v8637, %v8636
        %v8648 = vpack.c.b16 %v8639, %v8638
        %v8649 = vpack.c.b16 %v8641, %v8640
        %8658 = vmatprep.subr.bf16.mxu0 0
        %8659 = vmatpush1.bf16.msra.mxu0 %v8642
        %8660 = vmatprep.subr.bf16.mxu0 0
        %8661 = vmatpush1.bf16.msra.mxu0 %v8643
        %8662 = vmatprep.subr.bf16.mxu0 0
        %8663 = vmatpush1.bf16.msra.mxu0 %v8644
        %8664 = vmatprep.subr.bf16.mxu0 0
        %8665 = vmatpush1.bf16.msra.mxu0 %v8645
        %8666 = vmatprep.subr.bf16.mxu0 0
        %8667 = vmatpush1.bf16.msra.mxu0 %v8646
        %8668 = vmatprep.subr.bf16.mxu0 0
        %8669 = vmatpush1.bf16.msra.mxu0 %v8647
        %8670 = vmatprep.subr.bf16.mxu0 0
        %8671 = vmatpush1.bf16.msra.mxu0 %v8648
        %8672 = vmatprep.subr.bf16.mxu0 0
        %8673 = vmatpush1.bf16.msra.mxu0 %v8649
        %8674 = vmatprep.subr.bf16.mxu0 0
        %8675 = vmatpush1.bf16.msra.mxu0 0
        %8676 = vmatprep.subr.bf16.mxu0 0
        %8677 = vmatpush1.bf16.msra.mxu0 0
        %8678 = vmatprep.subr.bf16.mxu0 0
        %8679 = vmatpush1.bf16.msra.mxu0 0
        %8680 = vmatprep.subr.bf16.mxu0 0
        %8681 = vmatpush1.bf16.msra.mxu0 0
        %8682 = vmatprep.subr.bf16.mxu0 0
        %8683 = vmatpush1.bf16.msra.mxu0 0
        %8684 = vmatprep.subr.bf16.mxu0 0
        %8685 = vmatpush1.bf16.msra.mxu0 0
        %8686 = vmatprep.subr.bf16.mxu0 0
        %8687 = vmatpush1.bf16.msra.mxu0 0
        %8688 = vmatprep.subr.bf16.mxu0 0
        %8689 = vmatpush1.bf16.msra.mxu0 0
        %8690 = vmatprep.mubr.bf16.mxu0 0
        %8691 = vmatmul.mubr.bf16.gmra.mrb[0].mxu0 %v8592
        %v8692 = vpop.f32.mrb[0].mxu0
        %v8693 = vadd.f32 %v8609, %v8692
        %v8694 = vpop.f32.mrb[0].mxu0
        %v8695 = vpop.f32.mrb[0].mxu0
        %v8696 = vpop.f32.mrb[0].mxu0
        %8697 = vdwg.mxu0
        %8698 = vst [vmem:[%s378] sm:$0x1] %v8693
        %s8699 = sand.u32 %s269, 1
        %s8700 = scalar_lea.sflag [#allocation3], %s8699
        %s8701 = sand.u32 %s269, 1
        %s8702 = scalar_lea.vmem [#allocation2], %s8701
        // Predicated region
        $region65: #{net_forward.1} parent=63 // pred_check
          %p8703 = pneg %p279
        $region66: #{net_forward.1} parent=63 // pred_check_branch
          %8705 = sbr.rel (%p8703) target = $region68
        $region67: #{net_forward.1} parent=63 // pred_region
          %s8707 = ssub.s32 16, 16
          %8708 = vsyncadd %s8700, %s8707
          %s8709 = smul.addr %s25, 16
          %s8710 = scalar_lea.hbm %s11, %s8709
          %s8712 = sshll.u32 %s8702, 4
          %s8713 = int_to_ptr.vmem [resolvable:$true] %s8712
          %8715 = dma.vmem_to_hbm [thread:$0]  %s8713, 16, %s8710, %s8700
        $region68: #{net_forward.1} parent=63 // pred_fallthru
          _
      $region64: #{net_forward.1} parent=5 // pred_fallthru
        _
      %p8716 = scmp.le.s32.totalorder 2, %s20
      // Predicated region
      $region69: #{net_forward.1} parent=5 // pred_check
        %p8717 = pneg %p8716
      $region70: #{net_forward.1} parent=5 // pred_check_branch
        %8719 = sbr.rel (%p8717) target = $region72
      $region71: #{net_forward.1} parent=5 // pred_region
        %s8720 = ssub.s32 %s20, 2
        // Predicated region
        $region73: #{net_forward.1} parent=71 // pred_check
          %p8721 = pneg %p285
        $region74: #{net_forward.1} parent=71 // pred_check_branch
          %8723 = sbr.rel (%p8721) target = $region76
        $region75: #{net_forward.1} parent=71 // pred_region
          %s8724 = sand.u32 %s270, 1
          %s8725 = scalar_lea.sflag [#allocation3], %s8724
          %s8726 = sand.u32 %s270, 1
          %s8727 = scalar_lea.vmem [#allocation2], %s8726
          %8728 = dma.done %s8725, 16
        $region76: #{net_forward.1} parent=71 // pred_fallthru
          _
      $region72: #{net_forward.1} parent=5 // pred_fallthru
        _
    $region6: #{net_forward.1} parent=1 // loop_footer
      %s24 = sadd.s32 1, %s20
    $region7: #{net_forward.1} parent=1 // loop_footer_branch
      %19 = sbr.rel target = $region3
    $region8: #{net_forward.1} parent=1 // loop_exit
      _
    %8729 = vsyncpa [#allocation3], 1
    %s8730 = scalar_lea.sflag [#allocation3], 1
    %8731 = vsyncpa %s8730, 1

</llo_original>
